<compile_context>
chip_gen: v7x
topology: tpu7x:2x2x1
jax: 0.10.0
libtpu: 0.0.40
codegen_flags: <defaults>
</compile_context>

<pallas_src>
import functools

import jax
import jax.numpy as jnp
from jax import lax
from jax.experimental import pallas as pl
from jax.experimental.pallas import tpu as pltpu


def _enc_conv_kernel(x_ref, w1_ref, w2_ref, w3_ref, o_ref, *, reduce):
    """Fused ENC_Conv stage for one batch block.

    x_ref  : (B, H, W, Cin)            input tile, NHWC
    w1_ref : (9*Cin, Cmid)   bf16      layer-1 weights, all 9 taps folded
    w2_ref : (3, 3*Cmid, Cmid) bf16    per-dx matrices, rows = dy*Cin + ci
    w3_ref : (3, 3*Cmid, Cout) bf16
    o_ref  : (B, Ho, Wo, Cout)         Ho,Wo = H/2,W/2 if reduce else H,W
    """
    B, H, W = x_ref.shape[0], x_ref.shape[1], x_ref.shape[2]

    def shifted_padded_taps(x):
        """x: (B, H, W, C) -> (B, H, W+2, 3C).

        Lane-concat of the three dy taps of the blind input (shift-down by
        one row, replicate-pad 1, crop realized by never computing the last
        output row).  The (H+2)-row padded array is never materialized: the
        two zero rows enter as tiny per-dy zero prefixes.  H-offset slices
        are leading-dim slices (free); the only full copies are the
        W-replication and the lane concat itself.
        """
        c = x.shape[-1]
        xw = jnp.concatenate(                                   # replicate W
            [x[:, :, 0:1, :], x, x[:, :, W - 1:W, :]], axis=2)  # (B,H,W+2,C)
        z1 = jnp.zeros((B, 1, W + 2, c), x.dtype)
        z2 = jnp.zeros((B, 2, W + 2, c), x.dtype)
        slab0 = jnp.concatenate([z2, xw[:, :H - 2]], axis=1)    # padded[i]
        slab1 = jnp.concatenate([z1, xw[:, :H - 1]], axis=1)    # padded[i+1]
        slab2 = xw                                              # padded[i+2]
        return jnp.concatenate([slab0, slab1, slab2], axis=-1)  # (B,H,W+2,3C)

    def lrelu(a):
        return jnp.where(a >= 0, a, 0.1 * a)                    # LeakyReLU(0.1)

    # ---- layer 1 (tiny Cin): all 9 taps in one K = 9*Cin matmul ----
    x = x_ref[...].astype(jnp.bfloat16)
    cin = x.shape[-1]
    cmid = w1_ref.shape[-1]
    xcat = shifted_padded_taps(x)                               # (B,H,W+2,3Cin)
    patch9 = jnp.concatenate(
        [xcat[:, :, 0:W, :], xcat[:, :, 1:W + 1, :], xcat[:, :, 2:W + 2, :]],
        axis=-1).reshape(B * H * W, 9 * cin)                    # K = 9*Cin
    y = jnp.dot(patch9, w1_ref[...], preferred_element_type=jnp.float32)
    y = lrelu(y).reshape(B, H, W, cmid).astype(jnp.bfloat16)

    # ---- layers 2 & 3: dy folded into K, loop over the 3 dx offsets ----
    def conv_wide(xin, w_ref):
        c_in = xin.shape[-1]
        c_out = w_ref.shape[-1]
        xc = shifted_padded_taps(xin)                           # (B,H,W+2,3C)
        acc = None                                              # vreg accumulator
        for dx in range(3):
            patch = xc[:, :, dx:dx + W, :].reshape(B * H * W, 3 * c_in)
            contrib = jnp.dot(patch, w_ref[dx],
                              preferred_element_type=jnp.float32)
            acc = contrib if acc is None else acc + contrib
        return lrelu(acc).reshape(B, H, W, c_out)

    y = conv_wide(y, w2_ref).astype(jnp.bfloat16)
    y = conv_wide(y, w3_ref)                                    # keep f32

    if reduce:
        c = y.shape[-1]
        # blind Pool: shift down (zero top row, drop last row) ...
        ys = jnp.concatenate(
            [jnp.zeros((B, 1, W, c), y.dtype), y[:, :H - 1]], axis=1)
        # ... then 2x2 max-pool, linear cost (no one-hot matmuls):
        hp = jnp.max(ys.reshape(B, H // 2, 2, W, c), axis=2)          # row pairs
        y = jnp.max(hp.reshape(B, H // 2, W // 2, 2, c), axis=3)      # col pairs

    o_ref[...] = y.astype(o_ref.dtype)


def enc_conv_forward_nhwc(x_nhwc, weights, *, reduce=True, block_batch=None):
    """ENC_Conv forward in NHWC (preferred entry point: no layout transposes).

    x_nhwc : (N, H, W, Cin) float32, H and W even.
    weights: (w1, w2, w3), each (3, 3, Cin_l, Cout_l) float32
             (== torch Conv2d weight.permute(2, 3, 1, 0)).
    Returns (N, H/2, W/2, Cout) if reduce else (N, H, W, Cout).
    """
    w1, w2, w3 = weights
    n, h, wd, cin = x_nhwc.shape
    cmid = w1.shape[-1]
    cout = w3.shape[-1]
    assert h % 2 == 0 and wd % 2 == 0, "blind pool needs even H, W"
    assert w1.shape[2] == cin and w2.shape[2] == cmid and w3.shape[2] == cmid

    # Batch block: largest divisor of N up to 8 (amortizes per-grid-step
    # overhead; batch is flattened into the matmul M dim inside the kernel).
    if block_batch is None:
        block_batch = 1
        for b in range(min(n, 8), 0, -1):
            if n % b == 0:
                block_batch = b
                break
    assert n % block_batch == 0

    # bf16 weights, taps folded into the contraction rows.
    #   layer 1: (3,3,Cin,Cmid) -> (9*Cin, Cmid),   row = dx*3*Cin + dy*Cin + ci
    #   layer 2/3: (3,3,C,Co)   -> (3, 3*C, Co),    [dx] rows = dy*C + ci
    w1f = jnp.transpose(w1, (1, 0, 2, 3)).reshape(9 * cin, cmid).astype(jnp.bfloat16)
    w2f = jnp.transpose(w2, (1, 0, 2, 3)).reshape(3, 3 * cmid, cmid).astype(jnp.bfloat16)
    w3f = jnp.transpose(w3, (1, 0, 2, 3)).reshape(3, 3 * cmid, cout).astype(jnp.bfloat16)

    ho, wo = (h // 2, wd // 2) if reduce else (h, wd)

    out = pl.pallas_call(
        functools.partial(_enc_conv_kernel, reduce=reduce),
        out_shape=jax.ShapeDtypeStruct((n, ho, wo, cout), x_nhwc.dtype),
        grid=(n // block_batch,),
        in_specs=[
            pl.BlockSpec((block_batch, h, wd, cin), lambda b: (b, 0, 0, 0)),
            pl.BlockSpec(w1f.shape, lambda b: (0, 0)),
            pl.BlockSpec(w2f.shape, lambda b: (0, 0, 0)),
            pl.BlockSpec(w3f.shape, lambda b: (0, 0, 0)),
        ],
        out_specs=pl.BlockSpec((block_batch, ho, wo, cout), lambda b: (b, 0, 0, 0)),
        compiler_params=pltpu.CompilerParams(
            dimension_semantics=("parallel",),
            # plenty for these sizes; shrink (and H-tile) for the v7x build.
            vmem_limit_bytes=64 * 1024 * 1024),
    )(x_nhwc, w1f, w2f, w3f)
    return out


def enc_conv_forward(x_nchw, weights, *, reduce=True):
    """NCHW wrapper for parity with the PyTorch module.

    Prefer enc_conv_forward_nhwc between BSN stages: these two transposes are
    full HBM read+write passes that the fused kernel otherwise avoids.
    """
    x = jnp.transpose(x_nchw, (0, 2, 3, 1))                     # NCHW -> NHWC
    out = enc_conv_forward_nhwc(x, weights, reduce=reduce)
    return jnp.transpose(out, (0, 3, 1, 2))                     # NHWC -> NCHW


def _reference_enc_conv(x_nchw, weights, *, reduce=True):
    """Pure-JAX f32 reference mirroring the PyTorch ENC_Conv exactly."""
    x = jnp.transpose(x_nchw, (0, 2, 3, 1))
    for w in weights:
        _, h, _, _ = x.shape
        xp = jnp.pad(x, ((0, 0), (1, 0), (0, 0), (0, 0)))                 # shift down
        xp = jnp.pad(xp, ((0, 0), (1, 1), (1, 1), (0, 0)), mode="edge")   # replicate
        y = lax.conv_general_dilated(
            xp, w, window_strides=(1, 1), padding="VALID",
            dimension_numbers=("NHWC", "HWIO", "NHWC"))
        y = jnp.where(y >= 0, y, 0.1 * y)                                 # LeakyReLU
        x = y[:, :h]                                                      # crop
    if reduce:
        n, h, wd, c = x.shape
        x = jnp.pad(x, ((0, 0), (1, 0), (0, 0), (0, 0)))[:, :h]           # shift
        x = jnp.max(x.reshape(n, h // 2, 2, wd // 2, 2, c), axis=(2, 4))  # maxpool 2x2
    return jnp.transpose(x, (0, 3, 1, 2))


if __name__ == "__main__":
    key = jax.random.PRNGKey(0)
    kx, k1, k2, k3 = jax.random.split(key, 4)

    N, CIN, CMID, COUT, H, W = 2, 3, 48, 48, 16, 16

    def make_w(k, ci, co):
        return jax.random.normal(k, (3, 3, ci, co), jnp.float32) * (9.0 * ci) ** -0.5

    x = jax.random.normal(kx, (N, CIN, H, W), jnp.float32)
    weights = (make_w(k1, CIN, CMID), make_w(k2, CMID, CMID), make_w(k3, CMID, COUT))

    def check(out, ref):
        err = float(jnp.max(jnp.abs(out - ref)))
        scale = float(jnp.max(jnp.abs(ref)))
        assert err < max(1e-3, 5e-2 * scale), f"max abs err {err} (ref scale {scale})"

    # reduce=True path (ENC_Conv with blind Pool)
    fwd = jax.jit(functools.partial(enc_conv_forward, reduce=True))
    out = jax.block_until_ready(fwd(x, weights))
    assert out.shape == (N, COUT, H // 2, W // 2), out.shape
    assert bool(jnp.all(jnp.isfinite(out)))
    check(out, _reference_enc_conv(x, weights, reduce=True))

    # reduce=False path (ENC_Conv without Pool)
    fwd_nr = jax.jit(functools.partial(enc_conv_forward, reduce=False))
    out_nr = jax.block_until_ready(fwd_nr(x, weights))
    assert out_nr.shape == (N, COUT, H, W), out_nr.shape
    check(out_nr, _reference_enc_conv(x, weights, reduce=False))

    print("KERNEL_OK")
</pallas_src>

<mosaic_0001>
module attributes {stable_mosaic.version = 11 : i64} {
  func.func @_enc_conv_kernel(%arg0: i32, %arg1: memref<2x16x16x3xf32, #tpu.memory_space<vmem>>, %arg2: memref<27x48xbf16, #tpu.memory_space<vmem>>, %arg3: memref<3x144x48xbf16, #tpu.memory_space<vmem>>, %arg4: memref<3x144x48xbf16, #tpu.memory_space<vmem>>, %arg5: memref<2x8x8x48xf32, #tpu.memory_space<vmem>>) attributes {dimension_semantics = [#tpu.dimension_semantics<parallel>], iteration_bounds = array<i64: 1>, scalar_prefetch = 0 : i64, scratch_operands = 0 : i64, tpu.core_type = #tpu.core_type<tc>, window_params = [{transform_indices = @transform_0, window_bounds = array<i64: 2, 16, 16, 3>}, {pipeline_mode = #tpu.pipeline_mode<synchronous>, transform_indices = @transform_1, window_bounds = array<i64: 27, 48>}, {pipeline_mode = #tpu.pipeline_mode<synchronous>, transform_indices = @transform_2, window_bounds = array<i64: 3, 144, 48>}, {pipeline_mode = #tpu.pipeline_mode<synchronous>, transform_indices = @transform_3, window_bounds = array<i64: 3, 144, 48>}, {transform_indices = @transform_4, window_bounds = array<i64: 2, 8, 8, 48>}]} {
    %c0 = arith.constant 0 : index
    %c0_0 = arith.constant 0 : index
    %c0_1 = arith.constant 0 : index
    %c0_2 = arith.constant 0 : index
    %0 = vector.load %arg1[%c0, %c0_0, %c0_1, %c0_2] : memref<2x16x16x3xf32, #tpu.memory_space<vmem>>, vector<2x16x16x3xf32>
    %1 = arith.truncf %0 : vector<2x16x16x3xf32> to vector<2x16x16x3xbf16>
    %2 = vector.extract_strided_slice %1 {offsets = [0, 0, 0, 0], sizes = [2, 16, 1, 3], strides = [1, 1, 1, 1]} : vector<2x16x16x3xbf16> to vector<2x16x1x3xbf16>
    %3 = vector.extract_strided_slice %1 {offsets = [0, 0, 15, 0], sizes = [2, 16, 1, 3], strides = [1, 1, 1, 1]} : vector<2x16x16x3xbf16> to vector<2x16x1x3xbf16>
    %4 = tpu.concatenate %2, %1, %3 in 2 : vector<2x16x1x3xbf16>, vector<2x16x16x3xbf16>, vector<2x16x1x3xbf16> -> vector<2x16x18x3xbf16>
    %cst = arith.constant 0.000000e+00 : bf16
    %5 = vector.broadcast %cst : bf16 to vector<2x1x18x3xbf16>
    %cst_3 = arith.constant 0.000000e+00 : bf16
    %6 = vector.broadcast %cst_3 : bf16 to vector<2x2x18x3xbf16>
    %7 = vector.extract_strided_slice %4 {offsets = [0, 0, 0, 0], sizes = [2, 14, 18, 3], strides = [1, 1, 1, 1]} : vector<2x16x18x3xbf16> to vector<2x14x18x3xbf16>
    %8 = tpu.concatenate %6, %7 in 1 : vector<2x2x18x3xbf16>, vector<2x14x18x3xbf16> -> vector<2x16x18x3xbf16>
    %9 = vector.extract_strided_slice %4 {offsets = [0, 0, 0, 0], sizes = [2, 15, 18, 3], strides = [1, 1, 1, 1]} : vector<2x16x18x3xbf16> to vector<2x15x18x3xbf16>
    %10 = tpu.concatenate %5, %9 in 1 : vector<2x1x18x3xbf16>, vector<2x15x18x3xbf16> -> vector<2x16x18x3xbf16>
    %11 = tpu.concatenate %8, %10, %4 in 3 : vector<2x16x18x3xbf16>, vector<2x16x18x3xbf16>, vector<2x16x18x3xbf16> -> vector<2x16x18x9xbf16>
    %12 = vector.extract_strided_slice %11 {offsets = [0, 0, 0, 0], sizes = [2, 16, 16, 9], strides = [1, 1, 1, 1]} : vector<2x16x18x9xbf16> to vector<2x16x16x9xbf16>
    %13 = vector.extract_strided_slice %11 {offsets = [0, 0, 1, 0], sizes = [2, 16, 16, 9], strides = [1, 1, 1, 1]} : vector<2x16x18x9xbf16> to vector<2x16x16x9xbf16>
    %14 = vector.extract_strided_slice %11 {offsets = [0, 0, 2, 0], sizes = [2, 16, 16, 9], strides = [1, 1, 1, 1]} : vector<2x16x18x9xbf16> to vector<2x16x16x9xbf16>
    %15 = tpu.concatenate %12, %13, %14 in 3 : vector<2x16x16x9xbf16>, vector<2x16x16x9xbf16>, vector<2x16x16x9xbf16> -> vector<2x16x16x27xbf16>
    %16 = vector.shape_cast %15 : vector<2x16x16x27xbf16> to vector<512x27xbf16>
    %c0_4 = arith.constant 0 : index
    %c0_5 = arith.constant 0 : index
    %17 = vector.load %arg2[%c0_4, %c0_5] : memref<27x48xbf16, #tpu.memory_space<vmem>>, vector<27x48xbf16>
    %cst_6 = arith.constant dense<0.000000e+00> : vector<512x48xf32>
    %18 = tpu.matmul %16, %17, %cst_6 {dimension_numbers = #tpu.dot_dimension_numbers<[1], [0], [0], [1], [0, 0, 1, 1], [], []>} : vector<512x27xbf16>, vector<27x48xbf16>, vector<512x48xf32> -> vector<512x48xf32>
    %cst_7 = arith.constant 0.000000e+00 : f32
    %19 = vector.broadcast %cst_7 : f32 to vector<512x48xf32>
    %20 = arith.cmpf oge, %18, %19 : vector<512x48xf32>
    %cst_8 = arith.constant 1.000000e-01 : f32
    %21 = vector.broadcast %cst_8 : f32 to vector<512x48xf32>
    %22 = arith.mulf %21, %18 : vector<512x48xf32>
    %23 = arith.select %20, %18, %22 : vector<512x48xi1>, vector<512x48xf32>
    %24 = vector.shape_cast %23 : vector<512x48xf32> to vector<2x16x16x48xf32>
    %25 = arith.truncf %24 : vector<2x16x16x48xf32> to vector<2x16x16x48xbf16>
    %26 = vector.extract_strided_slice %25 {offsets = [0, 0, 0, 0], sizes = [2, 16, 1, 48], strides = [1, 1, 1, 1]} : vector<2x16x16x48xbf16> to vector<2x16x1x48xbf16>
    %27 = vector.extract_strided_slice %25 {offsets = [0, 0, 15, 0], sizes = [2, 16, 1, 48], strides = [1, 1, 1, 1]} : vector<2x16x16x48xbf16> to vector<2x16x1x48xbf16>
    %28 = tpu.concatenate %26, %25, %27 in 2 : vector<2x16x1x48xbf16>, vector<2x16x16x48xbf16>, vector<2x16x1x48xbf16> -> vector<2x16x18x48xbf16>
    %cst_9 = arith.constant 0.000000e+00 : bf16
    %29 = vector.broadcast %cst_9 : bf16 to vector<2x1x18x48xbf16>
    %cst_10 = arith.constant 0.000000e+00 : bf16
    %30 = vector.broadcast %cst_10 : bf16 to vector<2x2x18x48xbf16>
    %31 = vector.extract_strided_slice %28 {offsets = [0, 0, 0, 0], sizes = [2, 14, 18, 48], strides = [1, 1, 1, 1]} : vector<2x16x18x48xbf16> to vector<2x14x18x48xbf16>
    %32 = tpu.concatenate %30, %31 in 1 : vector<2x2x18x48xbf16>, vector<2x14x18x48xbf16> -> vector<2x16x18x48xbf16>
    %33 = vector.extract_strided_slice %28 {offsets = [0, 0, 0, 0], sizes = [2, 15, 18, 48], strides = [1, 1, 1, 1]} : vector<2x16x18x48xbf16> to vector<2x15x18x48xbf16>
    %34 = tpu.concatenate %29, %33 in 1 : vector<2x1x18x48xbf16>, vector<2x15x18x48xbf16> -> vector<2x16x18x48xbf16>
    %35 = tpu.concatenate %32, %34, %28 in 3 : vector<2x16x18x48xbf16>, vector<2x16x18x48xbf16>, vector<2x16x18x48xbf16> -> vector<2x16x18x144xbf16>
    %36 = vector.extract_strided_slice %35 {offsets = [0, 0, 0, 0], sizes = [2, 16, 16, 144], strides = [1, 1, 1, 1]} : vector<2x16x18x144xbf16> to vector<2x16x16x144xbf16>
    %37 = vector.shape_cast %36 : vector<2x16x16x144xbf16> to vector<512x144xbf16>
    %c0_11 = arith.constant 0 : index
    %c0_12 = arith.constant 0 : index
    %c0_13 = arith.constant 0 : index
    %38 = vector.load %arg3[%c0_11, %c0_12, %c0_13] : memref<3x144x48xbf16, #tpu.memory_space<vmem>>, vector<1x144x48xbf16>
    %39 = vector.shape_cast %38 : vector<1x144x48xbf16> to vector<144x48xbf16>
    %cst_14 = arith.constant dense<0.000000e+00> : vector<512x48xf32>
    %40 = tpu.matmul %37, %39, %cst_14 {dimension_numbers = #tpu.dot_dimension_numbers<[1], [0], [0], [1], [0, 0, 1, 1], [], []>} : vector<512x144xbf16>, vector<144x48xbf16>, vector<512x48xf32> -> vector<512x48xf32>
    %41 = vector.extract_strided_slice %35 {offsets = [0, 0, 1, 0], sizes = [2, 16, 16, 144], strides = [1, 1, 1, 1]} : vector<2x16x18x144xbf16> to vector<2x16x16x144xbf16>
    %42 = vector.shape_cast %41 : vector<2x16x16x144xbf16> to vector<512x144xbf16>
    %c1 = arith.constant 1 : index
    %c0_15 = arith.constant 0 : index
    %c0_16 = arith.constant 0 : index
    %43 = vector.load %arg3[%c1, %c0_15, %c0_16] : memref<3x144x48xbf16, #tpu.memory_space<vmem>>, vector<1x144x48xbf16>
    %44 = vector.shape_cast %43 : vector<1x144x48xbf16> to vector<144x48xbf16>
    %cst_17 = arith.constant dense<0.000000e+00> : vector<512x48xf32>
    %45 = tpu.matmul %42, %44, %cst_17 {dimension_numbers = #tpu.dot_dimension_numbers<[1], [0], [0], [1], [0, 0, 1, 1], [], []>} : vector<512x144xbf16>, vector<144x48xbf16>, vector<512x48xf32> -> vector<512x48xf32>
    %46 = arith.addf %40, %45 : vector<512x48xf32>
    %47 = vector.extract_strided_slice %35 {offsets = [0, 0, 2, 0], sizes = [2, 16, 16, 144], strides = [1, 1, 1, 1]} : vector<2x16x18x144xbf16> to vector<2x16x16x144xbf16>
    %48 = vector.shape_cast %47 : vector<2x16x16x144xbf16> to vector<512x144xbf16>
    %c2 = arith.constant 2 : index
    %c0_18 = arith.constant 0 : index
    %c0_19 = arith.constant 0 : index
    %49 = vector.load %arg3[%c2, %c0_18, %c0_19] : memref<3x144x48xbf16, #tpu.memory_space<vmem>>, vector<1x144x48xbf16>
    %50 = vector.shape_cast %49 : vector<1x144x48xbf16> to vector<144x48xbf16>
    %cst_20 = arith.constant dense<0.000000e+00> : vector<512x48xf32>
    %51 = tpu.matmul %48, %50, %cst_20 {dimension_numbers = #tpu.dot_dimension_numbers<[1], [0], [0], [1], [0, 0, 1, 1], [], []>} : vector<512x144xbf16>, vector<144x48xbf16>, vector<512x48xf32> -> vector<512x48xf32>
    %52 = arith.addf %46, %51 : vector<512x48xf32>
    %cst_21 = arith.constant 0.000000e+00 : f32
    %53 = vector.broadcast %cst_21 : f32 to vector<512x48xf32>
    %54 = arith.cmpf oge, %52, %53 : vector<512x48xf32>
    %cst_22 = arith.constant 1.000000e-01 : f32
    %55 = vector.broadcast %cst_22 : f32 to vector<512x48xf32>
    %56 = arith.mulf %55, %52 : vector<512x48xf32>
    %57 = arith.select %54, %52, %56 : vector<512x48xi1>, vector<512x48xf32>
    %58 = vector.shape_cast %57 : vector<512x48xf32> to vector<2x16x16x48xf32>
    %59 = arith.truncf %58 : vector<2x16x16x48xf32> to vector<2x16x16x48xbf16>
    %60 = vector.extract_strided_slice %59 {offsets = [0, 0, 0, 0], sizes = [2, 16, 1, 48], strides = [1, 1, 1, 1]} : vector<2x16x16x48xbf16> to vector<2x16x1x48xbf16>
    %61 = vector.extract_strided_slice %59 {offsets = [0, 0, 15, 0], sizes = [2, 16, 1, 48], strides = [1, 1, 1, 1]} : vector<2x16x16x48xbf16> to vector<2x16x1x48xbf16>
    %62 = tpu.concatenate %60, %59, %61 in 2 : vector<2x16x1x48xbf16>, vector<2x16x16x48xbf16>, vector<2x16x1x48xbf16> -> vector<2x16x18x48xbf16>
    %cst_23 = arith.constant 0.000000e+00 : bf16
    %63 = vector.broadcast %cst_23 : bf16 to vector<2x1x18x48xbf16>
    %cst_24 = arith.constant 0.000000e+00 : bf16
    %64 = vector.broadcast %cst_24 : bf16 to vector<2x2x18x48xbf16>
    %65 = vector.extract_strided_slice %62 {offsets = [0, 0, 0, 0], sizes = [2, 14, 18, 48], strides = [1, 1, 1, 1]} : vector<2x16x18x48xbf16> to vector<2x14x18x48xbf16>
    %66 = tpu.concatenate %64, %65 in 1 : vector<2x2x18x48xbf16>, vector<2x14x18x48xbf16> -> vector<2x16x18x48xbf16>
    %67 = vector.extract_strided_slice %62 {offsets = [0, 0, 0, 0], sizes = [2, 15, 18, 48], strides = [1, 1, 1, 1]} : vector<2x16x18x48xbf16> to vector<2x15x18x48xbf16>
    %68 = tpu.concatenate %63, %67 in 1 : vector<2x1x18x48xbf16>, vector<2x15x18x48xbf16> -> vector<2x16x18x48xbf16>
    %69 = tpu.concatenate %66, %68, %62 in 3 : vector<2x16x18x48xbf16>, vector<2x16x18x48xbf16>, vector<2x16x18x48xbf16> -> vector<2x16x18x144xbf16>
    %70 = vector.extract_strided_slice %69 {offsets = [0, 0, 0, 0], sizes = [2, 16, 16, 144], strides = [1, 1, 1, 1]} : vector<2x16x18x144xbf16> to vector<2x16x16x144xbf16>
    %71 = vector.shape_cast %70 : vector<2x16x16x144xbf16> to vector<512x144xbf16>
    %c0_25 = arith.constant 0 : index
    %c0_26 = arith.constant 0 : index
    %c0_27 = arith.constant 0 : index
    %72 = vector.load %arg4[%c0_25, %c0_26, %c0_27] : memref<3x144x48xbf16, #tpu.memory_space<vmem>>, vector<1x144x48xbf16>
    %73 = vector.shape_cast %72 : vector<1x144x48xbf16> to vector<144x48xbf16>
    %cst_28 = arith.constant dense<0.000000e+00> : vector<512x48xf32>
    %74 = tpu.matmul %71, %73, %cst_28 {dimension_numbers = #tpu.dot_dimension_numbers<[1], [0], [0], [1], [0, 0, 1, 1], [], []>} : vector<512x144xbf16>, vector<144x48xbf16>, vector<512x48xf32> -> vector<512x48xf32>
    %75 = vector.extract_strided_slice %69 {offsets = [0, 0, 1, 0], sizes = [2, 16, 16, 144], strides = [1, 1, 1, 1]} : vector<2x16x18x144xbf16> to vector<2x16x16x144xbf16>
    %76 = vector.shape_cast %75 : vector<2x16x16x144xbf16> to vector<512x144xbf16>
    %c1_29 = arith.constant 1 : index
    %c0_30 = arith.constant 0 : index
    %c0_31 = arith.constant 0 : index
    %77 = vector.load %arg4[%c1_29, %c0_30, %c0_31] : memref<3x144x48xbf16, #tpu.memory_space<vmem>>, vector<1x144x48xbf16>
    %78 = vector.shape_cast %77 : vector<1x144x48xbf16> to vector<144x48xbf16>
    %cst_32 = arith.constant dense<0.000000e+00> : vector<512x48xf32>
    %79 = tpu.matmul %76, %78, %cst_32 {dimension_numbers = #tpu.dot_dimension_numbers<[1], [0], [0], [1], [0, 0, 1, 1], [], []>} : vector<512x144xbf16>, vector<144x48xbf16>, vector<512x48xf32> -> vector<512x48xf32>
    %80 = arith.addf %74, %79 : vector<512x48xf32>
    %81 = vector.extract_strided_slice %69 {offsets = [0, 0, 2, 0], sizes = [2, 16, 16, 144], strides = [1, 1, 1, 1]} : vector<2x16x18x144xbf16> to vector<2x16x16x144xbf16>
    %82 = vector.shape_cast %81 : vector<2x16x16x144xbf16> to vector<512x144xbf16>
    %c2_33 = arith.constant 2 : index
    %c0_34 = arith.constant 0 : index
    %c0_35 = arith.constant 0 : index
    %83 = vector.load %arg4[%c2_33, %c0_34, %c0_35] : memref<3x144x48xbf16, #tpu.memory_space<vmem>>, vector<1x144x48xbf16>
    %84 = vector.shape_cast %83 : vector<1x144x48xbf16> to vector<144x48xbf16>
    %cst_36 = arith.constant dense<0.000000e+00> : vector<512x48xf32>
    %85 = tpu.matmul %82, %84, %cst_36 {dimension_numbers = #tpu.dot_dimension_numbers<[1], [0], [0], [1], [0, 0, 1, 1], [], []>} : vector<512x144xbf16>, vector<144x48xbf16>, vector<512x48xf32> -> vector<512x48xf32>
    %86 = arith.addf %80, %85 : vector<512x48xf32>
    %cst_37 = arith.constant 0.000000e+00 : f32
    %87 = vector.broadcast %cst_37 : f32 to vector<512x48xf32>
    %88 = arith.cmpf oge, %86, %87 : vector<512x48xf32>
    %cst_38 = arith.constant 1.000000e-01 : f32
    %89 = vector.broadcast %cst_38 : f32 to vector<512x48xf32>
    %90 = arith.mulf %89, %86 : vector<512x48xf32>
    %91 = arith.select %88, %86, %90 : vector<512x48xi1>, vector<512x48xf32>
    %92 = vector.shape_cast %91 : vector<512x48xf32> to vector<2x16x16x48xf32>
    %cst_39 = arith.constant 0.000000e+00 : f32
    %93 = vector.broadcast %cst_39 : f32 to vector<2x1x16x48xf32>
    %94 = vector.extract_strided_slice %92 {offsets = [0, 0, 0, 0], sizes = [2, 15, 16, 48], strides = [1, 1, 1, 1]} : vector<2x16x16x48xf32> to vector<2x15x16x48xf32>
    %95 = tpu.concatenate %93, %94 in 1 : vector<2x1x16x48xf32>, vector<2x15x16x48xf32> -> vector<2x16x16x48xf32>
    %96 = vector.shape_cast %95 : vector<2x16x16x48xf32> to vector<2x8x2x16x48xf32>
    %cst_40 = arith.constant dense<0xFF800000> : vector<2x8x16x48xf32>
    %97 = vector.multi_reduction <maximumf>, %96, %cst_40 [2] : vector<2x8x2x16x48xf32> to vector<2x8x16x48xf32>
    %98 = vector.shape_cast %97 : vector<2x8x16x48xf32> to vector<2x8x8x2x48xf32>
    %cst_41 = arith.constant dense<0xFF800000> : vector<2x8x8x48xf32>
    %99 = vector.multi_reduction <maximumf>, %98, %cst_41 [3] : vector<2x8x8x2x48xf32> to vector<2x8x8x48xf32>
    %c0_42 = arith.constant 0 : index
    %c0_43 = arith.constant 0 : index
    %c0_44 = arith.constant 0 : index
    %c0_45 = arith.constant 0 : index
    %100 = vector.load %arg5[%c0_42, %c0_43, %c0_44, %c0_45] : memref<2x8x8x48xf32, #tpu.memory_space<vmem>>, vector<2x8x8x48xf32>
    tpu.vector_store %arg5[%c0_42, %c0_43, %c0_44, %c0_45], %99 {strides = array<i32>} : memref<2x8x8x48xf32, #tpu.memory_space<vmem>>, vector<2x8x8x48xf32>,
    return
  }
  func.func @transform_0(%arg0: i32) -> (i32, i32, i32, i32) {
    %c0_i32 = arith.constant 0 : i32
    %c0_i32_0 = arith.constant 0 : i32
    %c0_i32_1 = arith.constant 0 : i32
    %c0_i32_2 = arith.constant 0 : i32
    return %arg0, %c0_i32, %c0_i32_0, %c0_i32_1 : i32, i32, i32, i32
  }
  func.func @transform_1(%arg0: i32) -> (i32, i32) {
    %c0_i32 = arith.constant 0 : i32
    %c0_i32_0 = arith.constant 0 : i32
    %c0_i32_1 = arith.constant 0 : i32
    return %c0_i32, %c0_i32_0 : i32, i32
  }
  func.func @transform_2(%arg0: i32) -> (i32, i32, i32) {
    %c0_i32 = arith.constant 0 : i32
    %c0_i32_0 = arith.constant 0 : i32
    %c0_i32_1 = arith.constant 0 : i32
    %c0_i32_2 = arith.constant 0 : i32
    return %c0_i32, %c0_i32_0, %c0_i32_1 : i32, i32, i32
  }
  func.func @transform_3(%arg0: i32) -> (i32, i32, i32) {
    %c0_i32 = arith.constant 0 : i32
    %c0_i32_0 = arith.constant 0 : i32
    %c0_i32_1 = arith.constant 0 : i32
    %c0_i32_2 = arith.constant 0 : i32
    return %c0_i32, %c0_i32_0, %c0_i32_1 : i32, i32, i32
  }
  func.func @transform_4(%arg0: i32) -> (i32, i32, i32, i32) {
    %c0_i32 = arith.constant 0 : i32
    %c0_i32_0 = arith.constant 0 : i32
    %c0_i32_1 = arith.constant 0 : i32
    %c0_i32_2 = arith.constant 0 : i32
    return %arg0, %c0_i32, %c0_i32_0, %c0_i32_1 : i32, i32, i32, i32
  }
}

</mosaic_0001>

<llo_original>
// kernel: enc_conv_forward.1
$region0: #{enc_conv_forward.1}
  #allocation0 [shape = 'u32[]', space=smem, size = 0x4, offset = 0x4, fixed_abs, tag = 'smem constant byte address 0x4 - core index']
  #allocation1 [shape = 'u32[144,128]{1,0:T(1,128)}', space=vmem, size = 0x12000, scoped, tag = 'internal scratch']
  %s0 = inlined_call_operand.hbm [shape: f32[2,16,16,3], index: 0, kind: input, shape index: {}]
  %s1 = inlined_call_operand.hbm [shape: bf16[27,48], index: 1, kind: input, shape index: {}]
  %s2 = inlined_call_operand.hbm [shape: bf16[3,144,48], index: 2, kind: input, shape index: {}]
  %s3 = inlined_call_operand.hbm [shape: bf16[3,144,48], index: 3, kind: input, shape index: {}]
  %s4 = inlined_call_operand.hbm [shape: f32[2,8,8,48], index: 4, kind: output, shape index: {}]
  %s5 = sld [smem:[#allocation0]]
  $region42: #{enc_conv_forward.1} parent=0
    _
  %s7 = ssub.s32 1, %s5
  %s8 = scalar_select 0, %s7, %s5
  $region1: #{enc_conv_forward.1} parent=0
    #allocation2 [shape = 'u8[262144]{0}', space=vmem, size = 0x40000, scoped, tag = 'input window, operand 0, single buffered']
    #allocation3 [shape = 's32[1]{0}', space=sflag, size = 0x4, scoped, tag = 'scoped memory for enc_conv_forward.1']
    #allocation4 [shape = 's32[1]{0}', space=sflag, size = 0x4, scoped, tag = 'scoped memory for enc_conv_forward.1']
    #allocation5 [shape = 'u8[8192]{0}', space=vmem, size = 0x2000, scoped, tag = 'input window, operand 1, single buffered']
    #allocation6 [shape = 's32[1]{0}', space=sflag, size = 0x4, scoped, tag = 'scoped memory for enc_conv_forward.1']
    #allocation7 [shape = 'u8[110592]{0}', space=vmem, size = 0x1b000, scoped, tag = 'input window, operand 2, single buffered']
    #allocation8 [shape = 'u8[110592]{0}', space=vmem, size = 0x1b000, scoped, tag = 'input window, operand 3, single buffered']
    #allocation9 [shape = 's32[1]{0}', space=sflag, size = 0x4, scoped, tag = 'scoped memory for enc_conv_forward.1']
    #allocation10 [shape = 'u8[65536]{0}', space=vmem, size = 0x10000, scoped, tag = 'output window, operand 0, single buffered']
    %9 = vsyncpa [#allocation3], 0
    %10 = vsyncpa [#allocation6], 0
    %11 = vsyncpa [#allocation9], 0
    %12 = vsyncpa [#allocation4], 0
    // Predicated region
    $region2: #{enc_conv_forward.1} parent=1 // pred_check
      _
    $region3: #{enc_conv_forward.1} parent=1 // pred_check_branch
      %14 = sbr.rel (0) target = $region5
    $region4: #{enc_conv_forward.1} parent=1 // pred_region
      %s16 = ssub.s32 8192, 8192
      %17 = vsyncadd [#allocation3], %s16
      %s18 = sshll.u32 [#allocation2], 4
      %s19 = int_to_ptr.vmem [resolvable:$true] %s18
      %24 = dma.hbm_to_vmem [thread:$0]  %s0, 8192, %s19, [#allocation3], 128, 128, 8
    $region5: #{enc_conv_forward.1} parent=1 // pred_fallthru
      _
    // Predicated region
    $region6: #{enc_conv_forward.1} parent=1 // pred_check
      _
    $region7: #{enc_conv_forward.1} parent=1 // pred_check_branch
      %26 = sbr.rel (0) target = $region9
    $region8: #{enc_conv_forward.1} parent=1 // pred_region
      %s28 = ssub.s32 256, 256
      %29 = vsyncadd [#allocation6], %s28
      %s30 = sshll.u32 [#allocation5], 4
      %s31 = int_to_ptr.vmem [resolvable:$true] %s30
      %36 = dma.hbm_to_vmem [thread:$0]  %s1, 256, %s31, [#allocation6], 64, 64, 4
    $region9: #{enc_conv_forward.1} parent=1 // pred_fallthru
      _
    // Predicated region
    $region10: #{enc_conv_forward.1} parent=1 // pred_check
      _
    $region11: #{enc_conv_forward.1} parent=1 // pred_check_branch
      %38 = sbr.rel (0) target = $region13
    $region12: #{enc_conv_forward.1} parent=1 // pred_region
      %s40 = ssub.s32 3456, 3456
      %41 = vsyncadd [#allocation6], %s40
      %s42 = sshll.u32 [#allocation7], 4
      %s43 = int_to_ptr.vmem [resolvable:$true] %s42
      %48 = dma.hbm_to_vmem [thread:$0]  %s2, 3456, %s43, [#allocation6], 64, 64, 4
    $region13: #{enc_conv_forward.1} parent=1 // pred_fallthru
      _
    // Predicated region
    $region14: #{enc_conv_forward.1} parent=1 // pred_check
      _
    $region15: #{enc_conv_forward.1} parent=1 // pred_check_branch
      %50 = sbr.rel (0) target = $region17
    $region16: #{enc_conv_forward.1} parent=1 // pred_region
      %s52 = ssub.s32 3456, 3456
      %53 = vsyncadd [#allocation9], %s52
      %s54 = sshll.u32 [#allocation8], 4
      %s55 = int_to_ptr.vmem [resolvable:$true] %s54
      %60 = dma.hbm_to_vmem [thread:$0]  %s3, 3456, %s55, [#allocation9], 64, 64, 4
    $region17: #{enc_conv_forward.1} parent=1 // pred_fallthru
      _
    // Predicated region
    $region18: #{enc_conv_forward.1} parent=1 // pred_check
      _
    $region19: #{enc_conv_forward.1} parent=1 // pred_check_branch
      %62 = sbr.rel (0) target = $region21
    $region20: #{enc_conv_forward.1} parent=1 // pred_region
      %63 = dma.done [#allocation3], 8192
    $region21: #{enc_conv_forward.1} parent=1 // pred_fallthru
      _
    // Predicated region
    $region22: #{enc_conv_forward.1} parent=1 // pred_check
      _
    $region23: #{enc_conv_forward.1} parent=1 // pred_check_branch
      %65 = sbr.rel (0) target = $region25
    $region24: #{enc_conv_forward.1} parent=1 // pred_region
      %66 = dma.done [#allocation6], 256
    $region25: #{enc_conv_forward.1} parent=1 // pred_fallthru
      _
    // Predicated region
    $region26: #{enc_conv_forward.1} parent=1 // pred_check
      _
    $region27: #{enc_conv_forward.1} parent=1 // pred_check_branch
      %68 = sbr.rel (0) target = $region29
    $region28: #{enc_conv_forward.1} parent=1 // pred_region
      %69 = dma.done [#allocation6], 3456
    $region29: #{enc_conv_forward.1} parent=1 // pred_fallthru
      _
    // Predicated region
    $region30: #{enc_conv_forward.1} parent=1 // pred_check
      _
    $region31: #{enc_conv_forward.1} parent=1 // pred_check_branch
      %71 = sbr.rel (0) target = $region33
    $region32: #{enc_conv_forward.1} parent=1 // pred_region
      %72 = dma.done [#allocation9], 3456
    $region33: #{enc_conv_forward.1} parent=1 // pred_fallthru
      _
    %v74 = vld [vmem:[#allocation2] sm:$0xff]
    %v75 = vld [vmem:[#allocation2 + $0x8] sm:$0xff]
    %v76 = vld [vmem:[#allocation2 + $0x10] sm:$0xff]
    %v77 = vld [vmem:[#allocation2 + $0x18] sm:$0xff]
    %v78 = vld [vmem:[#allocation2 + $0x20] sm:$0xff]
    %v79 = vld [vmem:[#allocation2 + $0x28] sm:$0xff]
    %v80 = vld [vmem:[#allocation2 + $0x30] sm:$0xff]
    %v81 = vld [vmem:[#allocation2 + $0x38] sm:$0xff]
    %v82 = vld [vmem:[#allocation2 + $0x40] sm:$0xff]
    %v83 = vld [vmem:[#allocation2 + $0x48] sm:$0xff]
    %v84 = vld [vmem:[#allocation2 + $0x50] sm:$0xff]
    %v85 = vld [vmem:[#allocation2 + $0x58] sm:$0xff]
    %v86 = vld [vmem:[#allocation2 + $0x60] sm:$0xff]
    %v87 = vld [vmem:[#allocation2 + $0x68] sm:$0xff]
    %v88 = vld [vmem:[#allocation2 + $0x70] sm:$0xff]
    %v89 = vld [vmem:[#allocation2 + $0x78] sm:$0xff]
    %v90 = vld [vmem:[#allocation2 + $0x80] sm:$0xff]
    %v91 = vld [vmem:[#allocation2 + $0x88] sm:$0xff]
    %v92 = vld [vmem:[#allocation2 + $0x90] sm:$0xff]
    %v93 = vld [vmem:[#allocation2 + $0x98] sm:$0xff]
    %v94 = vld [vmem:[#allocation2 + $0xa0] sm:$0xff]
    %v95 = vld [vmem:[#allocation2 + $0xa8] sm:$0xff]
    %v96 = vld [vmem:[#allocation2 + $0xb0] sm:$0xff]
    %v97 = vld [vmem:[#allocation2 + $0xb8] sm:$0xff]
    %v98 = vld [vmem:[#allocation2 + $0xc0] sm:$0xff]
    %v99 = vld [vmem:[#allocation2 + $0xc8] sm:$0xff]
    %v100 = vld [vmem:[#allocation2 + $0xd0] sm:$0xff]
    %v101 = vld [vmem:[#allocation2 + $0xd8] sm:$0xff]
    %v102 = vld [vmem:[#allocation2 + $0xe0] sm:$0xff]
    %v103 = vld [vmem:[#allocation2 + $0xe8] sm:$0xff]
    %v104 = vld [vmem:[#allocation2 + $0xf0] sm:$0xff]
    %v105 = vld [vmem:[#allocation2 + $0xf8] sm:$0xff]
    %v106 = vld [vmem:[#allocation2 + $0x100] sm:$0xff]
    %v107 = vld [vmem:[#allocation2 + $0x108] sm:$0xff]
    %v108 = vld [vmem:[#allocation2 + $0x110] sm:$0xff]
    %v109 = vld [vmem:[#allocation2 + $0x118] sm:$0xff]
    %v110 = vld [vmem:[#allocation2 + $0x120] sm:$0xff]
    %v111 = vld [vmem:[#allocation2 + $0x128] sm:$0xff]
    %v112 = vld [vmem:[#allocation2 + $0x130] sm:$0xff]
    %v113 = vld [vmem:[#allocation2 + $0x138] sm:$0xff]
    %v114 = vld [vmem:[#allocation2 + $0x140] sm:$0xff]
    %v115 = vld [vmem:[#allocation2 + $0x148] sm:$0xff]
    %v116 = vld [vmem:[#allocation2 + $0x150] sm:$0xff]
    %v117 = vld [vmem:[#allocation2 + $0x158] sm:$0xff]
    %v118 = vld [vmem:[#allocation2 + $0x160] sm:$0xff]
    %v119 = vld [vmem:[#allocation2 + $0x168] sm:$0xff]
    %v120 = vld [vmem:[#allocation2 + $0x170] sm:$0xff]
    %v121 = vld [vmem:[#allocation2 + $0x178] sm:$0xff]
    %v122 = vld [vmem:[#allocation2 + $0x180] sm:$0xff]
    %v123 = vld [vmem:[#allocation2 + $0x188] sm:$0xff]
    %v124 = vld [vmem:[#allocation2 + $0x190] sm:$0xff]
    %v125 = vld [vmem:[#allocation2 + $0x198] sm:$0xff]
    %v126 = vld [vmem:[#allocation2 + $0x1a0] sm:$0xff]
    %v127 = vld [vmem:[#allocation2 + $0x1a8] sm:$0xff]
    %v128 = vld [vmem:[#allocation2 + $0x1b0] sm:$0xff]
    %v129 = vld [vmem:[#allocation2 + $0x1b8] sm:$0xff]
    %v130 = vld [vmem:[#allocation2 + $0x1c0] sm:$0xff]
    %v131 = vld [vmem:[#allocation2 + $0x1c8] sm:$0xff]
    %v132 = vld [vmem:[#allocation2 + $0x1d0] sm:$0xff]
    %v133 = vld [vmem:[#allocation2 + $0x1d8] sm:$0xff]
    %v134 = vld [vmem:[#allocation2 + $0x1e0] sm:$0xff]
    %v135 = vld [vmem:[#allocation2 + $0x1e8] sm:$0xff]
    %v136 = vld [vmem:[#allocation2 + $0x1f0] sm:$0xff]
    %v137 = vld [vmem:[#allocation2 + $0x1f8] sm:$0xff]
    %v138 = vpack.c.bf16 %v75, %v74
    %v139 = vpack.c.bf16 %v77, %v76
    %v140 = vpack.c.bf16 %v79, %v78
    %v141 = vpack.c.bf16 %v81, %v80
    %v142 = vpack.c.bf16 %v83, %v82
    %v143 = vpack.c.bf16 %v85, %v84
    %v144 = vpack.c.bf16 %v87, %v86
    %v145 = vpack.c.bf16 %v89, %v88
    %v146 = vpack.c.bf16 %v91, %v90
    %v147 = vpack.c.bf16 %v93, %v92
    %v148 = vpack.c.bf16 %v95, %v94
    %v149 = vpack.c.bf16 %v97, %v96
    %v150 = vpack.c.bf16 %v99, %v98
    %v151 = vpack.c.bf16 %v101, %v100
    %v152 = vpack.c.bf16 %v103, %v102
    %v153 = vpack.c.bf16 %v105, %v104
    %v154 = vpack.c.bf16 %v107, %v106
    %v155 = vpack.c.bf16 %v109, %v108
    %v156 = vpack.c.bf16 %v111, %v110
    %v157 = vpack.c.bf16 %v113, %v112
    %v158 = vpack.c.bf16 %v115, %v114
    %v159 = vpack.c.bf16 %v117, %v116
    %v160 = vpack.c.bf16 %v119, %v118
    %v161 = vpack.c.bf16 %v121, %v120
    %v162 = vpack.c.bf16 %v123, %v122
    %v163 = vpack.c.bf16 %v125, %v124
    %v164 = vpack.c.bf16 %v127, %v126
    %v165 = vpack.c.bf16 %v129, %v128
    %v166 = vpack.c.bf16 %v131, %v130
    %v167 = vpack.c.bf16 %v133, %v132
    %v168 = vpack.c.bf16 %v135, %v134
    %v169 = vpack.c.bf16 %v137, %v136
    %v171 = vshrl.u32 %v138, 16
    %v173 = vrot.slane %v171, 7
    %v174 = vshll.u32 %v138, 16
    %v176 = vor.u32 %v173, %v174
    %v178 = vshrl.u32 %v139, 16
    %v180 = vrot.slane %v178, 7
    %v181 = vshll.u32 %v139, 16
    %v183 = vor.u32 %v180, %v181
    %v185 = vshrl.u32 %v140, 16
    %v187 = vrot.slane %v185, 7
    %v188 = vshll.u32 %v140, 16
    %v190 = vor.u32 %v187, %v188
    %v192 = vshrl.u32 %v141, 16
    %v194 = vrot.slane %v192, 7
    %v195 = vshll.u32 %v141, 16
    %v197 = vor.u32 %v194, %v195
    %v199 = vshrl.u32 %v142, 16
    %v201 = vrot.slane %v199, 7
    %v202 = vshll.u32 %v142, 16
    %v204 = vor.u32 %v201, %v202
    %v206 = vshrl.u32 %v143, 16
    %v208 = vrot.slane %v206, 7
    %v209 = vshll.u32 %v143, 16
    %v211 = vor.u32 %v208, %v209
    %v213 = vshrl.u32 %v144, 16
    %v215 = vrot.slane %v213, 7
    %v216 = vshll.u32 %v144, 16
    %v218 = vor.u32 %v215, %v216
    %v220 = vshrl.u32 %v145, 16
    %v222 = vrot.slane %v220, 7
    %v223 = vshll.u32 %v145, 16
    %v225 = vor.u32 %v222, %v223
    %v227 = vshrl.u32 %v146, 16
    %v229 = vrot.slane %v227, 7
    %v230 = vshll.u32 %v146, 16
    %v232 = vor.u32 %v229, %v230
    %v234 = vshrl.u32 %v147, 16
    %v236 = vrot.slane %v234, 7
    %v237 = vshll.u32 %v147, 16
    %v239 = vor.u32 %v236, %v237
    %v241 = vshrl.u32 %v148, 16
    %v243 = vrot.slane %v241, 7
    %v244 = vshll.u32 %v148, 16
    %v246 = vor.u32 %v243, %v244
    %v248 = vshrl.u32 %v149, 16
    %v250 = vrot.slane %v248, 7
    %v251 = vshll.u32 %v149, 16
    %v253 = vor.u32 %v250, %v251
    %v255 = vshrl.u32 %v150, 16
    %v257 = vrot.slane %v255, 7
    %v258 = vshll.u32 %v150, 16
    %v260 = vor.u32 %v257, %v258
    %v262 = vshrl.u32 %v151, 16
    %v264 = vrot.slane %v262, 7
    %v265 = vshll.u32 %v151, 16
    %v267 = vor.u32 %v264, %v265
    %v269 = vshrl.u32 %v152, 16
    %v271 = vrot.slane %v269, 7
    %v272 = vshll.u32 %v152, 16
    %v274 = vor.u32 %v271, %v272
    %v276 = vshrl.u32 %v153, 16
    %v278 = vrot.slane %v276, 7
    %v279 = vshll.u32 %v153, 16
    %v281 = vor.u32 %v278, %v279
    %v283 = vshrl.u32 %v154, 16
    %v285 = vrot.slane %v283, 7
    %v286 = vshll.u32 %v154, 16
    %v288 = vor.u32 %v285, %v286
    %v290 = vshrl.u32 %v155, 16
    %v292 = vrot.slane %v290, 7
    %v293 = vshll.u32 %v155, 16
    %v295 = vor.u32 %v292, %v293
    %v297 = vshrl.u32 %v156, 16
    %v299 = vrot.slane %v297, 7
    %v300 = vshll.u32 %v156, 16
    %v302 = vor.u32 %v299, %v300
    %v304 = vshrl.u32 %v157, 16
    %v306 = vrot.slane %v304, 7
    %v307 = vshll.u32 %v157, 16
    %v309 = vor.u32 %v306, %v307
    %v311 = vshrl.u32 %v158, 16
    %v313 = vrot.slane %v311, 7
    %v314 = vshll.u32 %v158, 16
    %v316 = vor.u32 %v313, %v314
    %v318 = vshrl.u32 %v159, 16
    %v320 = vrot.slane %v318, 7
    %v321 = vshll.u32 %v159, 16
    %v323 = vor.u32 %v320, %v321
    %v325 = vshrl.u32 %v160, 16
    %v327 = vrot.slane %v325, 7
    %v328 = vshll.u32 %v160, 16
    %v330 = vor.u32 %v327, %v328
    %v332 = vshrl.u32 %v161, 16
    %v334 = vrot.slane %v332, 7
    %v335 = vshll.u32 %v161, 16
    %v337 = vor.u32 %v334, %v335
    %v339 = vshrl.u32 %v162, 16
    %v341 = vrot.slane %v339, 7
    %v342 = vshll.u32 %v162, 16
    %v344 = vor.u32 %v341, %v342
    %v346 = vshrl.u32 %v163, 16
    %v348 = vrot.slane %v346, 7
    %v349 = vshll.u32 %v163, 16
    %v351 = vor.u32 %v348, %v349
    %v353 = vshrl.u32 %v164, 16
    %v355 = vrot.slane %v353, 7
    %v356 = vshll.u32 %v164, 16
    %v358 = vor.u32 %v355, %v356
    %v360 = vshrl.u32 %v165, 16
    %v362 = vrot.slane %v360, 7
    %v363 = vshll.u32 %v165, 16
    %v365 = vor.u32 %v362, %v363
    %v367 = vshrl.u32 %v166, 16
    %v369 = vrot.slane %v367, 7
    %v370 = vshll.u32 %v166, 16
    %v372 = vor.u32 %v369, %v370
    %v374 = vshrl.u32 %v167, 16
    %v376 = vrot.slane %v374, 7
    %v377 = vshll.u32 %v167, 16
    %v379 = vor.u32 %v376, %v377
    %v381 = vshrl.u32 %v168, 16
    %v383 = vrot.slane %v381, 7
    %v384 = vshll.u32 %v168, 16
    %v386 = vor.u32 %v383, %v384
    %v388 = vshrl.u32 %v169, 16
    %v390 = vrot.slane %v388, 7
    %v391 = vshll.u32 %v169, 16
    %v393 = vor.u32 %v390, %v391
    %v490 = vrot.slane %v138, 7
    %v491 = vrot.slane %v139, 7
    %v492 = vrot.slane %v140, 7
    %v493 = vrot.slane %v141, 7
    %v494 = vrot.slane %v142, 7
    %v495 = vrot.slane %v143, 7
    %v496 = vrot.slane %v144, 7
    %v497 = vrot.slane %v145, 7
    %v498 = vrot.slane %v146, 7
    %v499 = vrot.slane %v147, 7
    %v500 = vrot.slane %v148, 7
    %v501 = vrot.slane %v149, 7
    %v502 = vrot.slane %v150, 7
    %v503 = vrot.slane %v151, 7
    %v504 = vrot.slane %v152, 7
    %v505 = vrot.slane %v153, 7
    %v506 = vrot.slane %v154, 7
    %v507 = vrot.slane %v155, 7
    %v508 = vrot.slane %v156, 7
    %v509 = vrot.slane %v157, 7
    %v510 = vrot.slane %v158, 7
    %v511 = vrot.slane %v159, 7
    %v512 = vrot.slane %v160, 7
    %v513 = vrot.slane %v161, 7
    %v514 = vrot.slane %v162, 7
    %v515 = vrot.slane %v163, 7
    %v516 = vrot.slane %v164, 7
    %v517 = vrot.slane %v165, 7
    %v518 = vrot.slane %v166, 7
    %v519 = vrot.slane %v167, 7
    %v520 = vrot.slane %v168, 7
    %v521 = vrot.slane %v169, 7
    %vm554 = vcmask 1040384
    %vm555 = vsmask.f32 256
    %vm556 = vmand %vm554, %vm555
    %v557 = vsel %vm556, %v138, %v176
    %v558 = vsel %vm556, %v139, %v183
    %v559 = vsel %vm556, %v140, %v190
    %v560 = vsel %vm556, %v141, %v197
    %v561 = vsel %vm556, %v142, %v204
    %v562 = vsel %vm556, %v143, %v211
    %v563 = vsel %vm556, %v144, %v218
    %v564 = vsel %vm556, %v145, %v225
    %v565 = vsel %vm556, %v146, %v232
    %v566 = vsel %vm556, %v147, %v239
    %v567 = vsel %vm556, %v148, %v246
    %v568 = vsel %vm556, %v149, %v253
    %v569 = vsel %vm556, %v150, %v260
    %v570 = vsel %vm556, %v151, %v267
    %v571 = vsel %vm556, %v152, %v274
    %v572 = vsel %vm556, %v153, %v281
    %v573 = vsel %vm556, %v154, %v288
    %v574 = vsel %vm556, %v155, %v295
    %v575 = vsel %vm556, %v156, %v302
    %v576 = vsel %vm556, %v157, %v309
    %v577 = vsel %vm556, %v158, %v316
    %v578 = vsel %vm556, %v159, %v323
    %v579 = vsel %vm556, %v160, %v330
    %v580 = vsel %vm556, %v161, %v337
    %v581 = vsel %vm556, %v162, %v344
    %v582 = vsel %vm556, %v163, %v351
    %v583 = vsel %vm556, %v164, %v358
    %v584 = vsel %vm556, %v165, %v365
    %v585 = vsel %vm556, %v166, %v372
    %v586 = vsel %vm556, %v167, %v379
    %v587 = vsel %vm556, %v168, %v386
    %v588 = vsel %vm556, %v169, %v393
    %v589 = vsel %vm556, %v173, %v490
    %v590 = vsel %vm556, %v180, %v491
    %v591 = vsel %vm556, %v187, %v492
    %v592 = vsel %vm556, %v194, %v493
    %v593 = vsel %vm556, %v201, %v494
    %v594 = vsel %vm556, %v208, %v495
    %v595 = vsel %vm556, %v215, %v496
    %v596 = vsel %vm556, %v222, %v497
    %v597 = vsel %vm556, %v229, %v498
    %v598 = vsel %vm556, %v236, %v499
    %v599 = vsel %vm556, %v243, %v500
    %v600 = vsel %vm556, %v250, %v501
    %v601 = vsel %vm556, %v257, %v502
    %v602 = vsel %vm556, %v264, %v503
    %v603 = vsel %vm556, %v271, %v504
    %v604 = vsel %vm556, %v278, %v505
    %v605 = vsel %vm556, %v285, %v506
    %v606 = vsel %vm556, %v292, %v507
    %v607 = vsel %vm556, %v299, %v508
    %v608 = vsel %vm556, %v306, %v509
    %v609 = vsel %vm556, %v313, %v510
    %v610 = vsel %vm556, %v320, %v511
    %v611 = vsel %vm556, %v327, %v512
    %v612 = vsel %vm556, %v334, %v513
    %v613 = vsel %vm556, %v341, %v514
    %v614 = vsel %vm556, %v348, %v515
    %v615 = vsel %vm556, %v355, %v516
    %v616 = vsel %vm556, %v362, %v517
    %v617 = vsel %vm556, %v369, %v518
    %v618 = vsel %vm556, %v376, %v519
    %v619 = vsel %vm556, %v383, %v520
    %v620 = vsel %vm556, %v390, %v521
    %682 = vrot.lane.b32.xlu0 0, 3
    %v683 = vpop.permute.xlu0 %682
    %684 = vrot.lane.b32.xlu0 %v557, 3
    %v685 = vpop.permute.xlu0 %684
    %686 = vrot.lane.b32.xlu0 %v589, 3
    %v687 = vpop.permute.xlu0 %686
    %688 = vrot.lane.b32.xlu0 %v558, 3
    %v689 = vpop.permute.xlu0 %688
    %690 = vrot.lane.b32.xlu0 %v590, 3
    %v691 = vpop.permute.xlu0 %690
    %692 = vrot.lane.b32.xlu0 %v559, 3
    %v693 = vpop.permute.xlu0 %692
    %694 = vrot.lane.b32.xlu0 %v591, 3
    %v695 = vpop.permute.xlu0 %694
    %696 = vrot.lane.b32.xlu0 %v560, 3
    %v697 = vpop.permute.xlu0 %696
    %698 = vrot.lane.b32.xlu0 %v592, 3
    %v699 = vpop.permute.xlu0 %698
    %700 = vrot.lane.b32.xlu0 %v561, 3
    %v701 = vpop.permute.xlu0 %700
    %702 = vrot.lane.b32.xlu0 %v593, 3
    %v703 = vpop.permute.xlu0 %702
    %704 = vrot.lane.b32.xlu0 %v562, 3
    %v705 = vpop.permute.xlu0 %704
    %706 = vrot.lane.b32.xlu0 %v594, 3
    %v707 = vpop.permute.xlu0 %706
    %708 = vrot.lane.b32.xlu0 %v563, 3
    %v709 = vpop.permute.xlu0 %708
    %710 = vrot.lane.b32.xlu0 %v595, 3
    %v711 = vpop.permute.xlu0 %710
    %712 = vrot.lane.b32.xlu0 %v564, 3
    %v713 = vpop.permute.xlu0 %712
    %714 = vrot.lane.b32.xlu0 %v596, 3
    %v715 = vpop.permute.xlu0 %714
    %716 = vrot.lane.b32.xlu0 %v565, 3
    %v717 = vpop.permute.xlu0 %716
    %718 = vrot.lane.b32.xlu0 %v597, 3
    %v719 = vpop.permute.xlu0 %718
    %720 = vrot.lane.b32.xlu0 %v566, 3
    %v721 = vpop.permute.xlu0 %720
    %722 = vrot.lane.b32.xlu0 %v598, 3
    %v723 = vpop.permute.xlu0 %722
    %724 = vrot.lane.b32.xlu0 %v567, 3
    %v725 = vpop.permute.xlu0 %724
    %726 = vrot.lane.b32.xlu0 %v599, 3
    %v727 = vpop.permute.xlu0 %726
    %728 = vrot.lane.b32.xlu0 %v568, 3
    %v729 = vpop.permute.xlu0 %728
    %730 = vrot.lane.b32.xlu0 %v600, 3
    %v731 = vpop.permute.xlu0 %730
    %732 = vrot.lane.b32.xlu0 %v569, 3
    %v733 = vpop.permute.xlu0 %732
    %734 = vrot.lane.b32.xlu0 %v601, 3
    %v735 = vpop.permute.xlu0 %734
    %736 = vrot.lane.b32.xlu0 %v570, 3
    %v737 = vpop.permute.xlu0 %736
    %738 = vrot.lane.b32.xlu0 %v602, 3
    %v739 = vpop.permute.xlu0 %738
    %740 = vrot.lane.b32.xlu0 %v571, 3
    %v741 = vpop.permute.xlu0 %740
    %742 = vrot.lane.b32.xlu0 %v603, 3
    %v743 = vpop.permute.xlu0 %742
    %744 = vrot.lane.b32.xlu0 %v573, 3
    %v745 = vpop.permute.xlu0 %744
    %746 = vrot.lane.b32.xlu0 %v605, 3
    %v747 = vpop.permute.xlu0 %746
    %748 = vrot.lane.b32.xlu0 %v574, 3
    %v749 = vpop.permute.xlu0 %748
    %750 = vrot.lane.b32.xlu0 %v606, 3
    %v751 = vpop.permute.xlu0 %750
    %752 = vrot.lane.b32.xlu0 %v575, 3
    %v753 = vpop.permute.xlu0 %752
    %754 = vrot.lane.b32.xlu0 %v607, 3
    %v755 = vpop.permute.xlu0 %754
    %756 = vrot.lane.b32.xlu0 %v576, 3
    %v757 = vpop.permute.xlu0 %756
    %758 = vrot.lane.b32.xlu0 %v608, 3
    %v759 = vpop.permute.xlu0 %758
    %760 = vrot.lane.b32.xlu0 %v577, 3
    %v761 = vpop.permute.xlu0 %760
    %762 = vrot.lane.b32.xlu0 %v609, 3
    %v763 = vpop.permute.xlu0 %762
    %764 = vrot.lane.b32.xlu0 %v578, 3
    %v765 = vpop.permute.xlu0 %764
    %766 = vrot.lane.b32.xlu0 %v610, 3
    %v767 = vpop.permute.xlu0 %766
    %768 = vrot.lane.b32.xlu0 %v579, 3
    %v769 = vpop.permute.xlu0 %768
    %770 = vrot.lane.b32.xlu0 %v611, 3
    %v771 = vpop.permute.xlu0 %770
    %772 = vrot.lane.b32.xlu0 %v580, 3
    %v773 = vpop.permute.xlu0 %772
    %774 = vrot.lane.b32.xlu0 %v612, 3
    %v775 = vpop.permute.xlu0 %774
    %776 = vrot.lane.b32.xlu0 %v581, 3
    %v777 = vpop.permute.xlu0 %776
    %778 = vrot.lane.b32.xlu0 %v613, 3
    %v779 = vpop.permute.xlu0 %778
    %780 = vrot.lane.b32.xlu0 %v582, 3
    %v781 = vpop.permute.xlu0 %780
    %782 = vrot.lane.b32.xlu0 %v614, 3
    %v783 = vpop.permute.xlu0 %782
    %784 = vrot.lane.b32.xlu0 %v583, 3
    %v785 = vpop.permute.xlu0 %784
    %786 = vrot.lane.b32.xlu0 %v615, 3
    %v787 = vpop.permute.xlu0 %786
    %788 = vrot.lane.b32.xlu0 %v584, 3
    %v789 = vpop.permute.xlu0 %788
    %790 = vrot.lane.b32.xlu0 %v616, 3
    %v791 = vpop.permute.xlu0 %790
    %792 = vrot.lane.b32.xlu0 %v585, 3
    %v793 = vpop.permute.xlu0 %792
    %794 = vrot.lane.b32.xlu0 %v617, 3
    %v795 = vpop.permute.xlu0 %794
    %796 = vrot.lane.b32.xlu0 %v586, 3
    %v797 = vpop.permute.xlu0 %796
    %798 = vrot.lane.b32.xlu0 %v618, 3
    %v799 = vpop.permute.xlu0 %798
    %800 = vrot.lane.b32.xlu0 %v587, 3
    %v801 = vpop.permute.xlu0 %800
    %802 = vrot.lane.b32.xlu0 %v619, 3
    %v803 = vpop.permute.xlu0 %802
    %808 = vrot.lane.b32.xlu0 %v557, 6
    %v809 = vpop.permute.xlu0 %808
    %810 = vrot.lane.b32.xlu0 %v589, 6
    %v811 = vpop.permute.xlu0 %810
    %812 = vrot.lane.b32.xlu0 %v558, 6
    %v813 = vpop.permute.xlu0 %812
    %814 = vrot.lane.b32.xlu0 %v590, 6
    %v815 = vpop.permute.xlu0 %814
    %816 = vrot.lane.b32.xlu0 %v559, 6
    %v817 = vpop.permute.xlu0 %816
    %818 = vrot.lane.b32.xlu0 %v591, 6
    %v819 = vpop.permute.xlu0 %818
    %820 = vrot.lane.b32.xlu0 %v560, 6
    %v821 = vpop.permute.xlu0 %820
    %822 = vrot.lane.b32.xlu0 %v592, 6
    %v823 = vpop.permute.xlu0 %822
    %824 = vrot.lane.b32.xlu0 %v561, 6
    %v825 = vpop.permute.xlu0 %824
    %826 = vrot.lane.b32.xlu0 %v593, 6
    %v827 = vpop.permute.xlu0 %826
    %828 = vrot.lane.b32.xlu0 %v562, 6
    %v829 = vpop.permute.xlu0 %828
    %830 = vrot.lane.b32.xlu0 %v594, 6
    %v831 = vpop.permute.xlu0 %830
    %832 = vrot.lane.b32.xlu0 %v563, 6
    %v833 = vpop.permute.xlu0 %832
    %834 = vrot.lane.b32.xlu0 %v595, 6
    %v835 = vpop.permute.xlu0 %834
    %836 = vrot.lane.b32.xlu0 %v564, 6
    %v837 = vpop.permute.xlu0 %836
    %838 = vrot.lane.b32.xlu0 %v596, 6
    %v839 = vpop.permute.xlu0 %838
    %840 = vrot.lane.b32.xlu0 %v565, 6
    %v841 = vpop.permute.xlu0 %840
    %842 = vrot.lane.b32.xlu0 %v597, 6
    %v843 = vpop.permute.xlu0 %842
    %844 = vrot.lane.b32.xlu0 %v566, 6
    %v845 = vpop.permute.xlu0 %844
    %846 = vrot.lane.b32.xlu0 %v598, 6
    %v847 = vpop.permute.xlu0 %846
    %848 = vrot.lane.b32.xlu0 %v567, 6
    %v849 = vpop.permute.xlu0 %848
    %850 = vrot.lane.b32.xlu0 %v599, 6
    %v851 = vpop.permute.xlu0 %850
    %852 = vrot.lane.b32.xlu0 %v568, 6
    %v853 = vpop.permute.xlu0 %852
    %854 = vrot.lane.b32.xlu0 %v600, 6
    %v855 = vpop.permute.xlu0 %854
    %856 = vrot.lane.b32.xlu0 %v569, 6
    %v857 = vpop.permute.xlu0 %856
    %858 = vrot.lane.b32.xlu0 %v601, 6
    %v859 = vpop.permute.xlu0 %858
    %860 = vrot.lane.b32.xlu0 %v570, 6
    %v861 = vpop.permute.xlu0 %860
    %862 = vrot.lane.b32.xlu0 %v602, 6
    %v863 = vpop.permute.xlu0 %862
    %864 = vrot.lane.b32.xlu0 %v571, 6
    %v865 = vpop.permute.xlu0 %864
    %866 = vrot.lane.b32.xlu0 %v603, 6
    %v867 = vpop.permute.xlu0 %866
    %868 = vrot.lane.b32.xlu0 %v572, 6
    %v869 = vpop.permute.xlu0 %868
    %870 = vrot.lane.b32.xlu0 %v604, 6
    %v871 = vpop.permute.xlu0 %870
    %872 = vrot.lane.b32.xlu0 %v573, 6
    %v873 = vpop.permute.xlu0 %872
    %874 = vrot.lane.b32.xlu0 %v605, 6
    %v875 = vpop.permute.xlu0 %874
    %876 = vrot.lane.b32.xlu0 %v574, 6
    %v877 = vpop.permute.xlu0 %876
    %878 = vrot.lane.b32.xlu0 %v606, 6
    %v879 = vpop.permute.xlu0 %878
    %880 = vrot.lane.b32.xlu0 %v575, 6
    %v881 = vpop.permute.xlu0 %880
    %882 = vrot.lane.b32.xlu0 %v607, 6
    %v883 = vpop.permute.xlu0 %882
    %884 = vrot.lane.b32.xlu0 %v576, 6
    %v885 = vpop.permute.xlu0 %884
    %886 = vrot.lane.b32.xlu0 %v608, 6
    %v887 = vpop.permute.xlu0 %886
    %888 = vrot.lane.b32.xlu0 %v577, 6
    %v889 = vpop.permute.xlu0 %888
    %890 = vrot.lane.b32.xlu0 %v609, 6
    %v891 = vpop.permute.xlu0 %890
    %892 = vrot.lane.b32.xlu0 %v578, 6
    %v893 = vpop.permute.xlu0 %892
    %894 = vrot.lane.b32.xlu0 %v610, 6
    %v895 = vpop.permute.xlu0 %894
    %896 = vrot.lane.b32.xlu0 %v579, 6
    %v897 = vpop.permute.xlu0 %896
    %898 = vrot.lane.b32.xlu0 %v611, 6
    %v899 = vpop.permute.xlu0 %898
    %900 = vrot.lane.b32.xlu0 %v580, 6
    %v901 = vpop.permute.xlu0 %900
    %902 = vrot.lane.b32.xlu0 %v612, 6
    %v903 = vpop.permute.xlu0 %902
    %904 = vrot.lane.b32.xlu0 %v581, 6
    %v905 = vpop.permute.xlu0 %904
    %906 = vrot.lane.b32.xlu0 %v613, 6
    %v907 = vpop.permute.xlu0 %906
    %908 = vrot.lane.b32.xlu0 %v582, 6
    %v909 = vpop.permute.xlu0 %908
    %910 = vrot.lane.b32.xlu0 %v614, 6
    %v911 = vpop.permute.xlu0 %910
    %912 = vrot.lane.b32.xlu0 %v583, 6
    %v913 = vpop.permute.xlu0 %912
    %914 = vrot.lane.b32.xlu0 %v615, 6
    %v915 = vpop.permute.xlu0 %914
    %916 = vrot.lane.b32.xlu0 %v584, 6
    %v917 = vpop.permute.xlu0 %916
    %918 = vrot.lane.b32.xlu0 %v616, 6
    %v919 = vpop.permute.xlu0 %918
    %920 = vrot.lane.b32.xlu0 %v585, 6
    %v921 = vpop.permute.xlu0 %920
    %922 = vrot.lane.b32.xlu0 %v617, 6
    %v923 = vpop.permute.xlu0 %922
    %924 = vrot.lane.b32.xlu0 %v586, 6
    %v925 = vpop.permute.xlu0 %924
    %926 = vrot.lane.b32.xlu0 %v618, 6
    %v927 = vpop.permute.xlu0 %926
    %928 = vrot.lane.b32.xlu0 %v587, 6
    %v929 = vpop.permute.xlu0 %928
    %930 = vrot.lane.b32.xlu0 %v619, 6
    %v931 = vpop.permute.xlu0 %930
    %932 = vrot.lane.b32.xlu0 %v588, 6
    %v933 = vpop.permute.xlu0 %932
    %934 = vrot.lane.b32.xlu0 %v620, 6
    %v935 = vpop.permute.xlu0 %934
    %vm936 = vcmask 23552
    %v939 = vsel %vm936, 0, %v683
    %v941 = vsel %vm936, 0, %v685
    %v943 = vsel %vm936, 0, %v687
    %v946 = vsel %vm936, %v557, %v689
    %v949 = vsel %vm936, %v589, %v691
    %v952 = vsel %vm936, %v558, %v693
    %v955 = vsel %vm936, %v590, %v695
    %v958 = vsel %vm936, %v559, %v697
    %v961 = vsel %vm936, %v591, %v699
    %v964 = vsel %vm936, %v560, %v701
    %v967 = vsel %vm936, %v592, %v703
    %v970 = vsel %vm936, %v561, %v705
    %v973 = vsel %vm936, %v593, %v707
    %v976 = vsel %vm936, %v562, %v709
    %v979 = vsel %vm936, %v594, %v711
    %v982 = vsel %vm936, %v563, %v713
    %v985 = vsel %vm936, %v595, %v715
    %v988 = vsel %vm936, %v564, %v717
    %v991 = vsel %vm936, %v596, %v719
    %v994 = vsel %vm936, %v565, %v721
    %v997 = vsel %vm936, %v597, %v723
    %v1000 = vsel %vm936, %v566, %v725
    %v1003 = vsel %vm936, %v598, %v727
    %v1006 = vsel %vm936, %v567, %v729
    %v1009 = vsel %vm936, %v599, %v731
    %v1012 = vsel %vm936, %v568, %v733
    %v1015 = vsel %vm936, %v600, %v735
    %v1018 = vsel %vm936, %v569, %v737
    %v1021 = vsel %vm936, %v601, %v739
    %v1024 = vsel %vm936, %v570, %v741
    %v1027 = vsel %vm936, %v602, %v743
    %v1029 = vsel %vm936, 0, %v745
    %v1031 = vsel %vm936, 0, %v747
    %v1034 = vsel %vm936, %v573, %v749
    %v1037 = vsel %vm936, %v605, %v751
    %v1040 = vsel %vm936, %v574, %v753
    %v1043 = vsel %vm936, %v606, %v755
    %v1046 = vsel %vm936, %v575, %v757
    %v1049 = vsel %vm936, %v607, %v759
    %v1052 = vsel %vm936, %v576, %v761
    %v1055 = vsel %vm936, %v608, %v763
    %v1058 = vsel %vm936, %v577, %v765
    %v1061 = vsel %vm936, %v609, %v767
    %v1064 = vsel %vm936, %v578, %v769
    %v1067 = vsel %vm936, %v610, %v771
    %v1070 = vsel %vm936, %v579, %v773
    %v1073 = vsel %vm936, %v611, %v775
    %v1076 = vsel %vm936, %v580, %v777
    %v1079 = vsel %vm936, %v612, %v779
    %v1082 = vsel %vm936, %v581, %v781
    %v1085 = vsel %vm936, %v613, %v783
    %v1088 = vsel %vm936, %v582, %v785
    %v1091 = vsel %vm936, %v614, %v787
    %v1094 = vsel %vm936, %v583, %v789
    %v1097 = vsel %vm936, %v615, %v791
    %v1100 = vsel %vm936, %v584, %v793
    %v1103 = vsel %vm936, %v616, %v795
    %v1106 = vsel %vm936, %v585, %v797
    %v1109 = vsel %vm936, %v617, %v799
    %v1112 = vsel %vm936, %v586, %v801
    %v1115 = vsel %vm936, %v618, %v803
    %vm1116 = vcmask 48128
    %v1118 = vsel %vm1116, %v939, %v809
    %v1120 = vsel %vm1116, %v939, %v811
    %v1122 = vsel %vm1116, %v941, %v813
    %v1124 = vsel %vm1116, %v943, %v815
    %v1126 = vsel %vm1116, %v946, %v817
    %v1128 = vsel %vm1116, %v949, %v819
    %v1130 = vsel %vm1116, %v952, %v821
    %v1132 = vsel %vm1116, %v955, %v823
    %v1134 = vsel %vm1116, %v958, %v825
    %v1136 = vsel %vm1116, %v961, %v827
    %v1138 = vsel %vm1116, %v964, %v829
    %v1140 = vsel %vm1116, %v967, %v831
    %v1142 = vsel %vm1116, %v970, %v833
    %v1144 = vsel %vm1116, %v973, %v835
    %v1146 = vsel %vm1116, %v976, %v837
    %v1148 = vsel %vm1116, %v979, %v839
    %v1150 = vsel %vm1116, %v982, %v841
    %v1152 = vsel %vm1116, %v985, %v843
    %v1154 = vsel %vm1116, %v988, %v845
    %v1156 = vsel %vm1116, %v991, %v847
    %v1158 = vsel %vm1116, %v994, %v849
    %v1160 = vsel %vm1116, %v997, %v851
    %v1162 = vsel %vm1116, %v1000, %v853
    %v1164 = vsel %vm1116, %v1003, %v855
    %v1166 = vsel %vm1116, %v1006, %v857
    %v1168 = vsel %vm1116, %v1009, %v859
    %v1170 = vsel %vm1116, %v1012, %v861
    %v1172 = vsel %vm1116, %v1015, %v863
    %v1174 = vsel %vm1116, %v1018, %v865
    %v1176 = vsel %vm1116, %v1021, %v867
    %v1178 = vsel %vm1116, %v1024, %v869
    %v1180 = vsel %vm1116, %v1027, %v871
    %v1182 = vsel %vm1116, %v939, %v873
    %v1184 = vsel %vm1116, %v939, %v875
    %v1186 = vsel %vm1116, %v1029, %v877
    %v1188 = vsel %vm1116, %v1031, %v879
    %v1190 = vsel %vm1116, %v1034, %v881
    %v1192 = vsel %vm1116, %v1037, %v883
    %v1194 = vsel %vm1116, %v1040, %v885
    %v1196 = vsel %vm1116, %v1043, %v887
    %v1198 = vsel %vm1116, %v1046, %v889
    %v1200 = vsel %vm1116, %v1049, %v891
    %v1202 = vsel %vm1116, %v1052, %v893
    %v1204 = vsel %vm1116, %v1055, %v895
    %v1206 = vsel %vm1116, %v1058, %v897
    %v1208 = vsel %vm1116, %v1061, %v899
    %v1210 = vsel %vm1116, %v1064, %v901
    %v1212 = vsel %vm1116, %v1067, %v903
    %v1214 = vsel %vm1116, %v1070, %v905
    %v1216 = vsel %vm1116, %v1073, %v907
    %v1218 = vsel %vm1116, %v1076, %v909
    %v1220 = vsel %vm1116, %v1079, %v911
    %v1222 = vsel %vm1116, %v1082, %v913
    %v1224 = vsel %vm1116, %v1085, %v915
    %v1226 = vsel %vm1116, %v1088, %v917
    %v1228 = vsel %vm1116, %v1091, %v919
    %v1230 = vsel %vm1116, %v1094, %v921
    %v1232 = vsel %vm1116, %v1097, %v923
    %v1234 = vsel %vm1116, %v1100, %v925
    %v1236 = vsel %vm1116, %v1103, %v927
    %v1238 = vsel %vm1116, %v1106, %v929
    %v1240 = vsel %vm1116, %v1109, %v931
    %v1242 = vsel %vm1116, %v1112, %v933
    %v1244 = vsel %vm1116, %v1115, %v935
    %vm1245 = vsmask.f32 7424
    %v1246 = vshrl.u32 %v1118, 16
    %v1248 = vshll.u32 %v1118, 16
    %v1250 = vrot.slane %v1248, 1
    %v1251 = vor.u32 %v1246, %v1250
    %v1252 = vshll.u32 %v1120, 16
    %v1254 = vrot.slane %v1252, 1
    %v1255 = vsel %vm1245, %v1251, %v1254
    %v1256 = vshrl.u32 %v1122, 16
    %v1258 = vshll.u32 %v1122, 16
    %v1260 = vrot.slane %v1258, 1
    %v1261 = vor.u32 %v1256, %v1260
    %v1262 = vshll.u32 %v1124, 16
    %v1264 = vrot.slane %v1262, 1
    %v1265 = vsel %vm1245, %v1261, %v1264
    %v1266 = vshrl.u32 %v1126, 16
    %v1268 = vshll.u32 %v1126, 16
    %v1270 = vrot.slane %v1268, 1
    %v1271 = vor.u32 %v1266, %v1270
    %v1272 = vshll.u32 %v1128, 16
    %v1274 = vrot.slane %v1272, 1
    %v1275 = vsel %vm1245, %v1271, %v1274
    %v1276 = vshrl.u32 %v1130, 16
    %v1278 = vshll.u32 %v1130, 16
    %v1280 = vrot.slane %v1278, 1
    %v1281 = vor.u32 %v1276, %v1280
    %v1282 = vshll.u32 %v1132, 16
    %v1284 = vrot.slane %v1282, 1
    %v1285 = vsel %vm1245, %v1281, %v1284
    %v1286 = vshrl.u32 %v1134, 16
    %v1288 = vshll.u32 %v1134, 16
    %v1290 = vrot.slane %v1288, 1
    %v1291 = vor.u32 %v1286, %v1290
    %v1292 = vshll.u32 %v1136, 16
    %v1294 = vrot.slane %v1292, 1
    %v1295 = vsel %vm1245, %v1291, %v1294
    %v1296 = vshrl.u32 %v1138, 16
    %v1298 = vshll.u32 %v1138, 16
    %v1300 = vrot.slane %v1298, 1
    %v1301 = vor.u32 %v1296, %v1300
    %v1302 = vshll.u32 %v1140, 16
    %v1304 = vrot.slane %v1302, 1
    %v1305 = vsel %vm1245, %v1301, %v1304
    %v1306 = vshrl.u32 %v1142, 16
    %v1308 = vshll.u32 %v1142, 16
    %v1310 = vrot.slane %v1308, 1
    %v1311 = vor.u32 %v1306, %v1310
    %v1312 = vshll.u32 %v1144, 16
    %v1314 = vrot.slane %v1312, 1
    %v1315 = vsel %vm1245, %v1311, %v1314
    %v1316 = vshrl.u32 %v1146, 16
    %v1318 = vshll.u32 %v1146, 16
    %v1320 = vrot.slane %v1318, 1
    %v1321 = vor.u32 %v1316, %v1320
    %v1322 = vshll.u32 %v1148, 16
    %v1324 = vrot.slane %v1322, 1
    %v1325 = vsel %vm1245, %v1321, %v1324
    %v1326 = vshrl.u32 %v1150, 16
    %v1328 = vshll.u32 %v1150, 16
    %v1330 = vrot.slane %v1328, 1
    %v1331 = vor.u32 %v1326, %v1330
    %v1332 = vshll.u32 %v1152, 16
    %v1334 = vrot.slane %v1332, 1
    %v1335 = vsel %vm1245, %v1331, %v1334
    %v1336 = vshrl.u32 %v1154, 16
    %v1338 = vshll.u32 %v1154, 16
    %v1340 = vrot.slane %v1338, 1
    %v1341 = vor.u32 %v1336, %v1340
    %v1342 = vshll.u32 %v1156, 16
    %v1344 = vrot.slane %v1342, 1
    %v1345 = vsel %vm1245, %v1341, %v1344
    %v1346 = vshrl.u32 %v1158, 16
    %v1348 = vshll.u32 %v1158, 16
    %v1350 = vrot.slane %v1348, 1
    %v1351 = vor.u32 %v1346, %v1350
    %v1352 = vshll.u32 %v1160, 16
    %v1354 = vrot.slane %v1352, 1
    %v1355 = vsel %vm1245, %v1351, %v1354
    %v1356 = vshrl.u32 %v1162, 16
    %v1358 = vshll.u32 %v1162, 16
    %v1360 = vrot.slane %v1358, 1
    %v1361 = vor.u32 %v1356, %v1360
    %v1362 = vshll.u32 %v1164, 16
    %v1364 = vrot.slane %v1362, 1
    %v1365 = vsel %vm1245, %v1361, %v1364
    %v1366 = vshrl.u32 %v1166, 16
    %v1368 = vshll.u32 %v1166, 16
    %v1370 = vrot.slane %v1368, 1
    %v1371 = vor.u32 %v1366, %v1370
    %v1372 = vshll.u32 %v1168, 16
    %v1374 = vrot.slane %v1372, 1
    %v1375 = vsel %vm1245, %v1371, %v1374
    %v1376 = vshrl.u32 %v1170, 16
    %v1378 = vshll.u32 %v1170, 16
    %v1380 = vrot.slane %v1378, 1
    %v1381 = vor.u32 %v1376, %v1380
    %v1382 = vshll.u32 %v1172, 16
    %v1384 = vrot.slane %v1382, 1
    %v1385 = vsel %vm1245, %v1381, %v1384
    %v1386 = vshrl.u32 %v1174, 16
    %v1388 = vshll.u32 %v1174, 16
    %v1390 = vrot.slane %v1388, 1
    %v1391 = vor.u32 %v1386, %v1390
    %v1392 = vshll.u32 %v1176, 16
    %v1394 = vrot.slane %v1392, 1
    %v1395 = vsel %vm1245, %v1391, %v1394
    %v1396 = vshrl.u32 %v1178, 16
    %v1398 = vshll.u32 %v1178, 16
    %v1400 = vrot.slane %v1398, 1
    %v1401 = vor.u32 %v1396, %v1400
    %v1402 = vshll.u32 %v1180, 16
    %v1404 = vrot.slane %v1402, 1
    %v1405 = vsel %vm1245, %v1401, %v1404
    %v1406 = vshrl.u32 %v1182, 16
    %v1408 = vshll.u32 %v1182, 16
    %v1410 = vrot.slane %v1408, 1
    %v1411 = vor.u32 %v1406, %v1410
    %v1412 = vshll.u32 %v1184, 16
    %v1414 = vrot.slane %v1412, 1
    %v1415 = vsel %vm1245, %v1411, %v1414
    %v1416 = vshrl.u32 %v1186, 16
    %v1418 = vshll.u32 %v1186, 16
    %v1420 = vrot.slane %v1418, 1
    %v1421 = vor.u32 %v1416, %v1420
    %v1422 = vshll.u32 %v1188, 16
    %v1424 = vrot.slane %v1422, 1
    %v1425 = vsel %vm1245, %v1421, %v1424
    %v1426 = vshrl.u32 %v1190, 16
    %v1428 = vshll.u32 %v1190, 16
    %v1430 = vrot.slane %v1428, 1
    %v1431 = vor.u32 %v1426, %v1430
    %v1432 = vshll.u32 %v1192, 16
    %v1434 = vrot.slane %v1432, 1
    %v1435 = vsel %vm1245, %v1431, %v1434
    %v1436 = vshrl.u32 %v1194, 16
    %v1438 = vshll.u32 %v1194, 16
    %v1440 = vrot.slane %v1438, 1
    %v1441 = vor.u32 %v1436, %v1440
    %v1442 = vshll.u32 %v1196, 16
    %v1444 = vrot.slane %v1442, 1
    %v1445 = vsel %vm1245, %v1441, %v1444
    %v1446 = vshrl.u32 %v1198, 16
    %v1448 = vshll.u32 %v1198, 16
    %v1450 = vrot.slane %v1448, 1
    %v1451 = vor.u32 %v1446, %v1450
    %v1452 = vshll.u32 %v1200, 16
    %v1454 = vrot.slane %v1452, 1
    %v1455 = vsel %vm1245, %v1451, %v1454
    %v1456 = vshrl.u32 %v1202, 16
    %v1458 = vshll.u32 %v1202, 16
    %v1460 = vrot.slane %v1458, 1
    %v1461 = vor.u32 %v1456, %v1460
    %v1462 = vshll.u32 %v1204, 16
    %v1464 = vrot.slane %v1462, 1
    %v1465 = vsel %vm1245, %v1461, %v1464
    %v1466 = vshrl.u32 %v1206, 16
    %v1468 = vshll.u32 %v1206, 16
    %v1470 = vrot.slane %v1468, 1
    %v1471 = vor.u32 %v1466, %v1470
    %v1472 = vshll.u32 %v1208, 16
    %v1474 = vrot.slane %v1472, 1
    %v1475 = vsel %vm1245, %v1471, %v1474
    %v1476 = vshrl.u32 %v1210, 16
    %v1478 = vshll.u32 %v1210, 16
    %v1480 = vrot.slane %v1478, 1
    %v1481 = vor.u32 %v1476, %v1480
    %v1482 = vshll.u32 %v1212, 16
    %v1484 = vrot.slane %v1482, 1
    %v1485 = vsel %vm1245, %v1481, %v1484
    %v1486 = vshrl.u32 %v1214, 16
    %v1488 = vshll.u32 %v1214, 16
    %v1490 = vrot.slane %v1488, 1
    %v1491 = vor.u32 %v1486, %v1490
    %v1492 = vshll.u32 %v1216, 16
    %v1494 = vrot.slane %v1492, 1
    %v1495 = vsel %vm1245, %v1491, %v1494
    %v1496 = vshrl.u32 %v1218, 16
    %v1498 = vshll.u32 %v1218, 16
    %v1500 = vrot.slane %v1498, 1
    %v1501 = vor.u32 %v1496, %v1500
    %v1502 = vshll.u32 %v1220, 16
    %v1504 = vrot.slane %v1502, 1
    %v1505 = vsel %vm1245, %v1501, %v1504
    %v1506 = vshrl.u32 %v1222, 16
    %v1508 = vshll.u32 %v1222, 16
    %v1510 = vrot.slane %v1508, 1
    %v1511 = vor.u32 %v1506, %v1510
    %v1512 = vshll.u32 %v1224, 16
    %v1514 = vrot.slane %v1512, 1
    %v1515 = vsel %vm1245, %v1511, %v1514
    %v1516 = vshrl.u32 %v1226, 16
    %v1518 = vshll.u32 %v1226, 16
    %v1520 = vrot.slane %v1518, 1
    %v1521 = vor.u32 %v1516, %v1520
    %v1522 = vshll.u32 %v1228, 16
    %v1524 = vrot.slane %v1522, 1
    %v1525 = vsel %vm1245, %v1521, %v1524
    %v1526 = vshrl.u32 %v1230, 16
    %v1528 = vshll.u32 %v1230, 16
    %v1530 = vrot.slane %v1528, 1
    %v1531 = vor.u32 %v1526, %v1530
    %v1532 = vshll.u32 %v1232, 16
    %v1534 = vrot.slane %v1532, 1
    %v1535 = vsel %vm1245, %v1531, %v1534
    %v1536 = vshrl.u32 %v1234, 16
    %v1538 = vshll.u32 %v1234, 16
    %v1540 = vrot.slane %v1538, 1
    %v1541 = vor.u32 %v1536, %v1540
    %v1542 = vshll.u32 %v1236, 16
    %v1544 = vrot.slane %v1542, 1
    %v1545 = vsel %vm1245, %v1541, %v1544
    %v1546 = vshrl.u32 %v1238, 16
    %v1548 = vshll.u32 %v1238, 16
    %v1550 = vrot.slane %v1548, 1
    %v1551 = vor.u32 %v1546, %v1550
    %v1552 = vshll.u32 %v1240, 16
    %v1554 = vrot.slane %v1552, 1
    %v1555 = vsel %vm1245, %v1551, %v1554
    %v1556 = vshrl.u32 %v1242, 16
    %v1558 = vshll.u32 %v1242, 16
    %v1560 = vrot.slane %v1558, 1
    %v1561 = vor.u32 %v1556, %v1560
    %v1562 = vshll.u32 %v1244, 16
    %v1564 = vrot.slane %v1562, 1
    %v1565 = vsel %vm1245, %v1561, %v1564
    %1566 = vrot.lane.b32.xlu0 %v1255, 9
    %v1567 = vpop.permute.xlu0 %1566
    %1568 = vrot.lane.b32.xlu0 %v1265, 9
    %v1569 = vpop.permute.xlu0 %1568
    %1570 = vrot.lane.b32.xlu0 %v1275, 9
    %v1571 = vpop.permute.xlu0 %1570
    %1572 = vrot.lane.b32.xlu0 %v1285, 9
    %v1573 = vpop.permute.xlu0 %1572
    %1574 = vrot.lane.b32.xlu0 %v1295, 9
    %v1575 = vpop.permute.xlu0 %1574
    %1576 = vrot.lane.b32.xlu0 %v1305, 9
    %v1577 = vpop.permute.xlu0 %1576
    %1578 = vrot.lane.b32.xlu0 %v1315, 9
    %v1579 = vpop.permute.xlu0 %1578
    %1580 = vrot.lane.b32.xlu0 %v1325, 9
    %v1581 = vpop.permute.xlu0 %1580
    %1582 = vrot.lane.b32.xlu0 %v1335, 9
    %v1583 = vpop.permute.xlu0 %1582
    %1584 = vrot.lane.b32.xlu0 %v1345, 9
    %v1585 = vpop.permute.xlu0 %1584
    %1586 = vrot.lane.b32.xlu0 %v1355, 9
    %v1587 = vpop.permute.xlu0 %1586
    %1588 = vrot.lane.b32.xlu0 %v1365, 9
    %v1589 = vpop.permute.xlu0 %1588
    %1590 = vrot.lane.b32.xlu0 %v1375, 9
    %v1591 = vpop.permute.xlu0 %1590
    %1592 = vrot.lane.b32.xlu0 %v1385, 9
    %v1593 = vpop.permute.xlu0 %1592
    %1594 = vrot.lane.b32.xlu0 %v1395, 9
    %v1595 = vpop.permute.xlu0 %1594
    %1596 = vrot.lane.b32.xlu0 %v1405, 9
    %v1597 = vpop.permute.xlu0 %1596
    %1598 = vrot.lane.b32.xlu0 %v1415, 9
    %v1599 = vpop.permute.xlu0 %1598
    %1600 = vrot.lane.b32.xlu0 %v1425, 9
    %v1601 = vpop.permute.xlu0 %1600
    %1602 = vrot.lane.b32.xlu0 %v1435, 9
    %v1603 = vpop.permute.xlu0 %1602
    %1604 = vrot.lane.b32.xlu0 %v1445, 9
    %v1605 = vpop.permute.xlu0 %1604
    %1606 = vrot.lane.b32.xlu0 %v1455, 9
    %v1607 = vpop.permute.xlu0 %1606
    %1608 = vrot.lane.b32.xlu0 %v1465, 9
    %v1609 = vpop.permute.xlu0 %1608
    %1610 = vrot.lane.b32.xlu0 %v1475, 9
    %v1611 = vpop.permute.xlu0 %1610
    %1612 = vrot.lane.b32.xlu0 %v1485, 9
    %v1613 = vpop.permute.xlu0 %1612
    %1614 = vrot.lane.b32.xlu0 %v1495, 9
    %v1615 = vpop.permute.xlu0 %1614
    %1616 = vrot.lane.b32.xlu0 %v1505, 9
    %v1617 = vpop.permute.xlu0 %1616
    %1618 = vrot.lane.b32.xlu0 %v1515, 9
    %v1619 = vpop.permute.xlu0 %1618
    %1620 = vrot.lane.b32.xlu0 %v1525, 9
    %v1621 = vpop.permute.xlu0 %1620
    %1622 = vrot.lane.b32.xlu0 %v1535, 9
    %v1623 = vpop.permute.xlu0 %1622
    %1624 = vrot.lane.b32.xlu0 %v1545, 9
    %v1625 = vpop.permute.xlu0 %1624
    %1626 = vrot.lane.b32.xlu0 %v1555, 9
    %v1627 = vpop.permute.xlu0 %1626
    %1628 = vrot.lane.b32.xlu0 %v1565, 9
    %v1629 = vpop.permute.xlu0 %1628
    %vm1694 = vcmask 1046528
    %v1695 = vrot.slane %v1118, 1
    %v1696 = vrot.slane %v1120, 1
    %v1697 = vsel %vm1694, %v1695, %v1696
    %v1698 = vrot.slane %v1122, 1
    %v1699 = vrot.slane %v1124, 1
    %v1700 = vsel %vm1694, %v1698, %v1699
    %v1701 = vrot.slane %v1126, 1
    %v1702 = vrot.slane %v1128, 1
    %v1703 = vsel %vm1694, %v1701, %v1702
    %v1704 = vrot.slane %v1130, 1
    %v1705 = vrot.slane %v1132, 1
    %v1706 = vsel %vm1694, %v1704, %v1705
    %v1707 = vrot.slane %v1134, 1
    %v1708 = vrot.slane %v1136, 1
    %v1709 = vsel %vm1694, %v1707, %v1708
    %v1710 = vrot.slane %v1138, 1
    %v1711 = vrot.slane %v1140, 1
    %v1712 = vsel %vm1694, %v1710, %v1711
    %v1713 = vrot.slane %v1142, 1
    %v1714 = vrot.slane %v1144, 1
    %v1715 = vsel %vm1694, %v1713, %v1714
    %v1716 = vrot.slane %v1146, 1
    %v1717 = vrot.slane %v1148, 1
    %v1718 = vsel %vm1694, %v1716, %v1717
    %v1719 = vrot.slane %v1150, 1
    %v1720 = vrot.slane %v1152, 1
    %v1721 = vsel %vm1694, %v1719, %v1720
    %v1722 = vrot.slane %v1154, 1
    %v1723 = vrot.slane %v1156, 1
    %v1724 = vsel %vm1694, %v1722, %v1723
    %v1725 = vrot.slane %v1158, 1
    %v1726 = vrot.slane %v1160, 1
    %v1727 = vsel %vm1694, %v1725, %v1726
    %v1728 = vrot.slane %v1162, 1
    %v1729 = vrot.slane %v1164, 1
    %v1730 = vsel %vm1694, %v1728, %v1729
    %v1731 = vrot.slane %v1166, 1
    %v1732 = vrot.slane %v1168, 1
    %v1733 = vsel %vm1694, %v1731, %v1732
    %v1734 = vrot.slane %v1170, 1
    %v1735 = vrot.slane %v1172, 1
    %v1736 = vsel %vm1694, %v1734, %v1735
    %v1737 = vrot.slane %v1174, 1
    %v1738 = vrot.slane %v1176, 1
    %v1739 = vsel %vm1694, %v1737, %v1738
    %v1740 = vrot.slane %v1178, 1
    %v1741 = vrot.slane %v1180, 1
    %v1742 = vsel %vm1694, %v1740, %v1741
    %v1743 = vrot.slane %v1182, 1
    %v1744 = vrot.slane %v1184, 1
    %v1745 = vsel %vm1694, %v1743, %v1744
    %v1746 = vrot.slane %v1186, 1
    %v1747 = vrot.slane %v1188, 1
    %v1748 = vsel %vm1694, %v1746, %v1747
    %v1749 = vrot.slane %v1190, 1
    %v1750 = vrot.slane %v1192, 1
    %v1751 = vsel %vm1694, %v1749, %v1750
    %v1752 = vrot.slane %v1194, 1
    %v1753 = vrot.slane %v1196, 1
    %v1754 = vsel %vm1694, %v1752, %v1753
    %v1755 = vrot.slane %v1198, 1
    %v1756 = vrot.slane %v1200, 1
    %v1757 = vsel %vm1694, %v1755, %v1756
    %v1758 = vrot.slane %v1202, 1
    %v1759 = vrot.slane %v1204, 1
    %v1760 = vsel %vm1694, %v1758, %v1759
    %v1761 = vrot.slane %v1206, 1
    %v1762 = vrot.slane %v1208, 1
    %v1763 = vsel %vm1694, %v1761, %v1762
    %v1764 = vrot.slane %v1210, 1
    %v1765 = vrot.slane %v1212, 1
    %v1766 = vsel %vm1694, %v1764, %v1765
    %v1767 = vrot.slane %v1214, 1
    %v1768 = vrot.slane %v1216, 1
    %v1769 = vsel %vm1694, %v1767, %v1768
    %v1770 = vrot.slane %v1218, 1
    %v1771 = vrot.slane %v1220, 1
    %v1772 = vsel %vm1694, %v1770, %v1771
    %v1773 = vrot.slane %v1222, 1
    %v1774 = vrot.slane %v1224, 1
    %v1775 = vsel %vm1694, %v1773, %v1774
    %v1776 = vrot.slane %v1226, 1
    %v1777 = vrot.slane %v1228, 1
    %v1778 = vsel %vm1694, %v1776, %v1777
    %v1779 = vrot.slane %v1230, 1
    %v1780 = vrot.slane %v1232, 1
    %v1781 = vsel %vm1694, %v1779, %v1780
    %v1782 = vrot.slane %v1234, 1
    %v1783 = vrot.slane %v1236, 1
    %v1784 = vsel %vm1694, %v1782, %v1783
    %v1785 = vrot.slane %v1238, 1
    %v1786 = vrot.slane %v1240, 1
    %v1787 = vsel %vm1694, %v1785, %v1786
    %v1788 = vrot.slane %v1242, 1
    %v1789 = vrot.slane %v1244, 1
    %v1790 = vsel %vm1694, %v1788, %v1789
    %1791 = vrot.lane.b32.xlu0 %v1697, 18
    %v1792 = vpop.permute.xlu0 %1791
    %1793 = vrot.lane.b32.xlu0 %v1700, 18
    %v1794 = vpop.permute.xlu0 %1793
    %1795 = vrot.lane.b32.xlu0 %v1703, 18
    %v1796 = vpop.permute.xlu0 %1795
    %1797 = vrot.lane.b32.xlu0 %v1706, 18
    %v1798 = vpop.permute.xlu0 %1797
    %1799 = vrot.lane.b32.xlu0 %v1709, 18
    %v1800 = vpop.permute.xlu0 %1799
    %1801 = vrot.lane.b32.xlu0 %v1712, 18
    %v1802 = vpop.permute.xlu0 %1801
    %1803 = vrot.lane.b32.xlu0 %v1715, 18
    %v1804 = vpop.permute.xlu0 %1803
    %1805 = vrot.lane.b32.xlu0 %v1718, 18
    %v1806 = vpop.permute.xlu0 %1805
    %1807 = vrot.lane.b32.xlu0 %v1721, 18
    %v1808 = vpop.permute.xlu0 %1807
    %1809 = vrot.lane.b32.xlu0 %v1724, 18
    %v1810 = vpop.permute.xlu0 %1809
    %1811 = vrot.lane.b32.xlu0 %v1727, 18
    %v1812 = vpop.permute.xlu0 %1811
    %1813 = vrot.lane.b32.xlu0 %v1730, 18
    %v1814 = vpop.permute.xlu0 %1813
    %1815 = vrot.lane.b32.xlu0 %v1733, 18
    %v1816 = vpop.permute.xlu0 %1815
    %1817 = vrot.lane.b32.xlu0 %v1736, 18
    %v1818 = vpop.permute.xlu0 %1817
    %1819 = vrot.lane.b32.xlu0 %v1739, 18
    %v1820 = vpop.permute.xlu0 %1819
    %1821 = vrot.lane.b32.xlu0 %v1742, 18
    %v1822 = vpop.permute.xlu0 %1821
    %1823 = vrot.lane.b32.xlu0 %v1745, 18
    %v1824 = vpop.permute.xlu0 %1823
    %1825 = vrot.lane.b32.xlu0 %v1748, 18
    %v1826 = vpop.permute.xlu0 %1825
    %1827 = vrot.lane.b32.xlu0 %v1751, 18
    %v1828 = vpop.permute.xlu0 %1827
    %1829 = vrot.lane.b32.xlu0 %v1754, 18
    %v1830 = vpop.permute.xlu0 %1829
    %1831 = vrot.lane.b32.xlu0 %v1757, 18
    %v1832 = vpop.permute.xlu0 %1831
    %1833 = vrot.lane.b32.xlu0 %v1760, 18
    %v1834 = vpop.permute.xlu0 %1833
    %1835 = vrot.lane.b32.xlu0 %v1763, 18
    %v1836 = vpop.permute.xlu0 %1835
    %1837 = vrot.lane.b32.xlu0 %v1766, 18
    %v1838 = vpop.permute.xlu0 %1837
    %1839 = vrot.lane.b32.xlu0 %v1769, 18
    %v1840 = vpop.permute.xlu0 %1839
    %1841 = vrot.lane.b32.xlu0 %v1772, 18
    %v1842 = vpop.permute.xlu0 %1841
    %1843 = vrot.lane.b32.xlu0 %v1775, 18
    %v1844 = vpop.permute.xlu0 %1843
    %1845 = vrot.lane.b32.xlu0 %v1778, 18
    %v1846 = vpop.permute.xlu0 %1845
    %1847 = vrot.lane.b32.xlu0 %v1781, 18
    %v1848 = vpop.permute.xlu0 %1847
    %1849 = vrot.lane.b32.xlu0 %v1784, 18
    %v1850 = vpop.permute.xlu0 %1849
    %1851 = vrot.lane.b32.xlu0 %v1787, 18
    %v1852 = vpop.permute.xlu0 %1851
    %1853 = vrot.lane.b32.xlu0 %v1790, 18
    %v1854 = vpop.permute.xlu0 %1853
    %vm1855 = vcmask 72704
    %v1857 = vsel %vm1855, %v1118, %v1567
    %v1859 = vsel %vm1855, %v1122, %v1569
    %v1861 = vsel %vm1855, %v1126, %v1571
    %v1863 = vsel %vm1855, %v1130, %v1573
    %v1865 = vsel %vm1855, %v1134, %v1575
    %v1867 = vsel %vm1855, %v1138, %v1577
    %v1869 = vsel %vm1855, %v1142, %v1579
    %v1871 = vsel %vm1855, %v1146, %v1581
    %v1873 = vsel %vm1855, %v1150, %v1583
    %v1875 = vsel %vm1855, %v1154, %v1585
    %v1877 = vsel %vm1855, %v1158, %v1587
    %v1879 = vsel %vm1855, %v1162, %v1589
    %v1881 = vsel %vm1855, %v1166, %v1591
    %v1883 = vsel %vm1855, %v1170, %v1593
    %v1885 = vsel %vm1855, %v1174, %v1595
    %v1887 = vsel %vm1855, %v1178, %v1597
    %v1889 = vsel %vm1855, %v1182, %v1599
    %v1891 = vsel %vm1855, %v1186, %v1601
    %v1893 = vsel %vm1855, %v1190, %v1603
    %v1895 = vsel %vm1855, %v1194, %v1605
    %v1897 = vsel %vm1855, %v1198, %v1607
    %v1899 = vsel %vm1855, %v1202, %v1609
    %v1901 = vsel %vm1855, %v1206, %v1611
    %v1903 = vsel %vm1855, %v1210, %v1613
    %v1905 = vsel %vm1855, %v1214, %v1615
    %v1907 = vsel %vm1855, %v1218, %v1617
    %v1909 = vsel %vm1855, %v1222, %v1619
    %v1911 = vsel %vm1855, %v1226, %v1621
    %v1913 = vsel %vm1855, %v1230, %v1623
    %v1915 = vsel %vm1855, %v1234, %v1625
    %v1917 = vsel %vm1855, %v1238, %v1627
    %v1919 = vsel %vm1855, %v1242, %v1629
    %vm1920 = vcmask 146432
    %v1922 = vsel %vm1920, %v1857, %v1792
    %v1924 = vsel %vm1920, %v1859, %v1794
    %v1926 = vsel %vm1920, %v1861, %v1796
    %v1928 = vsel %vm1920, %v1863, %v1798
    %v1930 = vsel %vm1920, %v1865, %v1800
    %v1932 = vsel %vm1920, %v1867, %v1802
    %v1934 = vsel %vm1920, %v1869, %v1804
    %v1936 = vsel %vm1920, %v1871, %v1806
    %v1938 = vsel %vm1920, %v1873, %v1808
    %v1940 = vsel %vm1920, %v1875, %v1810
    %v1942 = vsel %vm1920, %v1877, %v1812
    %v1944 = vsel %vm1920, %v1879, %v1814
    %v1946 = vsel %vm1920, %v1881, %v1816
    %v1948 = vsel %vm1920, %v1883, %v1818
    %v1950 = vsel %vm1920, %v1885, %v1820
    %v1952 = vsel %vm1920, %v1887, %v1822
    %v1954 = vsel %vm1920, %v1889, %v1824
    %v1956 = vsel %vm1920, %v1891, %v1826
    %v1958 = vsel %vm1920, %v1893, %v1828
    %v1960 = vsel %vm1920, %v1895, %v1830
    %v1962 = vsel %vm1920, %v1897, %v1832
    %v1964 = vsel %vm1920, %v1899, %v1834
    %v1966 = vsel %vm1920, %v1901, %v1836
    %v1968 = vsel %vm1920, %v1903, %v1838
    %v1970 = vsel %vm1920, %v1905, %v1840
    %v1972 = vsel %vm1920, %v1907, %v1842
    %v1974 = vsel %vm1920, %v1909, %v1844
    %v1976 = vsel %vm1920, %v1911, %v1846
    %v1978 = vsel %vm1920, %v1913, %v1848
    %v1980 = vsel %vm1920, %v1915, %v1850
    %v1982 = vsel %vm1920, %v1917, %v1852
    %v1984 = vsel %vm1920, %v1919, %v1854
    %v1985 = vld [vmem:[#allocation5] sm:$0xf]
    %v1986 = vld [vmem:[#allocation5 + $0x4] sm:$0xf]
    %v1987 = vld [vmem:[#allocation5 + $0x8] sm:$0xf]
    %v1988 = vld [vmem:[#allocation5 + $0xc] sm:$0x3]
    %v1993 = vunpack.c.l.b16 %v1985
    %v1994 = vunpack.c.l.b16 %v1986
    %v1995 = vunpack.c.l.b16 %v1987
    %v1996 = vunpack.c.l.b16 %v1988
    %v1997 = vpack.c.b16 %v1994, %v1993
    %v1998 = vpack.c.b16 %v1996, %v1995
    %vm2000 = vcmask 220160
    %v2001 = vsel %vm2000, %v1922, 0
    %v2003 = vsel %vm2000, %v1924, 0
    %v2005 = vsel %vm2000, %v1926, 0
    %v2007 = vsel %vm2000, %v1928, 0
    %v2009 = vsel %vm2000, %v1930, 0
    %v2011 = vsel %vm2000, %v1932, 0
    %v2013 = vsel %vm2000, %v1934, 0
    %v2015 = vsel %vm2000, %v1936, 0
    %v2017 = vsel %vm2000, %v1938, 0
    %v2019 = vsel %vm2000, %v1940, 0
    %v2021 = vsel %vm2000, %v1942, 0
    %v2023 = vsel %vm2000, %v1944, 0
    %v2025 = vsel %vm2000, %v1946, 0
    %v2027 = vsel %vm2000, %v1948, 0
    %v2029 = vsel %vm2000, %v1950, 0
    %v2031 = vsel %vm2000, %v1952, 0
    %v2033 = vsel %vm2000, %v1954, 0
    %v2035 = vsel %vm2000, %v1956, 0
    %v2037 = vsel %vm2000, %v1958, 0
    %v2039 = vsel %vm2000, %v1960, 0
    %v2041 = vsel %vm2000, %v1962, 0
    %v2043 = vsel %vm2000, %v1964, 0
    %v2045 = vsel %vm2000, %v1966, 0
    %v2047 = vsel %vm2000, %v1968, 0
    %v2049 = vsel %vm2000, %v1970, 0
    %v2051 = vsel %vm2000, %v1972, 0
    %v2053 = vsel %vm2000, %v1974, 0
    %v2055 = vsel %vm2000, %v1976, 0
    %v2057 = vsel %vm2000, %v1978, 0
    %v2059 = vsel %vm2000, %v1980, 0
    %v2061 = vsel %vm2000, %v1982, 0
    %v2063 = vsel %vm2000, %v1984, 0
    %vm2065 = vcmask 1044480
    %vm2066 = vcmask 1045504
    %v2067 = vsel %vm2065, 4294967295, 65535
    %v2068 = vsel %vm2066, %v2067, 0
    %v2070 = vand.u32 %v1998, %v2068
    %2072 = vmatprep.subr.bf16.mxu0 0
    %2073 = vmatpush1.bf16.msra.mxu0 %v1997
    %2074 = vmatprep.subr.bf16.mxu0 0
    %2075 = vmatpush1.bf16.msra.mxu0 %v2070
    %2076 = vmatprep.subr.bf16.mxu0 0
    %2077 = vmatpush1.bf16.msra.mxu0 0
    %2078 = vmatprep.subr.bf16.mxu0 0
    %2079 = vmatpush1.bf16.msra.mxu0 0
    %2080 = vmatprep.subr.bf16.mxu0 0
    %2081 = vmatpush1.bf16.msra.mxu0 0
    %2082 = vmatprep.subr.bf16.mxu0 0
    %2083 = vmatpush1.bf16.msra.mxu0 0
    %2084 = vmatprep.subr.bf16.mxu0 0
    %2085 = vmatpush1.bf16.msra.mxu0 0
    %2086 = vmatprep.subr.bf16.mxu0 0
    %2087 = vmatpush1.bf16.msra.mxu0 0
    %2088 = vmatprep.subr.bf16.mxu0 0
    %2089 = vmatpush1.bf16.msra.mxu0 0
    %2090 = vmatprep.subr.bf16.mxu0 0
    %2091 = vmatpush1.bf16.msra.mxu0 0
    %2092 = vmatprep.subr.bf16.mxu0 0
    %2093 = vmatpush1.bf16.msra.mxu0 0
    %2094 = vmatprep.subr.bf16.mxu0 0
    %2095 = vmatpush1.bf16.msra.mxu0 0
    %2096 = vmatprep.subr.bf16.mxu0 0
    %2097 = vmatpush1.bf16.msra.mxu0 0
    %2098 = vmatprep.subr.bf16.mxu0 0
    %2099 = vmatpush1.bf16.msra.mxu0 0
    %2100 = vmatprep.subr.bf16.mxu0 0
    %2101 = vmatpush1.bf16.msra.mxu0 0
    %2102 = vmatprep.subr.bf16.mxu0 0
    %2103 = vmatpush1.bf16.msra.mxu0 0
    %2104 = vmatprep.mubr.bf16.mxu0 0
    %2105 = vmatmul.mubr.bf16.gmra.mrb[0].mxu0 %v2001
    %v2106 = vpop.f32.mrb[0].mxu0
    %v2107 = vadd.f32 0.0, %v2106
    %v2108 = vpop.f32.mrb[0].mxu0
    %v2109 = vpop.f32.mrb[0].mxu0
    %v2110 = vadd.f32 0.0, %v2109
    %v2111 = vpop.f32.mrb[0].mxu0
    %2112 = vmatprep.mubr.bf16.mxu0 0
    %2113 = vmatmul.mubr.bf16.gmra.mrb[0].mxu0 %v2003
    %v2114 = vpop.f32.mrb[0].mxu0
    %v2115 = vadd.f32 0.0, %v2114
    %v2116 = vpop.f32.mrb[0].mxu0
    %v2117 = vpop.f32.mrb[0].mxu0
    %v2118 = vadd.f32 0.0, %v2117
    %v2119 = vpop.f32.mrb[0].mxu0
    %2120 = vmatprep.mubr.bf16.mxu0 0
    %2121 = vmatmul.mubr.bf16.gmra.mrb[0].mxu0 %v2005
    %v2122 = vpop.f32.mrb[0].mxu0
    %v2123 = vadd.f32 0.0, %v2122
    %v2124 = vpop.f32.mrb[0].mxu0
    %v2125 = vpop.f32.mrb[0].mxu0
    %v2126 = vadd.f32 0.0, %v2125
    %v2127 = vpop.f32.mrb[0].mxu0
    %2128 = vmatprep.mubr.bf16.mxu0 0
    %2129 = vmatmul.mubr.bf16.gmra.mrb[0].mxu0 %v2007
    %v2130 = vpop.f32.mrb[0].mxu0
    %v2131 = vadd.f32 0.0, %v2130
    %v2132 = vpop.f32.mrb[0].mxu0
    %v2133 = vpop.f32.mrb[0].mxu0
    %v2134 = vadd.f32 0.0, %v2133
    %v2135 = vpop.f32.mrb[0].mxu0
    %2136 = vmatprep.mubr.bf16.mxu0 0
    %2137 = vmatmul.mubr.bf16.gmra.mrb[0].mxu0 %v2009
    %v2138 = vpop.f32.mrb[0].mxu0
    %v2139 = vadd.f32 0.0, %v2138
    %v2140 = vpop.f32.mrb[0].mxu0
    %v2141 = vpop.f32.mrb[0].mxu0
    %v2142 = vadd.f32 0.0, %v2141
    %v2143 = vpop.f32.mrb[0].mxu0
    %2144 = vmatprep.mubr.bf16.mxu0 0
    %2145 = vmatmul.mubr.bf16.gmra.mrb[0].mxu0 %v2011
    %v2146 = vpop.f32.mrb[0].mxu0
    %v2147 = vadd.f32 0.0, %v2146
    %v2148 = vpop.f32.mrb[0].mxu0
    %v2149 = vpop.f32.mrb[0].mxu0
    %v2150 = vadd.f32 0.0, %v2149
    %v2151 = vpop.f32.mrb[0].mxu0
    %2152 = vmatprep.mubr.bf16.mxu0 0
    %2153 = vmatmul.mubr.bf16.gmra.mrb[0].mxu0 %v2013
    %v2154 = vpop.f32.mrb[0].mxu0
    %v2155 = vadd.f32 0.0, %v2154
    %v2156 = vpop.f32.mrb[0].mxu0
    %v2157 = vpop.f32.mrb[0].mxu0
    %v2158 = vadd.f32 0.0, %v2157
    %v2159 = vpop.f32.mrb[0].mxu0
    %2160 = vmatprep.mubr.bf16.mxu0 0
    %2161 = vmatmul.mubr.bf16.gmra.mrb[0].mxu0 %v2015
    %v2162 = vpop.f32.mrb[0].mxu0
    %v2163 = vadd.f32 0.0, %v2162
    %v2164 = vpop.f32.mrb[0].mxu0
    %v2165 = vpop.f32.mrb[0].mxu0
    %v2166 = vadd.f32 0.0, %v2165
    %v2167 = vpop.f32.mrb[0].mxu0
    %2168 = vmatprep.mubr.bf16.mxu0 0
    %2169 = vmatmul.mubr.bf16.gmra.mrb[0].mxu0 %v2017
    %v2170 = vpop.f32.mrb[0].mxu0
    %v2171 = vadd.f32 0.0, %v2170
    %v2172 = vpop.f32.mrb[0].mxu0
    %v2173 = vpop.f32.mrb[0].mxu0
    %v2174 = vadd.f32 0.0, %v2173
    %v2175 = vpop.f32.mrb[0].mxu0
    %2176 = vmatprep.mubr.bf16.mxu0 0
    %2177 = vmatmul.mubr.bf16.gmra.mrb[0].mxu0 %v2019
    %v2178 = vpop.f32.mrb[0].mxu0
    %v2179 = vadd.f32 0.0, %v2178
    %v2180 = vpop.f32.mrb[0].mxu0
    %v2181 = vpop.f32.mrb[0].mxu0
    %v2182 = vadd.f32 0.0, %v2181
    %v2183 = vpop.f32.mrb[0].mxu0
    %2184 = vmatprep.mubr.bf16.mxu0 0
    %2185 = vmatmul.mubr.bf16.gmra.mrb[0].mxu0 %v2021
    %v2186 = vpop.f32.mrb[0].mxu0
    %v2187 = vadd.f32 0.0, %v2186
    %v2188 = vpop.f32.mrb[0].mxu0
    %v2189 = vpop.f32.mrb[0].mxu0
    %v2190 = vadd.f32 0.0, %v2189
    %v2191 = vpop.f32.mrb[0].mxu0
    %2192 = vmatprep.mubr.bf16.mxu0 0
    %2193 = vmatmul.mubr.bf16.gmra.mrb[0].mxu0 %v2023
    %v2194 = vpop.f32.mrb[0].mxu0
    %v2195 = vadd.f32 0.0, %v2194
    %v2196 = vpop.f32.mrb[0].mxu0
    %v2197 = vpop.f32.mrb[0].mxu0
    %v2198 = vadd.f32 0.0, %v2197
    %v2199 = vpop.f32.mrb[0].mxu0
    %2200 = vmatprep.mubr.bf16.mxu0 0
    %2201 = vmatmul.mubr.bf16.gmra.mrb[0].mxu0 %v2025
    %v2202 = vpop.f32.mrb[0].mxu0
    %v2203 = vadd.f32 0.0, %v2202
    %v2204 = vpop.f32.mrb[0].mxu0
    %v2205 = vpop.f32.mrb[0].mxu0
    %v2206 = vadd.f32 0.0, %v2205
    %v2207 = vpop.f32.mrb[0].mxu0
    %2208 = vmatprep.mubr.bf16.mxu0 0
    %2209 = vmatmul.mubr.bf16.gmra.mrb[0].mxu0 %v2027
    %v2210 = vpop.f32.mrb[0].mxu0
    %v2211 = vadd.f32 0.0, %v2210
    %v2212 = vpop.f32.mrb[0].mxu0
    %v2213 = vpop.f32.mrb[0].mxu0
    %v2214 = vadd.f32 0.0, %v2213
    %v2215 = vpop.f32.mrb[0].mxu0
    %2216 = vmatprep.mubr.bf16.mxu0 0
    %2217 = vmatmul.mubr.bf16.gmra.mrb[0].mxu0 %v2029
    %v2218 = vpop.f32.mrb[0].mxu0
    %v2219 = vadd.f32 0.0, %v2218
    %v2220 = vpop.f32.mrb[0].mxu0
    %v2221 = vpop.f32.mrb[0].mxu0
    %v2222 = vadd.f32 0.0, %v2221
    %v2223 = vpop.f32.mrb[0].mxu0
    %2224 = vmatprep.mubr.bf16.mxu0 0
    %2225 = vmatmul.mubr.bf16.gmra.mrb[0].mxu0 %v2031
    %v2226 = vpop.f32.mrb[0].mxu0
    %v2227 = vadd.f32 0.0, %v2226
    %v2228 = vpop.f32.mrb[0].mxu0
    %v2229 = vpop.f32.mrb[0].mxu0
    %v2230 = vadd.f32 0.0, %v2229
    %v2231 = vpop.f32.mrb[0].mxu0
    %2232 = vmatprep.mubr.bf16.mxu0 0
    %2233 = vmatmul.mubr.bf16.gmra.mrb[0].mxu0 %v2033
    %v2234 = vpop.f32.mrb[0].mxu0
    %v2235 = vadd.f32 0.0, %v2234
    %v2236 = vpop.f32.mrb[0].mxu0
    %v2237 = vpop.f32.mrb[0].mxu0
    %v2238 = vadd.f32 0.0, %v2237
    %v2239 = vpop.f32.mrb[0].mxu0
    %2240 = vmatprep.mubr.bf16.mxu0 0
    %2241 = vmatmul.mubr.bf16.gmra.mrb[0].mxu0 %v2035
    %v2242 = vpop.f32.mrb[0].mxu0
    %v2243 = vadd.f32 0.0, %v2242
    %v2244 = vpop.f32.mrb[0].mxu0
    %v2245 = vpop.f32.mrb[0].mxu0
    %v2246 = vadd.f32 0.0, %v2245
    %v2247 = vpop.f32.mrb[0].mxu0
    %2248 = vmatprep.mubr.bf16.mxu0 0
    %2249 = vmatmul.mubr.bf16.gmra.mrb[0].mxu0 %v2037
    %v2250 = vpop.f32.mrb[0].mxu0
    %v2251 = vadd.f32 0.0, %v2250
    %v2252 = vpop.f32.mrb[0].mxu0
    %v2253 = vpop.f32.mrb[0].mxu0
    %v2254 = vadd.f32 0.0, %v2253
    %v2255 = vpop.f32.mrb[0].mxu0
    %2256 = vmatprep.mubr.bf16.mxu0 0
    %2257 = vmatmul.mubr.bf16.gmra.mrb[0].mxu0 %v2039
    %v2258 = vpop.f32.mrb[0].mxu0
    %v2259 = vadd.f32 0.0, %v2258
    %v2260 = vpop.f32.mrb[0].mxu0
    %v2261 = vpop.f32.mrb[0].mxu0
    %v2262 = vadd.f32 0.0, %v2261
    %v2263 = vpop.f32.mrb[0].mxu0
    %2264 = vmatprep.mubr.bf16.mxu0 0
    %2265 = vmatmul.mubr.bf16.gmra.mrb[0].mxu0 %v2041
    %v2266 = vpop.f32.mrb[0].mxu0
    %v2267 = vadd.f32 0.0, %v2266
    %v2268 = vpop.f32.mrb[0].mxu0
    %v2269 = vpop.f32.mrb[0].mxu0
    %v2270 = vadd.f32 0.0, %v2269
    %v2271 = vpop.f32.mrb[0].mxu0
    %2272 = vmatprep.mubr.bf16.mxu0 0
    %2273 = vmatmul.mubr.bf16.gmra.mrb[0].mxu0 %v2043
    %v2274 = vpop.f32.mrb[0].mxu0
    %v2275 = vadd.f32 0.0, %v2274
    %v2276 = vpop.f32.mrb[0].mxu0
    %v2277 = vpop.f32.mrb[0].mxu0
    %v2278 = vadd.f32 0.0, %v2277
    %v2279 = vpop.f32.mrb[0].mxu0
    %2280 = vmatprep.mubr.bf16.mxu0 0
    %2281 = vmatmul.mubr.bf16.gmra.mrb[0].mxu0 %v2045
    %v2282 = vpop.f32.mrb[0].mxu0
    %v2283 = vadd.f32 0.0, %v2282
    %v2284 = vpop.f32.mrb[0].mxu0
    %v2285 = vpop.f32.mrb[0].mxu0
    %v2286 = vadd.f32 0.0, %v2285
    %v2287 = vpop.f32.mrb[0].mxu0
    %2288 = vmatprep.mubr.bf16.mxu0 0
    %2289 = vmatmul.mubr.bf16.gmra.mrb[0].mxu0 %v2047
    %v2290 = vpop.f32.mrb[0].mxu0
    %v2291 = vadd.f32 0.0, %v2290
    %v2292 = vpop.f32.mrb[0].mxu0
    %v2293 = vpop.f32.mrb[0].mxu0
    %v2294 = vadd.f32 0.0, %v2293
    %v2295 = vpop.f32.mrb[0].mxu0
    %2296 = vmatprep.mubr.bf16.mxu0 0
    %2297 = vmatmul.mubr.bf16.gmra.mrb[0].mxu0 %v2049
    %v2298 = vpop.f32.mrb[0].mxu0
    %v2299 = vadd.f32 0.0, %v2298
    %v2300 = vpop.f32.mrb[0].mxu0
    %v2301 = vpop.f32.mrb[0].mxu0
    %v2302 = vadd.f32 0.0, %v2301
    %v2303 = vpop.f32.mrb[0].mxu0
    %2304 = vmatprep.mubr.bf16.mxu0 0
    %2305 = vmatmul.mubr.bf16.gmra.mrb[0].mxu0 %v2051
    %v2306 = vpop.f32.mrb[0].mxu0
    %v2307 = vadd.f32 0.0, %v2306
    %v2308 = vpop.f32.mrb[0].mxu0
    %v2309 = vpop.f32.mrb[0].mxu0
    %v2310 = vadd.f32 0.0, %v2309
    %v2311 = vpop.f32.mrb[0].mxu0
    %2312 = vmatprep.mubr.bf16.mxu0 0
    %2313 = vmatmul.mubr.bf16.gmra.mrb[0].mxu0 %v2053
    %v2314 = vpop.f32.mrb[0].mxu0
    %v2315 = vadd.f32 0.0, %v2314
    %v2316 = vpop.f32.mrb[0].mxu0
    %v2317 = vpop.f32.mrb[0].mxu0
    %v2318 = vadd.f32 0.0, %v2317
    %v2319 = vpop.f32.mrb[0].mxu0
    %2320 = vmatprep.mubr.bf16.mxu0 0
    %2321 = vmatmul.mubr.bf16.gmra.mrb[0].mxu0 %v2055
    %v2322 = vpop.f32.mrb[0].mxu0
    %v2323 = vadd.f32 0.0, %v2322
    %v2324 = vpop.f32.mrb[0].mxu0
    %v2325 = vpop.f32.mrb[0].mxu0
    %v2326 = vadd.f32 0.0, %v2325
    %v2327 = vpop.f32.mrb[0].mxu0
    %2328 = vmatprep.mubr.bf16.mxu0 0
    %2329 = vmatmul.mubr.bf16.gmra.mrb[0].mxu0 %v2057
    %v2330 = vpop.f32.mrb[0].mxu0
    %v2331 = vadd.f32 0.0, %v2330
    %v2332 = vpop.f32.mrb[0].mxu0
    %v2333 = vpop.f32.mrb[0].mxu0
    %v2334 = vadd.f32 0.0, %v2333
    %v2335 = vpop.f32.mrb[0].mxu0
    %2336 = vmatprep.mubr.bf16.mxu0 0
    %2337 = vmatmul.mubr.bf16.gmra.mrb[0].mxu0 %v2059
    %v2338 = vpop.f32.mrb[0].mxu0
    %v2339 = vadd.f32 0.0, %v2338
    %v2340 = vpop.f32.mrb[0].mxu0
    %v2341 = vpop.f32.mrb[0].mxu0
    %v2342 = vadd.f32 0.0, %v2341
    %v2343 = vpop.f32.mrb[0].mxu0
    %2344 = vmatprep.mubr.bf16.mxu0 0
    %2345 = vmatmul.mubr.bf16.gmra.mrb[0].mxu0 %v2061
    %v2346 = vpop.f32.mrb[0].mxu0
    %v2347 = vadd.f32 0.0, %v2346
    %v2348 = vpop.f32.mrb[0].mxu0
    %v2349 = vpop.f32.mrb[0].mxu0
    %v2350 = vadd.f32 0.0, %v2349
    %v2351 = vpop.f32.mrb[0].mxu0
    %2352 = vmatprep.mubr.bf16.mxu0 0
    %2353 = vmatmul.mubr.bf16.gmra.mrb[0].mxu0 %v2063
    %v2354 = vpop.f32.mrb[0].mxu0
    %v2355 = vadd.f32 0.0, %v2354
    %v2356 = vpop.f32.mrb[0].mxu0
    %v2357 = vpop.f32.mrb[0].mxu0
    %v2358 = vadd.f32 0.0, %v2357
    %v2359 = vpop.f32.mrb[0].mxu0
    %2360 = vdwg.mxu0
    %vm2361 = vcmp.ge.f32.partialorder %v2107, 0.0
    %vm2362 = vcmp.ge.f32.partialorder %v2110, 0.0
    %vm2363 = vcmp.ge.f32.partialorder %v2115, 0.0
    %vm2364 = vcmp.ge.f32.partialorder %v2118, 0.0
    %vm2365 = vcmp.ge.f32.partialorder %v2123, 0.0
    %vm2366 = vcmp.ge.f32.partialorder %v2126, 0.0
    %vm2367 = vcmp.ge.f32.partialorder %v2131, 0.0
    %vm2368 = vcmp.ge.f32.partialorder %v2134, 0.0
    %vm2369 = vcmp.ge.f32.partialorder %v2139, 0.0
    %vm2370 = vcmp.ge.f32.partialorder %v2142, 0.0
    %vm2371 = vcmp.ge.f32.partialorder %v2147, 0.0
    %vm2372 = vcmp.ge.f32.partialorder %v2150, 0.0
    %vm2373 = vcmp.ge.f32.partialorder %v2155, 0.0
    %vm2374 = vcmp.ge.f32.partialorder %v2158, 0.0
    %vm2375 = vcmp.ge.f32.partialorder %v2163, 0.0
    %vm2376 = vcmp.ge.f32.partialorder %v2166, 0.0
    %vm2377 = vcmp.ge.f32.partialorder %v2171, 0.0
    %vm2378 = vcmp.ge.f32.partialorder %v2174, 0.0
    %vm2379 = vcmp.ge.f32.partialorder %v2179, 0.0
    %vm2380 = vcmp.ge.f32.partialorder %v2182, 0.0
    %vm2381 = vcmp.ge.f32.partialorder %v2187, 0.0
    %vm2382 = vcmp.ge.f32.partialorder %v2190, 0.0
    %vm2383 = vcmp.ge.f32.partialorder %v2195, 0.0
    %vm2384 = vcmp.ge.f32.partialorder %v2198, 0.0
    %vm2385 = vcmp.ge.f32.partialorder %v2203, 0.0
    %vm2386 = vcmp.ge.f32.partialorder %v2206, 0.0
    %vm2387 = vcmp.ge.f32.partialorder %v2211, 0.0
    %vm2388 = vcmp.ge.f32.partialorder %v2214, 0.0
    %vm2389 = vcmp.ge.f32.partialorder %v2219, 0.0
    %vm2390 = vcmp.ge.f32.partialorder %v2222, 0.0
    %vm2391 = vcmp.ge.f32.partialorder %v2227, 0.0
    %vm2392 = vcmp.ge.f32.partialorder %v2230, 0.0
    %vm2393 = vcmp.ge.f32.partialorder %v2235, 0.0
    %vm2394 = vcmp.ge.f32.partialorder %v2238, 0.0
    %vm2395 = vcmp.ge.f32.partialorder %v2243, 0.0
    %vm2396 = vcmp.ge.f32.partialorder %v2246, 0.0
    %vm2397 = vcmp.ge.f32.partialorder %v2251, 0.0
    %vm2398 = vcmp.ge.f32.partialorder %v2254, 0.0
    %vm2399 = vcmp.ge.f32.partialorder %v2259, 0.0
    %vm2400 = vcmp.ge.f32.partialorder %v2262, 0.0
    %vm2401 = vcmp.ge.f32.partialorder %v2267, 0.0
    %vm2402 = vcmp.ge.f32.partialorder %v2270, 0.0
    %vm2403 = vcmp.ge.f32.partialorder %v2275, 0.0
    %vm2404 = vcmp.ge.f32.partialorder %v2278, 0.0
    %vm2405 = vcmp.ge.f32.partialorder %v2283, 0.0
    %vm2406 = vcmp.ge.f32.partialorder %v2286, 0.0
    %vm2407 = vcmp.ge.f32.partialorder %v2291, 0.0
    %vm2408 = vcmp.ge.f32.partialorder %v2294, 0.0
    %vm2409 = vcmp.ge.f32.partialorder %v2299, 0.0
    %vm2410 = vcmp.ge.f32.partialorder %v2302, 0.0
    %vm2411 = vcmp.ge.f32.partialorder %v2307, 0.0
    %vm2412 = vcmp.ge.f32.partialorder %v2310, 0.0
    %vm2413 = vcmp.ge.f32.partialorder %v2315, 0.0
    %vm2414 = vcmp.ge.f32.partialorder %v2318, 0.0
    %vm2415 = vcmp.ge.f32.partialorder %v2323, 0.0
    %vm2416 = vcmp.ge.f32.partialorder %v2326, 0.0
    %vm2417 = vcmp.ge.f32.partialorder %v2331, 0.0
    %vm2418 = vcmp.ge.f32.partialorder %v2334, 0.0
    %vm2419 = vcmp.ge.f32.partialorder %v2339, 0.0
    %vm2420 = vcmp.ge.f32.partialorder %v2342, 0.0
    %vm2421 = vcmp.ge.f32.partialorder %v2347, 0.0
    %vm2422 = vcmp.ge.f32.partialorder %v2350, 0.0
    %vm2423 = vcmp.ge.f32.partialorder %v2355, 0.0
    %vm2424 = vcmp.ge.f32.partialorder %v2358, 0.0
    %v2425 = vmul.f32 %v2107, 0.1
    %v2426 = vmul.f32 %v2110, 0.1
    %v2427 = vmul.f32 %v2115, 0.1
    %v2428 = vmul.f32 %v2118, 0.1
    %v2429 = vmul.f32 %v2123, 0.1
    %v2430 = vmul.f32 %v2126, 0.1
    %v2431 = vmul.f32 %v2131, 0.1
    %v2432 = vmul.f32 %v2134, 0.1
    %v2433 = vmul.f32 %v2139, 0.1
    %v2434 = vmul.f32 %v2142, 0.1
    %v2435 = vmul.f32 %v2147, 0.1
    %v2436 = vmul.f32 %v2150, 0.1
    %v2437 = vmul.f32 %v2155, 0.1
    %v2438 = vmul.f32 %v2158, 0.1
    %v2439 = vmul.f32 %v2163, 0.1
    %v2440 = vmul.f32 %v2166, 0.1
    %v2441 = vmul.f32 %v2171, 0.1
    %v2442 = vmul.f32 %v2174, 0.1
    %v2443 = vmul.f32 %v2179, 0.1
    %v2444 = vmul.f32 %v2182, 0.1
    %v2445 = vmul.f32 %v2187, 0.1
    %v2446 = vmul.f32 %v2190, 0.1
    %v2447 = vmul.f32 %v2195, 0.1
    %v2448 = vmul.f32 %v2198, 0.1
    %v2449 = vmul.f32 %v2203, 0.1
    %v2450 = vmul.f32 %v2206, 0.1
    %v2451 = vmul.f32 %v2211, 0.1
    %v2452 = vmul.f32 %v2214, 0.1
    %v2453 = vmul.f32 %v2219, 0.1
    %v2454 = vmul.f32 %v2222, 0.1
    %v2455 = vmul.f32 %v2227, 0.1
    %v2456 = vmul.f32 %v2230, 0.1
    %v2457 = vmul.f32 %v2235, 0.1
    %v2458 = vmul.f32 %v2238, 0.1
    %v2459 = vmul.f32 %v2243, 0.1
    %v2460 = vmul.f32 %v2246, 0.1
    %v2461 = vmul.f32 %v2251, 0.1
    %v2462 = vmul.f32 %v2254, 0.1
    %v2463 = vmul.f32 %v2259, 0.1
    %v2464 = vmul.f32 %v2262, 0.1
    %v2465 = vmul.f32 %v2267, 0.1
    %v2466 = vmul.f32 %v2270, 0.1
    %v2467 = vmul.f32 %v2275, 0.1
    %v2468 = vmul.f32 %v2278, 0.1
    %v2469 = vmul.f32 %v2283, 0.1
    %v2470 = vmul.f32 %v2286, 0.1
    %v2471 = vmul.f32 %v2291, 0.1
    %v2472 = vmul.f32 %v2294, 0.1
    %v2473 = vmul.f32 %v2299, 0.1
    %v2474 = vmul.f32 %v2302, 0.1
    %v2475 = vmul.f32 %v2307, 0.1
    %v2476 = vmul.f32 %v2310, 0.1
    %v2477 = vmul.f32 %v2315, 0.1
    %v2478 = vmul.f32 %v2318, 0.1
    %v2479 = vmul.f32 %v2323, 0.1
    %v2480 = vmul.f32 %v2326, 0.1
    %v2481 = vmul.f32 %v2331, 0.1
    %v2482 = vmul.f32 %v2334, 0.1
    %v2483 = vmul.f32 %v2339, 0.1
    %v2484 = vmul.f32 %v2342, 0.1
    %v2485 = vmul.f32 %v2347, 0.1
    %v2486 = vmul.f32 %v2350, 0.1
    %v2487 = vmul.f32 %v2355, 0.1
    %v2488 = vmul.f32 %v2358, 0.1
    %v2489 = vsel %vm2361, %v2107, %v2425
    %v2490 = vsel %vm2362, %v2110, %v2426
    %v2491 = vsel %vm2363, %v2115, %v2427
    %v2492 = vsel %vm2364, %v2118, %v2428
    %v2493 = vsel %vm2365, %v2123, %v2429
    %v2494 = vsel %vm2366, %v2126, %v2430
    %v2495 = vsel %vm2367, %v2131, %v2431
    %v2496 = vsel %vm2368, %v2134, %v2432
    %v2497 = vsel %vm2369, %v2139, %v2433
    %v2498 = vsel %vm2370, %v2142, %v2434
    %v2499 = vsel %vm2371, %v2147, %v2435
    %v2500 = vsel %vm2372, %v2150, %v2436
    %v2501 = vsel %vm2373, %v2155, %v2437
    %v2502 = vsel %vm2374, %v2158, %v2438
    %v2503 = vsel %vm2375, %v2163, %v2439
    %v2504 = vsel %vm2376, %v2166, %v2440
    %v2505 = vsel %vm2377, %v2171, %v2441
    %v2506 = vsel %vm2378, %v2174, %v2442
    %v2507 = vsel %vm2379, %v2179, %v2443
    %v2508 = vsel %vm2380, %v2182, %v2444
    %v2509 = vsel %vm2381, %v2187, %v2445
    %v2510 = vsel %vm2382, %v2190, %v2446
    %v2511 = vsel %vm2383, %v2195, %v2447
    %v2512 = vsel %vm2384, %v2198, %v2448
    %v2513 = vsel %vm2385, %v2203, %v2449
    %v2514 = vsel %vm2386, %v2206, %v2450
    %v2515 = vsel %vm2387, %v2211, %v2451
    %v2516 = vsel %vm2388, %v2214, %v2452
    %v2517 = vsel %vm2389, %v2219, %v2453
    %v2518 = vsel %vm2390, %v2222, %v2454
    %v2519 = vsel %vm2391, %v2227, %v2455
    %v2520 = vsel %vm2392, %v2230, %v2456
    %v2521 = vsel %vm2393, %v2235, %v2457
    %v2522 = vsel %vm2394, %v2238, %v2458
    %v2523 = vsel %vm2395, %v2243, %v2459
    %v2524 = vsel %vm2396, %v2246, %v2460
    %v2525 = vsel %vm2397, %v2251, %v2461
    %v2526 = vsel %vm2398, %v2254, %v2462
    %v2527 = vsel %vm2399, %v2259, %v2463
    %v2528 = vsel %vm2400, %v2262, %v2464
    %v2529 = vsel %vm2401, %v2267, %v2465
    %v2530 = vsel %vm2402, %v2270, %v2466
    %v2531 = vsel %vm2403, %v2275, %v2467
    %v2532 = vsel %vm2404, %v2278, %v2468
    %v2533 = vsel %vm2405, %v2283, %v2469
    %v2534 = vsel %vm2406, %v2286, %v2470
    %v2535 = vsel %vm2407, %v2291, %v2471
    %v2536 = vsel %vm2408, %v2294, %v2472
    %v2537 = vsel %vm2409, %v2299, %v2473
    %v2538 = vsel %vm2410, %v2302, %v2474
    %v2539 = vsel %vm2411, %v2307, %v2475
    %v2540 = vsel %vm2412, %v2310, %v2476
    %v2541 = vsel %vm2413, %v2315, %v2477
    %v2542 = vsel %vm2414, %v2318, %v2478
    %v2543 = vsel %vm2415, %v2323, %v2479
    %v2544 = vsel %vm2416, %v2326, %v2480
    %v2545 = vsel %vm2417, %v2331, %v2481
    %v2546 = vsel %vm2418, %v2334, %v2482
    %v2547 = vsel %vm2419, %v2339, %v2483
    %v2548 = vsel %vm2420, %v2342, %v2484
    %v2549 = vsel %vm2421, %v2347, %v2485
    %v2550 = vsel %vm2422, %v2350, %v2486
    %v2551 = vsel %vm2423, %v2355, %v2487
    %v2552 = vsel %vm2424, %v2358, %v2488
    %v2553 = vpack.c.bf16 %v2490, %v2489
    %v2554 = vpack.c.bf16 %v2492, %v2491
    %v2555 = vpack.c.bf16 %v2494, %v2493
    %v2556 = vpack.c.bf16 %v2496, %v2495
    %v2557 = vpack.c.bf16 %v2498, %v2497
    %v2558 = vpack.c.bf16 %v2500, %v2499
    %v2559 = vpack.c.bf16 %v2502, %v2501
    %v2560 = vpack.c.bf16 %v2504, %v2503
    %v2561 = vpack.c.bf16 %v2506, %v2505
    %v2562 = vpack.c.bf16 %v2508, %v2507
    %v2563 = vpack.c.bf16 %v2510, %v2509
    %v2564 = vpack.c.bf16 %v2512, %v2511
    %v2565 = vpack.c.bf16 %v2514, %v2513
    %v2566 = vpack.c.bf16 %v2516, %v2515
    %v2567 = vpack.c.bf16 %v2518, %v2517
    %v2568 = vpack.c.bf16 %v2520, %v2519
    %v2569 = vpack.c.bf16 %v2522, %v2521
    %v2570 = vpack.c.bf16 %v2524, %v2523
    %v2571 = vpack.c.bf16 %v2526, %v2525
    %v2572 = vpack.c.bf16 %v2528, %v2527
    %v2573 = vpack.c.bf16 %v2530, %v2529
    %v2574 = vpack.c.bf16 %v2532, %v2531
    %v2575 = vpack.c.bf16 %v2534, %v2533
    %v2576 = vpack.c.bf16 %v2536, %v2535
    %v2577 = vpack.c.bf16 %v2538, %v2537
    %v2578 = vpack.c.bf16 %v2540, %v2539
    %v2579 = vpack.c.bf16 %v2542, %v2541
    %v2580 = vpack.c.bf16 %v2544, %v2543
    %v2581 = vpack.c.bf16 %v2546, %v2545
    %v2582 = vpack.c.bf16 %v2548, %v2547
    %v2583 = vpack.c.bf16 %v2550, %v2549
    %v2584 = vpack.c.bf16 %v2552, %v2551
    %v2586 = vshrl.u32 %v2553, 16
    %v2588 = vrot.slane %v2586, 7
    %v2589 = vshll.u32 %v2553, 16
    %v2591 = vor.u32 %v2588, %v2589
    %v2593 = vshrl.u32 %v2554, 16
    %v2595 = vrot.slane %v2593, 7
    %v2596 = vshll.u32 %v2554, 16
    %v2598 = vor.u32 %v2595, %v2596
    %v2600 = vshrl.u32 %v2555, 16
    %v2602 = vrot.slane %v2600, 7
    %v2603 = vshll.u32 %v2555, 16
    %v2605 = vor.u32 %v2602, %v2603
    %v2607 = vshrl.u32 %v2556, 16
    %v2609 = vrot.slane %v2607, 7
    %v2610 = vshll.u32 %v2556, 16
    %v2612 = vor.u32 %v2609, %v2610
    %v2614 = vshrl.u32 %v2557, 16
    %v2616 = vrot.slane %v2614, 7
    %v2617 = vshll.u32 %v2557, 16
    %v2619 = vor.u32 %v2616, %v2617
    %v2621 = vshrl.u32 %v2558, 16
    %v2623 = vrot.slane %v2621, 7
    %v2624 = vshll.u32 %v2558, 16
    %v2626 = vor.u32 %v2623, %v2624
    %v2628 = vshrl.u32 %v2559, 16
    %v2630 = vrot.slane %v2628, 7
    %v2631 = vshll.u32 %v2559, 16
    %v2633 = vor.u32 %v2630, %v2631
    %v2635 = vshrl.u32 %v2560, 16
    %v2637 = vrot.slane %v2635, 7
    %v2638 = vshll.u32 %v2560, 16
    %v2640 = vor.u32 %v2637, %v2638
    %v2642 = vshrl.u32 %v2561, 16
    %v2644 = vrot.slane %v2642, 7
    %v2645 = vshll.u32 %v2561, 16
    %v2647 = vor.u32 %v2644, %v2645
    %v2649 = vshrl.u32 %v2562, 16
    %v2651 = vrot.slane %v2649, 7
    %v2652 = vshll.u32 %v2562, 16
    %v2654 = vor.u32 %v2651, %v2652
    %v2656 = vshrl.u32 %v2563, 16
    %v2658 = vrot.slane %v2656, 7
    %v2659 = vshll.u32 %v2563, 16
    %v2661 = vor.u32 %v2658, %v2659
    %v2663 = vshrl.u32 %v2564, 16
    %v2665 = vrot.slane %v2663, 7
    %v2666 = vshll.u32 %v2564, 16
    %v2668 = vor.u32 %v2665, %v2666
    %v2670 = vshrl.u32 %v2565, 16
    %v2672 = vrot.slane %v2670, 7
    %v2673 = vshll.u32 %v2565, 16
    %v2675 = vor.u32 %v2672, %v2673
    %v2677 = vshrl.u32 %v2566, 16
    %v2679 = vrot.slane %v2677, 7
    %v2680 = vshll.u32 %v2566, 16
    %v2682 = vor.u32 %v2679, %v2680
    %v2684 = vshrl.u32 %v2567, 16
    %v2686 = vrot.slane %v2684, 7
    %v2687 = vshll.u32 %v2567, 16
    %v2689 = vor.u32 %v2686, %v2687
    %v2691 = vshrl.u32 %v2568, 16
    %v2693 = vrot.slane %v2691, 7
    %v2694 = vshll.u32 %v2568, 16
    %v2696 = vor.u32 %v2693, %v2694
    %v2698 = vshrl.u32 %v2569, 16
    %v2700 = vrot.slane %v2698, 7
    %v2701 = vshll.u32 %v2569, 16
    %v2703 = vor.u32 %v2700, %v2701
    %v2705 = vshrl.u32 %v2570, 16
    %v2707 = vrot.slane %v2705, 7
    %v2708 = vshll.u32 %v2570, 16
    %v2710 = vor.u32 %v2707, %v2708
    %v2712 = vshrl.u32 %v2571, 16
    %v2714 = vrot.slane %v2712, 7
    %v2715 = vshll.u32 %v2571, 16
    %v2717 = vor.u32 %v2714, %v2715
    %v2719 = vshrl.u32 %v2572, 16
    %v2721 = vrot.slane %v2719, 7
    %v2722 = vshll.u32 %v2572, 16
    %v2724 = vor.u32 %v2721, %v2722
    %v2726 = vshrl.u32 %v2573, 16
    %v2728 = vrot.slane %v2726, 7
    %v2729 = vshll.u32 %v2573, 16
    %v2731 = vor.u32 %v2728, %v2729
    %v2733 = vshrl.u32 %v2574, 16
    %v2735 = vrot.slane %v2733, 7
    %v2736 = vshll.u32 %v2574, 16
    %v2738 = vor.u32 %v2735, %v2736
    %v2740 = vshrl.u32 %v2575, 16
    %v2742 = vrot.slane %v2740, 7
    %v2743 = vshll.u32 %v2575, 16
    %v2745 = vor.u32 %v2742, %v2743
    %v2747 = vshrl.u32 %v2576, 16
    %v2749 = vrot.slane %v2747, 7
    %v2750 = vshll.u32 %v2576, 16
    %v2752 = vor.u32 %v2749, %v2750
    %v2754 = vshrl.u32 %v2577, 16
    %v2756 = vrot.slane %v2754, 7
    %v2757 = vshll.u32 %v2577, 16
    %v2759 = vor.u32 %v2756, %v2757
    %v2761 = vshrl.u32 %v2578, 16
    %v2763 = vrot.slane %v2761, 7
    %v2764 = vshll.u32 %v2578, 16
    %v2766 = vor.u32 %v2763, %v2764
    %v2768 = vshrl.u32 %v2579, 16
    %v2770 = vrot.slane %v2768, 7
    %v2771 = vshll.u32 %v2579, 16
    %v2773 = vor.u32 %v2770, %v2771
    %v2775 = vshrl.u32 %v2580, 16
    %v2777 = vrot.slane %v2775, 7
    %v2778 = vshll.u32 %v2580, 16
    %v2780 = vor.u32 %v2777, %v2778
    %v2782 = vshrl.u32 %v2581, 16
    %v2784 = vrot.slane %v2782, 7
    %v2785 = vshll.u32 %v2581, 16
    %v2787 = vor.u32 %v2784, %v2785
    %v2789 = vshrl.u32 %v2582, 16
    %v2791 = vrot.slane %v2789, 7
    %v2792 = vshll.u32 %v2582, 16
    %v2794 = vor.u32 %v2791, %v2792
    %v2796 = vshrl.u32 %v2583, 16
    %v2798 = vrot.slane %v2796, 7
    %v2799 = vshll.u32 %v2583, 16
    %v2801 = vor.u32 %v2798, %v2799
    %v2803 = vshrl.u32 %v2584, 16
    %v2805 = vrot.slane %v2803, 7
    %v2806 = vshll.u32 %v2584, 16
    %v2808 = vor.u32 %v2805, %v2806
    %v2905 = vrot.slane %v2553, 7
    %v2906 = vrot.slane %v2554, 7
    %v2907 = vrot.slane %v2555, 7
    %v2908 = vrot.slane %v2556, 7
    %v2909 = vrot.slane %v2557, 7
    %v2910 = vrot.slane %v2558, 7
    %v2911 = vrot.slane %v2559, 7
    %v2912 = vrot.slane %v2560, 7
    %v2913 = vrot.slane %v2561, 7
    %v2914 = vrot.slane %v2562, 7
    %v2915 = vrot.slane %v2563, 7
    %v2916 = vrot.slane %v2564, 7
    %v2917 = vrot.slane %v2565, 7
    %v2918 = vrot.slane %v2566, 7
    %v2919 = vrot.slane %v2567, 7
    %v2920 = vrot.slane %v2568, 7
    %v2921 = vrot.slane %v2569, 7
    %v2922 = vrot.slane %v2570, 7
    %v2923 = vrot.slane %v2571, 7
    %v2924 = vrot.slane %v2572, 7
    %v2925 = vrot.slane %v2573, 7
    %v2926 = vrot.slane %v2574, 7
    %v2927 = vrot.slane %v2575, 7
    %v2928 = vrot.slane %v2576, 7
    %v2929 = vrot.slane %v2577, 7
    %v2930 = vrot.slane %v2578, 7
    %v2931 = vrot.slane %v2579, 7
    %v2932 = vrot.slane %v2580, 7
    %v2933 = vrot.slane %v2581, 7
    %v2934 = vrot.slane %v2582, 7
    %v2935 = vrot.slane %v2583, 7
    %v2936 = vrot.slane %v2584, 7
    %v2969 = vsel %vm556, %v2553, %v2591
    %v2970 = vsel %vm556, %v2554, %v2598
    %v2971 = vsel %vm556, %v2555, %v2605
    %v2972 = vsel %vm556, %v2556, %v2612
    %v2973 = vsel %vm556, %v2557, %v2619
    %v2974 = vsel %vm556, %v2558, %v2626
    %v2975 = vsel %vm556, %v2559, %v2633
    %v2976 = vsel %vm556, %v2560, %v2640
    %v2977 = vsel %vm556, %v2561, %v2647
    %v2978 = vsel %vm556, %v2562, %v2654
    %v2979 = vsel %vm556, %v2563, %v2661
    %v2980 = vsel %vm556, %v2564, %v2668
    %v2981 = vsel %vm556, %v2565, %v2675
    %v2982 = vsel %vm556, %v2566, %v2682
    %v2983 = vsel %vm556, %v2567, %v2689
    %v2984 = vsel %vm556, %v2568, %v2696
    %v2985 = vsel %vm556, %v2569, %v2703
    %v2986 = vsel %vm556, %v2570, %v2710
    %v2987 = vsel %vm556, %v2571, %v2717
    %v2988 = vsel %vm556, %v2572, %v2724
    %v2989 = vsel %vm556, %v2573, %v2731
    %v2990 = vsel %vm556, %v2574, %v2738
    %v2991 = vsel %vm556, %v2575, %v2745
    %v2992 = vsel %vm556, %v2576, %v2752
    %v2993 = vsel %vm556, %v2577, %v2759
    %v2994 = vsel %vm556, %v2578, %v2766
    %v2995 = vsel %vm556, %v2579, %v2773
    %v2996 = vsel %vm556, %v2580, %v2780
    %v2997 = vsel %vm556, %v2581, %v2787
    %v2998 = vsel %vm556, %v2582, %v2794
    %v2999 = vsel %vm556, %v2583, %v2801
    %v3000 = vsel %vm556, %v2584, %v2808
    %v3001 = vsel %vm556, %v2588, %v2905
    %v3002 = vsel %vm556, %v2595, %v2906
    %v3003 = vsel %vm556, %v2602, %v2907
    %v3004 = vsel %vm556, %v2609, %v2908
    %v3005 = vsel %vm556, %v2616, %v2909
    %v3006 = vsel %vm556, %v2623, %v2910
    %v3007 = vsel %vm556, %v2630, %v2911
    %v3008 = vsel %vm556, %v2637, %v2912
    %v3009 = vsel %vm556, %v2644, %v2913
    %v3010 = vsel %vm556, %v2651, %v2914
    %v3011 = vsel %vm556, %v2658, %v2915
    %v3012 = vsel %vm556, %v2665, %v2916
    %v3013 = vsel %vm556, %v2672, %v2917
    %v3014 = vsel %vm556, %v2679, %v2918
    %v3015 = vsel %vm556, %v2686, %v2919
    %v3016 = vsel %vm556, %v2693, %v2920
    %v3017 = vsel %vm556, %v2700, %v2921
    %v3018 = vsel %vm556, %v2707, %v2922
    %v3019 = vsel %vm556, %v2714, %v2923
    %v3020 = vsel %vm556, %v2721, %v2924
    %v3021 = vsel %vm556, %v2728, %v2925
    %v3022 = vsel %vm556, %v2735, %v2926
    %v3023 = vsel %vm556, %v2742, %v2927
    %v3024 = vsel %vm556, %v2749, %v2928
    %v3025 = vsel %vm556, %v2756, %v2929
    %v3026 = vsel %vm556, %v2763, %v2930
    %v3027 = vsel %vm556, %v2770, %v2931
    %v3028 = vsel %vm556, %v2777, %v2932
    %v3029 = vsel %vm556, %v2784, %v2933
    %v3030 = vsel %vm556, %v2791, %v2934
    %v3031 = vsel %vm556, %v2798, %v2935
    %v3032 = vsel %vm556, %v2805, %v2936
    %3093 = vrot.lane.b32.xlu0 0, 48
    %v3094 = vpop.permute.xlu0 %3093
    %3095 = vrot.lane.b32.xlu0 %v2969, 48
    %v3096 = vpop.permute.xlu0 %3095
    %3097 = vrot.lane.b32.xlu0 %v3001, 48
    %v3098 = vpop.permute.xlu0 %3097
    %3099 = vrot.lane.b32.xlu0 %v2970, 48
    %v3100 = vpop.permute.xlu0 %3099
    %3101 = vrot.lane.b32.xlu0 %v3002, 48
    %v3102 = vpop.permute.xlu0 %3101
    %3103 = vrot.lane.b32.xlu0 %v2971, 48
    %v3104 = vpop.permute.xlu0 %3103
    %3105 = vrot.lane.b32.xlu0 %v3003, 48
    %v3106 = vpop.permute.xlu0 %3105
    %3107 = vrot.lane.b32.xlu0 %v2972, 48
    %v3108 = vpop.permute.xlu0 %3107
    %3109 = vrot.lane.b32.xlu0 %v3004, 48
    %v3110 = vpop.permute.xlu0 %3109
    %3111 = vrot.lane.b32.xlu0 %v2973, 48
    %v3112 = vpop.permute.xlu0 %3111
    %3113 = vrot.lane.b32.xlu0 %v3005, 48
    %v3114 = vpop.permute.xlu0 %3113
    %3115 = vrot.lane.b32.xlu0 %v2974, 48
    %v3116 = vpop.permute.xlu0 %3115
    %3117 = vrot.lane.b32.xlu0 %v3006, 48
    %v3118 = vpop.permute.xlu0 %3117
    %3119 = vrot.lane.b32.xlu0 %v2975, 48
    %v3120 = vpop.permute.xlu0 %3119
    %3121 = vrot.lane.b32.xlu0 %v3007, 48
    %v3122 = vpop.permute.xlu0 %3121
    %3123 = vrot.lane.b32.xlu0 %v2976, 48
    %v3124 = vpop.permute.xlu0 %3123
    %3125 = vrot.lane.b32.xlu0 %v3008, 48
    %v3126 = vpop.permute.xlu0 %3125
    %3127 = vrot.lane.b32.xlu0 %v2977, 48
    %v3128 = vpop.permute.xlu0 %3127
    %3129 = vrot.lane.b32.xlu0 %v3009, 48
    %v3130 = vpop.permute.xlu0 %3129
    %3131 = vrot.lane.b32.xlu0 %v2978, 48
    %v3132 = vpop.permute.xlu0 %3131
    %3133 = vrot.lane.b32.xlu0 %v3010, 48
    %v3134 = vpop.permute.xlu0 %3133
    %3135 = vrot.lane.b32.xlu0 %v2979, 48
    %v3136 = vpop.permute.xlu0 %3135
    %3137 = vrot.lane.b32.xlu0 %v3011, 48
    %v3138 = vpop.permute.xlu0 %3137
    %3139 = vrot.lane.b32.xlu0 %v2980, 48
    %v3140 = vpop.permute.xlu0 %3139
    %3141 = vrot.lane.b32.xlu0 %v3012, 48
    %v3142 = vpop.permute.xlu0 %3141
    %3143 = vrot.lane.b32.xlu0 %v2981, 48
    %v3144 = vpop.permute.xlu0 %3143
    %3145 = vrot.lane.b32.xlu0 %v3013, 48
    %v3146 = vpop.permute.xlu0 %3145
    %3147 = vrot.lane.b32.xlu0 %v2982, 48
    %v3148 = vpop.permute.xlu0 %3147
    %3149 = vrot.lane.b32.xlu0 %v3014, 48
    %v3150 = vpop.permute.xlu0 %3149
    %3151 = vrot.lane.b32.xlu0 %v2983, 48
    %v3152 = vpop.permute.xlu0 %3151
    %3153 = vrot.lane.b32.xlu0 %v3015, 48
    %v3154 = vpop.permute.xlu0 %3153
    %3155 = vrot.lane.b32.xlu0 %v2985, 48
    %v3156 = vpop.permute.xlu0 %3155
    %3157 = vrot.lane.b32.xlu0 %v3017, 48
    %v3158 = vpop.permute.xlu0 %3157
    %3159 = vrot.lane.b32.xlu0 %v2986, 48
    %v3160 = vpop.permute.xlu0 %3159
    %3161 = vrot.lane.b32.xlu0 %v3018, 48
    %v3162 = vpop.permute.xlu0 %3161
    %3163 = vrot.lane.b32.xlu0 %v2987, 48
    %v3164 = vpop.permute.xlu0 %3163
    %3165 = vrot.lane.b32.xlu0 %v3019, 48
    %v3166 = vpop.permute.xlu0 %3165
    %3167 = vrot.lane.b32.xlu0 %v2988, 48
    %v3168 = vpop.permute.xlu0 %3167
    %3169 = vrot.lane.b32.xlu0 %v3020, 48
    %v3170 = vpop.permute.xlu0 %3169
    %3171 = vrot.lane.b32.xlu0 %v2989, 48
    %v3172 = vpop.permute.xlu0 %3171
    %3173 = vrot.lane.b32.xlu0 %v3021, 48
    %v3174 = vpop.permute.xlu0 %3173
    %3175 = vrot.lane.b32.xlu0 %v2990, 48
    %v3176 = vpop.permute.xlu0 %3175
    %3177 = vrot.lane.b32.xlu0 %v3022, 48
    %v3178 = vpop.permute.xlu0 %3177
    %3179 = vrot.lane.b32.xlu0 %v2991, 48
    %v3180 = vpop.permute.xlu0 %3179
    %3181 = vrot.lane.b32.xlu0 %v3023, 48
    %v3182 = vpop.permute.xlu0 %3181
    %3183 = vrot.lane.b32.xlu0 %v2992, 48
    %v3184 = vpop.permute.xlu0 %3183
    %3185 = vrot.lane.b32.xlu0 %v3024, 48
    %v3186 = vpop.permute.xlu0 %3185
    %3187 = vrot.lane.b32.xlu0 %v2993, 48
    %v3188 = vpop.permute.xlu0 %3187
    %3189 = vrot.lane.b32.xlu0 %v3025, 48
    %v3190 = vpop.permute.xlu0 %3189
    %3191 = vrot.lane.b32.xlu0 %v2994, 48
    %v3192 = vpop.permute.xlu0 %3191
    %3193 = vrot.lane.b32.xlu0 %v3026, 48
    %v3194 = vpop.permute.xlu0 %3193
    %3195 = vrot.lane.b32.xlu0 %v2995, 48
    %v3196 = vpop.permute.xlu0 %3195
    %3197 = vrot.lane.b32.xlu0 %v3027, 48
    %v3198 = vpop.permute.xlu0 %3197
    %3199 = vrot.lane.b32.xlu0 %v2996, 48
    %v3200 = vpop.permute.xlu0 %3199
    %3201 = vrot.lane.b32.xlu0 %v3028, 48
    %v3202 = vpop.permute.xlu0 %3201
    %3203 = vrot.lane.b32.xlu0 %v2997, 48
    %v3204 = vpop.permute.xlu0 %3203
    %3205 = vrot.lane.b32.xlu0 %v3029, 48
    %v3206 = vpop.permute.xlu0 %3205
    %3207 = vrot.lane.b32.xlu0 %v2998, 48
    %v3208 = vpop.permute.xlu0 %3207
    %3209 = vrot.lane.b32.xlu0 %v3030, 48
    %v3210 = vpop.permute.xlu0 %3209
    %3211 = vrot.lane.b32.xlu0 %v2999, 48
    %v3212 = vpop.permute.xlu0 %3211
    %3213 = vrot.lane.b32.xlu0 %v3031, 48
    %v3214 = vpop.permute.xlu0 %3213
    %3219 = vrot.lane.b32.xlu0 %v2969, 96
    %v3220 = vpop.permute.xlu0 %3219
    %3221 = vrot.lane.b32.xlu0 %v3001, 96
    %v3222 = vpop.permute.xlu0 %3221
    %3223 = vrot.lane.b32.xlu0 %v2970, 96
    %v3224 = vpop.permute.xlu0 %3223
    %3225 = vrot.lane.b32.xlu0 %v3002, 96
    %v3226 = vpop.permute.xlu0 %3225
    %3227 = vrot.lane.b32.xlu0 %v2971, 96
    %v3228 = vpop.permute.xlu0 %3227
    %3229 = vrot.lane.b32.xlu0 %v3003, 96
    %v3230 = vpop.permute.xlu0 %3229
    %3231 = vrot.lane.b32.xlu0 %v2972, 96
    %v3232 = vpop.permute.xlu0 %3231
    %3233 = vrot.lane.b32.xlu0 %v3004, 96
    %v3234 = vpop.permute.xlu0 %3233
    %3235 = vrot.lane.b32.xlu0 %v2973, 96
    %v3236 = vpop.permute.xlu0 %3235
    %3237 = vrot.lane.b32.xlu0 %v3005, 96
    %v3238 = vpop.permute.xlu0 %3237
    %3239 = vrot.lane.b32.xlu0 %v2974, 96
    %v3240 = vpop.permute.xlu0 %3239
    %3241 = vrot.lane.b32.xlu0 %v3006, 96
    %v3242 = vpop.permute.xlu0 %3241
    %3243 = vrot.lane.b32.xlu0 %v2975, 96
    %v3244 = vpop.permute.xlu0 %3243
    %3245 = vrot.lane.b32.xlu0 %v3007, 96
    %v3246 = vpop.permute.xlu0 %3245
    %3247 = vrot.lane.b32.xlu0 %v2976, 96
    %v3248 = vpop.permute.xlu0 %3247
    %3249 = vrot.lane.b32.xlu0 %v3008, 96
    %v3250 = vpop.permute.xlu0 %3249
    %3251 = vrot.lane.b32.xlu0 %v2977, 96
    %v3252 = vpop.permute.xlu0 %3251
    %3253 = vrot.lane.b32.xlu0 %v3009, 96
    %v3254 = vpop.permute.xlu0 %3253
    %3255 = vrot.lane.b32.xlu0 %v2978, 96
    %v3256 = vpop.permute.xlu0 %3255
    %3257 = vrot.lane.b32.xlu0 %v3010, 96
    %v3258 = vpop.permute.xlu0 %3257
    %3259 = vrot.lane.b32.xlu0 %v2979, 96
    %v3260 = vpop.permute.xlu0 %3259
    %3261 = vrot.lane.b32.xlu0 %v3011, 96
    %v3262 = vpop.permute.xlu0 %3261
    %3263 = vrot.lane.b32.xlu0 %v2980, 96
    %v3264 = vpop.permute.xlu0 %3263
    %3265 = vrot.lane.b32.xlu0 %v3012, 96
    %v3266 = vpop.permute.xlu0 %3265
    %3267 = vrot.lane.b32.xlu0 %v2981, 96
    %v3268 = vpop.permute.xlu0 %3267
    %3269 = vrot.lane.b32.xlu0 %v3013, 96
    %v3270 = vpop.permute.xlu0 %3269
    %3271 = vrot.lane.b32.xlu0 %v2982, 96
    %v3272 = vpop.permute.xlu0 %3271
    %3273 = vrot.lane.b32.xlu0 %v3014, 96
    %v3274 = vpop.permute.xlu0 %3273
    %3275 = vrot.lane.b32.xlu0 %v2983, 96
    %v3276 = vpop.permute.xlu0 %3275
    %3277 = vrot.lane.b32.xlu0 %v3015, 96
    %v3278 = vpop.permute.xlu0 %3277
    %3279 = vrot.lane.b32.xlu0 %v2984, 96
    %v3280 = vpop.permute.xlu0 %3279
    %3281 = vrot.lane.b32.xlu0 %v3016, 96
    %v3282 = vpop.permute.xlu0 %3281
    %3283 = vrot.lane.b32.xlu0 %v2985, 96
    %v3284 = vpop.permute.xlu0 %3283
    %3285 = vrot.lane.b32.xlu0 %v3017, 96
    %v3286 = vpop.permute.xlu0 %3285
    %3287 = vrot.lane.b32.xlu0 %v2986, 96
    %v3288 = vpop.permute.xlu0 %3287
    %3289 = vrot.lane.b32.xlu0 %v3018, 96
    %v3290 = vpop.permute.xlu0 %3289
    %3291 = vrot.lane.b32.xlu0 %v2987, 96
    %v3292 = vpop.permute.xlu0 %3291
    %3293 = vrot.lane.b32.xlu0 %v3019, 96
    %v3294 = vpop.permute.xlu0 %3293
    %3295 = vrot.lane.b32.xlu0 %v2988, 96
    %v3296 = vpop.permute.xlu0 %3295
    %3297 = vrot.lane.b32.xlu0 %v3020, 96
    %v3298 = vpop.permute.xlu0 %3297
    %3299 = vrot.lane.b32.xlu0 %v2989, 96
    %v3300 = vpop.permute.xlu0 %3299
    %3301 = vrot.lane.b32.xlu0 %v3021, 96
    %v3302 = vpop.permute.xlu0 %3301
    %3303 = vrot.lane.b32.xlu0 %v2990, 96
    %v3304 = vpop.permute.xlu0 %3303
    %3305 = vrot.lane.b32.xlu0 %v3022, 96
    %v3306 = vpop.permute.xlu0 %3305
    %3307 = vrot.lane.b32.xlu0 %v2991, 96
    %v3308 = vpop.permute.xlu0 %3307
    %3309 = vrot.lane.b32.xlu0 %v3023, 96
    %v3310 = vpop.permute.xlu0 %3309
    %3311 = vrot.lane.b32.xlu0 %v2992, 96
    %v3312 = vpop.permute.xlu0 %3311
    %3313 = vrot.lane.b32.xlu0 %v3024, 96
    %v3314 = vpop.permute.xlu0 %3313
    %3315 = vrot.lane.b32.xlu0 %v2993, 96
    %v3316 = vpop.permute.xlu0 %3315
    %3317 = vrot.lane.b32.xlu0 %v3025, 96
    %v3318 = vpop.permute.xlu0 %3317
    %3319 = vrot.lane.b32.xlu0 %v2994, 96
    %v3320 = vpop.permute.xlu0 %3319
    %3321 = vrot.lane.b32.xlu0 %v3026, 96
    %v3322 = vpop.permute.xlu0 %3321
    %3323 = vrot.lane.b32.xlu0 %v2995, 96
    %v3324 = vpop.permute.xlu0 %3323
    %3325 = vrot.lane.b32.xlu0 %v3027, 96
    %v3326 = vpop.permute.xlu0 %3325
    %3327 = vrot.lane.b32.xlu0 %v2996, 96
    %v3328 = vpop.permute.xlu0 %3327
    %3329 = vrot.lane.b32.xlu0 %v3028, 96
    %v3330 = vpop.permute.xlu0 %3329
    %3331 = vrot.lane.b32.xlu0 %v2997, 96
    %v3332 = vpop.permute.xlu0 %3331
    %3333 = vrot.lane.b32.xlu0 %v3029, 96
    %v3334 = vpop.permute.xlu0 %3333
    %3335 = vrot.lane.b32.xlu0 %v2998, 96
    %v3336 = vpop.permute.xlu0 %3335
    %3337 = vrot.lane.b32.xlu0 %v3030, 96
    %v3338 = vpop.permute.xlu0 %3337
    %3339 = vrot.lane.b32.xlu0 %v2999, 96
    %v3340 = vpop.permute.xlu0 %3339
    %3341 = vrot.lane.b32.xlu0 %v3031, 96
    %v3342 = vpop.permute.xlu0 %3341
    %3343 = vrot.lane.b32.xlu0 %v3000, 96
    %v3344 = vpop.permute.xlu0 %3343
    %3345 = vrot.lane.b32.xlu0 %v3032, 96
    %v3346 = vpop.permute.xlu0 %3345
    %vm3347 = vcmask 392192
    %v3349 = vsel %vm3347, 0, %v3094
    %v3351 = vsel %vm3347, 0, %v3096
    %v3353 = vsel %vm3347, 0, %v3098
    %v3356 = vsel %vm3347, %v2969, %v3100
    %v3359 = vsel %vm3347, %v3001, %v3102
    %v3362 = vsel %vm3347, %v2970, %v3104
    %v3365 = vsel %vm3347, %v3002, %v3106
    %v3368 = vsel %vm3347, %v2971, %v3108
    %v3371 = vsel %vm3347, %v3003, %v3110
    %v3374 = vsel %vm3347, %v2972, %v3112
    %v3377 = vsel %vm3347, %v3004, %v3114
    %v3380 = vsel %vm3347, %v2973, %v3116
    %v3383 = vsel %vm3347, %v3005, %v3118
    %v3386 = vsel %vm3347, %v2974, %v3120
    %v3389 = vsel %vm3347, %v3006, %v3122
    %v3392 = vsel %vm3347, %v2975, %v3124
    %v3395 = vsel %vm3347, %v3007, %v3126
    %v3398 = vsel %vm3347, %v2976, %v3128
    %v3401 = vsel %vm3347, %v3008, %v3130
    %v3404 = vsel %vm3347, %v2977, %v3132
    %v3407 = vsel %vm3347, %v3009, %v3134
    %v3410 = vsel %vm3347, %v2978, %v3136
    %v3413 = vsel %vm3347, %v3010, %v3138
    %v3416 = vsel %vm3347, %v2979, %v3140
    %v3419 = vsel %vm3347, %v3011, %v3142
    %v3422 = vsel %vm3347, %v2980, %v3144
    %v3425 = vsel %vm3347, %v3012, %v3146
    %v3428 = vsel %vm3347, %v2981, %v3148
    %v3431 = vsel %vm3347, %v3013, %v3150
    %v3434 = vsel %vm3347, %v2982, %v3152
    %v3437 = vsel %vm3347, %v3014, %v3154
    %v3439 = vsel %vm3347, 0, %v3156
    %v3441 = vsel %vm3347, 0, %v3158
    %v3444 = vsel %vm3347, %v2985, %v3160
    %v3447 = vsel %vm3347, %v3017, %v3162
    %v3450 = vsel %vm3347, %v2986, %v3164
    %v3453 = vsel %vm3347, %v3018, %v3166
    %v3456 = vsel %vm3347, %v2987, %v3168
    %v3459 = vsel %vm3347, %v3019, %v3170
    %v3462 = vsel %vm3347, %v2988, %v3172
    %v3465 = vsel %vm3347, %v3020, %v3174
    %v3468 = vsel %vm3347, %v2989, %v3176
    %v3471 = vsel %vm3347, %v3021, %v3178
    %v3474 = vsel %vm3347, %v2990, %v3180
    %v3477 = vsel %vm3347, %v3022, %v3182
    %v3480 = vsel %vm3347, %v2991, %v3184
    %v3483 = vsel %vm3347, %v3023, %v3186
    %v3486 = vsel %vm3347, %v2992, %v3188
    %v3489 = vsel %vm3347, %v3024, %v3190
    %v3492 = vsel %vm3347, %v2993, %v3192
    %v3495 = vsel %vm3347, %v3025, %v3194
    %v3498 = vsel %vm3347, %v2994, %v3196
    %v3501 = vsel %vm3347, %v3026, %v3198
    %v3504 = vsel %vm3347, %v2995, %v3200
    %v3507 = vsel %vm3347, %v3027, %v3202
    %v3510 = vsel %vm3347, %v2996, %v3204
    %v3513 = vsel %vm3347, %v3028, %v3206
    %v3516 = vsel %vm3347, %v2997, %v3208
    %v3519 = vsel %vm3347, %v3029, %v3210
    %v3522 = vsel %vm3347, %v2998, %v3212
    %v3525 = vsel %vm3347, %v3030, %v3214
    %vm3526 = vcmask 785408
    %v3528 = vsel %vm3526, %v3349, %v3220
    %v3531 = vsel %vm3526, %v3349, %v3222
    %v3533 = vsel %vm3526, %v3351, %v3224
    %v3536 = vsel %vm3526, %v3353, %v3226
    %v3538 = vsel %vm3526, %v3356, %v3228
    %v3541 = vsel %vm3526, %v3359, %v3230
    %v3543 = vsel %vm3526, %v3362, %v3232
    %v3546 = vsel %vm3526, %v3365, %v3234
    %v3548 = vsel %vm3526, %v3368, %v3236
    %v3551 = vsel %vm3526, %v3371, %v3238
    %v3553 = vsel %vm3526, %v3374, %v3240
    %v3556 = vsel %vm3526, %v3377, %v3242
    %v3558 = vsel %vm3526, %v3380, %v3244
    %v3561 = vsel %vm3526, %v3383, %v3246
    %v3563 = vsel %vm3526, %v3386, %v3248
    %v3566 = vsel %vm3526, %v3389, %v3250
    %v3568 = vsel %vm3526, %v3392, %v3252
    %v3571 = vsel %vm3526, %v3395, %v3254
    %v3573 = vsel %vm3526, %v3398, %v3256
    %v3576 = vsel %vm3526, %v3401, %v3258
    %v3578 = vsel %vm3526, %v3404, %v3260
    %v3581 = vsel %vm3526, %v3407, %v3262
    %v3583 = vsel %vm3526, %v3410, %v3264
    %v3586 = vsel %vm3526, %v3413, %v3266
    %v3588 = vsel %vm3526, %v3416, %v3268
    %v3591 = vsel %vm3526, %v3419, %v3270
    %v3593 = vsel %vm3526, %v3422, %v3272
    %v3596 = vsel %vm3526, %v3425, %v3274
    %v3598 = vsel %vm3526, %v3428, %v3276
    %v3601 = vsel %vm3526, %v3431, %v3278
    %v3603 = vsel %vm3526, %v3434, %v3280
    %v3606 = vsel %vm3526, %v3437, %v3282
    %v3608 = vsel %vm3526, %v3349, %v3284
    %v3611 = vsel %vm3526, %v3349, %v3286
    %v3613 = vsel %vm3526, %v3439, %v3288
    %v3616 = vsel %vm3526, %v3441, %v3290
    %v3618 = vsel %vm3526, %v3444, %v3292
    %v3621 = vsel %vm3526, %v3447, %v3294
    %v3623 = vsel %vm3526, %v3450, %v3296
    %v3626 = vsel %vm3526, %v3453, %v3298
    %v3628 = vsel %vm3526, %v3456, %v3300
    %v3631 = vsel %vm3526, %v3459, %v3302
    %v3633 = vsel %vm3526, %v3462, %v3304
    %v3636 = vsel %vm3526, %v3465, %v3306
    %v3638 = vsel %vm3526, %v3468, %v3308
    %v3641 = vsel %vm3526, %v3471, %v3310
    %v3643 = vsel %vm3526, %v3474, %v3312
    %v3646 = vsel %vm3526, %v3477, %v3314
    %v3648 = vsel %vm3526, %v3480, %v3316
    %v3651 = vsel %vm3526, %v3483, %v3318
    %v3653 = vsel %vm3526, %v3486, %v3320
    %v3656 = vsel %vm3526, %v3489, %v3322
    %v3658 = vsel %vm3526, %v3492, %v3324
    %v3661 = vsel %vm3526, %v3495, %v3326
    %v3663 = vsel %vm3526, %v3498, %v3328
    %v3666 = vsel %vm3526, %v3501, %v3330
    %v3668 = vsel %vm3526, %v3504, %v3332
    %v3671 = vsel %vm3526, %v3507, %v3334
    %v3673 = vsel %vm3526, %v3510, %v3336
    %v3676 = vsel %vm3526, %v3513, %v3338
    %v3678 = vsel %vm3526, %v3516, %v3340
    %v3681 = vsel %vm3526, %v3519, %v3342
    %v3683 = vsel %vm3526, %v3522, %v3344
    %v3686 = vsel %vm3526, %v3525, %v3346
    %v3687 = vld [vmem:[#allocation7] sm:$0xf]
    %v3688 = vld [vmem:[#allocation7 + $0x4] sm:$0xf]
    %v3689 = vld [vmem:[#allocation7 + $0x8] sm:$0xf]
    %v3690 = vld [vmem:[#allocation7 + $0xc] sm:$0xf]
    %v3691 = vld [vmem:[#allocation7 + $0x10] sm:$0xf]
    %v3692 = vld [vmem:[#allocation7 + $0x14] sm:$0xf]
    %v3693 = vld [vmem:[#allocation7 + $0x18] sm:$0xf]
    %v3694 = vld [vmem:[#allocation7 + $0x1c] sm:$0xf]
    %v3695 = vld [vmem:[#allocation7 + $0x20] sm:$0xf]
    %v3696 = vld [vmem:[#allocation7 + $0x24] sm:$0xf]
    %v3697 = vld [vmem:[#allocation7 + $0x28] sm:$0xf]
    %v3698 = vld [vmem:[#allocation7 + $0x2c] sm:$0xf]
    %v3699 = vld [vmem:[#allocation7 + $0x30] sm:$0xf]
    %v3700 = vld [vmem:[#allocation7 + $0x34] sm:$0xf]
    %v3701 = vld [vmem:[#allocation7 + $0x38] sm:$0xf]
    %v3702 = vld [vmem:[#allocation7 + $0x3c] sm:$0xf]
    %v3703 = vld [vmem:[#allocation7 + $0x40] sm:$0xf]
    %v3704 = vld [vmem:[#allocation7 + $0x44] sm:$0xf]
    %v3705 = vshrl.u32 %v3528, 16
    %v3707 = vshll.u32 %v3528, 16
    %v3709 = vrot.slane %v3707, 1
    %v3710 = vor.u32 %v3705, %v3709
    %v3711 = vshll.u32 %v3531, 16
    %v3713 = vrot.slane %v3711, 1
    %v3714 = vsel %vm1245, %v3710, %v3713
    %v3715 = vshrl.u32 %v3220, 16
    %v3717 = vshll.u32 %v3220, 16
    %v3719 = vrot.slane %v3717, 1
    %v3720 = vor.u32 %v3715, %v3719
    %v3721 = vshll.u32 %v3222, 16
    %v3723 = vrot.slane %v3721, 1
    %v3724 = vsel %vm1245, %v3720, %v3723
    %v3725 = vshrl.u32 %v3533, 16
    %v3727 = vshll.u32 %v3533, 16
    %v3729 = vrot.slane %v3727, 1
    %v3730 = vor.u32 %v3725, %v3729
    %v3731 = vshll.u32 %v3536, 16
    %v3733 = vrot.slane %v3731, 1
    %v3734 = vsel %vm1245, %v3730, %v3733
    %v3735 = vshrl.u32 %v3224, 16
    %v3737 = vshll.u32 %v3224, 16
    %v3739 = vrot.slane %v3737, 1
    %v3740 = vor.u32 %v3735, %v3739
    %v3741 = vshll.u32 %v3226, 16
    %v3743 = vrot.slane %v3741, 1
    %v3744 = vsel %vm1245, %v3740, %v3743
    %v3745 = vshrl.u32 %v3538, 16
    %v3747 = vshll.u32 %v3538, 16
    %v3749 = vrot.slane %v3747, 1
    %v3750 = vor.u32 %v3745, %v3749
    %v3751 = vshll.u32 %v3541, 16
    %v3753 = vrot.slane %v3751, 1
    %v3754 = vsel %vm1245, %v3750, %v3753
    %v3755 = vshrl.u32 %v3228, 16
    %v3757 = vshll.u32 %v3228, 16
    %v3759 = vrot.slane %v3757, 1
    %v3760 = vor.u32 %v3755, %v3759
    %v3761 = vshll.u32 %v3230, 16
    %v3763 = vrot.slane %v3761, 1
    %v3764 = vsel %vm1245, %v3760, %v3763
    %v3765 = vshrl.u32 %v3543, 16
    %v3767 = vshll.u32 %v3543, 16
    %v3769 = vrot.slane %v3767, 1
    %v3770 = vor.u32 %v3765, %v3769
    %v3771 = vshll.u32 %v3546, 16
    %v3773 = vrot.slane %v3771, 1
    %v3774 = vsel %vm1245, %v3770, %v3773
    %v3775 = vshrl.u32 %v3232, 16
    %v3777 = vshll.u32 %v3232, 16
    %v3779 = vrot.slane %v3777, 1
    %v3780 = vor.u32 %v3775, %v3779
    %v3781 = vshll.u32 %v3234, 16
    %v3783 = vrot.slane %v3781, 1
    %v3784 = vsel %vm1245, %v3780, %v3783
    %v3785 = vshrl.u32 %v3548, 16
    %v3787 = vshll.u32 %v3548, 16
    %v3789 = vrot.slane %v3787, 1
    %v3790 = vor.u32 %v3785, %v3789
    %v3791 = vshll.u32 %v3551, 16
    %v3793 = vrot.slane %v3791, 1
    %v3794 = vsel %vm1245, %v3790, %v3793
    %v3795 = vshrl.u32 %v3236, 16
    %v3797 = vshll.u32 %v3236, 16
    %v3799 = vrot.slane %v3797, 1
    %v3800 = vor.u32 %v3795, %v3799
    %v3801 = vshll.u32 %v3238, 16
    %v3803 = vrot.slane %v3801, 1
    %v3804 = vsel %vm1245, %v3800, %v3803
    %v3805 = vshrl.u32 %v3553, 16
    %v3807 = vshll.u32 %v3553, 16
    %v3809 = vrot.slane %v3807, 1
    %v3810 = vor.u32 %v3805, %v3809
    %v3811 = vshll.u32 %v3556, 16
    %v3813 = vrot.slane %v3811, 1
    %v3814 = vsel %vm1245, %v3810, %v3813
    %v3815 = vshrl.u32 %v3240, 16
    %v3817 = vshll.u32 %v3240, 16
    %v3819 = vrot.slane %v3817, 1
    %v3820 = vor.u32 %v3815, %v3819
    %v3821 = vshll.u32 %v3242, 16
    %v3823 = vrot.slane %v3821, 1
    %v3824 = vsel %vm1245, %v3820, %v3823
    %v3825 = vshrl.u32 %v3558, 16
    %v3827 = vshll.u32 %v3558, 16
    %v3829 = vrot.slane %v3827, 1
    %v3830 = vor.u32 %v3825, %v3829
    %v3831 = vshll.u32 %v3561, 16
    %v3833 = vrot.slane %v3831, 1
    %v3834 = vsel %vm1245, %v3830, %v3833
    %v3835 = vshrl.u32 %v3244, 16
    %v3837 = vshll.u32 %v3244, 16
    %v3839 = vrot.slane %v3837, 1
    %v3840 = vor.u32 %v3835, %v3839
    %v3841 = vshll.u32 %v3246, 16
    %v3843 = vrot.slane %v3841, 1
    %v3844 = vsel %vm1245, %v3840, %v3843
    %v3845 = vshrl.u32 %v3563, 16
    %v3847 = vshll.u32 %v3563, 16
    %v3849 = vrot.slane %v3847, 1
    %v3850 = vor.u32 %v3845, %v3849
    %v3851 = vshll.u32 %v3566, 16
    %v3853 = vrot.slane %v3851, 1
    %v3854 = vsel %vm1245, %v3850, %v3853
    %v3855 = vshrl.u32 %v3248, 16
    %v3857 = vshll.u32 %v3248, 16
    %v3859 = vrot.slane %v3857, 1
    %v3860 = vor.u32 %v3855, %v3859
    %v3861 = vshll.u32 %v3250, 16
    %v3863 = vrot.slane %v3861, 1
    %v3864 = vsel %vm1245, %v3860, %v3863
    %v3865 = vshrl.u32 %v3568, 16
    %v3867 = vshll.u32 %v3568, 16
    %v3869 = vrot.slane %v3867, 1
    %v3870 = vor.u32 %v3865, %v3869
    %v3871 = vshll.u32 %v3571, 16
    %v3873 = vrot.slane %v3871, 1
    %v3874 = vsel %vm1245, %v3870, %v3873
    %v3875 = vshrl.u32 %v3252, 16
    %v3877 = vshll.u32 %v3252, 16
    %v3879 = vrot.slane %v3877, 1
    %v3880 = vor.u32 %v3875, %v3879
    %v3881 = vshll.u32 %v3254, 16
    %v3883 = vrot.slane %v3881, 1
    %v3884 = vsel %vm1245, %v3880, %v3883
    %v3885 = vshrl.u32 %v3573, 16
    %v3887 = vshll.u32 %v3573, 16
    %v3889 = vrot.slane %v3887, 1
    %v3890 = vor.u32 %v3885, %v3889
    %v3891 = vshll.u32 %v3576, 16
    %v3893 = vrot.slane %v3891, 1
    %v3894 = vsel %vm1245, %v3890, %v3893
    %v3895 = vshrl.u32 %v3256, 16
    %v3897 = vshll.u32 %v3256, 16
    %v3899 = vrot.slane %v3897, 1
    %v3900 = vor.u32 %v3895, %v3899
    %v3901 = vshll.u32 %v3258, 16
    %v3903 = vrot.slane %v3901, 1
    %v3904 = vsel %vm1245, %v3900, %v3903
    %v3905 = vshrl.u32 %v3578, 16
    %v3907 = vshll.u32 %v3578, 16
    %v3909 = vrot.slane %v3907, 1
    %v3910 = vor.u32 %v3905, %v3909
    %v3911 = vshll.u32 %v3581, 16
    %v3913 = vrot.slane %v3911, 1
    %v3914 = vsel %vm1245, %v3910, %v3913
    %v3915 = vshrl.u32 %v3260, 16
    %v3917 = vshll.u32 %v3260, 16
    %v3919 = vrot.slane %v3917, 1
    %v3920 = vor.u32 %v3915, %v3919
    %v3921 = vshll.u32 %v3262, 16
    %v3923 = vrot.slane %v3921, 1
    %v3924 = vsel %vm1245, %v3920, %v3923
    %v3925 = vshrl.u32 %v3583, 16
    %v3927 = vshll.u32 %v3583, 16
    %v3929 = vrot.slane %v3927, 1
    %v3930 = vor.u32 %v3925, %v3929
    %v3931 = vshll.u32 %v3586, 16
    %v3933 = vrot.slane %v3931, 1
    %v3934 = vsel %vm1245, %v3930, %v3933
    %v3935 = vshrl.u32 %v3264, 16
    %v3937 = vshll.u32 %v3264, 16
    %v3939 = vrot.slane %v3937, 1
    %v3940 = vor.u32 %v3935, %v3939
    %v3941 = vshll.u32 %v3266, 16
    %v3943 = vrot.slane %v3941, 1
    %v3944 = vsel %vm1245, %v3940, %v3943
    %v3945 = vshrl.u32 %v3588, 16
    %v3947 = vshll.u32 %v3588, 16
    %v3949 = vrot.slane %v3947, 1
    %v3950 = vor.u32 %v3945, %v3949
    %v3951 = vshll.u32 %v3591, 16
    %v3953 = vrot.slane %v3951, 1
    %v3954 = vsel %vm1245, %v3950, %v3953
    %v3955 = vshrl.u32 %v3268, 16
    %v3957 = vshll.u32 %v3268, 16
    %v3959 = vrot.slane %v3957, 1
    %v3960 = vor.u32 %v3955, %v3959
    %v3961 = vshll.u32 %v3270, 16
    %v3963 = vrot.slane %v3961, 1
    %v3964 = vsel %vm1245, %v3960, %v3963
    %v3965 = vshrl.u32 %v3593, 16
    %v3967 = vshll.u32 %v3593, 16
    %v3969 = vrot.slane %v3967, 1
    %v3970 = vor.u32 %v3965, %v3969
    %v3971 = vshll.u32 %v3596, 16
    %v3973 = vrot.slane %v3971, 1
    %v3974 = vsel %vm1245, %v3970, %v3973
    %v3975 = vshrl.u32 %v3272, 16
    %v3977 = vshll.u32 %v3272, 16
    %v3979 = vrot.slane %v3977, 1
    %v3980 = vor.u32 %v3975, %v3979
    %v3981 = vshll.u32 %v3274, 16
    %v3983 = vrot.slane %v3981, 1
    %v3984 = vsel %vm1245, %v3980, %v3983
    %v3985 = vshrl.u32 %v3598, 16
    %v3987 = vshll.u32 %v3598, 16
    %v3989 = vrot.slane %v3987, 1
    %v3990 = vor.u32 %v3985, %v3989
    %v3991 = vshll.u32 %v3601, 16
    %v3993 = vrot.slane %v3991, 1
    %v3994 = vsel %vm1245, %v3990, %v3993
    %v3995 = vshrl.u32 %v3276, 16
    %v3997 = vshll.u32 %v3276, 16
    %v3999 = vrot.slane %v3997, 1
    %v4000 = vor.u32 %v3995, %v3999
    %v4001 = vshll.u32 %v3278, 16
    %v4003 = vrot.slane %v4001, 1
    %v4004 = vsel %vm1245, %v4000, %v4003
    %v4005 = vshrl.u32 %v3603, 16
    %v4007 = vshll.u32 %v3603, 16
    %v4009 = vrot.slane %v4007, 1
    %v4010 = vor.u32 %v4005, %v4009
    %v4011 = vshll.u32 %v3606, 16
    %v4013 = vrot.slane %v4011, 1
    %v4014 = vsel %vm1245, %v4010, %v4013
    %v4015 = vshrl.u32 %v3280, 16
    %v4017 = vshll.u32 %v3280, 16
    %v4019 = vrot.slane %v4017, 1
    %v4020 = vor.u32 %v4015, %v4019
    %v4021 = vshll.u32 %v3282, 16
    %v4023 = vrot.slane %v4021, 1
    %v4024 = vsel %vm1245, %v4020, %v4023
    %v4025 = vshrl.u32 %v3608, 16
    %v4027 = vshll.u32 %v3608, 16
    %v4029 = vrot.slane %v4027, 1
    %v4030 = vor.u32 %v4025, %v4029
    %v4031 = vshll.u32 %v3611, 16
    %v4033 = vrot.slane %v4031, 1
    %v4034 = vsel %vm1245, %v4030, %v4033
    %v4035 = vshrl.u32 %v3284, 16
    %v4037 = vshll.u32 %v3284, 16
    %v4039 = vrot.slane %v4037, 1
    %v4040 = vor.u32 %v4035, %v4039
    %v4041 = vshll.u32 %v3286, 16
    %v4043 = vrot.slane %v4041, 1
    %v4044 = vsel %vm1245, %v4040, %v4043
    %v4045 = vshrl.u32 %v3613, 16
    %v4047 = vshll.u32 %v3613, 16
    %v4049 = vrot.slane %v4047, 1
    %v4050 = vor.u32 %v4045, %v4049
    %v4051 = vshll.u32 %v3616, 16
    %v4053 = vrot.slane %v4051, 1
    %v4054 = vsel %vm1245, %v4050, %v4053
    %v4055 = vshrl.u32 %v3288, 16
    %v4057 = vshll.u32 %v3288, 16
    %v4059 = vrot.slane %v4057, 1
    %v4060 = vor.u32 %v4055, %v4059
    %v4061 = vshll.u32 %v3290, 16
    %v4063 = vrot.slane %v4061, 1
    %v4064 = vsel %vm1245, %v4060, %v4063
    %v4065 = vshrl.u32 %v3618, 16
    %v4067 = vshll.u32 %v3618, 16
    %v4069 = vrot.slane %v4067, 1
    %v4070 = vor.u32 %v4065, %v4069
    %v4071 = vshll.u32 %v3621, 16
    %v4073 = vrot.slane %v4071, 1
    %v4074 = vsel %vm1245, %v4070, %v4073
    %v4075 = vshrl.u32 %v3292, 16
    %v4077 = vshll.u32 %v3292, 16
    %v4079 = vrot.slane %v4077, 1
    %v4080 = vor.u32 %v4075, %v4079
    %v4081 = vshll.u32 %v3294, 16
    %v4083 = vrot.slane %v4081, 1
    %v4084 = vsel %vm1245, %v4080, %v4083
    %v4085 = vshrl.u32 %v3623, 16
    %v4087 = vshll.u32 %v3623, 16
    %v4089 = vrot.slane %v4087, 1
    %v4090 = vor.u32 %v4085, %v4089
    %v4091 = vshll.u32 %v3626, 16
    %v4093 = vrot.slane %v4091, 1
    %v4094 = vsel %vm1245, %v4090, %v4093
    %v4095 = vshrl.u32 %v3296, 16
    %v4097 = vshll.u32 %v3296, 16
    %v4099 = vrot.slane %v4097, 1
    %v4100 = vor.u32 %v4095, %v4099
    %v4101 = vshll.u32 %v3298, 16
    %v4103 = vrot.slane %v4101, 1
    %v4104 = vsel %vm1245, %v4100, %v4103
    %v4105 = vshrl.u32 %v3628, 16
    %v4107 = vshll.u32 %v3628, 16
    %v4109 = vrot.slane %v4107, 1
    %v4110 = vor.u32 %v4105, %v4109
    %v4111 = vshll.u32 %v3631, 16
    %v4113 = vrot.slane %v4111, 1
    %v4114 = vsel %vm1245, %v4110, %v4113
    %v4115 = vshrl.u32 %v3300, 16
    %v4117 = vshll.u32 %v3300, 16
    %v4119 = vrot.slane %v4117, 1
    %v4120 = vor.u32 %v4115, %v4119
    %v4121 = vshll.u32 %v3302, 16
    %v4123 = vrot.slane %v4121, 1
    %v4124 = vsel %vm1245, %v4120, %v4123
    %v4125 = vshrl.u32 %v3633, 16
    %v4127 = vshll.u32 %v3633, 16
    %v4129 = vrot.slane %v4127, 1
    %v4130 = vor.u32 %v4125, %v4129
    %v4131 = vshll.u32 %v3636, 16
    %v4133 = vrot.slane %v4131, 1
    %v4134 = vsel %vm1245, %v4130, %v4133
    %v4135 = vshrl.u32 %v3304, 16
    %v4137 = vshll.u32 %v3304, 16
    %v4139 = vrot.slane %v4137, 1
    %v4140 = vor.u32 %v4135, %v4139
    %v4141 = vshll.u32 %v3306, 16
    %v4143 = vrot.slane %v4141, 1
    %v4144 = vsel %vm1245, %v4140, %v4143
    %v4145 = vshrl.u32 %v3638, 16
    %v4147 = vshll.u32 %v3638, 16
    %v4149 = vrot.slane %v4147, 1
    %v4150 = vor.u32 %v4145, %v4149
    %v4151 = vshll.u32 %v3641, 16
    %v4153 = vrot.slane %v4151, 1
    %v4154 = vsel %vm1245, %v4150, %v4153
    %v4155 = vshrl.u32 %v3308, 16
    %v4157 = vshll.u32 %v3308, 16
    %v4159 = vrot.slane %v4157, 1
    %v4160 = vor.u32 %v4155, %v4159
    %v4161 = vshll.u32 %v3310, 16
    %v4163 = vrot.slane %v4161, 1
    %v4164 = vsel %vm1245, %v4160, %v4163
    %v4165 = vshrl.u32 %v3643, 16
    %v4167 = vshll.u32 %v3643, 16
    %v4169 = vrot.slane %v4167, 1
    %v4170 = vor.u32 %v4165, %v4169
    %v4171 = vshll.u32 %v3646, 16
    %v4173 = vrot.slane %v4171, 1
    %v4174 = vsel %vm1245, %v4170, %v4173
    %v4175 = vshrl.u32 %v3312, 16
    %v4177 = vshll.u32 %v3312, 16
    %v4179 = vrot.slane %v4177, 1
    %v4180 = vor.u32 %v4175, %v4179
    %v4181 = vshll.u32 %v3314, 16
    %v4183 = vrot.slane %v4181, 1
    %v4184 = vsel %vm1245, %v4180, %v4183
    %v4185 = vshrl.u32 %v3648, 16
    %v4187 = vshll.u32 %v3648, 16
    %v4189 = vrot.slane %v4187, 1
    %v4190 = vor.u32 %v4185, %v4189
    %v4191 = vshll.u32 %v3651, 16
    %v4193 = vrot.slane %v4191, 1
    %v4194 = vsel %vm1245, %v4190, %v4193
    %v4195 = vshrl.u32 %v3316, 16
    %v4197 = vshll.u32 %v3316, 16
    %v4199 = vrot.slane %v4197, 1
    %v4200 = vor.u32 %v4195, %v4199
    %v4201 = vshll.u32 %v3318, 16
    %v4203 = vrot.slane %v4201, 1
    %v4204 = vsel %vm1245, %v4200, %v4203
    %v4205 = vshrl.u32 %v3653, 16
    %v4207 = vshll.u32 %v3653, 16
    %v4209 = vrot.slane %v4207, 1
    %v4210 = vor.u32 %v4205, %v4209
    %v4211 = vshll.u32 %v3656, 16
    %v4213 = vrot.slane %v4211, 1
    %v4214 = vsel %vm1245, %v4210, %v4213
    %v4215 = vshrl.u32 %v3320, 16
    %v4217 = vshll.u32 %v3320, 16
    %v4219 = vrot.slane %v4217, 1
    %v4220 = vor.u32 %v4215, %v4219
    %v4221 = vshll.u32 %v3322, 16
    %v4223 = vrot.slane %v4221, 1
    %v4224 = vsel %vm1245, %v4220, %v4223
    %v4225 = vshrl.u32 %v3658, 16
    %v4227 = vshll.u32 %v3658, 16
    %v4229 = vrot.slane %v4227, 1
    %v4230 = vor.u32 %v4225, %v4229
    %v4231 = vshll.u32 %v3661, 16
    %v4233 = vrot.slane %v4231, 1
    %v4234 = vsel %vm1245, %v4230, %v4233
    %v4235 = vshrl.u32 %v3324, 16
    %v4237 = vshll.u32 %v3324, 16
    %v4239 = vrot.slane %v4237, 1
    %v4240 = vor.u32 %v4235, %v4239
    %v4241 = vshll.u32 %v3326, 16
    %v4243 = vrot.slane %v4241, 1
    %v4244 = vsel %vm1245, %v4240, %v4243
    %v4245 = vshrl.u32 %v3663, 16
    %v4247 = vshll.u32 %v3663, 16
    %v4249 = vrot.slane %v4247, 1
    %v4250 = vor.u32 %v4245, %v4249
    %v4251 = vshll.u32 %v3666, 16
    %v4253 = vrot.slane %v4251, 1
    %v4254 = vsel %vm1245, %v4250, %v4253
    %v4255 = vshrl.u32 %v3328, 16
    %v4257 = vshll.u32 %v3328, 16
    %v4259 = vrot.slane %v4257, 1
    %v4260 = vor.u32 %v4255, %v4259
    %v4261 = vshll.u32 %v3330, 16
    %v4263 = vrot.slane %v4261, 1
    %v4264 = vsel %vm1245, %v4260, %v4263
    %v4265 = vshrl.u32 %v3668, 16
    %v4267 = vshll.u32 %v3668, 16
    %v4269 = vrot.slane %v4267, 1
    %v4270 = vor.u32 %v4265, %v4269
    %v4271 = vshll.u32 %v3671, 16
    %v4273 = vrot.slane %v4271, 1
    %v4274 = vsel %vm1245, %v4270, %v4273
    %v4275 = vshrl.u32 %v3332, 16
    %v4277 = vshll.u32 %v3332, 16
    %v4279 = vrot.slane %v4277, 1
    %v4280 = vor.u32 %v4275, %v4279
    %v4281 = vshll.u32 %v3334, 16
    %v4283 = vrot.slane %v4281, 1
    %v4284 = vsel %vm1245, %v4280, %v4283
    %v4285 = vshrl.u32 %v3673, 16
    %v4287 = vshll.u32 %v3673, 16
    %v4289 = vrot.slane %v4287, 1
    %v4290 = vor.u32 %v4285, %v4289
    %v4291 = vshll.u32 %v3676, 16
    %v4293 = vrot.slane %v4291, 1
    %v4294 = vsel %vm1245, %v4290, %v4293
    %v4295 = vshrl.u32 %v3336, 16
    %v4297 = vshll.u32 %v3336, 16
    %v4299 = vrot.slane %v4297, 1
    %v4300 = vor.u32 %v4295, %v4299
    %v4301 = vshll.u32 %v3338, 16
    %v4303 = vrot.slane %v4301, 1
    %v4304 = vsel %vm1245, %v4300, %v4303
    %v4305 = vshrl.u32 %v3678, 16
    %v4307 = vshll.u32 %v3678, 16
    %v4309 = vrot.slane %v4307, 1
    %v4310 = vor.u32 %v4305, %v4309
    %v4311 = vshll.u32 %v3681, 16
    %v4313 = vrot.slane %v4311, 1
    %v4314 = vsel %vm1245, %v4310, %v4313
    %v4315 = vshrl.u32 %v3340, 16
    %v4317 = vshll.u32 %v3340, 16
    %v4319 = vrot.slane %v4317, 1
    %v4320 = vor.u32 %v4315, %v4319
    %v4321 = vshll.u32 %v3342, 16
    %v4323 = vrot.slane %v4321, 1
    %v4324 = vsel %vm1245, %v4320, %v4323
    %v4325 = vshrl.u32 %v3683, 16
    %v4327 = vshll.u32 %v3683, 16
    %v4329 = vrot.slane %v4327, 1
    %v4330 = vor.u32 %v4325, %v4329
    %v4331 = vshll.u32 %v3686, 16
    %v4333 = vrot.slane %v4331, 1
    %v4334 = vsel %vm1245, %v4330, %v4333
    %v4335 = vshrl.u32 %v3344, 16
    %v4337 = vshll.u32 %v3344, 16
    %v4339 = vrot.slane %v4337, 1
    %v4340 = vor.u32 %v4335, %v4339
    %v4341 = vshll.u32 %v3346, 16
    %v4343 = vrot.slane %v4341, 1
    %v4344 = vsel %vm1245, %v4340, %v4343
    %s4377 = scalar_lea.vmem [#allocation7], 72
    %v4378 = vld [vmem:[%s4377] sm:$0xf]
    %v4379 = vld [vmem:[%s4377 + $0x4] sm:$0xf]
    %v4380 = vld [vmem:[%s4377 + $0x8] sm:$0xf]
    %v4381 = vld [vmem:[%s4377 + $0xc] sm:$0xf]
    %v4382 = vld [vmem:[%s4377 + $0x10] sm:$0xf]
    %v4383 = vld [vmem:[%s4377 + $0x14] sm:$0xf]
    %v4384 = vld [vmem:[%s4377 + $0x18] sm:$0xf]
    %v4385 = vld [vmem:[%s4377 + $0x1c] sm:$0xf]
    %v4386 = vld [vmem:[%s4377 + $0x20] sm:$0xf]
    %v4387 = vld [vmem:[%s4377 + $0x24] sm:$0xf]
    %v4388 = vld [vmem:[%s4377 + $0x28] sm:$0xf]
    %v4389 = vld [vmem:[%s4377 + $0x2c] sm:$0xf]
    %v4390 = vld [vmem:[%s4377 + $0x30] sm:$0xf]
    %v4391 = vld [vmem:[%s4377 + $0x34] sm:$0xf]
    %v4392 = vld [vmem:[%s4377 + $0x38] sm:$0xf]
    %v4393 = vld [vmem:[%s4377 + $0x3c] sm:$0xf]
    %v4394 = vld [vmem:[%s4377 + $0x40] sm:$0xf]
    %v4395 = vld [vmem:[%s4377 + $0x44] sm:$0xf]
    %v4414 = vunpack.c.l.b16 %v4378
    %v4415 = vunpack.c.l.b16 %v4379
    %v4416 = vunpack.c.l.b16 %v4380
    %v4417 = vunpack.c.l.b16 %v4381
    %v4418 = vunpack.c.l.b16 %v4382
    %v4419 = vunpack.c.l.b16 %v4383
    %v4420 = vunpack.c.l.b16 %v4384
    %v4421 = vunpack.c.l.b16 %v4385
    %v4422 = vunpack.c.l.b16 %v4386
    %v4423 = vunpack.c.l.b16 %v4387
    %v4424 = vunpack.c.l.b16 %v4388
    %v4425 = vunpack.c.l.b16 %v4389
    %v4426 = vunpack.c.l.b16 %v4390
    %v4427 = vunpack.c.l.b16 %v4391
    %v4428 = vunpack.c.l.b16 %v4392
    %v4429 = vunpack.c.l.b16 %v4393
    %v4430 = vunpack.c.l.b16 %v4394
    %v4431 = vunpack.c.l.b16 %v4395
    %v4432 = vpack.c.b16 %v4415, %v4414
    %v4433 = vpack.c.b16 %v4417, %v4416
    %v4434 = vpack.c.b16 %v4419, %v4418
    %v4435 = vpack.c.b16 %v4421, %v4420
    %v4436 = vpack.c.b16 %v4423, %v4422
    %v4437 = vpack.c.b16 %v4425, %v4424
    %v4438 = vpack.c.b16 %v4427, %v4426
    %v4439 = vpack.c.b16 %v4429, %v4428
    %v4440 = vpack.c.b16 %v4431, %v4430
    %vm4450 = vcmask 130048
    %v4452 = vsel %vm4450, %v3724, 0
    %v4455 = vsel %vm4450, %v3744, 0
    %v4458 = vsel %vm4450, %v3764, 0
    %v4461 = vsel %vm4450, %v3784, 0
    %v4464 = vsel %vm4450, %v3804, 0
    %v4467 = vsel %vm4450, %v3824, 0
    %v4470 = vsel %vm4450, %v3844, 0
    %v4473 = vsel %vm4450, %v3864, 0
    %v4476 = vsel %vm4450, %v3884, 0
    %v4479 = vsel %vm4450, %v3904, 0
    %v4482 = vsel %vm4450, %v3924, 0
    %v4485 = vsel %vm4450, %v3944, 0
    %v4488 = vsel %vm4450, %v3964, 0
    %v4491 = vsel %vm4450, %v3984, 0
    %v4494 = vsel %vm4450, %v4004, 0
    %v4497 = vsel %vm4450, %v4024, 0
    %v4500 = vsel %vm4450, %v4044, 0
    %v4503 = vsel %vm4450, %v4064, 0
    %v4506 = vsel %vm4450, %v4084, 0
    %v4509 = vsel %vm4450, %v4104, 0
    %v4512 = vsel %vm4450, %v4124, 0
    %v4515 = vsel %vm4450, %v4144, 0
    %v4518 = vsel %vm4450, %v4164, 0
    %v4521 = vsel %vm4450, %v4184, 0
    %v4524 = vsel %vm4450, %v4204, 0
    %v4527 = vsel %vm4450, %v4224, 0
    %v4530 = vsel %vm4450, %v4244, 0
    %v4533 = vsel %vm4450, %v4264, 0
    %v4536 = vsel %vm4450, %v4284, 0
    %v4539 = vsel %vm4450, %v4304, 0
    %v4542 = vsel %vm4450, %v4324, 0
    %v4545 = vsel %vm4450, %v4344, 0
    %4547 = vmatprep.subr.bf16.mxu0 0
    %4548 = vmatpush1.bf16.msra.mxu0 %v4432
    %4549 = vmatprep.subr.bf16.mxu0 0
    %4550 = vmatpush1.bf16.msra.mxu0 %v4433
    %4551 = vmatprep.subr.bf16.mxu0 0
    %4552 = vmatpush1.bf16.msra.mxu0 %v4434
    %4553 = vmatprep.subr.bf16.mxu0 0
    %4554 = vmatpush1.bf16.msra.mxu0 %v4435
    %4555 = vmatprep.subr.bf16.mxu0 0
    %4556 = vmatpush1.bf16.msra.mxu0 %v4436
    %4557 = vmatprep.subr.bf16.mxu0 0
    %4558 = vmatpush1.bf16.msra.mxu0 %v4437
    %4559 = vmatprep.subr.bf16.mxu0 0
    %4560 = vmatpush1.bf16.msra.mxu0 %v4438
    %4561 = vmatprep.subr.bf16.mxu0 0
    %4562 = vmatpush1.bf16.msra.mxu0 %v4439
    %4563 = vmatprep.subr.bf16.mxu0 0
    %4564 = vmatpush1.bf16.msra.mxu0 %v4440
    %4565 = vmatprep.subr.bf16.mxu0 0
    %4566 = vmatpush1.bf16.msra.mxu0 0
    %4567 = vmatprep.subr.bf16.mxu0 0
    %4568 = vmatpush1.bf16.msra.mxu0 0
    %4569 = vmatprep.subr.bf16.mxu0 0
    %4570 = vmatpush1.bf16.msra.mxu0 0
    %4571 = vmatprep.subr.bf16.mxu0 0
    %4572 = vmatpush1.bf16.msra.mxu0 0
    %4573 = vmatprep.subr.bf16.mxu0 0
    %4574 = vmatpush1.bf16.msra.mxu0 0
    %4575 = vmatprep.subr.bf16.mxu0 0
    %4576 = vmatpush1.bf16.msra.mxu0 0
    %4577 = vmatprep.subr.bf16.mxu0 0
    %4578 = vmatpush1.bf16.msra.mxu0 0
    %4579 = vmatprep.mubr.bf16.mxu0 %v4452
    %4580 = vmatmul.mubr.bf16.gmra.mrb[0].mxu0 %v3714
    %v4581 = vpop.f32.mrb[0].mxu0
    %v4582 = vadd.f32 0.0, %v4581
    %v4583 = vpop.f32.mrb[0].mxu0
    %v4584 = vpop.f32.mrb[0].mxu0
    %v4585 = vadd.f32 0.0, %v4584
    %v4586 = vpop.f32.mrb[0].mxu0
    %4587 = vmatprep.mubr.bf16.mxu0 %v4455
    %4588 = vmatmul.mubr.bf16.gmra.mrb[0].mxu0 %v3734
    %v4589 = vpop.f32.mrb[0].mxu0
    %v4590 = vadd.f32 0.0, %v4589
    %v4591 = vpop.f32.mrb[0].mxu0
    %v4592 = vpop.f32.mrb[0].mxu0
    %v4593 = vadd.f32 0.0, %v4592
    %v4594 = vpop.f32.mrb[0].mxu0
    %4595 = vmatprep.mubr.bf16.mxu0 %v4458
    %4596 = vmatmul.mubr.bf16.gmra.mrb[0].mxu0 %v3754
    %v4597 = vpop.f32.mrb[0].mxu0
    %v4598 = vadd.f32 0.0, %v4597
    %v4599 = vpop.f32.mrb[0].mxu0
    %v4600 = vpop.f32.mrb[0].mxu0
    %v4601 = vadd.f32 0.0, %v4600
    %v4602 = vpop.f32.mrb[0].mxu0
    %4603 = vmatprep.mubr.bf16.mxu0 %v4461
    %4604 = vmatmul.mubr.bf16.gmra.mrb[0].mxu0 %v3774
    %v4605 = vpop.f32.mrb[0].mxu0
    %v4606 = vadd.f32 0.0, %v4605
    %v4607 = vpop.f32.mrb[0].mxu0
    %v4608 = vpop.f32.mrb[0].mxu0
    %v4609 = vadd.f32 0.0, %v4608
    %v4610 = vpop.f32.mrb[0].mxu0
    %4611 = vmatprep.mubr.bf16.mxu0 %v4464
    %4612 = vmatmul.mubr.bf16.gmra.mrb[0].mxu0 %v3794
    %v4613 = vpop.f32.mrb[0].mxu0
    %v4614 = vadd.f32 0.0, %v4613
    %v4615 = vpop.f32.mrb[0].mxu0
    %v4616 = vpop.f32.mrb[0].mxu0
    %v4617 = vadd.f32 0.0, %v4616
    %v4618 = vpop.f32.mrb[0].mxu0
    %4619 = vmatprep.mubr.bf16.mxu0 %v4467
    %4620 = vmatmul.mubr.bf16.gmra.mrb[0].mxu0 %v3814
    %v4621 = vpop.f32.mrb[0].mxu0
    %v4622 = vadd.f32 0.0, %v4621
    %v4623 = vpop.f32.mrb[0].mxu0
    %v4624 = vpop.f32.mrb[0].mxu0
    %v4625 = vadd.f32 0.0, %v4624
    %v4626 = vpop.f32.mrb[0].mxu0
    %4627 = vmatprep.mubr.bf16.mxu0 %v4470
    %4628 = vmatmul.mubr.bf16.gmra.mrb[0].mxu0 %v3834
    %v4629 = vpop.f32.mrb[0].mxu0
    %v4630 = vadd.f32 0.0, %v4629
    %v4631 = vpop.f32.mrb[0].mxu0
    %v4632 = vpop.f32.mrb[0].mxu0
    %v4633 = vadd.f32 0.0, %v4632
    %v4634 = vpop.f32.mrb[0].mxu0
    %4635 = vmatprep.mubr.bf16.mxu0 %v4473
    %4636 = vmatmul.mubr.bf16.gmra.mrb[0].mxu0 %v3854
    %v4637 = vpop.f32.mrb[0].mxu0
    %v4638 = vadd.f32 0.0, %v4637
    %v4639 = vpop.f32.mrb[0].mxu0
    %v4640 = vpop.f32.mrb[0].mxu0
    %v4641 = vadd.f32 0.0, %v4640
    %v4642 = vpop.f32.mrb[0].mxu0
    %4643 = vmatprep.mubr.bf16.mxu0 %v4476
    %4644 = vmatmul.mubr.bf16.gmra.mrb[0].mxu0 %v3874
    %v4645 = vpop.f32.mrb[0].mxu0
    %v4646 = vadd.f32 0.0, %v4645
    %v4647 = vpop.f32.mrb[0].mxu0
    %v4648 = vpop.f32.mrb[0].mxu0
    %v4649 = vadd.f32 0.0, %v4648
    %v4650 = vpop.f32.mrb[0].mxu0
    %4651 = vmatprep.mubr.bf16.mxu0 %v4479
    %4652 = vmatmul.mubr.bf16.gmra.mrb[0].mxu0 %v3894
    %v4653 = vpop.f32.mrb[0].mxu0
    %v4654 = vadd.f32 0.0, %v4653
    %v4655 = vpop.f32.mrb[0].mxu0
    %v4656 = vpop.f32.mrb[0].mxu0
    %v4657 = vadd.f32 0.0, %v4656
    %v4658 = vpop.f32.mrb[0].mxu0
    %4659 = vmatprep.mubr.bf16.mxu0 %v4482
    %4660 = vmatmul.mubr.bf16.gmra.mrb[0].mxu0 %v3914
    %v4661 = vpop.f32.mrb[0].mxu0
    %v4662 = vadd.f32 0.0, %v4661
    %v4663 = vpop.f32.mrb[0].mxu0
    %v4664 = vpop.f32.mrb[0].mxu0
    %v4665 = vadd.f32 0.0, %v4664
    %v4666 = vpop.f32.mrb[0].mxu0
    %4667 = vmatprep.mubr.bf16.mxu0 %v4485
    %4668 = vmatmul.mubr.bf16.gmra.mrb[0].mxu0 %v3934
    %v4669 = vpop.f32.mrb[0].mxu0
    %v4670 = vadd.f32 0.0, %v4669
    %v4671 = vpop.f32.mrb[0].mxu0
    %v4672 = vpop.f32.mrb[0].mxu0
    %v4673 = vadd.f32 0.0, %v4672
    %v4674 = vpop.f32.mrb[0].mxu0
    %4675 = vmatprep.mubr.bf16.mxu0 %v4488
    %4676 = vmatmul.mubr.bf16.gmra.mrb[0].mxu0 %v3954
    %v4677 = vpop.f32.mrb[0].mxu0
    %v4678 = vadd.f32 0.0, %v4677
    %v4679 = vpop.f32.mrb[0].mxu0
    %v4680 = vpop.f32.mrb[0].mxu0
    %v4681 = vadd.f32 0.0, %v4680
    %v4682 = vpop.f32.mrb[0].mxu0
    %4683 = vmatprep.mubr.bf16.mxu0 %v4491
    %4684 = vmatmul.mubr.bf16.gmra.mrb[0].mxu0 %v3974
    %v4685 = vpop.f32.mrb[0].mxu0
    %v4686 = vadd.f32 0.0, %v4685
    %v4687 = vpop.f32.mrb[0].mxu0
    %v4688 = vpop.f32.mrb[0].mxu0
    %v4689 = vadd.f32 0.0, %v4688
    %v4690 = vpop.f32.mrb[0].mxu0
    %4691 = vmatprep.mubr.bf16.mxu0 %v4494
    %4692 = vmatmul.mubr.bf16.gmra.mrb[0].mxu0 %v3994
    %v4693 = vpop.f32.mrb[0].mxu0
    %v4694 = vadd.f32 0.0, %v4693
    %v4695 = vpop.f32.mrb[0].mxu0
    %v4696 = vpop.f32.mrb[0].mxu0
    %v4697 = vadd.f32 0.0, %v4696
    %v4698 = vpop.f32.mrb[0].mxu0
    %4699 = vmatprep.mubr.bf16.mxu0 %v4497
    %4700 = vmatmul.mubr.bf16.gmra.mrb[0].mxu0 %v4014
    %v4701 = vpop.f32.mrb[0].mxu0
    %v4702 = vadd.f32 0.0, %v4701
    %v4703 = vpop.f32.mrb[0].mxu0
    %v4704 = vpop.f32.mrb[0].mxu0
    %v4705 = vadd.f32 0.0, %v4704
    %v4706 = vpop.f32.mrb[0].mxu0
    %4707 = vmatprep.mubr.bf16.mxu0 %v4500
    %4708 = vmatmul.mubr.bf16.gmra.mrb[0].mxu0 %v4034
    %v4709 = vpop.f32.mrb[0].mxu0
    %v4710 = vadd.f32 0.0, %v4709
    %v4711 = vpop.f32.mrb[0].mxu0
    %v4712 = vpop.f32.mrb[0].mxu0
    %v4713 = vadd.f32 0.0, %v4712
    %v4714 = vpop.f32.mrb[0].mxu0
    %4715 = vmatprep.mubr.bf16.mxu0 %v4503
    %4716 = vmatmul.mubr.bf16.gmra.mrb[0].mxu0 %v4054
    %v4717 = vpop.f32.mrb[0].mxu0
    %v4718 = vadd.f32 0.0, %v4717
    %v4719 = vpop.f32.mrb[0].mxu0
    %v4720 = vpop.f32.mrb[0].mxu0
    %v4721 = vadd.f32 0.0, %v4720
    %v4722 = vpop.f32.mrb[0].mxu0
    %4723 = vmatprep.mubr.bf16.mxu0 %v4506
    %4724 = vmatmul.mubr.bf16.gmra.mrb[0].mxu0 %v4074
    %v4725 = vpop.f32.mrb[0].mxu0
    %v4726 = vadd.f32 0.0, %v4725
    %v4727 = vpop.f32.mrb[0].mxu0
    %v4728 = vpop.f32.mrb[0].mxu0
    %v4729 = vadd.f32 0.0, %v4728
    %v4730 = vpop.f32.mrb[0].mxu0
    %4731 = vmatprep.mubr.bf16.mxu0 %v4509
    %4732 = vmatmul.mubr.bf16.gmra.mrb[0].mxu0 %v4094
    %v4733 = vpop.f32.mrb[0].mxu0
    %v4734 = vadd.f32 0.0, %v4733
    %v4735 = vpop.f32.mrb[0].mxu0
    %v4736 = vpop.f32.mrb[0].mxu0
    %v4737 = vadd.f32 0.0, %v4736
    %v4738 = vpop.f32.mrb[0].mxu0
    %4739 = vmatprep.mubr.bf16.mxu0 %v4512
    %4740 = vmatmul.mubr.bf16.gmra.mrb[0].mxu0 %v4114
    %v4741 = vpop.f32.mrb[0].mxu0
    %v4742 = vadd.f32 0.0, %v4741
    %v4743 = vpop.f32.mrb[0].mxu0
    %v4744 = vpop.f32.mrb[0].mxu0
    %v4745 = vadd.f32 0.0, %v4744
    %v4746 = vpop.f32.mrb[0].mxu0
    %4747 = vmatprep.mubr.bf16.mxu0 %v4515
    %4748 = vmatmul.mubr.bf16.gmra.mrb[0].mxu0 %v4134
    %v4749 = vpop.f32.mrb[0].mxu0
    %v4750 = vadd.f32 0.0, %v4749
    %v4751 = vpop.f32.mrb[0].mxu0
    %v4752 = vpop.f32.mrb[0].mxu0
    %v4753 = vadd.f32 0.0, %v4752
    %v4754 = vpop.f32.mrb[0].mxu0
    %4755 = vmatprep.mubr.bf16.mxu0 %v4518
    %4756 = vmatmul.mubr.bf16.gmra.mrb[0].mxu0 %v4154
    %v4757 = vpop.f32.mrb[0].mxu0
    %v4758 = vadd.f32 0.0, %v4757
    %v4759 = vpop.f32.mrb[0].mxu0
    %v4760 = vpop.f32.mrb[0].mxu0
    %v4761 = vadd.f32 0.0, %v4760
    %v4762 = vpop.f32.mrb[0].mxu0
    %4763 = vmatprep.mubr.bf16.mxu0 %v4521
    %4764 = vmatmul.mubr.bf16.gmra.mrb[0].mxu0 %v4174
    %v4765 = vpop.f32.mrb[0].mxu0
    %v4766 = vadd.f32 0.0, %v4765
    %v4767 = vpop.f32.mrb[0].mxu0
    %v4768 = vpop.f32.mrb[0].mxu0
    %v4769 = vadd.f32 0.0, %v4768
    %v4770 = vpop.f32.mrb[0].mxu0
    %4771 = vmatprep.mubr.bf16.mxu0 %v4524
    %4772 = vmatmul.mubr.bf16.gmra.mrb[0].mxu0 %v4194
    %v4773 = vpop.f32.mrb[0].mxu0
    %v4774 = vadd.f32 0.0, %v4773
    %v4775 = vpop.f32.mrb[0].mxu0
    %v4776 = vpop.f32.mrb[0].mxu0
    %v4777 = vadd.f32 0.0, %v4776
    %v4778 = vpop.f32.mrb[0].mxu0
    %4779 = vmatprep.mubr.bf16.mxu0 %v4527
    %4780 = vmatmul.mubr.bf16.gmra.mrb[0].mxu0 %v4214
    %v4781 = vpop.f32.mrb[0].mxu0
    %v4782 = vadd.f32 0.0, %v4781
    %v4783 = vpop.f32.mrb[0].mxu0
    %v4784 = vpop.f32.mrb[0].mxu0
    %v4785 = vadd.f32 0.0, %v4784
    %v4786 = vpop.f32.mrb[0].mxu0
    %4787 = vmatprep.mubr.bf16.mxu0 %v4530
    %4788 = vmatmul.mubr.bf16.gmra.mrb[0].mxu0 %v4234
    %v4789 = vpop.f32.mrb[0].mxu0
    %v4790 = vadd.f32 0.0, %v4789
    %v4791 = vpop.f32.mrb[0].mxu0
    %v4792 = vpop.f32.mrb[0].mxu0
    %v4793 = vadd.f32 0.0, %v4792
    %v4794 = vpop.f32.mrb[0].mxu0
    %4795 = vmatprep.mubr.bf16.mxu0 %v4533
    %4796 = vmatmul.mubr.bf16.gmra.mrb[0].mxu0 %v4254
    %v4797 = vpop.f32.mrb[0].mxu0
    %v4798 = vadd.f32 0.0, %v4797
    %v4799 = vpop.f32.mrb[0].mxu0
    %v4800 = vpop.f32.mrb[0].mxu0
    %v4801 = vadd.f32 0.0, %v4800
    %v4802 = vpop.f32.mrb[0].mxu0
    %4803 = vmatprep.mubr.bf16.mxu0 %v4536
    %4804 = vmatmul.mubr.bf16.gmra.mrb[0].mxu0 %v4274
    %v4805 = vpop.f32.mrb[0].mxu0
    %v4806 = vadd.f32 0.0, %v4805
    %v4807 = vpop.f32.mrb[0].mxu0
    %v4808 = vpop.f32.mrb[0].mxu0
    %v4809 = vadd.f32 0.0, %v4808
    %v4810 = vpop.f32.mrb[0].mxu0
    %4811 = vmatprep.mubr.bf16.mxu0 %v4539
    %4812 = vmatmul.mubr.bf16.gmra.mrb[0].mxu0 %v4294
    %v4813 = vpop.f32.mrb[0].mxu0
    %v4814 = vadd.f32 0.0, %v4813
    %v4815 = vpop.f32.mrb[0].mxu0
    %v4816 = vpop.f32.mrb[0].mxu0
    %v4817 = vadd.f32 0.0, %v4816
    %v4818 = vpop.f32.mrb[0].mxu0
    %4819 = vmatprep.mubr.bf16.mxu0 %v4542
    %4820 = vmatmul.mubr.bf16.gmra.mrb[0].mxu0 %v4314
    %v4821 = vpop.f32.mrb[0].mxu0
    %v4822 = vadd.f32 0.0, %v4821
    %v4823 = vpop.f32.mrb[0].mxu0
    %v4824 = vpop.f32.mrb[0].mxu0
    %v4825 = vadd.f32 0.0, %v4824
    %v4826 = vpop.f32.mrb[0].mxu0
    %4827 = vmatprep.mubr.bf16.mxu0 %v4545
    %4828 = vmatmul.mubr.bf16.gmra.mrb[0].mxu0 %v4334
    %v4829 = vpop.f32.mrb[0].mxu0
    %v4830 = vadd.f32 0.0, %v4829
    %v4831 = vpop.f32.mrb[0].mxu0
    %v4832 = vpop.f32.mrb[0].mxu0
    %v4833 = vadd.f32 0.0, %v4832
    %v4834 = vpop.f32.mrb[0].mxu0
    %4835 = vdwg.mxu0
    %v4854 = vunpack.c.l.b16 %v3687
    %v4855 = vunpack.c.l.b16 %v3688
    %v4856 = vunpack.c.l.b16 %v3689
    %v4857 = vunpack.c.l.b16 %v3690
    %v4858 = vunpack.c.l.b16 %v3691
    %v4859 = vunpack.c.l.b16 %v3692
    %v4860 = vunpack.c.l.b16 %v3693
    %v4861 = vunpack.c.l.b16 %v3694
    %v4862 = vunpack.c.l.b16 %v3695
    %v4863 = vunpack.c.l.b16 %v3696
    %v4864 = vunpack.c.l.b16 %v3697
    %v4865 = vunpack.c.l.b16 %v3698
    %v4866 = vunpack.c.l.b16 %v3699
    %v4867 = vunpack.c.l.b16 %v3700
    %v4868 = vunpack.c.l.b16 %v3701
    %v4869 = vunpack.c.l.b16 %v3702
    %v4870 = vunpack.c.l.b16 %v3703
    %v4871 = vunpack.c.l.b16 %v3704
    %v4872 = vpack.c.b16 %v4855, %v4854
    %v4873 = vpack.c.b16 %v4857, %v4856
    %v4874 = vpack.c.b16 %v4859, %v4858
    %v4875 = vpack.c.b16 %v4861, %v4860
    %v4876 = vpack.c.b16 %v4863, %v4862
    %v4877 = vpack.c.b16 %v4865, %v4864
    %v4878 = vpack.c.b16 %v4867, %v4866
    %v4879 = vpack.c.b16 %v4869, %v4868
    %v4880 = vpack.c.b16 %v4871, %v4870
    %v4890 = vsel %vm4450, %v3220, 0
    %v4892 = vsel %vm4450, %v3224, 0
    %v4894 = vsel %vm4450, %v3228, 0
    %v4896 = vsel %vm4450, %v3232, 0
    %v4898 = vsel %vm4450, %v3236, 0
    %v4900 = vsel %vm4450, %v3240, 0
    %v4902 = vsel %vm4450, %v3244, 0
    %v4904 = vsel %vm4450, %v3248, 0
    %v4906 = vsel %vm4450, %v3252, 0
    %v4908 = vsel %vm4450, %v3256, 0
    %v4910 = vsel %vm4450, %v3260, 0
    %v4912 = vsel %vm4450, %v3264, 0
    %v4914 = vsel %vm4450, %v3268, 0
    %v4916 = vsel %vm4450, %v3272, 0
    %v4918 = vsel %vm4450, %v3276, 0
    %v4920 = vsel %vm4450, %v3280, 0
    %v4922 = vsel %vm4450, %v3284, 0
    %v4924 = vsel %vm4450, %v3288, 0
    %v4926 = vsel %vm4450, %v3292, 0
    %v4928 = vsel %vm4450, %v3296, 0
    %v4930 = vsel %vm4450, %v3300, 0
    %v4932 = vsel %vm4450, %v3304, 0
    %v4934 = vsel %vm4450, %v3308, 0
    %v4936 = vsel %vm4450, %v3312, 0
    %v4938 = vsel %vm4450, %v3316, 0
    %v4940 = vsel %vm4450, %v3320, 0
    %v4942 = vsel %vm4450, %v3324, 0
    %v4944 = vsel %vm4450, %v3328, 0
    %v4946 = vsel %vm4450, %v3332, 0
    %v4948 = vsel %vm4450, %v3336, 0
    %v4950 = vsel %vm4450, %v3340, 0
    %v4952 = vsel %vm4450, %v3344, 0
    %4954 = vmatprep.subr.bf16.mxu0 0
    %4955 = vmatpush1.bf16.msra.mxu0 %v4872
    %4956 = vmatprep.subr.bf16.mxu0 0
    %4957 = vmatpush1.bf16.msra.mxu0 %v4873
    %4958 = vmatprep.subr.bf16.mxu0 0
    %4959 = vmatpush1.bf16.msra.mxu0 %v4874
    %4960 = vmatprep.subr.bf16.mxu0 0
    %4961 = vmatpush1.bf16.msra.mxu0 %v4875
    %4962 = vmatprep.subr.bf16.mxu0 0
    %4963 = vmatpush1.bf16.msra.mxu0 %v4876
    %4964 = vmatprep.subr.bf16.mxu0 0
    %4965 = vmatpush1.bf16.msra.mxu0 %v4877
    %4966 = vmatprep.subr.bf16.mxu0 0
    %4967 = vmatpush1.bf16.msra.mxu0 %v4878
    %4968 = vmatprep.subr.bf16.mxu0 0
    %4969 = vmatpush1.bf16.msra.mxu0 %v4879
    %4970 = vmatprep.subr.bf16.mxu0 0
    %4971 = vmatpush1.bf16.msra.mxu0 %v4880
    %4972 = vmatprep.subr.bf16.mxu0 0
    %4973 = vmatpush1.bf16.msra.mxu0 0
    %4974 = vmatprep.subr.bf16.mxu0 0
    %4975 = vmatpush1.bf16.msra.mxu0 0
    %4976 = vmatprep.subr.bf16.mxu0 0
    %4977 = vmatpush1.bf16.msra.mxu0 0
    %4978 = vmatprep.subr.bf16.mxu0 0
    %4979 = vmatpush1.bf16.msra.mxu0 0
    %4980 = vmatprep.subr.bf16.mxu0 0
    %4981 = vmatpush1.bf16.msra.mxu0 0
    %4982 = vmatprep.subr.bf16.mxu0 0
    %4983 = vmatpush1.bf16.msra.mxu0 0
    %4984 = vmatprep.subr.bf16.mxu0 0
    %4985 = vmatpush1.bf16.msra.mxu0 0
    %4986 = vmatprep.mubr.bf16.mxu0 %v4890
    %4987 = vmatmul.mubr.bf16.gmra.mrb[0].mxu0 %v3528
    %v4988 = vpop.f32.mrb[0].mxu0
    %v4989 = vadd.f32 %v4582, %v4988
    %v4990 = vpop.f32.mrb[0].mxu0
    %v4991 = vpop.f32.mrb[0].mxu0
    %v4992 = vadd.f32 %v4585, %v4991
    %v4993 = vpop.f32.mrb[0].mxu0
    %4994 = vmatprep.mubr.bf16.mxu0 %v4892
    %4995 = vmatmul.mubr.bf16.gmra.mrb[0].mxu0 %v3533
    %v4996 = vpop.f32.mrb[0].mxu0
    %v4997 = vadd.f32 %v4590, %v4996
    %v4998 = vpop.f32.mrb[0].mxu0
    %v4999 = vpop.f32.mrb[0].mxu0
    %v5000 = vadd.f32 %v4593, %v4999
    %v5001 = vpop.f32.mrb[0].mxu0
    %5002 = vmatprep.mubr.bf16.mxu0 %v4894
    %5003 = vmatmul.mubr.bf16.gmra.mrb[0].mxu0 %v3538
    %v5004 = vpop.f32.mrb[0].mxu0
    %v5005 = vadd.f32 %v4598, %v5004
    %v5006 = vpop.f32.mrb[0].mxu0
    %v5007 = vpop.f32.mrb[0].mxu0
    %v5008 = vadd.f32 %v4601, %v5007
    %v5009 = vpop.f32.mrb[0].mxu0
    %5010 = vmatprep.mubr.bf16.mxu0 %v4896
    %5011 = vmatmul.mubr.bf16.gmra.mrb[0].mxu0 %v3543
    %v5012 = vpop.f32.mrb[0].mxu0
    %v5013 = vadd.f32 %v4606, %v5012
    %v5014 = vpop.f32.mrb[0].mxu0
    %v5015 = vpop.f32.mrb[0].mxu0
    %v5016 = vadd.f32 %v4609, %v5015
    %v5017 = vpop.f32.mrb[0].mxu0
    %5018 = vmatprep.mubr.bf16.mxu0 %v4898
    %5019 = vmatmul.mubr.bf16.gmra.mrb[0].mxu0 %v3548
    %v5020 = vpop.f32.mrb[0].mxu0
    %v5021 = vadd.f32 %v4614, %v5020
    %v5022 = vpop.f32.mrb[0].mxu0
    %v5023 = vpop.f32.mrb[0].mxu0
    %v5024 = vadd.f32 %v4617, %v5023
    %v5025 = vpop.f32.mrb[0].mxu0
    %5026 = vmatprep.mubr.bf16.mxu0 %v4900
    %5027 = vmatmul.mubr.bf16.gmra.mrb[0].mxu0 %v3553
    %v5028 = vpop.f32.mrb[0].mxu0
    %v5029 = vadd.f32 %v4622, %v5028
    %v5030 = vpop.f32.mrb[0].mxu0
    %v5031 = vpop.f32.mrb[0].mxu0
    %v5032 = vadd.f32 %v4625, %v5031
    %v5033 = vpop.f32.mrb[0].mxu0
    %5034 = vmatprep.mubr.bf16.mxu0 %v4902
    %5035 = vmatmul.mubr.bf16.gmra.mrb[0].mxu0 %v3558
    %v5036 = vpop.f32.mrb[0].mxu0
    %v5037 = vadd.f32 %v4630, %v5036
    %v5038 = vpop.f32.mrb[0].mxu0
    %v5039 = vpop.f32.mrb[0].mxu0
    %v5040 = vadd.f32 %v4633, %v5039
    %v5041 = vpop.f32.mrb[0].mxu0
    %5042 = vmatprep.mubr.bf16.mxu0 %v4904
    %5043 = vmatmul.mubr.bf16.gmra.mrb[0].mxu0 %v3563
    %v5044 = vpop.f32.mrb[0].mxu0
    %v5045 = vadd.f32 %v4638, %v5044
    %v5046 = vpop.f32.mrb[0].mxu0
    %v5047 = vpop.f32.mrb[0].mxu0
    %v5048 = vadd.f32 %v4641, %v5047
    %v5049 = vpop.f32.mrb[0].mxu0
    %5050 = vmatprep.mubr.bf16.mxu0 %v4906
    %5051 = vmatmul.mubr.bf16.gmra.mrb[0].mxu0 %v3568
    %v5052 = vpop.f32.mrb[0].mxu0
    %v5053 = vadd.f32 %v4646, %v5052
    %v5054 = vpop.f32.mrb[0].mxu0
    %v5055 = vpop.f32.mrb[0].mxu0
    %v5056 = vadd.f32 %v4649, %v5055
    %v5057 = vpop.f32.mrb[0].mxu0
    %5058 = vmatprep.mubr.bf16.mxu0 %v4908
    %5059 = vmatmul.mubr.bf16.gmra.mrb[0].mxu0 %v3573
    %v5060 = vpop.f32.mrb[0].mxu0
    %v5061 = vadd.f32 %v4654, %v5060
    %v5062 = vpop.f32.mrb[0].mxu0
    %v5063 = vpop.f32.mrb[0].mxu0
    %v5064 = vadd.f32 %v4657, %v5063
    %v5065 = vpop.f32.mrb[0].mxu0
    %5066 = vmatprep.mubr.bf16.mxu0 %v4910
    %5067 = vmatmul.mubr.bf16.gmra.mrb[0].mxu0 %v3578
    %v5068 = vpop.f32.mrb[0].mxu0
    %v5069 = vadd.f32 %v4662, %v5068
    %v5070 = vpop.f32.mrb[0].mxu0
    %v5071 = vpop.f32.mrb[0].mxu0
    %v5072 = vadd.f32 %v4665, %v5071
    %v5073 = vpop.f32.mrb[0].mxu0
    %5074 = vmatprep.mubr.bf16.mxu0 %v4912
    %5075 = vmatmul.mubr.bf16.gmra.mrb[0].mxu0 %v3583
    %v5076 = vpop.f32.mrb[0].mxu0
    %v5077 = vadd.f32 %v4670, %v5076
    %v5078 = vpop.f32.mrb[0].mxu0
    %v5079 = vpop.f32.mrb[0].mxu0
    %v5080 = vadd.f32 %v4673, %v5079
    %v5081 = vpop.f32.mrb[0].mxu0
    %5082 = vmatprep.mubr.bf16.mxu0 %v4914
    %5083 = vmatmul.mubr.bf16.gmra.mrb[0].mxu0 %v3588
    %v5084 = vpop.f32.mrb[0].mxu0
    %v5085 = vadd.f32 %v4678, %v5084
    %v5086 = vpop.f32.mrb[0].mxu0
    %v5087 = vpop.f32.mrb[0].mxu0
    %v5088 = vadd.f32 %v4681, %v5087
    %v5089 = vpop.f32.mrb[0].mxu0
    %5090 = vmatprep.mubr.bf16.mxu0 %v4916
    %5091 = vmatmul.mubr.bf16.gmra.mrb[0].mxu0 %v3593
    %v5092 = vpop.f32.mrb[0].mxu0
    %v5093 = vadd.f32 %v4686, %v5092
    %v5094 = vpop.f32.mrb[0].mxu0
    %v5095 = vpop.f32.mrb[0].mxu0
    %v5096 = vadd.f32 %v4689, %v5095
    %v5097 = vpop.f32.mrb[0].mxu0
    %5098 = vmatprep.mubr.bf16.mxu0 %v4918
    %5099 = vmatmul.mubr.bf16.gmra.mrb[0].mxu0 %v3598
    %v5100 = vpop.f32.mrb[0].mxu0
    %v5101 = vadd.f32 %v4694, %v5100
    %v5102 = vpop.f32.mrb[0].mxu0
    %v5103 = vpop.f32.mrb[0].mxu0
    %v5104 = vadd.f32 %v4697, %v5103
    %v5105 = vpop.f32.mrb[0].mxu0
    %5106 = vmatprep.mubr.bf16.mxu0 %v4920
    %5107 = vmatmul.mubr.bf16.gmra.mrb[0].mxu0 %v3603
    %v5108 = vpop.f32.mrb[0].mxu0
    %v5109 = vadd.f32 %v4702, %v5108
    %v5110 = vpop.f32.mrb[0].mxu0
    %v5111 = vpop.f32.mrb[0].mxu0
    %v5112 = vadd.f32 %v4705, %v5111
    %v5113 = vpop.f32.mrb[0].mxu0
    %5114 = vmatprep.mubr.bf16.mxu0 %v4922
    %5115 = vmatmul.mubr.bf16.gmra.mrb[0].mxu0 %v3608
    %v5116 = vpop.f32.mrb[0].mxu0
    %v5117 = vadd.f32 %v4710, %v5116
    %v5118 = vpop.f32.mrb[0].mxu0
    %v5119 = vpop.f32.mrb[0].mxu0
    %v5120 = vadd.f32 %v4713, %v5119
    %v5121 = vpop.f32.mrb[0].mxu0
    %5122 = vmatprep.mubr.bf16.mxu0 %v4924
    %5123 = vmatmul.mubr.bf16.gmra.mrb[0].mxu0 %v3613
    %v5124 = vpop.f32.mrb[0].mxu0
    %v5125 = vadd.f32 %v4718, %v5124
    %v5126 = vpop.f32.mrb[0].mxu0
    %v5127 = vpop.f32.mrb[0].mxu0
    %v5128 = vadd.f32 %v4721, %v5127
    %v5129 = vpop.f32.mrb[0].mxu0
    %5130 = vmatprep.mubr.bf16.mxu0 %v4926
    %5131 = vmatmul.mubr.bf16.gmra.mrb[0].mxu0 %v3618
    %v5132 = vpop.f32.mrb[0].mxu0
    %v5133 = vadd.f32 %v4726, %v5132
    %v5134 = vpop.f32.mrb[0].mxu0
    %v5135 = vpop.f32.mrb[0].mxu0
    %v5136 = vadd.f32 %v4729, %v5135
    %v5137 = vpop.f32.mrb[0].mxu0
    %5138 = vmatprep.mubr.bf16.mxu0 %v4928
    %5139 = vmatmul.mubr.bf16.gmra.mrb[0].mxu0 %v3623
    %v5140 = vpop.f32.mrb[0].mxu0
    %v5141 = vadd.f32 %v4734, %v5140
    %v5142 = vpop.f32.mrb[0].mxu0
    %v5143 = vpop.f32.mrb[0].mxu0
    %v5144 = vadd.f32 %v4737, %v5143
    %v5145 = vpop.f32.mrb[0].mxu0
    %5146 = vmatprep.mubr.bf16.mxu0 %v4930
    %5147 = vmatmul.mubr.bf16.gmra.mrb[0].mxu0 %v3628
    %v5148 = vpop.f32.mrb[0].mxu0
    %v5149 = vadd.f32 %v4742, %v5148
    %v5150 = vpop.f32.mrb[0].mxu0
    %v5151 = vpop.f32.mrb[0].mxu0
    %v5152 = vadd.f32 %v4745, %v5151
    %v5153 = vpop.f32.mrb[0].mxu0
    %5154 = vmatprep.mubr.bf16.mxu0 %v4932
    %5155 = vmatmul.mubr.bf16.gmra.mrb[0].mxu0 %v3633
    %v5156 = vpop.f32.mrb[0].mxu0
    %v5157 = vadd.f32 %v4750, %v5156
    %v5158 = vpop.f32.mrb[0].mxu0
    %v5159 = vpop.f32.mrb[0].mxu0
    %v5160 = vadd.f32 %v4753, %v5159
    %v5161 = vpop.f32.mrb[0].mxu0
    %5162 = vmatprep.mubr.bf16.mxu0 %v4934
    %5163 = vmatmul.mubr.bf16.gmra.mrb[0].mxu0 %v3638
    %v5164 = vpop.f32.mrb[0].mxu0
    %v5165 = vadd.f32 %v4758, %v5164
    %v5166 = vpop.f32.mrb[0].mxu0
    %v5167 = vpop.f32.mrb[0].mxu0
    %v5168 = vadd.f32 %v4761, %v5167
    %v5169 = vpop.f32.mrb[0].mxu0
    %5170 = vmatprep.mubr.bf16.mxu0 %v4936
    %5171 = vmatmul.mubr.bf16.gmra.mrb[0].mxu0 %v3643
    %v5172 = vpop.f32.mrb[0].mxu0
    %v5173 = vadd.f32 %v4766, %v5172
    %v5174 = vpop.f32.mrb[0].mxu0
    %v5175 = vpop.f32.mrb[0].mxu0
    %v5176 = vadd.f32 %v4769, %v5175
    %v5177 = vpop.f32.mrb[0].mxu0
    %5178 = vmatprep.mubr.bf16.mxu0 %v4938
    %5179 = vmatmul.mubr.bf16.gmra.mrb[0].mxu0 %v3648
    %v5180 = vpop.f32.mrb[0].mxu0
    %v5181 = vadd.f32 %v4774, %v5180
    %v5182 = vpop.f32.mrb[0].mxu0
    %v5183 = vpop.f32.mrb[0].mxu0
    %v5184 = vadd.f32 %v4777, %v5183
    %v5185 = vpop.f32.mrb[0].mxu0
    %5186 = vmatprep.mubr.bf16.mxu0 %v4940
    %5187 = vmatmul.mubr.bf16.gmra.mrb[0].mxu0 %v3653
    %v5188 = vpop.f32.mrb[0].mxu0
    %v5189 = vadd.f32 %v4782, %v5188
    %v5190 = vpop.f32.mrb[0].mxu0
    %v5191 = vpop.f32.mrb[0].mxu0
    %v5192 = vadd.f32 %v4785, %v5191
    %v5193 = vpop.f32.mrb[0].mxu0
    %5194 = vmatprep.mubr.bf16.mxu0 %v4942
    %5195 = vmatmul.mubr.bf16.gmra.mrb[0].mxu0 %v3658
    %v5196 = vpop.f32.mrb[0].mxu0
    %v5197 = vadd.f32 %v4790, %v5196
    %v5198 = vpop.f32.mrb[0].mxu0
    %v5199 = vpop.f32.mrb[0].mxu0
    %v5200 = vadd.f32 %v4793, %v5199
    %v5201 = vpop.f32.mrb[0].mxu0
    %5202 = vmatprep.mubr.bf16.mxu0 %v4944
    %5203 = vmatmul.mubr.bf16.gmra.mrb[0].mxu0 %v3663
    %v5204 = vpop.f32.mrb[0].mxu0
    %v5205 = vadd.f32 %v4798, %v5204
    %v5206 = vpop.f32.mrb[0].mxu0
    %v5207 = vpop.f32.mrb[0].mxu0
    %v5208 = vadd.f32 %v4801, %v5207
    %v5209 = vpop.f32.mrb[0].mxu0
    %5210 = vmatprep.mubr.bf16.mxu0 %v4946
    %5211 = vmatmul.mubr.bf16.gmra.mrb[0].mxu0 %v3668
    %v5212 = vpop.f32.mrb[0].mxu0
    %v5213 = vadd.f32 %v4806, %v5212
    %v5214 = vpop.f32.mrb[0].mxu0
    %v5215 = vpop.f32.mrb[0].mxu0
    %v5216 = vadd.f32 %v4809, %v5215
    %v5217 = vpop.f32.mrb[0].mxu0
    %5218 = vmatprep.mubr.bf16.mxu0 %v4948
    %5219 = vmatmul.mubr.bf16.gmra.mrb[0].mxu0 %v3673
    %v5220 = vpop.f32.mrb[0].mxu0
    %v5221 = vadd.f32 %v4814, %v5220
    %v5222 = vpop.f32.mrb[0].mxu0
    %v5223 = vpop.f32.mrb[0].mxu0
    %v5224 = vadd.f32 %v4817, %v5223
    %v5225 = vpop.f32.mrb[0].mxu0
    %5226 = vmatprep.mubr.bf16.mxu0 %v4950
    %5227 = vmatmul.mubr.bf16.gmra.mrb[0].mxu0 %v3678
    %v5228 = vpop.f32.mrb[0].mxu0
    %v5229 = vadd.f32 %v4822, %v5228
    %v5230 = vpop.f32.mrb[0].mxu0
    %v5231 = vpop.f32.mrb[0].mxu0
    %v5232 = vadd.f32 %v4825, %v5231
    %v5233 = vpop.f32.mrb[0].mxu0
    %5234 = vmatprep.mubr.bf16.mxu0 %v4952
    %5235 = vmatmul.mubr.bf16.gmra.mrb[0].mxu0 %v3683
    %v5236 = vpop.f32.mrb[0].mxu0
    %v5237 = vadd.f32 %v4830, %v5236
    %v5238 = vpop.f32.mrb[0].mxu0
    %v5239 = vpop.f32.mrb[0].mxu0
    %v5240 = vadd.f32 %v4833, %v5239
    %v5241 = vpop.f32.mrb[0].mxu0
    %5242 = vdwg.mxu0
    %v5307 = vrot.slane %v3528, 1
    %v5308 = vrot.slane %v3531, 1
    %v5309 = vsel %vm1694, %v5307, %v5308
    %v5310 = vrot.slane %v3220, 1
    %v5311 = vrot.slane %v3222, 1
    %v5312 = vsel %vm1694, %v5310, %v5311
    %v5313 = vrot.slane %v3533, 1
    %v5314 = vrot.slane %v3536, 1
    %v5315 = vsel %vm1694, %v5313, %v5314
    %v5316 = vrot.slane %v3224, 1
    %v5317 = vrot.slane %v3226, 1
    %v5318 = vsel %vm1694, %v5316, %v5317
    %v5319 = vrot.slane %v3538, 1
    %v5320 = vrot.slane %v3541, 1
    %v5321 = vsel %vm1694, %v5319, %v5320
    %v5322 = vrot.slane %v3228, 1
    %v5323 = vrot.slane %v3230, 1
    %v5324 = vsel %vm1694, %v5322, %v5323
    %v5325 = vrot.slane %v3543, 1
    %v5326 = vrot.slane %v3546, 1
    %v5327 = vsel %vm1694, %v5325, %v5326
    %v5328 = vrot.slane %v3232, 1
    %v5329 = vrot.slane %v3234, 1
    %v5330 = vsel %vm1694, %v5328, %v5329
    %v5331 = vrot.slane %v3548, 1
    %v5332 = vrot.slane %v3551, 1
    %v5333 = vsel %vm1694, %v5331, %v5332
    %v5334 = vrot.slane %v3236, 1
    %v5335 = vrot.slane %v3238, 1
    %v5336 = vsel %vm1694, %v5334, %v5335
    %v5337 = vrot.slane %v3553, 1
    %v5338 = vrot.slane %v3556, 1
    %v5339 = vsel %vm1694, %v5337, %v5338
    %v5340 = vrot.slane %v3240, 1
    %v5341 = vrot.slane %v3242, 1
    %v5342 = vsel %vm1694, %v5340, %v5341
    %v5343 = vrot.slane %v3558, 1
    %v5344 = vrot.slane %v3561, 1
    %v5345 = vsel %vm1694, %v5343, %v5344
    %v5346 = vrot.slane %v3244, 1
    %v5347 = vrot.slane %v3246, 1
    %v5348 = vsel %vm1694, %v5346, %v5347
    %v5349 = vrot.slane %v3563, 1
    %v5350 = vrot.slane %v3566, 1
    %v5351 = vsel %vm1694, %v5349, %v5350
    %v5352 = vrot.slane %v3248, 1
    %v5353 = vrot.slane %v3250, 1
    %v5354 = vsel %vm1694, %v5352, %v5353
    %v5355 = vrot.slane %v3568, 1
    %v5356 = vrot.slane %v3571, 1
    %v5357 = vsel %vm1694, %v5355, %v5356
    %v5358 = vrot.slane %v3252, 1
    %v5359 = vrot.slane %v3254, 1
    %v5360 = vsel %vm1694, %v5358, %v5359
    %v5361 = vrot.slane %v3573, 1
    %v5362 = vrot.slane %v3576, 1
    %v5363 = vsel %vm1694, %v5361, %v5362
    %v5364 = vrot.slane %v3256, 1
    %v5365 = vrot.slane %v3258, 1
    %v5366 = vsel %vm1694, %v5364, %v5365
    %v5367 = vrot.slane %v3578, 1
    %v5368 = vrot.slane %v3581, 1
    %v5369 = vsel %vm1694, %v5367, %v5368
    %v5370 = vrot.slane %v3260, 1
    %v5371 = vrot.slane %v3262, 1
    %v5372 = vsel %vm1694, %v5370, %v5371
    %v5373 = vrot.slane %v3583, 1
    %v5374 = vrot.slane %v3586, 1
    %v5375 = vsel %vm1694, %v5373, %v5374
    %v5376 = vrot.slane %v3264, 1
    %v5377 = vrot.slane %v3266, 1
    %v5378 = vsel %vm1694, %v5376, %v5377
    %v5379 = vrot.slane %v3588, 1
    %v5380 = vrot.slane %v3591, 1
    %v5381 = vsel %vm1694, %v5379, %v5380
    %v5382 = vrot.slane %v3268, 1
    %v5383 = vrot.slane %v3270, 1
    %v5384 = vsel %vm1694, %v5382, %v5383
    %v5385 = vrot.slane %v3593, 1
    %v5386 = vrot.slane %v3596, 1
    %v5387 = vsel %vm1694, %v5385, %v5386
    %v5388 = vrot.slane %v3272, 1
    %v5389 = vrot.slane %v3274, 1
    %v5390 = vsel %vm1694, %v5388, %v5389
    %v5391 = vrot.slane %v3598, 1
    %v5392 = vrot.slane %v3601, 1
    %v5393 = vsel %vm1694, %v5391, %v5392
    %v5394 = vrot.slane %v3276, 1
    %v5395 = vrot.slane %v3278, 1
    %v5396 = vsel %vm1694, %v5394, %v5395
    %v5397 = vrot.slane %v3603, 1
    %v5398 = vrot.slane %v3606, 1
    %v5399 = vsel %vm1694, %v5397, %v5398
    %v5400 = vrot.slane %v3280, 1
    %v5401 = vrot.slane %v3282, 1
    %v5402 = vsel %vm1694, %v5400, %v5401
    %v5403 = vrot.slane %v3608, 1
    %v5404 = vrot.slane %v3611, 1
    %v5405 = vsel %vm1694, %v5403, %v5404
    %v5406 = vrot.slane %v3284, 1
    %v5407 = vrot.slane %v3286, 1
    %v5408 = vsel %vm1694, %v5406, %v5407
    %v5409 = vrot.slane %v3613, 1
    %v5410 = vrot.slane %v3616, 1
    %v5411 = vsel %vm1694, %v5409, %v5410
    %v5412 = vrot.slane %v3288, 1
    %v5413 = vrot.slane %v3290, 1
    %v5414 = vsel %vm1694, %v5412, %v5413
    %v5415 = vrot.slane %v3618, 1
    %v5416 = vrot.slane %v3621, 1
    %v5417 = vsel %vm1694, %v5415, %v5416
    %v5418 = vrot.slane %v3292, 1
    %v5419 = vrot.slane %v3294, 1
    %v5420 = vsel %vm1694, %v5418, %v5419
    %v5421 = vrot.slane %v3623, 1
    %v5422 = vrot.slane %v3626, 1
    %v5423 = vsel %vm1694, %v5421, %v5422
    %v5424 = vrot.slane %v3296, 1
    %v5425 = vrot.slane %v3298, 1
    %v5426 = vsel %vm1694, %v5424, %v5425
    %v5427 = vrot.slane %v3628, 1
    %v5428 = vrot.slane %v3631, 1
    %v5429 = vsel %vm1694, %v5427, %v5428
    %v5430 = vrot.slane %v3300, 1
    %v5431 = vrot.slane %v3302, 1
    %v5432 = vsel %vm1694, %v5430, %v5431
    %v5433 = vrot.slane %v3633, 1
    %v5434 = vrot.slane %v3636, 1
    %v5435 = vsel %vm1694, %v5433, %v5434
    %v5436 = vrot.slane %v3304, 1
    %v5437 = vrot.slane %v3306, 1
    %v5438 = vsel %vm1694, %v5436, %v5437
    %v5439 = vrot.slane %v3638, 1
    %v5440 = vrot.slane %v3641, 1
    %v5441 = vsel %vm1694, %v5439, %v5440
    %v5442 = vrot.slane %v3308, 1
    %v5443 = vrot.slane %v3310, 1
    %v5444 = vsel %vm1694, %v5442, %v5443
    %v5445 = vrot.slane %v3643, 1
    %v5446 = vrot.slane %v3646, 1
    %v5447 = vsel %vm1694, %v5445, %v5446
    %v5448 = vrot.slane %v3312, 1
    %v5449 = vrot.slane %v3314, 1
    %v5450 = vsel %vm1694, %v5448, %v5449
    %v5451 = vrot.slane %v3648, 1
    %v5452 = vrot.slane %v3651, 1
    %v5453 = vsel %vm1694, %v5451, %v5452
    %v5454 = vrot.slane %v3316, 1
    %v5455 = vrot.slane %v3318, 1
    %v5456 = vsel %vm1694, %v5454, %v5455
    %v5457 = vrot.slane %v3653, 1
    %v5458 = vrot.slane %v3656, 1
    %v5459 = vsel %vm1694, %v5457, %v5458
    %v5460 = vrot.slane %v3320, 1
    %v5461 = vrot.slane %v3322, 1
    %v5462 = vsel %vm1694, %v5460, %v5461
    %v5463 = vrot.slane %v3658, 1
    %v5464 = vrot.slane %v3661, 1
    %v5465 = vsel %vm1694, %v5463, %v5464
    %v5466 = vrot.slane %v3324, 1
    %v5467 = vrot.slane %v3326, 1
    %v5468 = vsel %vm1694, %v5466, %v5467
    %v5469 = vrot.slane %v3663, 1
    %v5470 = vrot.slane %v3666, 1
    %v5471 = vsel %vm1694, %v5469, %v5470
    %v5472 = vrot.slane %v3328, 1
    %v5473 = vrot.slane %v3330, 1
    %v5474 = vsel %vm1694, %v5472, %v5473
    %v5475 = vrot.slane %v3668, 1
    %v5476 = vrot.slane %v3671, 1
    %v5477 = vsel %vm1694, %v5475, %v5476
    %v5478 = vrot.slane %v3332, 1
    %v5479 = vrot.slane %v3334, 1
    %v5480 = vsel %vm1694, %v5478, %v5479
    %v5481 = vrot.slane %v3673, 1
    %v5482 = vrot.slane %v3676, 1
    %v5483 = vsel %vm1694, %v5481, %v5482
    %v5484 = vrot.slane %v3336, 1
    %v5485 = vrot.slane %v3338, 1
    %v5486 = vsel %vm1694, %v5484, %v5485
    %v5487 = vrot.slane %v3678, 1
    %v5488 = vrot.slane %v3681, 1
    %v5489 = vsel %vm1694, %v5487, %v5488
    %v5490 = vrot.slane %v3340, 1
    %v5491 = vrot.slane %v3342, 1
    %v5492 = vsel %vm1694, %v5490, %v5491
    %v5493 = vrot.slane %v3683, 1
    %v5494 = vrot.slane %v3686, 1
    %v5495 = vsel %vm1694, %v5493, %v5494
    %v5496 = vrot.slane %v3344, 1
    %v5497 = vrot.slane %v3346, 1
    %v5498 = vsel %vm1694, %v5496, %v5497
    %s5531 = scalar_lea.vmem [#allocation7], 144
    %v5532 = vld [vmem:[%s5531] sm:$0xf]
    %v5533 = vld [vmem:[%s5531 + $0x4] sm:$0xf]
    %v5534 = vld [vmem:[%s5531 + $0x8] sm:$0xf]
    %v5535 = vld [vmem:[%s5531 + $0xc] sm:$0xf]
    %v5536 = vld [vmem:[%s5531 + $0x10] sm:$0xf]
    %v5537 = vld [vmem:[%s5531 + $0x14] sm:$0xf]
    %v5538 = vld [vmem:[%s5531 + $0x18] sm:$0xf]
    %v5539 = vld [vmem:[%s5531 + $0x1c] sm:$0xf]
    %v5540 = vld [vmem:[%s5531 + $0x20] sm:$0xf]
    %v5541 = vld [vmem:[%s5531 + $0x24] sm:$0xf]
    %v5542 = vld [vmem:[%s5531 + $0x28] sm:$0xf]
    %v5543 = vld [vmem:[%s5531 + $0x2c] sm:$0xf]
    %v5544 = vld [vmem:[%s5531 + $0x30] sm:$0xf]
    %v5545 = vld [vmem:[%s5531 + $0x34] sm:$0xf]
    %v5546 = vld [vmem:[%s5531 + $0x38] sm:$0xf]
    %v5547 = vld [vmem:[%s5531 + $0x3c] sm:$0xf]
    %v5548 = vld [vmem:[%s5531 + $0x40] sm:$0xf]
    %v5549 = vld [vmem:[%s5531 + $0x44] sm:$0xf]
    %v5568 = vunpack.c.l.b16 %v5532
    %v5569 = vunpack.c.l.b16 %v5533
    %v5570 = vunpack.c.l.b16 %v5534
    %v5571 = vunpack.c.l.b16 %v5535
    %v5572 = vunpack.c.l.b16 %v5536
    %v5573 = vunpack.c.l.b16 %v5537
    %v5574 = vunpack.c.l.b16 %v5538
    %v5575 = vunpack.c.l.b16 %v5539
    %v5576 = vunpack.c.l.b16 %v5540
    %v5577 = vunpack.c.l.b16 %v5541
    %v5578 = vunpack.c.l.b16 %v5542
    %v5579 = vunpack.c.l.b16 %v5543
    %v5580 = vunpack.c.l.b16 %v5544
    %v5581 = vunpack.c.l.b16 %v5545
    %v5582 = vunpack.c.l.b16 %v5546
    %v5583 = vunpack.c.l.b16 %v5547
    %v5584 = vunpack.c.l.b16 %v5548
    %v5585 = vunpack.c.l.b16 %v5549
    %v5586 = vpack.c.b16 %v5569, %v5568
    %v5587 = vpack.c.b16 %v5571, %v5570
    %v5588 = vpack.c.b16 %v5573, %v5572
    %v5589 = vpack.c.b16 %v5575, %v5574
    %v5590 = vpack.c.b16 %v5577, %v5576
    %v5591 = vpack.c.b16 %v5579, %v5578
    %v5592 = vpack.c.b16 %v5581, %v5580
    %v5593 = vpack.c.b16 %v5583, %v5582
    %v5594 = vpack.c.b16 %v5585, %v5584
    %v5605 = vsel %vm4450, %v5312, 0
    %v5608 = vsel %vm4450, %v5318, 0
    %v5611 = vsel %vm4450, %v5324, 0
    %v5614 = vsel %vm4450, %v5330, 0
    %v5617 = vsel %vm4450, %v5336, 0
    %v5620 = vsel %vm4450, %v5342, 0
    %v5623 = vsel %vm4450, %v5348, 0
    %v5626 = vsel %vm4450, %v5354, 0
    %v5629 = vsel %vm4450, %v5360, 0
    %v5632 = vsel %vm4450, %v5366, 0
    %v5635 = vsel %vm4450, %v5372, 0
    %v5638 = vsel %vm4450, %v5378, 0
    %v5641 = vsel %vm4450, %v5384, 0
    %v5644 = vsel %vm4450, %v5390, 0
    %v5647 = vsel %vm4450, %v5396, 0
    %v5650 = vsel %vm4450, %v5402, 0
    %v5653 = vsel %vm4450, %v5408, 0
    %v5656 = vsel %vm4450, %v5414, 0
    %v5659 = vsel %vm4450, %v5420, 0
    %v5662 = vsel %vm4450, %v5426, 0
    %v5665 = vsel %vm4450, %v5432, 0
    %v5668 = vsel %vm4450, %v5438, 0
    %v5671 = vsel %vm4450, %v5444, 0
    %v5674 = vsel %vm4450, %v5450, 0
    %v5677 = vsel %vm4450, %v5456, 0
    %v5680 = vsel %vm4450, %v5462, 0
    %v5683 = vsel %vm4450, %v5468, 0
    %v5686 = vsel %vm4450, %v5474, 0
    %v5689 = vsel %vm4450, %v5480, 0
    %v5692 = vsel %vm4450, %v5486, 0
    %v5695 = vsel %vm4450, %v5492, 0
    %v5698 = vsel %vm4450, %v5498, 0
    %5700 = vmatprep.subr.bf16.mxu0 0
    %5701 = vmatpush1.bf16.msra.mxu0 %v5586
    %5702 = vmatprep.subr.bf16.mxu0 0
    %5703 = vmatpush1.bf16.msra.mxu0 %v5587
    %5704 = vmatprep.subr.bf16.mxu0 0
    %5705 = vmatpush1.bf16.msra.mxu0 %v5588
    %5706 = vmatprep.subr.bf16.mxu0 0
    %5707 = vmatpush1.bf16.msra.mxu0 %v5589
    %5708 = vmatprep.subr.bf16.mxu0 0
    %5709 = vmatpush1.bf16.msra.mxu0 %v5590
    %5710 = vmatprep.subr.bf16.mxu0 0
    %5711 = vmatpush1.bf16.msra.mxu0 %v5591
    %5712 = vmatprep.subr.bf16.mxu0 0
    %5713 = vmatpush1.bf16.msra.mxu0 %v5592
    %5714 = vmatprep.subr.bf16.mxu0 0
    %5715 = vmatpush1.bf16.msra.mxu0 %v5593
    %5716 = vmatprep.subr.bf16.mxu0 0
    %5717 = vmatpush1.bf16.msra.mxu0 %v5594
    %5718 = vmatprep.subr.bf16.mxu0 0
    %5719 = vmatpush1.bf16.msra.mxu0 0
    %5720 = vmatprep.subr.bf16.mxu0 0
    %5721 = vmatpush1.bf16.msra.mxu0 0
    %5722 = vmatprep.subr.bf16.mxu0 0
    %5723 = vmatpush1.bf16.msra.mxu0 0
    %5724 = vmatprep.subr.bf16.mxu0 0
    %5725 = vmatpush1.bf16.msra.mxu0 0
    %5726 = vmatprep.subr.bf16.mxu0 0
    %5727 = vmatpush1.bf16.msra.mxu0 0
    %5728 = vmatprep.subr.bf16.mxu0 0
    %5729 = vmatpush1.bf16.msra.mxu0 0
    %5730 = vmatprep.subr.bf16.mxu0 0
    %5731 = vmatpush1.bf16.msra.mxu0 0
    %5732 = vmatprep.mubr.bf16.mxu0 %v5605
    %5733 = vmatmul.mubr.bf16.gmra.mrb[0].mxu0 %v5309
    %v5734 = vpop.f32.mrb[0].mxu0
    %v5735 = vadd.f32 0.0, %v5734
    %v5736 = vpop.f32.mrb[0].mxu0
    %v5737 = vpop.f32.mrb[0].mxu0
    %v5738 = vadd.f32 0.0, %v5737
    %v5739 = vpop.f32.mrb[0].mxu0
    %5740 = vmatprep.mubr.bf16.mxu0 %v5608
    %5741 = vmatmul.mubr.bf16.gmra.mrb[0].mxu0 %v5315
    %v5742 = vpop.f32.mrb[0].mxu0
    %v5743 = vadd.f32 0.0, %v5742
    %v5744 = vpop.f32.mrb[0].mxu0
    %v5745 = vpop.f32.mrb[0].mxu0
    %v5746 = vadd.f32 0.0, %v5745
    %v5747 = vpop.f32.mrb[0].mxu0
    %5748 = vmatprep.mubr.bf16.mxu0 %v5611
    %5749 = vmatmul.mubr.bf16.gmra.mrb[0].mxu0 %v5321
    %v5750 = vpop.f32.mrb[0].mxu0
    %v5751 = vadd.f32 0.0, %v5750
    %v5752 = vpop.f32.mrb[0].mxu0
    %v5753 = vpop.f32.mrb[0].mxu0
    %v5754 = vadd.f32 0.0, %v5753
    %v5755 = vpop.f32.mrb[0].mxu0
    %5756 = vmatprep.mubr.bf16.mxu0 %v5614
    %5757 = vmatmul.mubr.bf16.gmra.mrb[0].mxu0 %v5327
    %v5758 = vpop.f32.mrb[0].mxu0
    %v5759 = vadd.f32 0.0, %v5758
    %v5760 = vpop.f32.mrb[0].mxu0
    %v5761 = vpop.f32.mrb[0].mxu0
    %v5762 = vadd.f32 0.0, %v5761
    %v5763 = vpop.f32.mrb[0].mxu0
    %5764 = vmatprep.mubr.bf16.mxu0 %v5617
    %5765 = vmatmul.mubr.bf16.gmra.mrb[0].mxu0 %v5333
    %v5766 = vpop.f32.mrb[0].mxu0
    %v5767 = vadd.f32 0.0, %v5766
    %v5768 = vpop.f32.mrb[0].mxu0
    %v5769 = vpop.f32.mrb[0].mxu0
    %v5770 = vadd.f32 0.0, %v5769
    %v5771 = vpop.f32.mrb[0].mxu0
    %5772 = vmatprep.mubr.bf16.mxu0 %v5620
    %5773 = vmatmul.mubr.bf16.gmra.mrb[0].mxu0 %v5339
    %v5774 = vpop.f32.mrb[0].mxu0
    %v5775 = vadd.f32 0.0, %v5774
    %v5776 = vpop.f32.mrb[0].mxu0
    %v5777 = vpop.f32.mrb[0].mxu0
    %v5778 = vadd.f32 0.0, %v5777
    %v5779 = vpop.f32.mrb[0].mxu0
    %5780 = vmatprep.mubr.bf16.mxu0 %v5623
    %5781 = vmatmul.mubr.bf16.gmra.mrb[0].mxu0 %v5345
    %v5782 = vpop.f32.mrb[0].mxu0
    %v5783 = vadd.f32 0.0, %v5782
    %v5784 = vpop.f32.mrb[0].mxu0
    %v5785 = vpop.f32.mrb[0].mxu0
    %v5786 = vadd.f32 0.0, %v5785
    %v5787 = vpop.f32.mrb[0].mxu0
    %5788 = vmatprep.mubr.bf16.mxu0 %v5626
    %5789 = vmatmul.mubr.bf16.gmra.mrb[0].mxu0 %v5351
    %v5790 = vpop.f32.mrb[0].mxu0
    %v5791 = vadd.f32 0.0, %v5790
    %v5792 = vpop.f32.mrb[0].mxu0
    %v5793 = vpop.f32.mrb[0].mxu0
    %v5794 = vadd.f32 0.0, %v5793
    %v5795 = vpop.f32.mrb[0].mxu0
    %5796 = vmatprep.mubr.bf16.mxu0 %v5629
    %5797 = vmatmul.mubr.bf16.gmra.mrb[0].mxu0 %v5357
    %v5798 = vpop.f32.mrb[0].mxu0
    %v5799 = vadd.f32 0.0, %v5798
    %v5800 = vpop.f32.mrb[0].mxu0
    %v5801 = vpop.f32.mrb[0].mxu0
    %v5802 = vadd.f32 0.0, %v5801
    %v5803 = vpop.f32.mrb[0].mxu0
    %5804 = vmatprep.mubr.bf16.mxu0 %v5632
    %5805 = vmatmul.mubr.bf16.gmra.mrb[0].mxu0 %v5363
    %v5806 = vpop.f32.mrb[0].mxu0
    %v5807 = vadd.f32 0.0, %v5806
    %v5808 = vpop.f32.mrb[0].mxu0
    %v5809 = vpop.f32.mrb[0].mxu0
    %v5810 = vadd.f32 0.0, %v5809
    %v5811 = vpop.f32.mrb[0].mxu0
    %5812 = vmatprep.mubr.bf16.mxu0 %v5635
    %5813 = vmatmul.mubr.bf16.gmra.mrb[0].mxu0 %v5369
    %v5814 = vpop.f32.mrb[0].mxu0
    %v5815 = vadd.f32 0.0, %v5814
    %v5816 = vpop.f32.mrb[0].mxu0
    %v5817 = vpop.f32.mrb[0].mxu0
    %v5818 = vadd.f32 0.0, %v5817
    %v5819 = vpop.f32.mrb[0].mxu0
    %5820 = vmatprep.mubr.bf16.mxu0 %v5638
    %5821 = vmatmul.mubr.bf16.gmra.mrb[0].mxu0 %v5375
    %v5822 = vpop.f32.mrb[0].mxu0
    %v5823 = vadd.f32 0.0, %v5822
    %v5824 = vpop.f32.mrb[0].mxu0
    %v5825 = vpop.f32.mrb[0].mxu0
    %v5826 = vadd.f32 0.0, %v5825
    %v5827 = vpop.f32.mrb[0].mxu0
    %5828 = vmatprep.mubr.bf16.mxu0 %v5641
    %5829 = vmatmul.mubr.bf16.gmra.mrb[0].mxu0 %v5381
    %v5830 = vpop.f32.mrb[0].mxu0
    %v5831 = vadd.f32 0.0, %v5830
    %v5832 = vpop.f32.mrb[0].mxu0
    %v5833 = vpop.f32.mrb[0].mxu0
    %v5834 = vadd.f32 0.0, %v5833
    %v5835 = vpop.f32.mrb[0].mxu0
    %5836 = vmatprep.mubr.bf16.mxu0 %v5644
    %5837 = vmatmul.mubr.bf16.gmra.mrb[0].mxu0 %v5387
    %v5838 = vpop.f32.mrb[0].mxu0
    %v5839 = vadd.f32 0.0, %v5838
    %v5840 = vpop.f32.mrb[0].mxu0
    %v5841 = vpop.f32.mrb[0].mxu0
    %v5842 = vadd.f32 0.0, %v5841
    %v5843 = vpop.f32.mrb[0].mxu0
    %5844 = vmatprep.mubr.bf16.mxu0 %v5647
    %5845 = vmatmul.mubr.bf16.gmra.mrb[0].mxu0 %v5393
    %v5846 = vpop.f32.mrb[0].mxu0
    %v5847 = vadd.f32 0.0, %v5846
    %v5848 = vpop.f32.mrb[0].mxu0
    %v5849 = vpop.f32.mrb[0].mxu0
    %v5850 = vadd.f32 0.0, %v5849
    %v5851 = vpop.f32.mrb[0].mxu0
    %5852 = vmatprep.mubr.bf16.mxu0 %v5650
    %5853 = vmatmul.mubr.bf16.gmra.mrb[0].mxu0 %v5399
    %v5854 = vpop.f32.mrb[0].mxu0
    %v5855 = vadd.f32 0.0, %v5854
    %v5856 = vpop.f32.mrb[0].mxu0
    %v5857 = vpop.f32.mrb[0].mxu0
    %v5858 = vadd.f32 0.0, %v5857
    %v5859 = vpop.f32.mrb[0].mxu0
    %5860 = vmatprep.mubr.bf16.mxu0 %v5653
    %5861 = vmatmul.mubr.bf16.gmra.mrb[0].mxu0 %v5405
    %v5862 = vpop.f32.mrb[0].mxu0
    %v5863 = vadd.f32 0.0, %v5862
    %v5864 = vpop.f32.mrb[0].mxu0
    %v5865 = vpop.f32.mrb[0].mxu0
    %v5866 = vadd.f32 0.0, %v5865
    %v5867 = vpop.f32.mrb[0].mxu0
    %5868 = vmatprep.mubr.bf16.mxu0 %v5656
    %5869 = vmatmul.mubr.bf16.gmra.mrb[0].mxu0 %v5411
    %v5870 = vpop.f32.mrb[0].mxu0
    %v5871 = vadd.f32 0.0, %v5870
    %v5872 = vpop.f32.mrb[0].mxu0
    %v5873 = vpop.f32.mrb[0].mxu0
    %v5874 = vadd.f32 0.0, %v5873
    %v5875 = vpop.f32.mrb[0].mxu0
    %5876 = vmatprep.mubr.bf16.mxu0 %v5659
    %5877 = vmatmul.mubr.bf16.gmra.mrb[0].mxu0 %v5417
    %v5878 = vpop.f32.mrb[0].mxu0
    %v5879 = vadd.f32 0.0, %v5878
    %v5880 = vpop.f32.mrb[0].mxu0
    %v5881 = vpop.f32.mrb[0].mxu0
    %v5882 = vadd.f32 0.0, %v5881
    %v5883 = vpop.f32.mrb[0].mxu0
    %5884 = vmatprep.mubr.bf16.mxu0 %v5662
    %5885 = vmatmul.mubr.bf16.gmra.mrb[0].mxu0 %v5423
    %v5886 = vpop.f32.mrb[0].mxu0
    %v5887 = vadd.f32 0.0, %v5886
    %v5888 = vpop.f32.mrb[0].mxu0
    %v5889 = vpop.f32.mrb[0].mxu0
    %v5890 = vadd.f32 0.0, %v5889
    %v5891 = vpop.f32.mrb[0].mxu0
    %5892 = vmatprep.mubr.bf16.mxu0 %v5665
    %5893 = vmatmul.mubr.bf16.gmra.mrb[0].mxu0 %v5429
    %v5894 = vpop.f32.mrb[0].mxu0
    %v5895 = vadd.f32 0.0, %v5894
    %v5896 = vpop.f32.mrb[0].mxu0
    %v5897 = vpop.f32.mrb[0].mxu0
    %v5898 = vadd.f32 0.0, %v5897
    %v5899 = vpop.f32.mrb[0].mxu0
    %5900 = vmatprep.mubr.bf16.mxu0 %v5668
    %5901 = vmatmul.mubr.bf16.gmra.mrb[0].mxu0 %v5435
    %v5902 = vpop.f32.mrb[0].mxu0
    %v5903 = vadd.f32 0.0, %v5902
    %v5904 = vpop.f32.mrb[0].mxu0
    %v5905 = vpop.f32.mrb[0].mxu0
    %v5906 = vadd.f32 0.0, %v5905
    %v5907 = vpop.f32.mrb[0].mxu0
    %5908 = vmatprep.mubr.bf16.mxu0 %v5671
    %5909 = vmatmul.mubr.bf16.gmra.mrb[0].mxu0 %v5441
    %v5910 = vpop.f32.mrb[0].mxu0
    %v5911 = vadd.f32 0.0, %v5910
    %v5912 = vpop.f32.mrb[0].mxu0
    %v5913 = vpop.f32.mrb[0].mxu0
    %v5914 = vadd.f32 0.0, %v5913
    %v5915 = vpop.f32.mrb[0].mxu0
    %5916 = vmatprep.mubr.bf16.mxu0 %v5674
    %5917 = vmatmul.mubr.bf16.gmra.mrb[0].mxu0 %v5447
    %v5918 = vpop.f32.mrb[0].mxu0
    %v5919 = vadd.f32 0.0, %v5918
    %v5920 = vpop.f32.mrb[0].mxu0
    %v5921 = vpop.f32.mrb[0].mxu0
    %v5922 = vadd.f32 0.0, %v5921
    %v5923 = vpop.f32.mrb[0].mxu0
    %5924 = vmatprep.mubr.bf16.mxu0 %v5677
    %5925 = vmatmul.mubr.bf16.gmra.mrb[0].mxu0 %v5453
    %v5926 = vpop.f32.mrb[0].mxu0
    %v5927 = vadd.f32 0.0, %v5926
    %v5928 = vpop.f32.mrb[0].mxu0
    %v5929 = vpop.f32.mrb[0].mxu0
    %v5930 = vadd.f32 0.0, %v5929
    %v5931 = vpop.f32.mrb[0].mxu0
    %5932 = vmatprep.mubr.bf16.mxu0 %v5680
    %5933 = vmatmul.mubr.bf16.gmra.mrb[0].mxu0 %v5459
    %v5934 = vpop.f32.mrb[0].mxu0
    %v5935 = vadd.f32 0.0, %v5934
    %v5936 = vpop.f32.mrb[0].mxu0
    %v5937 = vpop.f32.mrb[0].mxu0
    %v5938 = vadd.f32 0.0, %v5937
    %v5939 = vpop.f32.mrb[0].mxu0
    %5940 = vmatprep.mubr.bf16.mxu0 %v5683
    %5941 = vmatmul.mubr.bf16.gmra.mrb[0].mxu0 %v5465
    %v5942 = vpop.f32.mrb[0].mxu0
    %v5943 = vadd.f32 0.0, %v5942
    %v5944 = vpop.f32.mrb[0].mxu0
    %v5945 = vpop.f32.mrb[0].mxu0
    %v5946 = vadd.f32 0.0, %v5945
    %v5947 = vpop.f32.mrb[0].mxu0
    %5948 = vmatprep.mubr.bf16.mxu0 %v5686
    %5949 = vmatmul.mubr.bf16.gmra.mrb[0].mxu0 %v5471
    %v5950 = vpop.f32.mrb[0].mxu0
    %v5951 = vadd.f32 0.0, %v5950
    %v5952 = vpop.f32.mrb[0].mxu0
    %v5953 = vpop.f32.mrb[0].mxu0
    %v5954 = vadd.f32 0.0, %v5953
    %v5955 = vpop.f32.mrb[0].mxu0
    %5956 = vmatprep.mubr.bf16.mxu0 %v5689
    %5957 = vmatmul.mubr.bf16.gmra.mrb[0].mxu0 %v5477
    %v5958 = vpop.f32.mrb[0].mxu0
    %v5959 = vadd.f32 0.0, %v5958
    %v5960 = vpop.f32.mrb[0].mxu0
    %v5961 = vpop.f32.mrb[0].mxu0
    %v5962 = vadd.f32 0.0, %v5961
    %v5963 = vpop.f32.mrb[0].mxu0
    %5964 = vmatprep.mubr.bf16.mxu0 %v5692
    %5965 = vmatmul.mubr.bf16.gmra.mrb[0].mxu0 %v5483
    %v5966 = vpop.f32.mrb[0].mxu0
    %v5967 = vadd.f32 0.0, %v5966
    %v5968 = vpop.f32.mrb[0].mxu0
    %v5969 = vpop.f32.mrb[0].mxu0
    %v5970 = vadd.f32 0.0, %v5969
    %v5971 = vpop.f32.mrb[0].mxu0
    %5972 = vmatprep.mubr.bf16.mxu0 %v5695
    %5973 = vmatmul.mubr.bf16.gmra.mrb[0].mxu0 %v5489
    %v5974 = vpop.f32.mrb[0].mxu0
    %v5975 = vadd.f32 0.0, %v5974
    %v5976 = vpop.f32.mrb[0].mxu0
    %v5977 = vpop.f32.mrb[0].mxu0
    %v5978 = vadd.f32 0.0, %v5977
    %v5979 = vpop.f32.mrb[0].mxu0
    %5980 = vmatprep.mubr.bf16.mxu0 %v5698
    %5981 = vmatmul.mubr.bf16.gmra.mrb[0].mxu0 %v5495
    %v5982 = vpop.f32.mrb[0].mxu0
    %v5983 = vadd.f32 0.0, %v5982
    %v5984 = vpop.f32.mrb[0].mxu0
    %v5985 = vpop.f32.mrb[0].mxu0
    %v5986 = vadd.f32 0.0, %v5985
    %v5987 = vpop.f32.mrb[0].mxu0
    %5988 = vdwg.mxu0
    %v5989 = vadd.f32 %v4989, %v5735
    %v5990 = vadd.f32 %v4992, %v5738
    %v5991 = vadd.f32 %v4997, %v5743
    %v5992 = vadd.f32 %v5000, %v5746
    %v5993 = vadd.f32 %v5005, %v5751
    %v5994 = vadd.f32 %v5008, %v5754
    %v5995 = vadd.f32 %v5013, %v5759
    %v5996 = vadd.f32 %v5016, %v5762
    %v5997 = vadd.f32 %v5021, %v5767
    %v5998 = vadd.f32 %v5024, %v5770
    %v5999 = vadd.f32 %v5029, %v5775
    %v6000 = vadd.f32 %v5032, %v5778
    %v6001 = vadd.f32 %v5037, %v5783
    %v6002 = vadd.f32 %v5040, %v5786
    %v6003 = vadd.f32 %v5045, %v5791
    %v6004 = vadd.f32 %v5048, %v5794
    %v6005 = vadd.f32 %v5053, %v5799
    %v6006 = vadd.f32 %v5056, %v5802
    %v6007 = vadd.f32 %v5061, %v5807
    %v6008 = vadd.f32 %v5064, %v5810
    %v6009 = vadd.f32 %v5069, %v5815
    %v6010 = vadd.f32 %v5072, %v5818
    %v6011 = vadd.f32 %v5077, %v5823
    %v6012 = vadd.f32 %v5080, %v5826
    %v6013 = vadd.f32 %v5085, %v5831
    %v6014 = vadd.f32 %v5088, %v5834
    %v6015 = vadd.f32 %v5093, %v5839
    %v6016 = vadd.f32 %v5096, %v5842
    %v6017 = vadd.f32 %v5101, %v5847
    %v6018 = vadd.f32 %v5104, %v5850
    %v6019 = vadd.f32 %v5109, %v5855
    %v6020 = vadd.f32 %v5112, %v5858
    %v6021 = vadd.f32 %v5117, %v5863
    %v6022 = vadd.f32 %v5120, %v5866
    %v6023 = vadd.f32 %v5125, %v5871
    %v6024 = vadd.f32 %v5128, %v5874
    %v6025 = vadd.f32 %v5133, %v5879
    %v6026 = vadd.f32 %v5136, %v5882
    %v6027 = vadd.f32 %v5141, %v5887
    %v6028 = vadd.f32 %v5144, %v5890
    %v6029 = vadd.f32 %v5149, %v5895
    %v6030 = vadd.f32 %v5152, %v5898
    %v6031 = vadd.f32 %v5157, %v5903
    %v6032 = vadd.f32 %v5160, %v5906
    %v6033 = vadd.f32 %v5165, %v5911
    %v6034 = vadd.f32 %v5168, %v5914
    %v6035 = vadd.f32 %v5173, %v5919
    %v6036 = vadd.f32 %v5176, %v5922
    %v6037 = vadd.f32 %v5181, %v5927
    %v6038 = vadd.f32 %v5184, %v5930
    %v6039 = vadd.f32 %v5189, %v5935
    %v6040 = vadd.f32 %v5192, %v5938
    %v6041 = vadd.f32 %v5197, %v5943
    %v6042 = vadd.f32 %v5200, %v5946
    %v6043 = vadd.f32 %v5205, %v5951
    %v6044 = vadd.f32 %v5208, %v5954
    %v6045 = vadd.f32 %v5213, %v5959
    %v6046 = vadd.f32 %v5216, %v5962
    %v6047 = vadd.f32 %v5221, %v5967
    %v6048 = vadd.f32 %v5224, %v5970
    %v6049 = vadd.f32 %v5229, %v5975
    %v6050 = vadd.f32 %v5232, %v5978
    %v6051 = vadd.f32 %v5237, %v5983
    %v6052 = vadd.f32 %v5240, %v5986
    %vm6053 = vcmp.ge.f32.partialorder %v5989, 0.0
    %vm6054 = vcmp.ge.f32.partialorder %v5990, 0.0
    %vm6055 = vcmp.ge.f32.partialorder %v5991, 0.0
    %vm6056 = vcmp.ge.f32.partialorder %v5992, 0.0
    %vm6057 = vcmp.ge.f32.partialorder %v5993, 0.0
    %vm6058 = vcmp.ge.f32.partialorder %v5994, 0.0
    %vm6059 = vcmp.ge.f32.partialorder %v5995, 0.0
    %vm6060 = vcmp.ge.f32.partialorder %v5996, 0.0
    %vm6061 = vcmp.ge.f32.partialorder %v5997, 0.0
    %vm6062 = vcmp.ge.f32.partialorder %v5998, 0.0
    %vm6063 = vcmp.ge.f32.partialorder %v5999, 0.0
    %vm6064 = vcmp.ge.f32.partialorder %v6000, 0.0
    %vm6065 = vcmp.ge.f32.partialorder %v6001, 0.0
    %vm6066 = vcmp.ge.f32.partialorder %v6002, 0.0
    %vm6067 = vcmp.ge.f32.partialorder %v6003, 0.0
    %vm6068 = vcmp.ge.f32.partialorder %v6004, 0.0
    %vm6069 = vcmp.ge.f32.partialorder %v6005, 0.0
    %vm6070 = vcmp.ge.f32.partialorder %v6006, 0.0
    %vm6071 = vcmp.ge.f32.partialorder %v6007, 0.0
    %vm6072 = vcmp.ge.f32.partialorder %v6008, 0.0
    %vm6073 = vcmp.ge.f32.partialorder %v6009, 0.0
    %vm6074 = vcmp.ge.f32.partialorder %v6010, 0.0
    %vm6075 = vcmp.ge.f32.partialorder %v6011, 0.0
    %vm6076 = vcmp.ge.f32.partialorder %v6012, 0.0
    %vm6077 = vcmp.ge.f32.partialorder %v6013, 0.0
    %vm6078 = vcmp.ge.f32.partialorder %v6014, 0.0
    %vm6079 = vcmp.ge.f32.partialorder %v6015, 0.0
    %vm6080 = vcmp.ge.f32.partialorder %v6016, 0.0
    %vm6081 = vcmp.ge.f32.partialorder %v6017, 0.0
    %vm6082 = vcmp.ge.f32.partialorder %v6018, 0.0
    %vm6083 = vcmp.ge.f32.partialorder %v6019, 0.0
    %vm6084 = vcmp.ge.f32.partialorder %v6020, 0.0
    %vm6085 = vcmp.ge.f32.partialorder %v6021, 0.0
    %vm6086 = vcmp.ge.f32.partialorder %v6022, 0.0
    %vm6087 = vcmp.ge.f32.partialorder %v6023, 0.0
    %vm6088 = vcmp.ge.f32.partialorder %v6024, 0.0
    %vm6089 = vcmp.ge.f32.partialorder %v6025, 0.0
    %vm6090 = vcmp.ge.f32.partialorder %v6026, 0.0
    %vm6091 = vcmp.ge.f32.partialorder %v6027, 0.0
    %vm6092 = vcmp.ge.f32.partialorder %v6028, 0.0
    %vm6093 = vcmp.ge.f32.partialorder %v6029, 0.0
    %vm6094 = vcmp.ge.f32.partialorder %v6030, 0.0
    %vm6095 = vcmp.ge.f32.partialorder %v6031, 0.0
    %vm6096 = vcmp.ge.f32.partialorder %v6032, 0.0
    %vm6097 = vcmp.ge.f32.partialorder %v6033, 0.0
    %vm6098 = vcmp.ge.f32.partialorder %v6034, 0.0
    %vm6099 = vcmp.ge.f32.partialorder %v6035, 0.0
    %vm6100 = vcmp.ge.f32.partialorder %v6036, 0.0
    %vm6101 = vcmp.ge.f32.partialorder %v6037, 0.0
    %vm6102 = vcmp.ge.f32.partialorder %v6038, 0.0
    %vm6103 = vcmp.ge.f32.partialorder %v6039, 0.0
    %vm6104 = vcmp.ge.f32.partialorder %v6040, 0.0
    %vm6105 = vcmp.ge.f32.partialorder %v6041, 0.0
    %vm6106 = vcmp.ge.f32.partialorder %v6042, 0.0
    %vm6107 = vcmp.ge.f32.partialorder %v6043, 0.0
    %vm6108 = vcmp.ge.f32.partialorder %v6044, 0.0
    %vm6109 = vcmp.ge.f32.partialorder %v6045, 0.0
    %vm6110 = vcmp.ge.f32.partialorder %v6046, 0.0
    %vm6111 = vcmp.ge.f32.partialorder %v6047, 0.0
    %vm6112 = vcmp.ge.f32.partialorder %v6048, 0.0
    %vm6113 = vcmp.ge.f32.partialorder %v6049, 0.0
    %vm6114 = vcmp.ge.f32.partialorder %v6050, 0.0
    %vm6115 = vcmp.ge.f32.partialorder %v6051, 0.0
    %vm6116 = vcmp.ge.f32.partialorder %v6052, 0.0
    %v6117 = vmul.f32 %v5989, 0.1
    %v6118 = vmul.f32 %v5990, 0.1
    %v6119 = vmul.f32 %v5991, 0.1
    %v6120 = vmul.f32 %v5992, 0.1
    %v6121 = vmul.f32 %v5993, 0.1
    %v6122 = vmul.f32 %v5994, 0.1
    %v6123 = vmul.f32 %v5995, 0.1
    %v6124 = vmul.f32 %v5996, 0.1
    %v6125 = vmul.f32 %v5997, 0.1
    %v6126 = vmul.f32 %v5998, 0.1
    %v6127 = vmul.f32 %v5999, 0.1
    %v6128 = vmul.f32 %v6000, 0.1
    %v6129 = vmul.f32 %v6001, 0.1
    %v6130 = vmul.f32 %v6002, 0.1
    %v6131 = vmul.f32 %v6003, 0.1
    %v6132 = vmul.f32 %v6004, 0.1
    %v6133 = vmul.f32 %v6005, 0.1
    %v6134 = vmul.f32 %v6006, 0.1
    %v6135 = vmul.f32 %v6007, 0.1
    %v6136 = vmul.f32 %v6008, 0.1
    %v6137 = vmul.f32 %v6009, 0.1
    %v6138 = vmul.f32 %v6010, 0.1
    %v6139 = vmul.f32 %v6011, 0.1
    %v6140 = vmul.f32 %v6012, 0.1
    %v6141 = vmul.f32 %v6013, 0.1
    %v6142 = vmul.f32 %v6014, 0.1
    %v6143 = vmul.f32 %v6015, 0.1
    %v6144 = vmul.f32 %v6016, 0.1
    %v6145 = vmul.f32 %v6017, 0.1
    %v6146 = vmul.f32 %v6018, 0.1
    %v6147 = vmul.f32 %v6019, 0.1
    %v6148 = vmul.f32 %v6020, 0.1
    %v6149 = vmul.f32 %v6021, 0.1
    %v6150 = vmul.f32 %v6022, 0.1
    %v6151 = vmul.f32 %v6023, 0.1
    %v6152 = vmul.f32 %v6024, 0.1
    %v6153 = vmul.f32 %v6025, 0.1
    %v6154 = vmul.f32 %v6026, 0.1
    %v6155 = vmul.f32 %v6027, 0.1
    %v6156 = vmul.f32 %v6028, 0.1
    %v6157 = vmul.f32 %v6029, 0.1
    %v6158 = vmul.f32 %v6030, 0.1
    %v6159 = vmul.f32 %v6031, 0.1
    %v6160 = vmul.f32 %v6032, 0.1
    %v6161 = vmul.f32 %v6033, 0.1
    %v6162 = vmul.f32 %v6034, 0.1
    %v6163 = vmul.f32 %v6035, 0.1
    %v6164 = vmul.f32 %v6036, 0.1
    %v6165 = vmul.f32 %v6037, 0.1
    %v6166 = vmul.f32 %v6038, 0.1
    %v6167 = vmul.f32 %v6039, 0.1
    %v6168 = vmul.f32 %v6040, 0.1
    %v6169 = vmul.f32 %v6041, 0.1
    %v6170 = vmul.f32 %v6042, 0.1
    %v6171 = vmul.f32 %v6043, 0.1
    %v6172 = vmul.f32 %v6044, 0.1
    %v6173 = vmul.f32 %v6045, 0.1
    %v6174 = vmul.f32 %v6046, 0.1
    %v6175 = vmul.f32 %v6047, 0.1
    %v6176 = vmul.f32 %v6048, 0.1
    %v6177 = vmul.f32 %v6049, 0.1
    %v6178 = vmul.f32 %v6050, 0.1
    %v6179 = vmul.f32 %v6051, 0.1
    %v6180 = vmul.f32 %v6052, 0.1
    %v6181 = vsel %vm6053, %v5989, %v6117
    %v6182 = vsel %vm6054, %v5990, %v6118
    %v6183 = vsel %vm6055, %v5991, %v6119
    %v6184 = vsel %vm6056, %v5992, %v6120
    %v6185 = vsel %vm6057, %v5993, %v6121
    %v6186 = vsel %vm6058, %v5994, %v6122
    %v6187 = vsel %vm6059, %v5995, %v6123
    %v6188 = vsel %vm6060, %v5996, %v6124
    %v6189 = vsel %vm6061, %v5997, %v6125
    %v6190 = vsel %vm6062, %v5998, %v6126
    %v6191 = vsel %vm6063, %v5999, %v6127
    %v6192 = vsel %vm6064, %v6000, %v6128
    %v6193 = vsel %vm6065, %v6001, %v6129
    %v6194 = vsel %vm6066, %v6002, %v6130
    %v6195 = vsel %vm6067, %v6003, %v6131
    %v6196 = vsel %vm6068, %v6004, %v6132
    %v6197 = vsel %vm6069, %v6005, %v6133
    %v6198 = vsel %vm6070, %v6006, %v6134
    %v6199 = vsel %vm6071, %v6007, %v6135
    %v6200 = vsel %vm6072, %v6008, %v6136
    %v6201 = vsel %vm6073, %v6009, %v6137
    %v6202 = vsel %vm6074, %v6010, %v6138
    %v6203 = vsel %vm6075, %v6011, %v6139
    %v6204 = vsel %vm6076, %v6012, %v6140
    %v6205 = vsel %vm6077, %v6013, %v6141
    %v6206 = vsel %vm6078, %v6014, %v6142
    %v6207 = vsel %vm6079, %v6015, %v6143
    %v6208 = vsel %vm6080, %v6016, %v6144
    %v6209 = vsel %vm6081, %v6017, %v6145
    %v6210 = vsel %vm6082, %v6018, %v6146
    %v6211 = vsel %vm6083, %v6019, %v6147
    %v6212 = vsel %vm6084, %v6020, %v6148
    %v6213 = vsel %vm6085, %v6021, %v6149
    %v6214 = vsel %vm6086, %v6022, %v6150
    %v6215 = vsel %vm6087, %v6023, %v6151
    %v6216 = vsel %vm6088, %v6024, %v6152
    %v6217 = vsel %vm6089, %v6025, %v6153
    %v6218 = vsel %vm6090, %v6026, %v6154
    %v6219 = vsel %vm6091, %v6027, %v6155
    %v6220 = vsel %vm6092, %v6028, %v6156
    %v6221 = vsel %vm6093, %v6029, %v6157
    %v6222 = vsel %vm6094, %v6030, %v6158
    %v6223 = vsel %vm6095, %v6031, %v6159
    %v6224 = vsel %vm6096, %v6032, %v6160
    %v6225 = vsel %vm6097, %v6033, %v6161
    %v6226 = vsel %vm6098, %v6034, %v6162
    %v6227 = vsel %vm6099, %v6035, %v6163
    %v6228 = vsel %vm6100, %v6036, %v6164
    %v6229 = vsel %vm6101, %v6037, %v6165
    %v6230 = vsel %vm6102, %v6038, %v6166
    %v6231 = vsel %vm6103, %v6039, %v6167
    %v6232 = vsel %vm6104, %v6040, %v6168
    %v6233 = vsel %vm6105, %v6041, %v6169
    %v6234 = vsel %vm6106, %v6042, %v6170
    %v6235 = vsel %vm6107, %v6043, %v6171
    %v6236 = vsel %vm6108, %v6044, %v6172
    %v6237 = vsel %vm6109, %v6045, %v6173
    %v6238 = vsel %vm6110, %v6046, %v6174
    %v6239 = vsel %vm6111, %v6047, %v6175
    %v6240 = vsel %vm6112, %v6048, %v6176
    %v6241 = vsel %vm6113, %v6049, %v6177
    %v6242 = vsel %vm6114, %v6050, %v6178
    %v6243 = vsel %vm6115, %v6051, %v6179
    %v6244 = vsel %vm6116, %v6052, %v6180
    %v6245 = vpack.c.bf16 %v6182, %v6181
    %v6246 = vpack.c.bf16 %v6184, %v6183
    %v6247 = vpack.c.bf16 %v6186, %v6185
    %v6248 = vpack.c.bf16 %v6188, %v6187
    %v6249 = vpack.c.bf16 %v6190, %v6189
    %v6250 = vpack.c.bf16 %v6192, %v6191
    %v6251 = vpack.c.bf16 %v6194, %v6193
    %v6252 = vpack.c.bf16 %v6196, %v6195
    %v6253 = vpack.c.bf16 %v6198, %v6197
    %v6254 = vpack.c.bf16 %v6200, %v6199
    %v6255 = vpack.c.bf16 %v6202, %v6201
    %v6256 = vpack.c.bf16 %v6204, %v6203
    %v6257 = vpack.c.bf16 %v6206, %v6205
    %v6258 = vpack.c.bf16 %v6208, %v6207
    %v6259 = vpack.c.bf16 %v6210, %v6209
    %v6260 = vpack.c.bf16 %v6212, %v6211
    %v6261 = vpack.c.bf16 %v6214, %v6213
    %v6262 = vpack.c.bf16 %v6216, %v6215
    %v6263 = vpack.c.bf16 %v6218, %v6217
    %v6264 = vpack.c.bf16 %v6220, %v6219
    %v6265 = vpack.c.bf16 %v6222, %v6221
    %v6266 = vpack.c.bf16 %v6224, %v6223
    %v6267 = vpack.c.bf16 %v6226, %v6225
    %v6268 = vpack.c.bf16 %v6228, %v6227
    %v6269 = vpack.c.bf16 %v6230, %v6229
    %v6270 = vpack.c.bf16 %v6232, %v6231
    %v6271 = vpack.c.bf16 %v6234, %v6233
    %v6272 = vpack.c.bf16 %v6236, %v6235
    %v6273 = vpack.c.bf16 %v6238, %v6237
    %v6274 = vpack.c.bf16 %v6240, %v6239
    %v6275 = vpack.c.bf16 %v6242, %v6241
    %v6276 = vpack.c.bf16 %v6244, %v6243
    %v6278 = vshrl.u32 %v6245, 16
    %v6280 = vrot.slane %v6278, 7
    %v6281 = vshll.u32 %v6245, 16
    %v6283 = vor.u32 %v6280, %v6281
    %v6285 = vshrl.u32 %v6246, 16
    %v6287 = vrot.slane %v6285, 7
    %v6288 = vshll.u32 %v6246, 16
    %v6290 = vor.u32 %v6287, %v6288
    %v6292 = vshrl.u32 %v6247, 16
    %v6294 = vrot.slane %v6292, 7
    %v6295 = vshll.u32 %v6247, 16
    %v6297 = vor.u32 %v6294, %v6295
    %v6299 = vshrl.u32 %v6248, 16
    %v6301 = vrot.slane %v6299, 7
    %v6302 = vshll.u32 %v6248, 16
    %v6304 = vor.u32 %v6301, %v6302
    %v6306 = vshrl.u32 %v6249, 16
    %v6308 = vrot.slane %v6306, 7
    %v6309 = vshll.u32 %v6249, 16
    %v6311 = vor.u32 %v6308, %v6309
    %v6313 = vshrl.u32 %v6250, 16
    %v6315 = vrot.slane %v6313, 7
    %v6316 = vshll.u32 %v6250, 16
    %v6318 = vor.u32 %v6315, %v6316
    %v6320 = vshrl.u32 %v6251, 16
    %v6322 = vrot.slane %v6320, 7
    %v6323 = vshll.u32 %v6251, 16
    %v6325 = vor.u32 %v6322, %v6323
    %v6327 = vshrl.u32 %v6252, 16
    %v6329 = vrot.slane %v6327, 7
    %v6330 = vshll.u32 %v6252, 16
    %v6332 = vor.u32 %v6329, %v6330
    %v6334 = vshrl.u32 %v6253, 16
    %v6336 = vrot.slane %v6334, 7
    %v6337 = vshll.u32 %v6253, 16
    %v6339 = vor.u32 %v6336, %v6337
    %v6341 = vshrl.u32 %v6254, 16
    %v6343 = vrot.slane %v6341, 7
    %v6344 = vshll.u32 %v6254, 16
    %v6346 = vor.u32 %v6343, %v6344
    %v6348 = vshrl.u32 %v6255, 16
    %v6350 = vrot.slane %v6348, 7
    %v6351 = vshll.u32 %v6255, 16
    %v6353 = vor.u32 %v6350, %v6351
    %v6355 = vshrl.u32 %v6256, 16
    %v6357 = vrot.slane %v6355, 7
    %v6358 = vshll.u32 %v6256, 16
    %v6360 = vor.u32 %v6357, %v6358
    %v6362 = vshrl.u32 %v6257, 16
    %v6364 = vrot.slane %v6362, 7
    %v6365 = vshll.u32 %v6257, 16
    %v6367 = vor.u32 %v6364, %v6365
    %v6369 = vshrl.u32 %v6258, 16
    %v6371 = vrot.slane %v6369, 7
    %v6372 = vshll.u32 %v6258, 16
    %v6374 = vor.u32 %v6371, %v6372
    %v6376 = vshrl.u32 %v6259, 16
    %v6378 = vrot.slane %v6376, 7
    %v6379 = vshll.u32 %v6259, 16
    %v6381 = vor.u32 %v6378, %v6379
    %v6383 = vshrl.u32 %v6260, 16
    %v6385 = vrot.slane %v6383, 7
    %v6386 = vshll.u32 %v6260, 16
    %v6388 = vor.u32 %v6385, %v6386
    %v6390 = vshrl.u32 %v6261, 16
    %v6392 = vrot.slane %v6390, 7
    %v6393 = vshll.u32 %v6261, 16
    %v6395 = vor.u32 %v6392, %v6393
    %v6397 = vshrl.u32 %v6262, 16
    %v6399 = vrot.slane %v6397, 7
    %v6400 = vshll.u32 %v6262, 16
    %v6402 = vor.u32 %v6399, %v6400
    %v6404 = vshrl.u32 %v6263, 16
    %v6406 = vrot.slane %v6404, 7
    %v6407 = vshll.u32 %v6263, 16
    %v6409 = vor.u32 %v6406, %v6407
    %v6411 = vshrl.u32 %v6264, 16
    %v6413 = vrot.slane %v6411, 7
    %v6414 = vshll.u32 %v6264, 16
    %v6416 = vor.u32 %v6413, %v6414
    %v6418 = vshrl.u32 %v6265, 16
    %v6420 = vrot.slane %v6418, 7
    %v6421 = vshll.u32 %v6265, 16
    %v6423 = vor.u32 %v6420, %v6421
    %v6425 = vshrl.u32 %v6266, 16
    %v6427 = vrot.slane %v6425, 7
    %v6428 = vshll.u32 %v6266, 16
    %v6430 = vor.u32 %v6427, %v6428
    %v6432 = vshrl.u32 %v6267, 16
    %v6434 = vrot.slane %v6432, 7
    %v6435 = vshll.u32 %v6267, 16
    %v6437 = vor.u32 %v6434, %v6435
    %v6439 = vshrl.u32 %v6268, 16
    %v6441 = vrot.slane %v6439, 7
    %v6442 = vshll.u32 %v6268, 16
    %v6444 = vor.u32 %v6441, %v6442
    %v6446 = vshrl.u32 %v6269, 16
    %v6448 = vrot.slane %v6446, 7
    %v6449 = vshll.u32 %v6269, 16
    %v6451 = vor.u32 %v6448, %v6449
    %v6453 = vshrl.u32 %v6270, 16
    %v6455 = vrot.slane %v6453, 7
    %v6456 = vshll.u32 %v6270, 16
    %v6458 = vor.u32 %v6455, %v6456
    %v6460 = vshrl.u32 %v6271, 16
    %v6462 = vrot.slane %v6460, 7
    %v6463 = vshll.u32 %v6271, 16
    %v6465 = vor.u32 %v6462, %v6463
    %v6467 = vshrl.u32 %v6272, 16
    %v6469 = vrot.slane %v6467, 7
    %v6470 = vshll.u32 %v6272, 16
    %v6472 = vor.u32 %v6469, %v6470
    %v6474 = vshrl.u32 %v6273, 16
    %v6476 = vrot.slane %v6474, 7
    %v6477 = vshll.u32 %v6273, 16
    %v6479 = vor.u32 %v6476, %v6477
    %v6481 = vshrl.u32 %v6274, 16
    %v6483 = vrot.slane %v6481, 7
    %v6484 = vshll.u32 %v6274, 16
    %v6486 = vor.u32 %v6483, %v6484
    %v6488 = vshrl.u32 %v6275, 16
    %v6490 = vrot.slane %v6488, 7
    %v6491 = vshll.u32 %v6275, 16
    %v6493 = vor.u32 %v6490, %v6491
    %v6495 = vshrl.u32 %v6276, 16
    %v6497 = vrot.slane %v6495, 7
    %v6498 = vshll.u32 %v6276, 16
    %v6500 = vor.u32 %v6497, %v6498
    %v6597 = vrot.slane %v6245, 7
    %v6598 = vrot.slane %v6246, 7
    %v6599 = vrot.slane %v6247, 7
    %v6600 = vrot.slane %v6248, 7
    %v6601 = vrot.slane %v6249, 7
    %v6602 = vrot.slane %v6250, 7
    %v6603 = vrot.slane %v6251, 7
    %v6604 = vrot.slane %v6252, 7
    %v6605 = vrot.slane %v6253, 7
    %v6606 = vrot.slane %v6254, 7
    %v6607 = vrot.slane %v6255, 7
    %v6608 = vrot.slane %v6256, 7
    %v6609 = vrot.slane %v6257, 7
    %v6610 = vrot.slane %v6258, 7
    %v6611 = vrot.slane %v6259, 7
    %v6612 = vrot.slane %v6260, 7
    %v6613 = vrot.slane %v6261, 7
    %v6614 = vrot.slane %v6262, 7
    %v6615 = vrot.slane %v6263, 7
    %v6616 = vrot.slane %v6264, 7
    %v6617 = vrot.slane %v6265, 7
    %v6618 = vrot.slane %v6266, 7
    %v6619 = vrot.slane %v6267, 7
    %v6620 = vrot.slane %v6268, 7
    %v6621 = vrot.slane %v6269, 7
    %v6622 = vrot.slane %v6270, 7
    %v6623 = vrot.slane %v6271, 7
    %v6624 = vrot.slane %v6272, 7
    %v6625 = vrot.slane %v6273, 7
    %v6626 = vrot.slane %v6274, 7
    %v6627 = vrot.slane %v6275, 7
    %v6628 = vrot.slane %v6276, 7
    %v6661 = vsel %vm556, %v6245, %v6283
    %v6662 = vsel %vm556, %v6246, %v6290
    %v6663 = vsel %vm556, %v6247, %v6297
    %v6664 = vsel %vm556, %v6248, %v6304
    %v6665 = vsel %vm556, %v6249, %v6311
    %v6666 = vsel %vm556, %v6250, %v6318
    %v6667 = vsel %vm556, %v6251, %v6325
    %v6668 = vsel %vm556, %v6252, %v6332
    %v6669 = vsel %vm556, %v6253, %v6339
    %v6670 = vsel %vm556, %v6254, %v6346
    %v6671 = vsel %vm556, %v6255, %v6353
    %v6672 = vsel %vm556, %v6256, %v6360
    %v6673 = vsel %vm556, %v6257, %v6367
    %v6674 = vsel %vm556, %v6258, %v6374
    %v6675 = vsel %vm556, %v6259, %v6381
    %v6676 = vsel %vm556, %v6260, %v6388
    %v6677 = vsel %vm556, %v6261, %v6395
    %v6678 = vsel %vm556, %v6262, %v6402
    %v6679 = vsel %vm556, %v6263, %v6409
    %v6680 = vsel %vm556, %v6264, %v6416
    %v6681 = vsel %vm556, %v6265, %v6423
    %v6682 = vsel %vm556, %v6266, %v6430
    %v6683 = vsel %vm556, %v6267, %v6437
    %v6684 = vsel %vm556, %v6268, %v6444
    %v6685 = vsel %vm556, %v6269, %v6451
    %v6686 = vsel %vm556, %v6270, %v6458
    %v6687 = vsel %vm556, %v6271, %v6465
    %v6688 = vsel %vm556, %v6272, %v6472
    %v6689 = vsel %vm556, %v6273, %v6479
    %v6690 = vsel %vm556, %v6274, %v6486
    %v6691 = vsel %vm556, %v6275, %v6493
    %v6692 = vsel %vm556, %v6276, %v6500
    %v6693 = vsel %vm556, %v6280, %v6597
    %v6694 = vsel %vm556, %v6287, %v6598
    %v6695 = vsel %vm556, %v6294, %v6599
    %v6696 = vsel %vm556, %v6301, %v6600
    %v6697 = vsel %vm556, %v6308, %v6601
    %v6698 = vsel %vm556, %v6315, %v6602
    %v6699 = vsel %vm556, %v6322, %v6603
    %v6700 = vsel %vm556, %v6329, %v6604
    %v6701 = vsel %vm556, %v6336, %v6605
    %v6702 = vsel %vm556, %v6343, %v6606
    %v6703 = vsel %vm556, %v6350, %v6607
    %v6704 = vsel %vm556, %v6357, %v6608
    %v6705 = vsel %vm556, %v6364, %v6609
    %v6706 = vsel %vm556, %v6371, %v6610
    %v6707 = vsel %vm556, %v6378, %v6611
    %v6708 = vsel %vm556, %v6385, %v6612
    %v6709 = vsel %vm556, %v6392, %v6613
    %v6710 = vsel %vm556, %v6399, %v6614
    %v6711 = vsel %vm556, %v6406, %v6615
    %v6712 = vsel %vm556, %v6413, %v6616
    %v6713 = vsel %vm556, %v6420, %v6617
    %v6714 = vsel %vm556, %v6427, %v6618
    %v6715 = vsel %vm556, %v6434, %v6619
    %v6716 = vsel %vm556, %v6441, %v6620
    %v6717 = vsel %vm556, %v6448, %v6621
    %v6718 = vsel %vm556, %v6455, %v6622
    %v6719 = vsel %vm556, %v6462, %v6623
    %v6720 = vsel %vm556, %v6469, %v6624
    %v6721 = vsel %vm556, %v6476, %v6625
    %v6722 = vsel %vm556, %v6483, %v6626
    %v6723 = vsel %vm556, %v6490, %v6627
    %v6724 = vsel %vm556, %v6497, %v6628
    %6785 = vrot.lane.b32.xlu0 %v6661, 48
    %v6786 = vpop.permute.xlu0 %6785
    %6787 = vrot.lane.b32.xlu0 %v6693, 48
    %v6788 = vpop.permute.xlu0 %6787
    %6789 = vrot.lane.b32.xlu0 %v6662, 48
    %v6790 = vpop.permute.xlu0 %6789
    %6791 = vrot.lane.b32.xlu0 %v6694, 48
    %v6792 = vpop.permute.xlu0 %6791
    %6793 = vrot.lane.b32.xlu0 %v6663, 48
    %v6794 = vpop.permute.xlu0 %6793
    %6795 = vrot.lane.b32.xlu0 %v6695, 48
    %v6796 = vpop.permute.xlu0 %6795
    %6797 = vrot.lane.b32.xlu0 %v6664, 48
    %v6798 = vpop.permute.xlu0 %6797
    %6799 = vrot.lane.b32.xlu0 %v6696, 48
    %v6800 = vpop.permute.xlu0 %6799
    %6801 = vrot.lane.b32.xlu0 %v6665, 48
    %v6802 = vpop.permute.xlu0 %6801
    %6803 = vrot.lane.b32.xlu0 %v6697, 48
    %v6804 = vpop.permute.xlu0 %6803
    %6805 = vrot.lane.b32.xlu0 %v6666, 48
    %v6806 = vpop.permute.xlu0 %6805
    %6807 = vrot.lane.b32.xlu0 %v6698, 48
    %v6808 = vpop.permute.xlu0 %6807
    %6809 = vrot.lane.b32.xlu0 %v6667, 48
    %v6810 = vpop.permute.xlu0 %6809
    %6811 = vrot.lane.b32.xlu0 %v6699, 48
    %v6812 = vpop.permute.xlu0 %6811
    %6813 = vrot.lane.b32.xlu0 %v6668, 48
    %v6814 = vpop.permute.xlu0 %6813
    %6815 = vrot.lane.b32.xlu0 %v6700, 48
    %v6816 = vpop.permute.xlu0 %6815
    %6817 = vrot.lane.b32.xlu0 %v6669, 48
    %v6818 = vpop.permute.xlu0 %6817
    %6819 = vrot.lane.b32.xlu0 %v6701, 48
    %v6820 = vpop.permute.xlu0 %6819
    %6821 = vrot.lane.b32.xlu0 %v6670, 48
    %v6822 = vpop.permute.xlu0 %6821
    %6823 = vrot.lane.b32.xlu0 %v6702, 48
    %v6824 = vpop.permute.xlu0 %6823
    %6825 = vrot.lane.b32.xlu0 %v6671, 48
    %v6826 = vpop.permute.xlu0 %6825
    %6827 = vrot.lane.b32.xlu0 %v6703, 48
    %v6828 = vpop.permute.xlu0 %6827
    %6829 = vrot.lane.b32.xlu0 %v6672, 48
    %v6830 = vpop.permute.xlu0 %6829
    %6831 = vrot.lane.b32.xlu0 %v6704, 48
    %v6832 = vpop.permute.xlu0 %6831
    %6833 = vrot.lane.b32.xlu0 %v6673, 48
    %v6834 = vpop.permute.xlu0 %6833
    %6835 = vrot.lane.b32.xlu0 %v6705, 48
    %v6836 = vpop.permute.xlu0 %6835
    %6837 = vrot.lane.b32.xlu0 %v6674, 48
    %v6838 = vpop.permute.xlu0 %6837
    %6839 = vrot.lane.b32.xlu0 %v6706, 48
    %v6840 = vpop.permute.xlu0 %6839
    %6841 = vrot.lane.b32.xlu0 %v6675, 48
    %v6842 = vpop.permute.xlu0 %6841
    %6843 = vrot.lane.b32.xlu0 %v6707, 48
    %v6844 = vpop.permute.xlu0 %6843
    %6845 = vrot.lane.b32.xlu0 %v6677, 48
    %v6846 = vpop.permute.xlu0 %6845
    %6847 = vrot.lane.b32.xlu0 %v6709, 48
    %v6848 = vpop.permute.xlu0 %6847
    %6849 = vrot.lane.b32.xlu0 %v6678, 48
    %v6850 = vpop.permute.xlu0 %6849
    %6851 = vrot.lane.b32.xlu0 %v6710, 48
    %v6852 = vpop.permute.xlu0 %6851
    %6853 = vrot.lane.b32.xlu0 %v6679, 48
    %v6854 = vpop.permute.xlu0 %6853
    %6855 = vrot.lane.b32.xlu0 %v6711, 48
    %v6856 = vpop.permute.xlu0 %6855
    %6857 = vrot.lane.b32.xlu0 %v6680, 48
    %v6858 = vpop.permute.xlu0 %6857
    %6859 = vrot.lane.b32.xlu0 %v6712, 48
    %v6860 = vpop.permute.xlu0 %6859
    %6861 = vrot.lane.b32.xlu0 %v6681, 48
    %v6862 = vpop.permute.xlu0 %6861
    %6863 = vrot.lane.b32.xlu0 %v6713, 48
    %v6864 = vpop.permute.xlu0 %6863
    %6865 = vrot.lane.b32.xlu0 %v6682, 48
    %v6866 = vpop.permute.xlu0 %6865
    %6867 = vrot.lane.b32.xlu0 %v6714, 48
    %v6868 = vpop.permute.xlu0 %6867
    %6869 = vrot.lane.b32.xlu0 %v6683, 48
    %v6870 = vpop.permute.xlu0 %6869
    %6871 = vrot.lane.b32.xlu0 %v6715, 48
    %v6872 = vpop.permute.xlu0 %6871
    %6873 = vrot.lane.b32.xlu0 %v6684, 48
    %v6874 = vpop.permute.xlu0 %6873
    %6875 = vrot.lane.b32.xlu0 %v6716, 48
    %v6876 = vpop.permute.xlu0 %6875
    %6877 = vrot.lane.b32.xlu0 %v6685, 48
    %v6878 = vpop.permute.xlu0 %6877
    %6879 = vrot.lane.b32.xlu0 %v6717, 48
    %v6880 = vpop.permute.xlu0 %6879
    %6881 = vrot.lane.b32.xlu0 %v6686, 48
    %v6882 = vpop.permute.xlu0 %6881
    %6883 = vrot.lane.b32.xlu0 %v6718, 48
    %v6884 = vpop.permute.xlu0 %6883
    %6885 = vrot.lane.b32.xlu0 %v6687, 48
    %v6886 = vpop.permute.xlu0 %6885
    %6887 = vrot.lane.b32.xlu0 %v6719, 48
    %v6888 = vpop.permute.xlu0 %6887
    %6889 = vrot.lane.b32.xlu0 %v6688, 48
    %v6890 = vpop.permute.xlu0 %6889
    %6891 = vrot.lane.b32.xlu0 %v6720, 48
    %v6892 = vpop.permute.xlu0 %6891
    %6893 = vrot.lane.b32.xlu0 %v6689, 48
    %v6894 = vpop.permute.xlu0 %6893
    %6895 = vrot.lane.b32.xlu0 %v6721, 48
    %v6896 = vpop.permute.xlu0 %6895
    %6897 = vrot.lane.b32.xlu0 %v6690, 48
    %v6898 = vpop.permute.xlu0 %6897
    %6899 = vrot.lane.b32.xlu0 %v6722, 48
    %v6900 = vpop.permute.xlu0 %6899
    %6901 = vrot.lane.b32.xlu0 %v6691, 48
    %v6902 = vpop.permute.xlu0 %6901
    %6903 = vrot.lane.b32.xlu0 %v6723, 48
    %v6904 = vpop.permute.xlu0 %6903
    %6909 = vrot.lane.b32.xlu0 %v6661, 96
    %v6910 = vpop.permute.xlu0 %6909
    %6911 = vrot.lane.b32.xlu0 %v6693, 96
    %v6912 = vpop.permute.xlu0 %6911
    %6913 = vrot.lane.b32.xlu0 %v6662, 96
    %v6914 = vpop.permute.xlu0 %6913
    %6915 = vrot.lane.b32.xlu0 %v6694, 96
    %v6916 = vpop.permute.xlu0 %6915
    %6917 = vrot.lane.b32.xlu0 %v6663, 96
    %v6918 = vpop.permute.xlu0 %6917
    %6919 = vrot.lane.b32.xlu0 %v6695, 96
    %v6920 = vpop.permute.xlu0 %6919
    %6921 = vrot.lane.b32.xlu0 %v6664, 96
    %v6922 = vpop.permute.xlu0 %6921
    %6923 = vrot.lane.b32.xlu0 %v6696, 96
    %v6924 = vpop.permute.xlu0 %6923
    %6925 = vrot.lane.b32.xlu0 %v6665, 96
    %v6926 = vpop.permute.xlu0 %6925
    %6927 = vrot.lane.b32.xlu0 %v6697, 96
    %v6928 = vpop.permute.xlu0 %6927
    %6929 = vrot.lane.b32.xlu0 %v6666, 96
    %v6930 = vpop.permute.xlu0 %6929
    %6931 = vrot.lane.b32.xlu0 %v6698, 96
    %v6932 = vpop.permute.xlu0 %6931
    %6933 = vrot.lane.b32.xlu0 %v6667, 96
    %v6934 = vpop.permute.xlu0 %6933
    %6935 = vrot.lane.b32.xlu0 %v6699, 96
    %v6936 = vpop.permute.xlu0 %6935
    %6937 = vrot.lane.b32.xlu0 %v6668, 96
    %v6938 = vpop.permute.xlu0 %6937
    %6939 = vrot.lane.b32.xlu0 %v6700, 96
    %v6940 = vpop.permute.xlu0 %6939
    %6941 = vrot.lane.b32.xlu0 %v6669, 96
    %v6942 = vpop.permute.xlu0 %6941
    %6943 = vrot.lane.b32.xlu0 %v6701, 96
    %v6944 = vpop.permute.xlu0 %6943
    %6945 = vrot.lane.b32.xlu0 %v6670, 96
    %v6946 = vpop.permute.xlu0 %6945
    %6947 = vrot.lane.b32.xlu0 %v6702, 96
    %v6948 = vpop.permute.xlu0 %6947
    %6949 = vrot.lane.b32.xlu0 %v6671, 96
    %v6950 = vpop.permute.xlu0 %6949
    %6951 = vrot.lane.b32.xlu0 %v6703, 96
    %v6952 = vpop.permute.xlu0 %6951
    %6953 = vrot.lane.b32.xlu0 %v6672, 96
    %v6954 = vpop.permute.xlu0 %6953
    %6955 = vrot.lane.b32.xlu0 %v6704, 96
    %v6956 = vpop.permute.xlu0 %6955
    %6957 = vrot.lane.b32.xlu0 %v6673, 96
    %v6958 = vpop.permute.xlu0 %6957
    %6959 = vrot.lane.b32.xlu0 %v6705, 96
    %v6960 = vpop.permute.xlu0 %6959
    %6961 = vrot.lane.b32.xlu0 %v6674, 96
    %v6962 = vpop.permute.xlu0 %6961
    %6963 = vrot.lane.b32.xlu0 %v6706, 96
    %v6964 = vpop.permute.xlu0 %6963
    %6965 = vrot.lane.b32.xlu0 %v6675, 96
    %v6966 = vpop.permute.xlu0 %6965
    %6967 = vrot.lane.b32.xlu0 %v6707, 96
    %v6968 = vpop.permute.xlu0 %6967
    %6969 = vrot.lane.b32.xlu0 %v6676, 96
    %v6970 = vpop.permute.xlu0 %6969
    %6971 = vrot.lane.b32.xlu0 %v6708, 96
    %v6972 = vpop.permute.xlu0 %6971
    %6973 = vrot.lane.b32.xlu0 %v6677, 96
    %v6974 = vpop.permute.xlu0 %6973
    %6975 = vrot.lane.b32.xlu0 %v6709, 96
    %v6976 = vpop.permute.xlu0 %6975
    %6977 = vrot.lane.b32.xlu0 %v6678, 96
    %v6978 = vpop.permute.xlu0 %6977
    %6979 = vrot.lane.b32.xlu0 %v6710, 96
    %v6980 = vpop.permute.xlu0 %6979
    %6981 = vrot.lane.b32.xlu0 %v6679, 96
    %v6982 = vpop.permute.xlu0 %6981
    %6983 = vrot.lane.b32.xlu0 %v6711, 96
    %v6984 = vpop.permute.xlu0 %6983
    %6985 = vrot.lane.b32.xlu0 %v6680, 96
    %v6986 = vpop.permute.xlu0 %6985
    %6987 = vrot.lane.b32.xlu0 %v6712, 96
    %v6988 = vpop.permute.xlu0 %6987
    %6989 = vrot.lane.b32.xlu0 %v6681, 96
    %v6990 = vpop.permute.xlu0 %6989
    %6991 = vrot.lane.b32.xlu0 %v6713, 96
    %v6992 = vpop.permute.xlu0 %6991
    %6993 = vrot.lane.b32.xlu0 %v6682, 96
    %v6994 = vpop.permute.xlu0 %6993
    %6995 = vrot.lane.b32.xlu0 %v6714, 96
    %v6996 = vpop.permute.xlu0 %6995
    %6997 = vrot.lane.b32.xlu0 %v6683, 96
    %v6998 = vpop.permute.xlu0 %6997
    %6999 = vrot.lane.b32.xlu0 %v6715, 96
    %v7000 = vpop.permute.xlu0 %6999
    %7001 = vrot.lane.b32.xlu0 %v6684, 96
    %v7002 = vpop.permute.xlu0 %7001
    %7003 = vrot.lane.b32.xlu0 %v6716, 96
    %v7004 = vpop.permute.xlu0 %7003
    %7005 = vrot.lane.b32.xlu0 %v6685, 96
    %v7006 = vpop.permute.xlu0 %7005
    %7007 = vrot.lane.b32.xlu0 %v6717, 96
    %v7008 = vpop.permute.xlu0 %7007
    %7009 = vrot.lane.b32.xlu0 %v6686, 96
    %v7010 = vpop.permute.xlu0 %7009
    %7011 = vrot.lane.b32.xlu0 %v6718, 96
    %v7012 = vpop.permute.xlu0 %7011
    %7013 = vrot.lane.b32.xlu0 %v6687, 96
    %v7014 = vpop.permute.xlu0 %7013
    %7015 = vrot.lane.b32.xlu0 %v6719, 96
    %v7016 = vpop.permute.xlu0 %7015
    %7017 = vrot.lane.b32.xlu0 %v6688, 96
    %v7018 = vpop.permute.xlu0 %7017
    %7019 = vrot.lane.b32.xlu0 %v6720, 96
    %v7020 = vpop.permute.xlu0 %7019
    %7021 = vrot.lane.b32.xlu0 %v6689, 96
    %v7022 = vpop.permute.xlu0 %7021
    %7023 = vrot.lane.b32.xlu0 %v6721, 96
    %v7024 = vpop.permute.xlu0 %7023
    %7025 = vrot.lane.b32.xlu0 %v6690, 96
    %v7026 = vpop.permute.xlu0 %7025
    %7027 = vrot.lane.b32.xlu0 %v6722, 96
    %v7028 = vpop.permute.xlu0 %7027
    %7029 = vrot.lane.b32.xlu0 %v6691, 96
    %v7030 = vpop.permute.xlu0 %7029
    %7031 = vrot.lane.b32.xlu0 %v6723, 96
    %v7032 = vpop.permute.xlu0 %7031
    %7033 = vrot.lane.b32.xlu0 %v6692, 96
    %v7034 = vpop.permute.xlu0 %7033
    %7035 = vrot.lane.b32.xlu0 %v6724, 96
    %v7036 = vpop.permute.xlu0 %7035
    %v7038 = vsel %vm3347, 0, %v6786
    %v7040 = vsel %vm3347, 0, %v6788
    %v7043 = vsel %vm3347, %v6661, %v6790
    %v7046 = vsel %vm3347, %v6693, %v6792
    %v7049 = vsel %vm3347, %v6662, %v6794
    %v7052 = vsel %vm3347, %v6694, %v6796
    %v7055 = vsel %vm3347, %v6663, %v6798
    %v7058 = vsel %vm3347, %v6695, %v6800
    %v7061 = vsel %vm3347, %v6664, %v6802
    %v7064 = vsel %vm3347, %v6696, %v6804
    %v7067 = vsel %vm3347, %v6665, %v6806
    %v7070 = vsel %vm3347, %v6697, %v6808
    %v7073 = vsel %vm3347, %v6666, %v6810
    %v7076 = vsel %vm3347, %v6698, %v6812
    %v7079 = vsel %vm3347, %v6667, %v6814
    %v7082 = vsel %vm3347, %v6699, %v6816
    %v7085 = vsel %vm3347, %v6668, %v6818
    %v7088 = vsel %vm3347, %v6700, %v6820
    %v7091 = vsel %vm3347, %v6669, %v6822
    %v7094 = vsel %vm3347, %v6701, %v6824
    %v7097 = vsel %vm3347, %v6670, %v6826
    %v7100 = vsel %vm3347, %v6702, %v6828
    %v7103 = vsel %vm3347, %v6671, %v6830
    %v7106 = vsel %vm3347, %v6703, %v6832
    %v7109 = vsel %vm3347, %v6672, %v6834
    %v7112 = vsel %vm3347, %v6704, %v6836
    %v7115 = vsel %vm3347, %v6673, %v6838
    %v7118 = vsel %vm3347, %v6705, %v6840
    %v7121 = vsel %vm3347, %v6674, %v6842
    %v7124 = vsel %vm3347, %v6706, %v6844
    %v7126 = vsel %vm3347, 0, %v6846
    %v7128 = vsel %vm3347, 0, %v6848
    %v7131 = vsel %vm3347, %v6677, %v6850
    %v7134 = vsel %vm3347, %v6709, %v6852
    %v7137 = vsel %vm3347, %v6678, %v6854
    %v7140 = vsel %vm3347, %v6710, %v6856
    %v7143 = vsel %vm3347, %v6679, %v6858
    %v7146 = vsel %vm3347, %v6711, %v6860
    %v7149 = vsel %vm3347, %v6680, %v6862
    %v7152 = vsel %vm3347, %v6712, %v6864
    %v7155 = vsel %vm3347, %v6681, %v6866
    %v7158 = vsel %vm3347, %v6713, %v6868
    %v7161 = vsel %vm3347, %v6682, %v6870
    %v7164 = vsel %vm3347, %v6714, %v6872
    %v7167 = vsel %vm3347, %v6683, %v6874
    %v7170 = vsel %vm3347, %v6715, %v6876
    %v7173 = vsel %vm3347, %v6684, %v6878
    %v7176 = vsel %vm3347, %v6716, %v6880
    %v7179 = vsel %vm3347, %v6685, %v6882
    %v7182 = vsel %vm3347, %v6717, %v6884
    %v7185 = vsel %vm3347, %v6686, %v6886
    %v7188 = vsel %vm3347, %v6718, %v6888
    %v7191 = vsel %vm3347, %v6687, %v6890
    %v7194 = vsel %vm3347, %v6719, %v6892
    %v7197 = vsel %vm3347, %v6688, %v6894
    %v7200 = vsel %vm3347, %v6720, %v6896
    %v7203 = vsel %vm3347, %v6689, %v6898
    %v7206 = vsel %vm3347, %v6721, %v6900
    %v7209 = vsel %vm3347, %v6690, %v6902
    %v7212 = vsel %vm3347, %v6722, %v6904
    %v7214 = vsel %vm3526, %v3349, %v6910
    %v7217 = vsel %vm3526, %v3349, %v6912
    %v7219 = vsel %vm3526, %v7038, %v6914
    %v7222 = vsel %vm3526, %v7040, %v6916
    %v7224 = vsel %vm3526, %v7043, %v6918
    %v7227 = vsel %vm3526, %v7046, %v6920
    %v7229 = vsel %vm3526, %v7049, %v6922
    %v7232 = vsel %vm3526, %v7052, %v6924
    %v7234 = vsel %vm3526, %v7055, %v6926
    %v7237 = vsel %vm3526, %v7058, %v6928
    %v7239 = vsel %vm3526, %v7061, %v6930
    %v7242 = vsel %vm3526, %v7064, %v6932
    %v7244 = vsel %vm3526, %v7067, %v6934
    %v7247 = vsel %vm3526, %v7070, %v6936
    %v7249 = vsel %vm3526, %v7073, %v6938
    %v7252 = vsel %vm3526, %v7076, %v6940
    %v7254 = vsel %vm3526, %v7079, %v6942
    %v7257 = vsel %vm3526, %v7082, %v6944
    %v7259 = vsel %vm3526, %v7085, %v6946
    %v7262 = vsel %vm3526, %v7088, %v6948
    %v7264 = vsel %vm3526, %v7091, %v6950
    %v7267 = vsel %vm3526, %v7094, %v6952
    %v7269 = vsel %vm3526, %v7097, %v6954
    %v7272 = vsel %vm3526, %v7100, %v6956
    %v7274 = vsel %vm3526, %v7103, %v6958
    %v7277 = vsel %vm3526, %v7106, %v6960
    %v7279 = vsel %vm3526, %v7109, %v6962
    %v7282 = vsel %vm3526, %v7112, %v6964
    %v7284 = vsel %vm3526, %v7115, %v6966
    %v7287 = vsel %vm3526, %v7118, %v6968
    %v7289 = vsel %vm3526, %v7121, %v6970
    %v7292 = vsel %vm3526, %v7124, %v6972
    %v7294 = vsel %vm3526, %v3349, %v6974
    %v7297 = vsel %vm3526, %v3349, %v6976
    %v7299 = vsel %vm3526, %v7126, %v6978
    %v7302 = vsel %vm3526, %v7128, %v6980
    %v7304 = vsel %vm3526, %v7131, %v6982
    %v7307 = vsel %vm3526, %v7134, %v6984
    %v7309 = vsel %vm3526, %v7137, %v6986
    %v7312 = vsel %vm3526, %v7140, %v6988
    %v7314 = vsel %vm3526, %v7143, %v6990
    %v7317 = vsel %vm3526, %v7146, %v6992
    %v7319 = vsel %vm3526, %v7149, %v6994
    %v7322 = vsel %vm3526, %v7152, %v6996
    %v7324 = vsel %vm3526, %v7155, %v6998
    %v7327 = vsel %vm3526, %v7158, %v7000
    %v7329 = vsel %vm3526, %v7161, %v7002
    %v7332 = vsel %vm3526, %v7164, %v7004
    %v7334 = vsel %vm3526, %v7167, %v7006
    %v7337 = vsel %vm3526, %v7170, %v7008
    %v7339 = vsel %vm3526, %v7173, %v7010
    %v7342 = vsel %vm3526, %v7176, %v7012
    %v7344 = vsel %vm3526, %v7179, %v7014
    %v7347 = vsel %vm3526, %v7182, %v7016
    %v7349 = vsel %vm3526, %v7185, %v7018
    %v7352 = vsel %vm3526, %v7188, %v7020
    %v7354 = vsel %vm3526, %v7191, %v7022
    %v7357 = vsel %vm3526, %v7194, %v7024
    %v7359 = vsel %vm3526, %v7197, %v7026
    %v7362 = vsel %vm3526, %v7200, %v7028
    %v7364 = vsel %vm3526, %v7203, %v7030
    %v7367 = vsel %vm3526, %v7206, %v7032
    %v7369 = vsel %vm3526, %v7209, %v7034
    %v7372 = vsel %vm3526, %v7212, %v7036
    %v7373 = vld [vmem:[#allocation8] sm:$0xf]
    %v7374 = vld [vmem:[#allocation8 + $0x4] sm:$0xf]
    %v7375 = vld [vmem:[#allocation8 + $0x8] sm:$0xf]
    %v7376 = vld [vmem:[#allocation8 + $0xc] sm:$0xf]
    %v7377 = vld [vmem:[#allocation8 + $0x10] sm:$0xf]
    %v7378 = vld [vmem:[#allocation8 + $0x14] sm:$0xf]
    %v7379 = vld [vmem:[#allocation8 + $0x18] sm:$0xf]
    %v7380 = vld [vmem:[#allocation8 + $0x1c] sm:$0xf]
    %v7381 = vld [vmem:[#allocation8 + $0x20] sm:$0xf]
    %v7382 = vld [vmem:[#allocation8 + $0x24] sm:$0xf]
    %v7383 = vld [vmem:[#allocation8 + $0x28] sm:$0xf]
    %v7384 = vld [vmem:[#allocation8 + $0x2c] sm:$0xf]
    %v7385 = vld [vmem:[#allocation8 + $0x30] sm:$0xf]
    %v7386 = vld [vmem:[#allocation8 + $0x34] sm:$0xf]
    %v7387 = vld [vmem:[#allocation8 + $0x38] sm:$0xf]
    %v7388 = vld [vmem:[#allocation8 + $0x3c] sm:$0xf]
    %v7389 = vld [vmem:[#allocation8 + $0x40] sm:$0xf]
    %v7390 = vld [vmem:[#allocation8 + $0x44] sm:$0xf]
    %v7391 = vshrl.u32 %v7214, 16
    %v7393 = vshll.u32 %v7214, 16
    %v7395 = vrot.slane %v7393, 1
    %v7396 = vor.u32 %v7391, %v7395
    %v7397 = vshll.u32 %v7217, 16
    %v7399 = vrot.slane %v7397, 1
    %v7400 = vsel %vm1245, %v7396, %v7399
    %v7401 = vshrl.u32 %v6910, 16
    %v7403 = vshll.u32 %v6910, 16
    %v7405 = vrot.slane %v7403, 1
    %v7406 = vor.u32 %v7401, %v7405
    %v7407 = vshll.u32 %v6912, 16
    %v7409 = vrot.slane %v7407, 1
    %v7410 = vsel %vm1245, %v7406, %v7409
    %v7411 = vshrl.u32 %v7219, 16
    %v7413 = vshll.u32 %v7219, 16
    %v7415 = vrot.slane %v7413, 1
    %v7416 = vor.u32 %v7411, %v7415
    %v7417 = vshll.u32 %v7222, 16
    %v7419 = vrot.slane %v7417, 1
    %v7420 = vsel %vm1245, %v7416, %v7419
    %v7421 = vshrl.u32 %v6914, 16
    %v7423 = vshll.u32 %v6914, 16
    %v7425 = vrot.slane %v7423, 1
    %v7426 = vor.u32 %v7421, %v7425
    %v7427 = vshll.u32 %v6916, 16
    %v7429 = vrot.slane %v7427, 1
    %v7430 = vsel %vm1245, %v7426, %v7429
    %v7431 = vshrl.u32 %v7224, 16
    %v7433 = vshll.u32 %v7224, 16
    %v7435 = vrot.slane %v7433, 1
    %v7436 = vor.u32 %v7431, %v7435
    %v7437 = vshll.u32 %v7227, 16
    %v7439 = vrot.slane %v7437, 1
    %v7440 = vsel %vm1245, %v7436, %v7439
    %v7441 = vshrl.u32 %v6918, 16
    %v7443 = vshll.u32 %v6918, 16
    %v7445 = vrot.slane %v7443, 1
    %v7446 = vor.u32 %v7441, %v7445
    %v7447 = vshll.u32 %v6920, 16
    %v7449 = vrot.slane %v7447, 1
    %v7450 = vsel %vm1245, %v7446, %v7449
    %v7451 = vshrl.u32 %v7229, 16
    %v7453 = vshll.u32 %v7229, 16
    %v7455 = vrot.slane %v7453, 1
    %v7456 = vor.u32 %v7451, %v7455
    %v7457 = vshll.u32 %v7232, 16
    %v7459 = vrot.slane %v7457, 1
    %v7460 = vsel %vm1245, %v7456, %v7459
    %v7461 = vshrl.u32 %v6922, 16
    %v7463 = vshll.u32 %v6922, 16
    %v7465 = vrot.slane %v7463, 1
    %v7466 = vor.u32 %v7461, %v7465
    %v7467 = vshll.u32 %v6924, 16
    %v7469 = vrot.slane %v7467, 1
    %v7470 = vsel %vm1245, %v7466, %v7469
    %v7471 = vshrl.u32 %v7234, 16
    %v7473 = vshll.u32 %v7234, 16
    %v7475 = vrot.slane %v7473, 1
    %v7476 = vor.u32 %v7471, %v7475
    %v7477 = vshll.u32 %v7237, 16
    %v7479 = vrot.slane %v7477, 1
    %v7480 = vsel %vm1245, %v7476, %v7479
    %v7481 = vshrl.u32 %v6926, 16
    %v7483 = vshll.u32 %v6926, 16
    %v7485 = vrot.slane %v7483, 1
    %v7486 = vor.u32 %v7481, %v7485
    %v7487 = vshll.u32 %v6928, 16
    %v7489 = vrot.slane %v7487, 1
    %v7490 = vsel %vm1245, %v7486, %v7489
    %v7491 = vshrl.u32 %v7239, 16
    %v7493 = vshll.u32 %v7239, 16
    %v7495 = vrot.slane %v7493, 1
    %v7496 = vor.u32 %v7491, %v7495
    %v7497 = vshll.u32 %v7242, 16
    %v7499 = vrot.slane %v7497, 1
    %v7500 = vsel %vm1245, %v7496, %v7499
    %v7501 = vshrl.u32 %v6930, 16
    %v7503 = vshll.u32 %v6930, 16
    %v7505 = vrot.slane %v7503, 1
    %v7506 = vor.u32 %v7501, %v7505
    %v7507 = vshll.u32 %v6932, 16
    %v7509 = vrot.slane %v7507, 1
    %v7510 = vsel %vm1245, %v7506, %v7509
    %v7511 = vshrl.u32 %v7244, 16
    %v7513 = vshll.u32 %v7244, 16
    %v7515 = vrot.slane %v7513, 1
    %v7516 = vor.u32 %v7511, %v7515
    %v7517 = vshll.u32 %v7247, 16
    %v7519 = vrot.slane %v7517, 1
    %v7520 = vsel %vm1245, %v7516, %v7519
    %v7521 = vshrl.u32 %v6934, 16
    %v7523 = vshll.u32 %v6934, 16
    %v7525 = vrot.slane %v7523, 1
    %v7526 = vor.u32 %v7521, %v7525
    %v7527 = vshll.u32 %v6936, 16
    %v7529 = vrot.slane %v7527, 1
    %v7530 = vsel %vm1245, %v7526, %v7529
    %v7531 = vshrl.u32 %v7249, 16
    %v7533 = vshll.u32 %v7249, 16
    %v7535 = vrot.slane %v7533, 1
    %v7536 = vor.u32 %v7531, %v7535
    %v7537 = vshll.u32 %v7252, 16
    %v7539 = vrot.slane %v7537, 1
    %v7540 = vsel %vm1245, %v7536, %v7539
    %v7541 = vshrl.u32 %v6938, 16
    %v7543 = vshll.u32 %v6938, 16
    %v7545 = vrot.slane %v7543, 1
    %v7546 = vor.u32 %v7541, %v7545
    %v7547 = vshll.u32 %v6940, 16
    %v7549 = vrot.slane %v7547, 1
    %v7550 = vsel %vm1245, %v7546, %v7549
    %v7551 = vshrl.u32 %v7254, 16
    %v7553 = vshll.u32 %v7254, 16
    %v7555 = vrot.slane %v7553, 1
    %v7556 = vor.u32 %v7551, %v7555
    %v7557 = vshll.u32 %v7257, 16
    %v7559 = vrot.slane %v7557, 1
    %v7560 = vsel %vm1245, %v7556, %v7559
    %v7561 = vshrl.u32 %v6942, 16
    %v7563 = vshll.u32 %v6942, 16
    %v7565 = vrot.slane %v7563, 1
    %v7566 = vor.u32 %v7561, %v7565
    %v7567 = vshll.u32 %v6944, 16
    %v7569 = vrot.slane %v7567, 1
    %v7570 = vsel %vm1245, %v7566, %v7569
    %v7571 = vshrl.u32 %v7259, 16
    %v7573 = vshll.u32 %v7259, 16
    %v7575 = vrot.slane %v7573, 1
    %v7576 = vor.u32 %v7571, %v7575
    %v7577 = vshll.u32 %v7262, 16
    %v7579 = vrot.slane %v7577, 1
    %v7580 = vsel %vm1245, %v7576, %v7579
    %v7581 = vshrl.u32 %v6946, 16
    %v7583 = vshll.u32 %v6946, 16
    %v7585 = vrot.slane %v7583, 1
    %v7586 = vor.u32 %v7581, %v7585
    %v7587 = vshll.u32 %v6948, 16
    %v7589 = vrot.slane %v7587, 1
    %v7590 = vsel %vm1245, %v7586, %v7589
    %v7591 = vshrl.u32 %v7264, 16
    %v7593 = vshll.u32 %v7264, 16
    %v7595 = vrot.slane %v7593, 1
    %v7596 = vor.u32 %v7591, %v7595
    %v7597 = vshll.u32 %v7267, 16
    %v7599 = vrot.slane %v7597, 1
    %v7600 = vsel %vm1245, %v7596, %v7599
    %v7601 = vshrl.u32 %v6950, 16
    %v7603 = vshll.u32 %v6950, 16
    %v7605 = vrot.slane %v7603, 1
    %v7606 = vor.u32 %v7601, %v7605
    %v7607 = vshll.u32 %v6952, 16
    %v7609 = vrot.slane %v7607, 1
    %v7610 = vsel %vm1245, %v7606, %v7609
    %v7611 = vshrl.u32 %v7269, 16
    %v7613 = vshll.u32 %v7269, 16
    %v7615 = vrot.slane %v7613, 1
    %v7616 = vor.u32 %v7611, %v7615
    %v7617 = vshll.u32 %v7272, 16
    %v7619 = vrot.slane %v7617, 1
    %v7620 = vsel %vm1245, %v7616, %v7619
    %v7621 = vshrl.u32 %v6954, 16
    %v7623 = vshll.u32 %v6954, 16
    %v7625 = vrot.slane %v7623, 1
    %v7626 = vor.u32 %v7621, %v7625
    %v7627 = vshll.u32 %v6956, 16
    %v7629 = vrot.slane %v7627, 1
    %v7630 = vsel %vm1245, %v7626, %v7629
    %v7631 = vshrl.u32 %v7274, 16
    %v7633 = vshll.u32 %v7274, 16
    %v7635 = vrot.slane %v7633, 1
    %v7636 = vor.u32 %v7631, %v7635
    %v7637 = vshll.u32 %v7277, 16
    %v7639 = vrot.slane %v7637, 1
    %v7640 = vsel %vm1245, %v7636, %v7639
    %v7641 = vshrl.u32 %v6958, 16
    %v7643 = vshll.u32 %v6958, 16
    %v7645 = vrot.slane %v7643, 1
    %v7646 = vor.u32 %v7641, %v7645
    %v7647 = vshll.u32 %v6960, 16
    %v7649 = vrot.slane %v7647, 1
    %v7650 = vsel %vm1245, %v7646, %v7649
    %v7651 = vshrl.u32 %v7279, 16
    %v7653 = vshll.u32 %v7279, 16
    %v7655 = vrot.slane %v7653, 1
    %v7656 = vor.u32 %v7651, %v7655
    %v7657 = vshll.u32 %v7282, 16
    %v7659 = vrot.slane %v7657, 1
    %v7660 = vsel %vm1245, %v7656, %v7659
    %v7661 = vshrl.u32 %v6962, 16
    %v7663 = vshll.u32 %v6962, 16
    %v7665 = vrot.slane %v7663, 1
    %v7666 = vor.u32 %v7661, %v7665
    %v7667 = vshll.u32 %v6964, 16
    %v7669 = vrot.slane %v7667, 1
    %v7670 = vsel %vm1245, %v7666, %v7669
    %v7671 = vshrl.u32 %v7284, 16
    %v7673 = vshll.u32 %v7284, 16
    %v7675 = vrot.slane %v7673, 1
    %v7676 = vor.u32 %v7671, %v7675
    %v7677 = vshll.u32 %v7287, 16
    %v7679 = vrot.slane %v7677, 1
    %v7680 = vsel %vm1245, %v7676, %v7679
    %v7681 = vshrl.u32 %v6966, 16
    %v7683 = vshll.u32 %v6966, 16
    %v7685 = vrot.slane %v7683, 1
    %v7686 = vor.u32 %v7681, %v7685
    %v7687 = vshll.u32 %v6968, 16
    %v7689 = vrot.slane %v7687, 1
    %v7690 = vsel %vm1245, %v7686, %v7689
    %v7691 = vshrl.u32 %v7289, 16
    %v7693 = vshll.u32 %v7289, 16
    %v7695 = vrot.slane %v7693, 1
    %v7696 = vor.u32 %v7691, %v7695
    %v7697 = vshll.u32 %v7292, 16
    %v7699 = vrot.slane %v7697, 1
    %v7700 = vsel %vm1245, %v7696, %v7699
    %v7701 = vshrl.u32 %v6970, 16
    %v7703 = vshll.u32 %v6970, 16
    %v7705 = vrot.slane %v7703, 1
    %v7706 = vor.u32 %v7701, %v7705
    %v7707 = vshll.u32 %v6972, 16
    %v7709 = vrot.slane %v7707, 1
    %v7710 = vsel %vm1245, %v7706, %v7709
    %v7711 = vshrl.u32 %v7294, 16
    %v7713 = vshll.u32 %v7294, 16
    %v7715 = vrot.slane %v7713, 1
    %v7716 = vor.u32 %v7711, %v7715
    %v7717 = vshll.u32 %v7297, 16
    %v7719 = vrot.slane %v7717, 1
    %v7720 = vsel %vm1245, %v7716, %v7719
    %v7721 = vshrl.u32 %v6974, 16
    %v7723 = vshll.u32 %v6974, 16
    %v7725 = vrot.slane %v7723, 1
    %v7726 = vor.u32 %v7721, %v7725
    %v7727 = vshll.u32 %v6976, 16
    %v7729 = vrot.slane %v7727, 1
    %v7730 = vsel %vm1245, %v7726, %v7729
    %v7731 = vshrl.u32 %v7299, 16
    %v7733 = vshll.u32 %v7299, 16
    %v7735 = vrot.slane %v7733, 1
    %v7736 = vor.u32 %v7731, %v7735
    %v7737 = vshll.u32 %v7302, 16
    %v7739 = vrot.slane %v7737, 1
    %v7740 = vsel %vm1245, %v7736, %v7739
    %v7741 = vshrl.u32 %v6978, 16
    %v7743 = vshll.u32 %v6978, 16
    %v7745 = vrot.slane %v7743, 1
    %v7746 = vor.u32 %v7741, %v7745
    %v7747 = vshll.u32 %v6980, 16
    %v7749 = vrot.slane %v7747, 1
    %v7750 = vsel %vm1245, %v7746, %v7749
    %v7751 = vshrl.u32 %v7304, 16
    %v7753 = vshll.u32 %v7304, 16
    %v7755 = vrot.slane %v7753, 1
    %v7756 = vor.u32 %v7751, %v7755
    %v7757 = vshll.u32 %v7307, 16
    %v7759 = vrot.slane %v7757, 1
    %v7760 = vsel %vm1245, %v7756, %v7759
    %v7761 = vshrl.u32 %v6982, 16
    %v7763 = vshll.u32 %v6982, 16
    %v7765 = vrot.slane %v7763, 1
    %v7766 = vor.u32 %v7761, %v7765
    %v7767 = vshll.u32 %v6984, 16
    %v7769 = vrot.slane %v7767, 1
    %v7770 = vsel %vm1245, %v7766, %v7769
    %v7771 = vshrl.u32 %v7309, 16
    %v7773 = vshll.u32 %v7309, 16
    %v7775 = vrot.slane %v7773, 1
    %v7776 = vor.u32 %v7771, %v7775
    %v7777 = vshll.u32 %v7312, 16
    %v7779 = vrot.slane %v7777, 1
    %v7780 = vsel %vm1245, %v7776, %v7779
    %v7781 = vshrl.u32 %v6986, 16
    %v7783 = vshll.u32 %v6986, 16
    %v7785 = vrot.slane %v7783, 1
    %v7786 = vor.u32 %v7781, %v7785
    %v7787 = vshll.u32 %v6988, 16
    %v7789 = vrot.slane %v7787, 1
    %v7790 = vsel %vm1245, %v7786, %v7789
    %v7791 = vshrl.u32 %v7314, 16
    %v7793 = vshll.u32 %v7314, 16
    %v7795 = vrot.slane %v7793, 1
    %v7796 = vor.u32 %v7791, %v7795
    %v7797 = vshll.u32 %v7317, 16
    %v7799 = vrot.slane %v7797, 1
    %v7800 = vsel %vm1245, %v7796, %v7799
    %v7801 = vshrl.u32 %v6990, 16
    %v7803 = vshll.u32 %v6990, 16
    %v7805 = vrot.slane %v7803, 1
    %v7806 = vor.u32 %v7801, %v7805
    %v7807 = vshll.u32 %v6992, 16
    %v7809 = vrot.slane %v7807, 1
    %v7810 = vsel %vm1245, %v7806, %v7809
    %v7811 = vshrl.u32 %v7319, 16
    %v7813 = vshll.u32 %v7319, 16
    %v7815 = vrot.slane %v7813, 1
    %v7816 = vor.u32 %v7811, %v7815
    %v7817 = vshll.u32 %v7322, 16
    %v7819 = vrot.slane %v7817, 1
    %v7820 = vsel %vm1245, %v7816, %v7819
    %v7821 = vshrl.u32 %v6994, 16
    %v7823 = vshll.u32 %v6994, 16
    %v7825 = vrot.slane %v7823, 1
    %v7826 = vor.u32 %v7821, %v7825
    %v7827 = vshll.u32 %v6996, 16
    %v7829 = vrot.slane %v7827, 1
    %v7830 = vsel %vm1245, %v7826, %v7829
    %v7831 = vshrl.u32 %v7324, 16
    %v7833 = vshll.u32 %v7324, 16
    %v7835 = vrot.slane %v7833, 1
    %v7836 = vor.u32 %v7831, %v7835
    %v7837 = vshll.u32 %v7327, 16
    %v7839 = vrot.slane %v7837, 1
    %v7840 = vsel %vm1245, %v7836, %v7839
    %v7841 = vshrl.u32 %v6998, 16
    %v7843 = vshll.u32 %v6998, 16
    %v7845 = vrot.slane %v7843, 1
    %v7846 = vor.u32 %v7841, %v7845
    %v7847 = vshll.u32 %v7000, 16
    %v7849 = vrot.slane %v7847, 1
    %v7850 = vsel %vm1245, %v7846, %v7849
    %v7851 = vshrl.u32 %v7329, 16
    %v7853 = vshll.u32 %v7329, 16
    %v7855 = vrot.slane %v7853, 1
    %v7856 = vor.u32 %v7851, %v7855
    %v7857 = vshll.u32 %v7332, 16
    %v7859 = vrot.slane %v7857, 1
    %v7860 = vsel %vm1245, %v7856, %v7859
    %v7861 = vshrl.u32 %v7002, 16
    %v7863 = vshll.u32 %v7002, 16
    %v7865 = vrot.slane %v7863, 1
    %v7866 = vor.u32 %v7861, %v7865
    %v7867 = vshll.u32 %v7004, 16
    %v7869 = vrot.slane %v7867, 1
    %v7870 = vsel %vm1245, %v7866, %v7869
    %v7871 = vshrl.u32 %v7334, 16
    %v7873 = vshll.u32 %v7334, 16
    %v7875 = vrot.slane %v7873, 1
    %v7876 = vor.u32 %v7871, %v7875
    %v7877 = vshll.u32 %v7337, 16
    %v7879 = vrot.slane %v7877, 1
    %v7880 = vsel %vm1245, %v7876, %v7879
    %v7881 = vshrl.u32 %v7006, 16
    %v7883 = vshll.u32 %v7006, 16
    %v7885 = vrot.slane %v7883, 1
    %v7886 = vor.u32 %v7881, %v7885
    %v7887 = vshll.u32 %v7008, 16
    %v7889 = vrot.slane %v7887, 1
    %v7890 = vsel %vm1245, %v7886, %v7889
    %v7891 = vshrl.u32 %v7339, 16
    %v7893 = vshll.u32 %v7339, 16
    %v7895 = vrot.slane %v7893, 1
    %v7896 = vor.u32 %v7891, %v7895
    %v7897 = vshll.u32 %v7342, 16
    %v7899 = vrot.slane %v7897, 1
    %v7900 = vsel %vm1245, %v7896, %v7899
    %v7901 = vshrl.u32 %v7010, 16
    %v7903 = vshll.u32 %v7010, 16
    %v7905 = vrot.slane %v7903, 1
    %v7906 = vor.u32 %v7901, %v7905
    %v7907 = vshll.u32 %v7012, 16
    %v7909 = vrot.slane %v7907, 1
    %v7910 = vsel %vm1245, %v7906, %v7909
    %v7911 = vshrl.u32 %v7344, 16
    %v7913 = vshll.u32 %v7344, 16
    %v7915 = vrot.slane %v7913, 1
    %v7916 = vor.u32 %v7911, %v7915
    %v7917 = vshll.u32 %v7347, 16
    %v7919 = vrot.slane %v7917, 1
    %v7920 = vsel %vm1245, %v7916, %v7919
    %v7921 = vshrl.u32 %v7014, 16
    %v7923 = vshll.u32 %v7014, 16
    %v7925 = vrot.slane %v7923, 1
    %v7926 = vor.u32 %v7921, %v7925
    %v7927 = vshll.u32 %v7016, 16
    %v7929 = vrot.slane %v7927, 1
    %v7930 = vsel %vm1245, %v7926, %v7929
    %v7931 = vshrl.u32 %v7349, 16
    %v7933 = vshll.u32 %v7349, 16
    %v7935 = vrot.slane %v7933, 1
    %v7936 = vor.u32 %v7931, %v7935
    %v7937 = vshll.u32 %v7352, 16
    %v7939 = vrot.slane %v7937, 1
    %v7940 = vsel %vm1245, %v7936, %v7939
    %v7941 = vshrl.u32 %v7018, 16
    %v7943 = vshll.u32 %v7018, 16
    %v7945 = vrot.slane %v7943, 1
    %v7946 = vor.u32 %v7941, %v7945
    %v7947 = vshll.u32 %v7020, 16
    %v7949 = vrot.slane %v7947, 1
    %v7950 = vsel %vm1245, %v7946, %v7949
    %v7951 = vshrl.u32 %v7354, 16
    %v7953 = vshll.u32 %v7354, 16
    %v7955 = vrot.slane %v7953, 1
    %v7956 = vor.u32 %v7951, %v7955
    %v7957 = vshll.u32 %v7357, 16
    %v7959 = vrot.slane %v7957, 1
    %v7960 = vsel %vm1245, %v7956, %v7959
    %v7961 = vshrl.u32 %v7022, 16
    %v7963 = vshll.u32 %v7022, 16
    %v7965 = vrot.slane %v7963, 1
    %v7966 = vor.u32 %v7961, %v7965
    %v7967 = vshll.u32 %v7024, 16
    %v7969 = vrot.slane %v7967, 1
    %v7970 = vsel %vm1245, %v7966, %v7969
    %v7971 = vshrl.u32 %v7359, 16
    %v7973 = vshll.u32 %v7359, 16
    %v7975 = vrot.slane %v7973, 1
    %v7976 = vor.u32 %v7971, %v7975
    %v7977 = vshll.u32 %v7362, 16
    %v7979 = vrot.slane %v7977, 1
    %v7980 = vsel %vm1245, %v7976, %v7979
    %v7981 = vshrl.u32 %v7026, 16
    %v7983 = vshll.u32 %v7026, 16
    %v7985 = vrot.slane %v7983, 1
    %v7986 = vor.u32 %v7981, %v7985
    %v7987 = vshll.u32 %v7028, 16
    %v7989 = vrot.slane %v7987, 1
    %v7990 = vsel %vm1245, %v7986, %v7989
    %v7991 = vshrl.u32 %v7364, 16
    %v7993 = vshll.u32 %v7364, 16
    %v7995 = vrot.slane %v7993, 1
    %v7996 = vor.u32 %v7991, %v7995
    %v7997 = vshll.u32 %v7367, 16
    %v7999 = vrot.slane %v7997, 1
    %v8000 = vsel %vm1245, %v7996, %v7999
    %v8001 = vshrl.u32 %v7030, 16
    %v8003 = vshll.u32 %v7030, 16
    %v8005 = vrot.slane %v8003, 1
    %v8006 = vor.u32 %v8001, %v8005
    %v8007 = vshll.u32 %v7032, 16
    %v8009 = vrot.slane %v8007, 1
    %v8010 = vsel %vm1245, %v8006, %v8009
    %v8011 = vshrl.u32 %v7369, 16
    %v8013 = vshll.u32 %v7369, 16
    %v8015 = vrot.slane %v8013, 1
    %v8016 = vor.u32 %v8011, %v8015
    %v8017 = vshll.u32 %v7372, 16
    %v8019 = vrot.slane %v8017, 1
    %v8020 = vsel %vm1245, %v8016, %v8019
    %v8021 = vshrl.u32 %v7034, 16
    %v8023 = vshll.u32 %v7034, 16
    %v8025 = vrot.slane %v8023, 1
    %v8026 = vor.u32 %v8021, %v8025
    %v8027 = vshll.u32 %v7036, 16
    %v8029 = vrot.slane %v8027, 1
    %v8030 = vsel %vm1245, %v8026, %v8029
    %s8063 = scalar_lea.vmem [#allocation8], 72
    %v8064 = vld [vmem:[%s8063] sm:$0xf]
    %v8065 = vld [vmem:[%s8063 + $0x4] sm:$0xf]
    %v8066 = vld [vmem:[%s8063 + $0x8] sm:$0xf]
    %v8067 = vld [vmem:[%s8063 + $0xc] sm:$0xf]
    %v8068 = vld [vmem:[%s8063 + $0x10] sm:$0xf]
    %v8069 = vld [vmem:[%s8063 + $0x14] sm:$0xf]
    %v8070 = vld [vmem:[%s8063 + $0x18] sm:$0xf]
    %v8071 = vld [vmem:[%s8063 + $0x1c] sm:$0xf]
    %v8072 = vld [vmem:[%s8063 + $0x20] sm:$0xf]
    %v8073 = vld [vmem:[%s8063 + $0x24] sm:$0xf]
    %v8074 = vld [vmem:[%s8063 + $0x28] sm:$0xf]
    %v8075 = vld [vmem:[%s8063 + $0x2c] sm:$0xf]
    %v8076 = vld [vmem:[%s8063 + $0x30] sm:$0xf]
    %v8077 = vld [vmem:[%s8063 + $0x34] sm:$0xf]
    %v8078 = vld [vmem:[%s8063 + $0x38] sm:$0xf]
    %v8079 = vld [vmem:[%s8063 + $0x3c] sm:$0xf]
    %v8080 = vld [vmem:[%s8063 + $0x40] sm:$0xf]
    %v8081 = vld [vmem:[%s8063 + $0x44] sm:$0xf]
    %v8100 = vunpack.c.l.b16 %v8064
    %v8101 = vunpack.c.l.b16 %v8065
    %v8102 = vunpack.c.l.b16 %v8066
    %v8103 = vunpack.c.l.b16 %v8067
    %v8104 = vunpack.c.l.b16 %v8068
    %v8105 = vunpack.c.l.b16 %v8069
    %v8106 = vunpack.c.l.b16 %v8070
    %v8107 = vunpack.c.l.b16 %v8071
    %v8108 = vunpack.c.l.b16 %v8072
    %v8109 = vunpack.c.l.b16 %v8073
    %v8110 = vunpack.c.l.b16 %v8074
    %v8111 = vunpack.c.l.b16 %v8075
    %v8112 = vunpack.c.l.b16 %v8076
    %v8113 = vunpack.c.l.b16 %v8077
    %v8114 = vunpack.c.l.b16 %v8078
    %v8115 = vunpack.c.l.b16 %v8079
    %v8116 = vunpack.c.l.b16 %v8080
    %v8117 = vunpack.c.l.b16 %v8081
    %v8118 = vpack.c.b16 %v8101, %v8100
    %v8119 = vpack.c.b16 %v8103, %v8102
    %v8120 = vpack.c.b16 %v8105, %v8104
    %v8121 = vpack.c.b16 %v8107, %v8106
    %v8122 = vpack.c.b16 %v8109, %v8108
    %v8123 = vpack.c.b16 %v8111, %v8110
    %v8124 = vpack.c.b16 %v8113, %v8112
    %v8125 = vpack.c.b16 %v8115, %v8114
    %v8126 = vpack.c.b16 %v8117, %v8116
    %v8137 = vsel %vm4450, %v7410, 0
    %v8140 = vsel %vm4450, %v7430, 0
    %v8143 = vsel %vm4450, %v7450, 0
    %v8146 = vsel %vm4450, %v7470, 0
    %v8149 = vsel %vm4450, %v7490, 0
    %v8152 = vsel %vm4450, %v7510, 0
    %v8155 = vsel %vm4450, %v7530, 0
    %v8158 = vsel %vm4450, %v7550, 0
    %v8161 = vsel %vm4450, %v7570, 0
    %v8164 = vsel %vm4450, %v7590, 0
    %v8167 = vsel %vm4450, %v7610, 0
    %v8170 = vsel %vm4450, %v7630, 0
    %v8173 = vsel %vm4450, %v7650, 0
    %v8176 = vsel %vm4450, %v7670, 0
    %v8179 = vsel %vm4450, %v7690, 0
    %v8182 = vsel %vm4450, %v7710, 0
    %v8185 = vsel %vm4450, %v7730, 0
    %v8188 = vsel %vm4450, %v7750, 0
    %v8191 = vsel %vm4450, %v7770, 0
    %v8194 = vsel %vm4450, %v7790, 0
    %v8197 = vsel %vm4450, %v7810, 0
    %v8200 = vsel %vm4450, %v7830, 0
    %v8203 = vsel %vm4450, %v7850, 0
    %v8206 = vsel %vm4450, %v7870, 0
    %v8209 = vsel %vm4450, %v7890, 0
    %v8212 = vsel %vm4450, %v7910, 0
    %v8215 = vsel %vm4450, %v7930, 0
    %v8218 = vsel %vm4450, %v7950, 0
    %v8221 = vsel %vm4450, %v7970, 0
    %v8224 = vsel %vm4450, %v7990, 0
    %v8227 = vsel %vm4450, %v8010, 0
    %v8230 = vsel %vm4450, %v8030, 0
    %8232 = vmatprep.subr.bf16.mxu0 0
    %8233 = vmatpush1.bf16.msra.mxu0 %v8118
    %8234 = vmatprep.subr.bf16.mxu0 0
    %8235 = vmatpush1.bf16.msra.mxu0 %v8119
    %8236 = vmatprep.subr.bf16.mxu0 0
    %8237 = vmatpush1.bf16.msra.mxu0 %v8120
    %8238 = vmatprep.subr.bf16.mxu0 0
    %8239 = vmatpush1.bf16.msra.mxu0 %v8121
    %8240 = vmatprep.subr.bf16.mxu0 0
    %8241 = vmatpush1.bf16.msra.mxu0 %v8122
    %8242 = vmatprep.subr.bf16.mxu0 0
    %8243 = vmatpush1.bf16.msra.mxu0 %v8123
    %8244 = vmatprep.subr.bf16.mxu0 0
    %8245 = vmatpush1.bf16.msra.mxu0 %v8124
    %8246 = vmatprep.subr.bf16.mxu0 0
    %8247 = vmatpush1.bf16.msra.mxu0 %v8125
    %8248 = vmatprep.subr.bf16.mxu0 0
    %8249 = vmatpush1.bf16.msra.mxu0 %v8126
    %8250 = vmatprep.subr.bf16.mxu0 0
    %8251 = vmatpush1.bf16.msra.mxu0 0
    %8252 = vmatprep.subr.bf16.mxu0 0
    %8253 = vmatpush1.bf16.msra.mxu0 0
    %8254 = vmatprep.subr.bf16.mxu0 0
    %8255 = vmatpush1.bf16.msra.mxu0 0
    %8256 = vmatprep.subr.bf16.mxu0 0
    %8257 = vmatpush1.bf16.msra.mxu0 0
    %8258 = vmatprep.subr.bf16.mxu0 0
    %8259 = vmatpush1.bf16.msra.mxu0 0
    %8260 = vmatprep.subr.bf16.mxu0 0
    %8261 = vmatpush1.bf16.msra.mxu0 0
    %8262 = vmatprep.subr.bf16.mxu0 0
    %8263 = vmatpush1.bf16.msra.mxu0 0
    %8264 = vmatprep.mubr.bf16.mxu0 %v8137
    %8265 = vmatmul.mubr.bf16.gmra.mrb[0].mxu0 %v7400
    %v8266 = vpop.f32.mrb[0].mxu0
    %v8267 = vadd.f32 0.0, %v8266
    %v8268 = vpop.f32.mrb[0].mxu0
    %v8269 = vpop.f32.mrb[0].mxu0
    %v8270 = vadd.f32 0.0, %v8269
    %v8271 = vpop.f32.mrb[0].mxu0
    %8272 = vmatprep.mubr.bf16.mxu0 %v8140
    %8273 = vmatmul.mubr.bf16.gmra.mrb[0].mxu0 %v7420
    %v8274 = vpop.f32.mrb[0].mxu0
    %v8275 = vadd.f32 0.0, %v8274
    %v8276 = vpop.f32.mrb[0].mxu0
    %v8277 = vpop.f32.mrb[0].mxu0
    %v8278 = vadd.f32 0.0, %v8277
    %v8279 = vpop.f32.mrb[0].mxu0
    %8280 = vmatprep.mubr.bf16.mxu0 %v8143
    %8281 = vmatmul.mubr.bf16.gmra.mrb[0].mxu0 %v7440
    %v8282 = vpop.f32.mrb[0].mxu0
    %v8283 = vadd.f32 0.0, %v8282
    %v8284 = vpop.f32.mrb[0].mxu0
    %v8285 = vpop.f32.mrb[0].mxu0
    %v8286 = vadd.f32 0.0, %v8285
    %v8287 = vpop.f32.mrb[0].mxu0
    %8288 = vmatprep.mubr.bf16.mxu0 %v8146
    %8289 = vmatmul.mubr.bf16.gmra.mrb[0].mxu0 %v7460
    %v8290 = vpop.f32.mrb[0].mxu0
    %v8291 = vadd.f32 0.0, %v8290
    %v8292 = vpop.f32.mrb[0].mxu0
    %v8293 = vpop.f32.mrb[0].mxu0
    %v8294 = vadd.f32 0.0, %v8293
    %v8295 = vpop.f32.mrb[0].mxu0
    %8296 = vmatprep.mubr.bf16.mxu0 %v8149
    %8297 = vmatmul.mubr.bf16.gmra.mrb[0].mxu0 %v7480
    %v8298 = vpop.f32.mrb[0].mxu0
    %v8299 = vadd.f32 0.0, %v8298
    %v8300 = vpop.f32.mrb[0].mxu0
    %v8301 = vpop.f32.mrb[0].mxu0
    %v8302 = vadd.f32 0.0, %v8301
    %v8303 = vpop.f32.mrb[0].mxu0
    %8304 = vmatprep.mubr.bf16.mxu0 %v8152
    %8305 = vmatmul.mubr.bf16.gmra.mrb[0].mxu0 %v7500
    %v8306 = vpop.f32.mrb[0].mxu0
    %v8307 = vadd.f32 0.0, %v8306
    %v8308 = vpop.f32.mrb[0].mxu0
    %v8309 = vpop.f32.mrb[0].mxu0
    %v8310 = vadd.f32 0.0, %v8309
    %v8311 = vpop.f32.mrb[0].mxu0
    %8312 = vmatprep.mubr.bf16.mxu0 %v8155
    %8313 = vmatmul.mubr.bf16.gmra.mrb[0].mxu0 %v7520
    %v8314 = vpop.f32.mrb[0].mxu0
    %v8315 = vadd.f32 0.0, %v8314
    %v8316 = vpop.f32.mrb[0].mxu0
    %v8317 = vpop.f32.mrb[0].mxu0
    %v8318 = vadd.f32 0.0, %v8317
    %v8319 = vpop.f32.mrb[0].mxu0
    %8320 = vmatprep.mubr.bf16.mxu0 %v8158
    %8321 = vmatmul.mubr.bf16.gmra.mrb[0].mxu0 %v7540
    %v8322 = vpop.f32.mrb[0].mxu0
    %v8323 = vadd.f32 0.0, %v8322
    %v8324 = vpop.f32.mrb[0].mxu0
    %v8325 = vpop.f32.mrb[0].mxu0
    %v8326 = vadd.f32 0.0, %v8325
    %v8327 = vpop.f32.mrb[0].mxu0
    %8328 = vmatprep.mubr.bf16.mxu0 %v8161
    %8329 = vmatmul.mubr.bf16.gmra.mrb[0].mxu0 %v7560
    %v8330 = vpop.f32.mrb[0].mxu0
    %v8331 = vadd.f32 0.0, %v8330
    %v8332 = vpop.f32.mrb[0].mxu0
    %v8333 = vpop.f32.mrb[0].mxu0
    %v8334 = vadd.f32 0.0, %v8333
    %v8335 = vpop.f32.mrb[0].mxu0
    %8336 = vmatprep.mubr.bf16.mxu0 %v8164
    %8337 = vmatmul.mubr.bf16.gmra.mrb[0].mxu0 %v7580
    %v8338 = vpop.f32.mrb[0].mxu0
    %v8339 = vadd.f32 0.0, %v8338
    %v8340 = vpop.f32.mrb[0].mxu0
    %v8341 = vpop.f32.mrb[0].mxu0
    %v8342 = vadd.f32 0.0, %v8341
    %v8343 = vpop.f32.mrb[0].mxu0
    %8344 = vmatprep.mubr.bf16.mxu0 %v8167
    %8345 = vmatmul.mubr.bf16.gmra.mrb[0].mxu0 %v7600
    %v8346 = vpop.f32.mrb[0].mxu0
    %v8347 = vadd.f32 0.0, %v8346
    %v8348 = vpop.f32.mrb[0].mxu0
    %v8349 = vpop.f32.mrb[0].mxu0
    %v8350 = vadd.f32 0.0, %v8349
    %v8351 = vpop.f32.mrb[0].mxu0
    %8352 = vmatprep.mubr.bf16.mxu0 %v8170
    %8353 = vmatmul.mubr.bf16.gmra.mrb[0].mxu0 %v7620
    %v8354 = vpop.f32.mrb[0].mxu0
    %v8355 = vadd.f32 0.0, %v8354
    %v8356 = vpop.f32.mrb[0].mxu0
    %v8357 = vpop.f32.mrb[0].mxu0
    %v8358 = vadd.f32 0.0, %v8357
    %v8359 = vpop.f32.mrb[0].mxu0
    %8360 = vmatprep.mubr.bf16.mxu0 %v8173
    %8361 = vmatmul.mubr.bf16.gmra.mrb[0].mxu0 %v7640
    %v8362 = vpop.f32.mrb[0].mxu0
    %v8363 = vadd.f32 0.0, %v8362
    %v8364 = vpop.f32.mrb[0].mxu0
    %v8365 = vpop.f32.mrb[0].mxu0
    %v8366 = vadd.f32 0.0, %v8365
    %v8367 = vpop.f32.mrb[0].mxu0
    %8368 = vmatprep.mubr.bf16.mxu0 %v8176
    %8369 = vmatmul.mubr.bf16.gmra.mrb[0].mxu0 %v7660
    %v8370 = vpop.f32.mrb[0].mxu0
    %v8371 = vadd.f32 0.0, %v8370
    %v8372 = vpop.f32.mrb[0].mxu0
    %v8373 = vpop.f32.mrb[0].mxu0
    %v8374 = vadd.f32 0.0, %v8373
    %v8375 = vpop.f32.mrb[0].mxu0
    %8376 = vmatprep.mubr.bf16.mxu0 %v8179
    %8377 = vmatmul.mubr.bf16.gmra.mrb[0].mxu0 %v7680
    %v8378 = vpop.f32.mrb[0].mxu0
    %v8379 = vadd.f32 0.0, %v8378
    %v8380 = vpop.f32.mrb[0].mxu0
    %v8381 = vpop.f32.mrb[0].mxu0
    %v8382 = vadd.f32 0.0, %v8381
    %v8383 = vpop.f32.mrb[0].mxu0
    %8384 = vmatprep.mubr.bf16.mxu0 %v8182
    %8385 = vmatmul.mubr.bf16.gmra.mrb[0].mxu0 %v7700
    %v8386 = vpop.f32.mrb[0].mxu0
    %v8387 = vpop.f32.mrb[0].mxu0
    %v8388 = vpop.f32.mrb[0].mxu0
    %v8389 = vpop.f32.mrb[0].mxu0
    %8390 = vmatprep.mubr.bf16.mxu0 %v8185
    %8391 = vmatmul.mubr.bf16.gmra.mrb[0].mxu0 %v7720
    %v8392 = vpop.f32.mrb[0].mxu0
    %v8393 = vadd.f32 0.0, %v8392
    %v8394 = vpop.f32.mrb[0].mxu0
    %v8395 = vpop.f32.mrb[0].mxu0
    %v8396 = vadd.f32 0.0, %v8395
    %v8397 = vpop.f32.mrb[0].mxu0
    %8398 = vmatprep.mubr.bf16.mxu0 %v8188
    %8399 = vmatmul.mubr.bf16.gmra.mrb[0].mxu0 %v7740
    %v8400 = vpop.f32.mrb[0].mxu0
    %v8401 = vadd.f32 0.0, %v8400
    %v8402 = vpop.f32.mrb[0].mxu0
    %v8403 = vpop.f32.mrb[0].mxu0
    %v8404 = vadd.f32 0.0, %v8403
    %v8405 = vpop.f32.mrb[0].mxu0
    %8406 = vmatprep.mubr.bf16.mxu0 %v8191
    %8407 = vmatmul.mubr.bf16.gmra.mrb[0].mxu0 %v7760
    %v8408 = vpop.f32.mrb[0].mxu0
    %v8409 = vadd.f32 0.0, %v8408
    %v8410 = vpop.f32.mrb[0].mxu0
    %v8411 = vpop.f32.mrb[0].mxu0
    %v8412 = vadd.f32 0.0, %v8411
    %v8413 = vpop.f32.mrb[0].mxu0
    %8414 = vmatprep.mubr.bf16.mxu0 %v8194
    %8415 = vmatmul.mubr.bf16.gmra.mrb[0].mxu0 %v7780
    %v8416 = vpop.f32.mrb[0].mxu0
    %v8417 = vadd.f32 0.0, %v8416
    %v8418 = vpop.f32.mrb[0].mxu0
    %v8419 = vpop.f32.mrb[0].mxu0
    %v8420 = vadd.f32 0.0, %v8419
    %v8421 = vpop.f32.mrb[0].mxu0
    %8422 = vmatprep.mubr.bf16.mxu0 %v8197
    %8423 = vmatmul.mubr.bf16.gmra.mrb[0].mxu0 %v7800
    %v8424 = vpop.f32.mrb[0].mxu0
    %v8425 = vadd.f32 0.0, %v8424
    %v8426 = vpop.f32.mrb[0].mxu0
    %v8427 = vpop.f32.mrb[0].mxu0
    %v8428 = vadd.f32 0.0, %v8427
    %v8429 = vpop.f32.mrb[0].mxu0
    %8430 = vmatprep.mubr.bf16.mxu0 %v8200
    %8431 = vmatmul.mubr.bf16.gmra.mrb[0].mxu0 %v7820
    %v8432 = vpop.f32.mrb[0].mxu0
    %v8433 = vadd.f32 0.0, %v8432
    %v8434 = vpop.f32.mrb[0].mxu0
    %v8435 = vpop.f32.mrb[0].mxu0
    %v8436 = vadd.f32 0.0, %v8435
    %v8437 = vpop.f32.mrb[0].mxu0
    %8438 = vmatprep.mubr.bf16.mxu0 %v8203
    %8439 = vmatmul.mubr.bf16.gmra.mrb[0].mxu0 %v7840
    %v8440 = vpop.f32.mrb[0].mxu0
    %v8441 = vadd.f32 0.0, %v8440
    %v8442 = vpop.f32.mrb[0].mxu0
    %v8443 = vpop.f32.mrb[0].mxu0
    %v8444 = vadd.f32 0.0, %v8443
    %v8445 = vpop.f32.mrb[0].mxu0
    %8446 = vmatprep.mubr.bf16.mxu0 %v8206
    %8447 = vmatmul.mubr.bf16.gmra.mrb[0].mxu0 %v7860
    %v8448 = vpop.f32.mrb[0].mxu0
    %v8449 = vadd.f32 0.0, %v8448
    %v8450 = vpop.f32.mrb[0].mxu0
    %v8451 = vpop.f32.mrb[0].mxu0
    %v8452 = vadd.f32 0.0, %v8451
    %v8453 = vpop.f32.mrb[0].mxu0
    %8454 = vmatprep.mubr.bf16.mxu0 %v8209
    %8455 = vmatmul.mubr.bf16.gmra.mrb[0].mxu0 %v7880
    %v8456 = vpop.f32.mrb[0].mxu0
    %v8457 = vadd.f32 0.0, %v8456
    %v8458 = vpop.f32.mrb[0].mxu0
    %v8459 = vpop.f32.mrb[0].mxu0
    %v8460 = vadd.f32 0.0, %v8459
    %v8461 = vpop.f32.mrb[0].mxu0
    %8462 = vmatprep.mubr.bf16.mxu0 %v8212
    %8463 = vmatmul.mubr.bf16.gmra.mrb[0].mxu0 %v7900
    %v8464 = vpop.f32.mrb[0].mxu0
    %v8465 = vadd.f32 0.0, %v8464
    %v8466 = vpop.f32.mrb[0].mxu0
    %v8467 = vpop.f32.mrb[0].mxu0
    %v8468 = vadd.f32 0.0, %v8467
    %v8469 = vpop.f32.mrb[0].mxu0
    %8470 = vmatprep.mubr.bf16.mxu0 %v8215
    %8471 = vmatmul.mubr.bf16.gmra.mrb[0].mxu0 %v7920
    %v8472 = vpop.f32.mrb[0].mxu0
    %v8473 = vadd.f32 0.0, %v8472
    %v8474 = vpop.f32.mrb[0].mxu0
    %v8475 = vpop.f32.mrb[0].mxu0
    %v8476 = vadd.f32 0.0, %v8475
    %v8477 = vpop.f32.mrb[0].mxu0
    %8478 = vmatprep.mubr.bf16.mxu0 %v8218
    %8479 = vmatmul.mubr.bf16.gmra.mrb[0].mxu0 %v7940
    %v8480 = vpop.f32.mrb[0].mxu0
    %v8481 = vadd.f32 0.0, %v8480
    %v8482 = vpop.f32.mrb[0].mxu0
    %v8483 = vpop.f32.mrb[0].mxu0
    %v8484 = vadd.f32 0.0, %v8483
    %v8485 = vpop.f32.mrb[0].mxu0
    %8486 = vmatprep.mubr.bf16.mxu0 %v8221
    %8487 = vmatmul.mubr.bf16.gmra.mrb[0].mxu0 %v7960
    %v8488 = vpop.f32.mrb[0].mxu0
    %v8489 = vadd.f32 0.0, %v8488
    %v8490 = vpop.f32.mrb[0].mxu0
    %v8491 = vpop.f32.mrb[0].mxu0
    %v8492 = vadd.f32 0.0, %v8491
    %v8493 = vpop.f32.mrb[0].mxu0
    %8494 = vmatprep.mubr.bf16.mxu0 %v8224
    %8495 = vmatmul.mubr.bf16.gmra.mrb[0].mxu0 %v7980
    %v8496 = vpop.f32.mrb[0].mxu0
    %v8497 = vadd.f32 0.0, %v8496
    %v8498 = vpop.f32.mrb[0].mxu0
    %v8499 = vpop.f32.mrb[0].mxu0
    %v8500 = vadd.f32 0.0, %v8499
    %v8501 = vpop.f32.mrb[0].mxu0
    %8502 = vmatprep.mubr.bf16.mxu0 %v8227
    %8503 = vmatmul.mubr.bf16.gmra.mrb[0].mxu0 %v8000
    %v8504 = vpop.f32.mrb[0].mxu0
    %v8505 = vadd.f32 0.0, %v8504
    %v8506 = vpop.f32.mrb[0].mxu0
    %v8507 = vpop.f32.mrb[0].mxu0
    %v8508 = vadd.f32 0.0, %v8507
    %v8509 = vpop.f32.mrb[0].mxu0
    %8510 = vmatprep.mubr.bf16.mxu0 %v8230
    %8511 = vmatmul.mubr.bf16.gmra.mrb[0].mxu0 %v8020
    %v8512 = vpop.f32.mrb[0].mxu0
    %v8513 = vpop.f32.mrb[0].mxu0
    %v8514 = vpop.f32.mrb[0].mxu0
    %v8515 = vpop.f32.mrb[0].mxu0
    %8516 = vdwg.mxu0
    %v8535 = vunpack.c.l.b16 %v7373
    %v8536 = vunpack.c.l.b16 %v7374
    %v8537 = vunpack.c.l.b16 %v7375
    %v8538 = vunpack.c.l.b16 %v7376
    %v8539 = vunpack.c.l.b16 %v7377
    %v8540 = vunpack.c.l.b16 %v7378
    %v8541 = vunpack.c.l.b16 %v7379
    %v8542 = vunpack.c.l.b16 %v7380
    %v8543 = vunpack.c.l.b16 %v7381
    %v8544 = vunpack.c.l.b16 %v7382
    %v8545 = vunpack.c.l.b16 %v7383
    %v8546 = vunpack.c.l.b16 %v7384
    %v8547 = vunpack.c.l.b16 %v7385
    %v8548 = vunpack.c.l.b16 %v7386
    %v8549 = vunpack.c.l.b16 %v7387
    %v8550 = vunpack.c.l.b16 %v7388
    %v8551 = vunpack.c.l.b16 %v7389
    %v8552 = vunpack.c.l.b16 %v7390
    %v8553 = vpack.c.b16 %v8536, %v8535
    %v8554 = vpack.c.b16 %v8538, %v8537
    %v8555 = vpack.c.b16 %v8540, %v8539
    %v8556 = vpack.c.b16 %v8542, %v8541
    %v8557 = vpack.c.b16 %v8544, %v8543
    %v8558 = vpack.c.b16 %v8546, %v8545
    %v8559 = vpack.c.b16 %v8548, %v8547
    %v8560 = vpack.c.b16 %v8550, %v8549
    %v8561 = vpack.c.b16 %v8552, %v8551
    %v8571 = vsel %vm4450, %v6910, 0
    %v8573 = vsel %vm4450, %v6914, 0
    %v8575 = vsel %vm4450, %v6918, 0
    %v8577 = vsel %vm4450, %v6922, 0
    %v8579 = vsel %vm4450, %v6926, 0
    %v8581 = vsel %vm4450, %v6930, 0
    %v8583 = vsel %vm4450, %v6934, 0
    %v8585 = vsel %vm4450, %v6938, 0
    %v8587 = vsel %vm4450, %v6942, 0
    %v8589 = vsel %vm4450, %v6946, 0
    %v8591 = vsel %vm4450, %v6950, 0
    %v8593 = vsel %vm4450, %v6954, 0
    %v8595 = vsel %vm4450, %v6958, 0
    %v8597 = vsel %vm4450, %v6962, 0
    %v8599 = vsel %vm4450, %v6966, 0
    %v8601 = vsel %vm4450, %v6970, 0
    %v8603 = vsel %vm4450, %v6974, 0
    %v8605 = vsel %vm4450, %v6978, 0
    %v8607 = vsel %vm4450, %v6982, 0
    %v8609 = vsel %vm4450, %v6986, 0
    %v8611 = vsel %vm4450, %v6990, 0
    %v8613 = vsel %vm4450, %v6994, 0
    %v8615 = vsel %vm4450, %v6998, 0
    %v8617 = vsel %vm4450, %v7002, 0
    %v8619 = vsel %vm4450, %v7006, 0
    %v8621 = vsel %vm4450, %v7010, 0
    %v8623 = vsel %vm4450, %v7014, 0
    %v8625 = vsel %vm4450, %v7018, 0
    %v8627 = vsel %vm4450, %v7022, 0
    %v8629 = vsel %vm4450, %v7026, 0
    %v8631 = vsel %vm4450, %v7030, 0
    %v8633 = vsel %vm4450, %v7034, 0
    %8635 = vmatprep.subr.bf16.mxu0 0
    %8636 = vmatpush1.bf16.msra.mxu0 %v8553
    %8637 = vmatprep.subr.bf16.mxu0 0
    %8638 = vmatpush1.bf16.msra.mxu0 %v8554
    %8639 = vmatprep.subr.bf16.mxu0 0
    %8640 = vmatpush1.bf16.msra.mxu0 %v8555
    %8641 = vmatprep.subr.bf16.mxu0 0
    %8642 = vmatpush1.bf16.msra.mxu0 %v8556
    %8643 = vmatprep.subr.bf16.mxu0 0
    %8644 = vmatpush1.bf16.msra.mxu0 %v8557
    %8645 = vmatprep.subr.bf16.mxu0 0
    %8646 = vmatpush1.bf16.msra.mxu0 %v8558
    %8647 = vmatprep.subr.bf16.mxu0 0
    %8648 = vmatpush1.bf16.msra.mxu0 %v8559
    %8649 = vmatprep.subr.bf16.mxu0 0
    %8650 = vmatpush1.bf16.msra.mxu0 %v8560
    %8651 = vmatprep.subr.bf16.mxu0 0
    %8652 = vmatpush1.bf16.msra.mxu0 %v8561
    %8653 = vmatprep.subr.bf16.mxu0 0
    %8654 = vmatpush1.bf16.msra.mxu0 0
    %8655 = vmatprep.subr.bf16.mxu0 0
    %8656 = vmatpush1.bf16.msra.mxu0 0
    %8657 = vmatprep.subr.bf16.mxu0 0
    %8658 = vmatpush1.bf16.msra.mxu0 0
    %8659 = vmatprep.subr.bf16.mxu0 0
    %8660 = vmatpush1.bf16.msra.mxu0 0
    %8661 = vmatprep.subr.bf16.mxu0 0
    %8662 = vmatpush1.bf16.msra.mxu0 0
    %8663 = vmatprep.subr.bf16.mxu0 0
    %8664 = vmatpush1.bf16.msra.mxu0 0
    %8665 = vmatprep.subr.bf16.mxu0 0
    %8666 = vmatpush1.bf16.msra.mxu0 0
    %8667 = vmatprep.mubr.bf16.mxu0 %v8571
    %8668 = vmatmul.mubr.bf16.gmra.mrb[0].mxu0 %v7214
    %v8669 = vpop.f32.mrb[0].mxu0
    %v8670 = vadd.f32 %v8267, %v8669
    %v8671 = vpop.f32.mrb[0].mxu0
    %v8672 = vpop.f32.mrb[0].mxu0
    %v8673 = vadd.f32 %v8270, %v8672
    %v8674 = vpop.f32.mrb[0].mxu0
    %8675 = vmatprep.mubr.bf16.mxu0 %v8573
    %8676 = vmatmul.mubr.bf16.gmra.mrb[0].mxu0 %v7219
    %v8677 = vpop.f32.mrb[0].mxu0
    %v8678 = vadd.f32 %v8275, %v8677
    %v8679 = vpop.f32.mrb[0].mxu0
    %v8680 = vpop.f32.mrb[0].mxu0
    %v8681 = vadd.f32 %v8278, %v8680
    %v8682 = vpop.f32.mrb[0].mxu0
    %8683 = vmatprep.mubr.bf16.mxu0 %v8575
    %8684 = vmatmul.mubr.bf16.gmra.mrb[0].mxu0 %v7224
    %v8685 = vpop.f32.mrb[0].mxu0
    %v8686 = vadd.f32 %v8283, %v8685
    %v8687 = vpop.f32.mrb[0].mxu0
    %v8688 = vpop.f32.mrb[0].mxu0
    %v8689 = vadd.f32 %v8286, %v8688
    %v8690 = vpop.f32.mrb[0].mxu0
    %8691 = vmatprep.mubr.bf16.mxu0 %v8577
    %8692 = vmatmul.mubr.bf16.gmra.mrb[0].mxu0 %v7229
    %v8693 = vpop.f32.mrb[0].mxu0
    %v8694 = vadd.f32 %v8291, %v8693
    %v8695 = vpop.f32.mrb[0].mxu0
    %v8696 = vpop.f32.mrb[0].mxu0
    %v8697 = vadd.f32 %v8294, %v8696
    %v8698 = vpop.f32.mrb[0].mxu0
    %8699 = vmatprep.mubr.bf16.mxu0 %v8579
    %8700 = vmatmul.mubr.bf16.gmra.mrb[0].mxu0 %v7234
    %v8701 = vpop.f32.mrb[0].mxu0
    %v8702 = vadd.f32 %v8299, %v8701
    %v8703 = vpop.f32.mrb[0].mxu0
    %v8704 = vpop.f32.mrb[0].mxu0
    %v8705 = vadd.f32 %v8302, %v8704
    %v8706 = vpop.f32.mrb[0].mxu0
    %8707 = vmatprep.mubr.bf16.mxu0 %v8581
    %8708 = vmatmul.mubr.bf16.gmra.mrb[0].mxu0 %v7239
    %v8709 = vpop.f32.mrb[0].mxu0
    %v8710 = vadd.f32 %v8307, %v8709
    %v8711 = vpop.f32.mrb[0].mxu0
    %v8712 = vpop.f32.mrb[0].mxu0
    %v8713 = vadd.f32 %v8310, %v8712
    %v8714 = vpop.f32.mrb[0].mxu0
    %8715 = vmatprep.mubr.bf16.mxu0 %v8583
    %8716 = vmatmul.mubr.bf16.gmra.mrb[0].mxu0 %v7244
    %v8717 = vpop.f32.mrb[0].mxu0
    %v8718 = vadd.f32 %v8315, %v8717
    %v8719 = vpop.f32.mrb[0].mxu0
    %v8720 = vpop.f32.mrb[0].mxu0
    %v8721 = vadd.f32 %v8318, %v8720
    %v8722 = vpop.f32.mrb[0].mxu0
    %8723 = vmatprep.mubr.bf16.mxu0 %v8585
    %8724 = vmatmul.mubr.bf16.gmra.mrb[0].mxu0 %v7249
    %v8725 = vpop.f32.mrb[0].mxu0
    %v8726 = vadd.f32 %v8323, %v8725
    %v8727 = vpop.f32.mrb[0].mxu0
    %v8728 = vpop.f32.mrb[0].mxu0
    %v8729 = vadd.f32 %v8326, %v8728
    %v8730 = vpop.f32.mrb[0].mxu0
    %8731 = vmatprep.mubr.bf16.mxu0 %v8587
    %8732 = vmatmul.mubr.bf16.gmra.mrb[0].mxu0 %v7254
    %v8733 = vpop.f32.mrb[0].mxu0
    %v8734 = vadd.f32 %v8331, %v8733
    %v8735 = vpop.f32.mrb[0].mxu0
    %v8736 = vpop.f32.mrb[0].mxu0
    %v8737 = vadd.f32 %v8334, %v8736
    %v8738 = vpop.f32.mrb[0].mxu0
    %8739 = vmatprep.mubr.bf16.mxu0 %v8589
    %8740 = vmatmul.mubr.bf16.gmra.mrb[0].mxu0 %v7259
    %v8741 = vpop.f32.mrb[0].mxu0
    %v8742 = vadd.f32 %v8339, %v8741
    %v8743 = vpop.f32.mrb[0].mxu0
    %v8744 = vpop.f32.mrb[0].mxu0
    %v8745 = vadd.f32 %v8342, %v8744
    %v8746 = vpop.f32.mrb[0].mxu0
    %8747 = vmatprep.mubr.bf16.mxu0 %v8591
    %8748 = vmatmul.mubr.bf16.gmra.mrb[0].mxu0 %v7264
    %v8749 = vpop.f32.mrb[0].mxu0
    %v8750 = vadd.f32 %v8347, %v8749
    %v8751 = vpop.f32.mrb[0].mxu0
    %v8752 = vpop.f32.mrb[0].mxu0
    %v8753 = vadd.f32 %v8350, %v8752
    %v8754 = vpop.f32.mrb[0].mxu0
    %8755 = vmatprep.mubr.bf16.mxu0 %v8593
    %8756 = vmatmul.mubr.bf16.gmra.mrb[0].mxu0 %v7269
    %v8757 = vpop.f32.mrb[0].mxu0
    %v8758 = vadd.f32 %v8355, %v8757
    %v8759 = vpop.f32.mrb[0].mxu0
    %v8760 = vpop.f32.mrb[0].mxu0
    %v8761 = vadd.f32 %v8358, %v8760
    %v8762 = vpop.f32.mrb[0].mxu0
    %8763 = vmatprep.mubr.bf16.mxu0 %v8595
    %8764 = vmatmul.mubr.bf16.gmra.mrb[0].mxu0 %v7274
    %v8765 = vpop.f32.mrb[0].mxu0
    %v8766 = vadd.f32 %v8363, %v8765
    %v8767 = vpop.f32.mrb[0].mxu0
    %v8768 = vpop.f32.mrb[0].mxu0
    %v8769 = vadd.f32 %v8366, %v8768
    %v8770 = vpop.f32.mrb[0].mxu0
    %8771 = vmatprep.mubr.bf16.mxu0 %v8597
    %8772 = vmatmul.mubr.bf16.gmra.mrb[0].mxu0 %v7279
    %v8773 = vpop.f32.mrb[0].mxu0
    %v8774 = vadd.f32 %v8371, %v8773
    %v8775 = vpop.f32.mrb[0].mxu0
    %v8776 = vpop.f32.mrb[0].mxu0
    %v8777 = vadd.f32 %v8374, %v8776
    %v8778 = vpop.f32.mrb[0].mxu0
    %8779 = vmatprep.mubr.bf16.mxu0 %v8599
    %8780 = vmatmul.mubr.bf16.gmra.mrb[0].mxu0 %v7284
    %v8781 = vpop.f32.mrb[0].mxu0
    %v8782 = vadd.f32 %v8379, %v8781
    %v8783 = vpop.f32.mrb[0].mxu0
    %v8784 = vpop.f32.mrb[0].mxu0
    %v8785 = vadd.f32 %v8382, %v8784
    %v8786 = vpop.f32.mrb[0].mxu0
    %8787 = vmatprep.mubr.bf16.mxu0 %v8601
    %8788 = vmatmul.mubr.bf16.gmra.mrb[0].mxu0 %v7289
    %v8789 = vpop.f32.mrb[0].mxu0
    %v8790 = vpop.f32.mrb[0].mxu0
    %v8791 = vpop.f32.mrb[0].mxu0
    %v8792 = vpop.f32.mrb[0].mxu0
    %8793 = vmatprep.mubr.bf16.mxu0 %v8603
    %8794 = vmatmul.mubr.bf16.gmra.mrb[0].mxu0 %v7294
    %v8795 = vpop.f32.mrb[0].mxu0
    %v8796 = vadd.f32 %v8393, %v8795
    %v8797 = vpop.f32.mrb[0].mxu0
    %v8798 = vpop.f32.mrb[0].mxu0
    %v8799 = vadd.f32 %v8396, %v8798
    %v8800 = vpop.f32.mrb[0].mxu0
    %8801 = vmatprep.mubr.bf16.mxu0 %v8605
    %8802 = vmatmul.mubr.bf16.gmra.mrb[0].mxu0 %v7299
    %v8803 = vpop.f32.mrb[0].mxu0
    %v8804 = vadd.f32 %v8401, %v8803
    %v8805 = vpop.f32.mrb[0].mxu0
    %v8806 = vpop.f32.mrb[0].mxu0
    %v8807 = vadd.f32 %v8404, %v8806
    %v8808 = vpop.f32.mrb[0].mxu0
    %8809 = vmatprep.mubr.bf16.mxu0 %v8607
    %8810 = vmatmul.mubr.bf16.gmra.mrb[0].mxu0 %v7304
    %v8811 = vpop.f32.mrb[0].mxu0
    %v8812 = vadd.f32 %v8409, %v8811
    %v8813 = vpop.f32.mrb[0].mxu0
    %v8814 = vpop.f32.mrb[0].mxu0
    %v8815 = vadd.f32 %v8412, %v8814
    %v8816 = vpop.f32.mrb[0].mxu0
    %8817 = vmatprep.mubr.bf16.mxu0 %v8609
    %8818 = vmatmul.mubr.bf16.gmra.mrb[0].mxu0 %v7309
    %v8819 = vpop.f32.mrb[0].mxu0
    %v8820 = vadd.f32 %v8417, %v8819
    %v8821 = vpop.f32.mrb[0].mxu0
    %v8822 = vpop.f32.mrb[0].mxu0
    %v8823 = vadd.f32 %v8420, %v8822
    %v8824 = vpop.f32.mrb[0].mxu0
    %8825 = vmatprep.mubr.bf16.mxu0 %v8611
    %8826 = vmatmul.mubr.bf16.gmra.mrb[0].mxu0 %v7314
    %v8827 = vpop.f32.mrb[0].mxu0
    %v8828 = vadd.f32 %v8425, %v8827
    %v8829 = vpop.f32.mrb[0].mxu0
    %v8830 = vpop.f32.mrb[0].mxu0
    %v8831 = vadd.f32 %v8428, %v8830
    %v8832 = vpop.f32.mrb[0].mxu0
    %8833 = vmatprep.mubr.bf16.mxu0 %v8613
    %8834 = vmatmul.mubr.bf16.gmra.mrb[0].mxu0 %v7319
    %v8835 = vpop.f32.mrb[0].mxu0
    %v8836 = vadd.f32 %v8433, %v8835
    %v8837 = vpop.f32.mrb[0].mxu0
    %v8838 = vpop.f32.mrb[0].mxu0
    %v8839 = vadd.f32 %v8436, %v8838
    %v8840 = vpop.f32.mrb[0].mxu0
    %8841 = vmatprep.mubr.bf16.mxu0 %v8615
    %8842 = vmatmul.mubr.bf16.gmra.mrb[0].mxu0 %v7324
    %v8843 = vpop.f32.mrb[0].mxu0
    %v8844 = vadd.f32 %v8441, %v8843
    %v8845 = vpop.f32.mrb[0].mxu0
    %v8846 = vpop.f32.mrb[0].mxu0
    %v8847 = vadd.f32 %v8444, %v8846
    %v8848 = vpop.f32.mrb[0].mxu0
    %8849 = vmatprep.mubr.bf16.mxu0 %v8617
    %8850 = vmatmul.mubr.bf16.gmra.mrb[0].mxu0 %v7329
    %v8851 = vpop.f32.mrb[0].mxu0
    %v8852 = vadd.f32 %v8449, %v8851
    %v8853 = vpop.f32.mrb[0].mxu0
    %v8854 = vpop.f32.mrb[0].mxu0
    %v8855 = vadd.f32 %v8452, %v8854
    %v8856 = vpop.f32.mrb[0].mxu0
    %8857 = vmatprep.mubr.bf16.mxu0 %v8619
    %8858 = vmatmul.mubr.bf16.gmra.mrb[0].mxu0 %v7334
    %v8859 = vpop.f32.mrb[0].mxu0
    %v8860 = vadd.f32 %v8457, %v8859
    %v8861 = vpop.f32.mrb[0].mxu0
    %v8862 = vpop.f32.mrb[0].mxu0
    %v8863 = vadd.f32 %v8460, %v8862
    %v8864 = vpop.f32.mrb[0].mxu0
    %8865 = vmatprep.mubr.bf16.mxu0 %v8621
    %8866 = vmatmul.mubr.bf16.gmra.mrb[0].mxu0 %v7339
    %v8867 = vpop.f32.mrb[0].mxu0
    %v8868 = vadd.f32 %v8465, %v8867
    %v8869 = vpop.f32.mrb[0].mxu0
    %v8870 = vpop.f32.mrb[0].mxu0
    %v8871 = vadd.f32 %v8468, %v8870
    %v8872 = vpop.f32.mrb[0].mxu0
    %8873 = vmatprep.mubr.bf16.mxu0 %v8623
    %8874 = vmatmul.mubr.bf16.gmra.mrb[0].mxu0 %v7344
    %v8875 = vpop.f32.mrb[0].mxu0
    %v8876 = vadd.f32 %v8473, %v8875
    %v8877 = vpop.f32.mrb[0].mxu0
    %v8878 = vpop.f32.mrb[0].mxu0
    %v8879 = vadd.f32 %v8476, %v8878
    %v8880 = vpop.f32.mrb[0].mxu0
    %8881 = vmatprep.mubr.bf16.mxu0 %v8625
    %8882 = vmatmul.mubr.bf16.gmra.mrb[0].mxu0 %v7349
    %v8883 = vpop.f32.mrb[0].mxu0
    %v8884 = vadd.f32 %v8481, %v8883
    %v8885 = vpop.f32.mrb[0].mxu0
    %v8886 = vpop.f32.mrb[0].mxu0
    %v8887 = vadd.f32 %v8484, %v8886
    %v8888 = vpop.f32.mrb[0].mxu0
    %8889 = vmatprep.mubr.bf16.mxu0 %v8627
    %8890 = vmatmul.mubr.bf16.gmra.mrb[0].mxu0 %v7354
    %v8891 = vpop.f32.mrb[0].mxu0
    %v8892 = vadd.f32 %v8489, %v8891
    %v8893 = vpop.f32.mrb[0].mxu0
    %v8894 = vpop.f32.mrb[0].mxu0
    %v8895 = vadd.f32 %v8492, %v8894
    %v8896 = vpop.f32.mrb[0].mxu0
    %8897 = vmatprep.mubr.bf16.mxu0 %v8629
    %8898 = vmatmul.mubr.bf16.gmra.mrb[0].mxu0 %v7359
    %v8899 = vpop.f32.mrb[0].mxu0
    %v8900 = vadd.f32 %v8497, %v8899
    %v8901 = vpop.f32.mrb[0].mxu0
    %v8902 = vpop.f32.mrb[0].mxu0
    %v8903 = vadd.f32 %v8500, %v8902
    %v8904 = vpop.f32.mrb[0].mxu0
    %8905 = vmatprep.mubr.bf16.mxu0 %v8631
    %8906 = vmatmul.mubr.bf16.gmra.mrb[0].mxu0 %v7364
    %v8907 = vpop.f32.mrb[0].mxu0
    %v8908 = vadd.f32 %v8505, %v8907
    %v8909 = vpop.f32.mrb[0].mxu0
    %v8910 = vpop.f32.mrb[0].mxu0
    %v8911 = vadd.f32 %v8508, %v8910
    %v8912 = vpop.f32.mrb[0].mxu0
    %8913 = vmatprep.mubr.bf16.mxu0 %v8633
    %8914 = vmatmul.mubr.bf16.gmra.mrb[0].mxu0 %v7369
    %v8915 = vpop.f32.mrb[0].mxu0
    %v8916 = vpop.f32.mrb[0].mxu0
    %v8917 = vpop.f32.mrb[0].mxu0
    %v8918 = vpop.f32.mrb[0].mxu0
    %8919 = vdwg.mxu0
    %v8984 = vrot.slane %v7214, 1
    %v8985 = vrot.slane %v7217, 1
    %v8986 = vsel %vm1694, %v8984, %v8985
    %v8987 = vrot.slane %v6910, 1
    %v8988 = vrot.slane %v6912, 1
    %v8989 = vsel %vm1694, %v8987, %v8988
    %v8990 = vrot.slane %v7219, 1
    %v8991 = vrot.slane %v7222, 1
    %v8992 = vsel %vm1694, %v8990, %v8991
    %v8993 = vrot.slane %v6914, 1
    %v8994 = vrot.slane %v6916, 1
    %v8995 = vsel %vm1694, %v8993, %v8994
    %v8996 = vrot.slane %v7224, 1
    %v8997 = vrot.slane %v7227, 1
    %v8998 = vsel %vm1694, %v8996, %v8997
    %v8999 = vrot.slane %v6918, 1
    %v9000 = vrot.slane %v6920, 1
    %v9001 = vsel %vm1694, %v8999, %v9000
    %v9002 = vrot.slane %v7229, 1
    %v9003 = vrot.slane %v7232, 1
    %v9004 = vsel %vm1694, %v9002, %v9003
    %v9005 = vrot.slane %v6922, 1
    %v9006 = vrot.slane %v6924, 1
    %v9007 = vsel %vm1694, %v9005, %v9006
    %v9008 = vrot.slane %v7234, 1
    %v9009 = vrot.slane %v7237, 1
    %v9010 = vsel %vm1694, %v9008, %v9009
    %v9011 = vrot.slane %v6926, 1
    %v9012 = vrot.slane %v6928, 1
    %v9013 = vsel %vm1694, %v9011, %v9012
    %v9014 = vrot.slane %v7239, 1
    %v9015 = vrot.slane %v7242, 1
    %v9016 = vsel %vm1694, %v9014, %v9015
    %v9017 = vrot.slane %v6930, 1
    %v9018 = vrot.slane %v6932, 1
    %v9019 = vsel %vm1694, %v9017, %v9018
    %v9020 = vrot.slane %v7244, 1
    %v9021 = vrot.slane %v7247, 1
    %v9022 = vsel %vm1694, %v9020, %v9021
    %v9023 = vrot.slane %v6934, 1
    %v9024 = vrot.slane %v6936, 1
    %v9025 = vsel %vm1694, %v9023, %v9024
    %v9026 = vrot.slane %v7249, 1
    %v9027 = vrot.slane %v7252, 1
    %v9028 = vsel %vm1694, %v9026, %v9027
    %v9029 = vrot.slane %v6938, 1
    %v9030 = vrot.slane %v6940, 1
    %v9031 = vsel %vm1694, %v9029, %v9030
    %v9032 = vrot.slane %v7254, 1
    %v9033 = vrot.slane %v7257, 1
    %v9034 = vsel %vm1694, %v9032, %v9033
    %v9035 = vrot.slane %v6942, 1
    %v9036 = vrot.slane %v6944, 1
    %v9037 = vsel %vm1694, %v9035, %v9036
    %v9038 = vrot.slane %v7259, 1
    %v9039 = vrot.slane %v7262, 1
    %v9040 = vsel %vm1694, %v9038, %v9039
    %v9041 = vrot.slane %v6946, 1
    %v9042 = vrot.slane %v6948, 1
    %v9043 = vsel %vm1694, %v9041, %v9042
    %v9044 = vrot.slane %v7264, 1
    %v9045 = vrot.slane %v7267, 1
    %v9046 = vsel %vm1694, %v9044, %v9045
    %v9047 = vrot.slane %v6950, 1
    %v9048 = vrot.slane %v6952, 1
    %v9049 = vsel %vm1694, %v9047, %v9048
    %v9050 = vrot.slane %v7269, 1
    %v9051 = vrot.slane %v7272, 1
    %v9052 = vsel %vm1694, %v9050, %v9051
    %v9053 = vrot.slane %v6954, 1
    %v9054 = vrot.slane %v6956, 1
    %v9055 = vsel %vm1694, %v9053, %v9054
    %v9056 = vrot.slane %v7274, 1
    %v9057 = vrot.slane %v7277, 1
    %v9058 = vsel %vm1694, %v9056, %v9057
    %v9059 = vrot.slane %v6958, 1
    %v9060 = vrot.slane %v6960, 1
    %v9061 = vsel %vm1694, %v9059, %v9060
    %v9062 = vrot.slane %v7279, 1
    %v9063 = vrot.slane %v7282, 1
    %v9064 = vsel %vm1694, %v9062, %v9063
    %v9065 = vrot.slane %v6962, 1
    %v9066 = vrot.slane %v6964, 1
    %v9067 = vsel %vm1694, %v9065, %v9066
    %v9068 = vrot.slane %v7284, 1
    %v9069 = vrot.slane %v7287, 1
    %v9070 = vsel %vm1694, %v9068, %v9069
    %v9071 = vrot.slane %v6966, 1
    %v9072 = vrot.slane %v6968, 1
    %v9073 = vsel %vm1694, %v9071, %v9072
    %v9074 = vrot.slane %v7289, 1
    %v9075 = vrot.slane %v7292, 1
    %v9076 = vsel %vm1694, %v9074, %v9075
    %v9077 = vrot.slane %v6970, 1
    %v9078 = vrot.slane %v6972, 1
    %v9079 = vsel %vm1694, %v9077, %v9078
    %v9080 = vrot.slane %v7294, 1
    %v9081 = vrot.slane %v7297, 1
    %v9082 = vsel %vm1694, %v9080, %v9081
    %v9083 = vrot.slane %v6974, 1
    %v9084 = vrot.slane %v6976, 1
    %v9085 = vsel %vm1694, %v9083, %v9084
    %v9086 = vrot.slane %v7299, 1
    %v9087 = vrot.slane %v7302, 1
    %v9088 = vsel %vm1694, %v9086, %v9087
    %v9089 = vrot.slane %v6978, 1
    %v9090 = vrot.slane %v6980, 1
    %v9091 = vsel %vm1694, %v9089, %v9090
    %v9092 = vrot.slane %v7304, 1
    %v9093 = vrot.slane %v7307, 1
    %v9094 = vsel %vm1694, %v9092, %v9093
    %v9095 = vrot.slane %v6982, 1
    %v9096 = vrot.slane %v6984, 1
    %v9097 = vsel %vm1694, %v9095, %v9096
    %v9098 = vrot.slane %v7309, 1
    %v9099 = vrot.slane %v7312, 1
    %v9100 = vsel %vm1694, %v9098, %v9099
    %v9101 = vrot.slane %v6986, 1
    %v9102 = vrot.slane %v6988, 1
    %v9103 = vsel %vm1694, %v9101, %v9102
    %v9104 = vrot.slane %v7314, 1
    %v9105 = vrot.slane %v7317, 1
    %v9106 = vsel %vm1694, %v9104, %v9105
    %v9107 = vrot.slane %v6990, 1
    %v9108 = vrot.slane %v6992, 1
    %v9109 = vsel %vm1694, %v9107, %v9108
    %v9110 = vrot.slane %v7319, 1
    %v9111 = vrot.slane %v7322, 1
    %v9112 = vsel %vm1694, %v9110, %v9111
    %v9113 = vrot.slane %v6994, 1
    %v9114 = vrot.slane %v6996, 1
    %v9115 = vsel %vm1694, %v9113, %v9114
    %v9116 = vrot.slane %v7324, 1
    %v9117 = vrot.slane %v7327, 1
    %v9118 = vsel %vm1694, %v9116, %v9117
    %v9119 = vrot.slane %v6998, 1
    %v9120 = vrot.slane %v7000, 1
    %v9121 = vsel %vm1694, %v9119, %v9120
    %v9122 = vrot.slane %v7329, 1
    %v9123 = vrot.slane %v7332, 1
    %v9124 = vsel %vm1694, %v9122, %v9123
    %v9125 = vrot.slane %v7002, 1
    %v9126 = vrot.slane %v7004, 1
    %v9127 = vsel %vm1694, %v9125, %v9126
    %v9128 = vrot.slane %v7334, 1
    %v9129 = vrot.slane %v7337, 1
    %v9130 = vsel %vm1694, %v9128, %v9129
    %v9131 = vrot.slane %v7006, 1
    %v9132 = vrot.slane %v7008, 1
    %v9133 = vsel %vm1694, %v9131, %v9132
    %v9134 = vrot.slane %v7339, 1
    %v9135 = vrot.slane %v7342, 1
    %v9136 = vsel %vm1694, %v9134, %v9135
    %v9137 = vrot.slane %v7010, 1
    %v9138 = vrot.slane %v7012, 1
    %v9139 = vsel %vm1694, %v9137, %v9138
    %v9140 = vrot.slane %v7344, 1
    %v9141 = vrot.slane %v7347, 1
    %v9142 = vsel %vm1694, %v9140, %v9141
    %v9143 = vrot.slane %v7014, 1
    %v9144 = vrot.slane %v7016, 1
    %v9145 = vsel %vm1694, %v9143, %v9144
    %v9146 = vrot.slane %v7349, 1
    %v9147 = vrot.slane %v7352, 1
    %v9148 = vsel %vm1694, %v9146, %v9147
    %v9149 = vrot.slane %v7018, 1
    %v9150 = vrot.slane %v7020, 1
    %v9151 = vsel %vm1694, %v9149, %v9150
    %v9152 = vrot.slane %v7354, 1
    %v9153 = vrot.slane %v7357, 1
    %v9154 = vsel %vm1694, %v9152, %v9153
    %v9155 = vrot.slane %v7022, 1
    %v9156 = vrot.slane %v7024, 1
    %v9157 = vsel %vm1694, %v9155, %v9156
    %v9158 = vrot.slane %v7359, 1
    %v9159 = vrot.slane %v7362, 1
    %v9160 = vsel %vm1694, %v9158, %v9159
    %v9161 = vrot.slane %v7026, 1
    %v9162 = vrot.slane %v7028, 1
    %v9163 = vsel %vm1694, %v9161, %v9162
    %v9164 = vrot.slane %v7364, 1
    %v9165 = vrot.slane %v7367, 1
    %v9166 = vsel %vm1694, %v9164, %v9165
    %v9167 = vrot.slane %v7030, 1
    %v9168 = vrot.slane %v7032, 1
    %v9169 = vsel %vm1694, %v9167, %v9168
    %v9170 = vrot.slane %v7369, 1
    %v9171 = vrot.slane %v7372, 1
    %v9172 = vsel %vm1694, %v9170, %v9171
    %v9173 = vrot.slane %v7034, 1
    %v9174 = vrot.slane %v7036, 1
    %v9175 = vsel %vm1694, %v9173, %v9174
    %s9208 = scalar_lea.vmem [#allocation8], 144
    %v9209 = vld [vmem:[%s9208] sm:$0xf]
    %v9210 = vld [vmem:[%s9208 + $0x4] sm:$0xf]
    %v9211 = vld [vmem:[%s9208 + $0x8] sm:$0xf]
    %v9212 = vld [vmem:[%s9208 + $0xc] sm:$0xf]
    %v9213 = vld [vmem:[%s9208 + $0x10] sm:$0xf]
    %v9214 = vld [vmem:[%s9208 + $0x14] sm:$0xf]
    %v9215 = vld [vmem:[%s9208 + $0x18] sm:$0xf]
    %v9216 = vld [vmem:[%s9208 + $0x1c] sm:$0xf]
    %v9217 = vld [vmem:[%s9208 + $0x20] sm:$0xf]
    %v9218 = vld [vmem:[%s9208 + $0x24] sm:$0xf]
    %v9219 = vld [vmem:[%s9208 + $0x28] sm:$0xf]
    %v9220 = vld [vmem:[%s9208 + $0x2c] sm:$0xf]
    %v9221 = vld [vmem:[%s9208 + $0x30] sm:$0xf]
    %v9222 = vld [vmem:[%s9208 + $0x34] sm:$0xf]
    %v9223 = vld [vmem:[%s9208 + $0x38] sm:$0xf]
    %v9224 = vld [vmem:[%s9208 + $0x3c] sm:$0xf]
    %v9225 = vld [vmem:[%s9208 + $0x40] sm:$0xf]
    %v9226 = vld [vmem:[%s9208 + $0x44] sm:$0xf]
    %v9245 = vunpack.c.l.b16 %v9209
    %v9246 = vunpack.c.l.b16 %v9210
    %v9247 = vunpack.c.l.b16 %v9211
    %v9248 = vunpack.c.l.b16 %v9212
    %v9249 = vunpack.c.l.b16 %v9213
    %v9250 = vunpack.c.l.b16 %v9214
    %v9251 = vunpack.c.l.b16 %v9215
    %v9252 = vunpack.c.l.b16 %v9216
    %v9253 = vunpack.c.l.b16 %v9217
    %v9254 = vunpack.c.l.b16 %v9218
    %v9255 = vunpack.c.l.b16 %v9219
    %v9256 = vunpack.c.l.b16 %v9220
    %v9257 = vunpack.c.l.b16 %v9221
    %v9258 = vunpack.c.l.b16 %v9222
    %v9259 = vunpack.c.l.b16 %v9223
    %v9260 = vunpack.c.l.b16 %v9224
    %v9261 = vunpack.c.l.b16 %v9225
    %v9262 = vunpack.c.l.b16 %v9226
    %v9263 = vpack.c.b16 %v9246, %v9245
    %v9264 = vpack.c.b16 %v9248, %v9247
    %v9265 = vpack.c.b16 %v9250, %v9249
    %v9266 = vpack.c.b16 %v9252, %v9251
    %v9267 = vpack.c.b16 %v9254, %v9253
    %v9268 = vpack.c.b16 %v9256, %v9255
    %v9269 = vpack.c.b16 %v9258, %v9257
    %v9270 = vpack.c.b16 %v9260, %v9259
    %v9271 = vpack.c.b16 %v9262, %v9261
    %v9282 = vsel %vm4450, %v8989, 0
    %v9285 = vsel %vm4450, %v8995, 0
    %v9288 = vsel %vm4450, %v9001, 0
    %v9291 = vsel %vm4450, %v9007, 0
    %v9294 = vsel %vm4450, %v9013, 0
    %v9297 = vsel %vm4450, %v9019, 0
    %v9300 = vsel %vm4450, %v9025, 0
    %v9303 = vsel %vm4450, %v9031, 0
    %v9306 = vsel %vm4450, %v9037, 0
    %v9309 = vsel %vm4450, %v9043, 0
    %v9312 = vsel %vm4450, %v9049, 0
    %v9315 = vsel %vm4450, %v9055, 0
    %v9318 = vsel %vm4450, %v9061, 0
    %v9321 = vsel %vm4450, %v9067, 0
    %v9324 = vsel %vm4450, %v9073, 0
    %v9327 = vsel %vm4450, %v9079, 0
    %v9330 = vsel %vm4450, %v9085, 0
    %v9333 = vsel %vm4450, %v9091, 0
    %v9336 = vsel %vm4450, %v9097, 0
    %v9339 = vsel %vm4450, %v9103, 0
    %v9342 = vsel %vm4450, %v9109, 0
    %v9345 = vsel %vm4450, %v9115, 0
    %v9348 = vsel %vm4450, %v9121, 0
    %v9351 = vsel %vm4450, %v9127, 0
    %v9354 = vsel %vm4450, %v9133, 0
    %v9357 = vsel %vm4450, %v9139, 0
    %v9360 = vsel %vm4450, %v9145, 0
    %v9363 = vsel %vm4450, %v9151, 0
    %v9366 = vsel %vm4450, %v9157, 0
    %v9369 = vsel %vm4450, %v9163, 0
    %v9372 = vsel %vm4450, %v9169, 0
    %v9375 = vsel %vm4450, %v9175, 0
    %9377 = vmatprep.subr.bf16.mxu0 0
    %9378 = vmatpush1.bf16.msra.mxu0 %v9263
    %9379 = vmatprep.subr.bf16.mxu0 0
    %9380 = vmatpush1.bf16.msra.mxu0 %v9264
    %9381 = vmatprep.subr.bf16.mxu0 0
    %9382 = vmatpush1.bf16.msra.mxu0 %v9265
    %9383 = vmatprep.subr.bf16.mxu0 0
    %9384 = vmatpush1.bf16.msra.mxu0 %v9266
    %9385 = vmatprep.subr.bf16.mxu0 0
    %9386 = vmatpush1.bf16.msra.mxu0 %v9267
    %9387 = vmatprep.subr.bf16.mxu0 0
    %9388 = vmatpush1.bf16.msra.mxu0 %v9268
    %9389 = vmatprep.subr.bf16.mxu0 0
    %9390 = vmatpush1.bf16.msra.mxu0 %v9269
    %9391 = vmatprep.subr.bf16.mxu0 0
    %9392 = vmatpush1.bf16.msra.mxu0 %v9270
    %9393 = vmatprep.subr.bf16.mxu0 0
    %9394 = vmatpush1.bf16.msra.mxu0 %v9271
    %9395 = vmatprep.subr.bf16.mxu0 0
    %9396 = vmatpush1.bf16.msra.mxu0 0
    %9397 = vmatprep.subr.bf16.mxu0 0
    %9398 = vmatpush1.bf16.msra.mxu0 0
    %9399 = vmatprep.subr.bf16.mxu0 0
    %9400 = vmatpush1.bf16.msra.mxu0 0
    %9401 = vmatprep.subr.bf16.mxu0 0
    %9402 = vmatpush1.bf16.msra.mxu0 0
    %9403 = vmatprep.subr.bf16.mxu0 0
    %9404 = vmatpush1.bf16.msra.mxu0 0
    %9405 = vmatprep.subr.bf16.mxu0 0
    %9406 = vmatpush1.bf16.msra.mxu0 0
    %9407 = vmatprep.subr.bf16.mxu0 0
    %9408 = vmatpush1.bf16.msra.mxu0 0
    %9409 = vmatprep.mubr.bf16.mxu0 %v9282
    %9410 = vmatmul.mubr.bf16.gmra.mrb[0].mxu0 %v8986
    %v9411 = vpop.f32.mrb[0].mxu0
    %v9412 = vadd.f32 0.0, %v9411
    %v9413 = vpop.f32.mrb[0].mxu0
    %v9414 = vpop.f32.mrb[0].mxu0
    %v9415 = vadd.f32 0.0, %v9414
    %v9416 = vpop.f32.mrb[0].mxu0
    %9417 = vmatprep.mubr.bf16.mxu0 %v9285
    %9418 = vmatmul.mubr.bf16.gmra.mrb[0].mxu0 %v8992
    %v9419 = vpop.f32.mrb[0].mxu0
    %v9420 = vadd.f32 0.0, %v9419
    %v9421 = vpop.f32.mrb[0].mxu0
    %v9422 = vpop.f32.mrb[0].mxu0
    %v9423 = vadd.f32 0.0, %v9422
    %v9424 = vpop.f32.mrb[0].mxu0
    %9425 = vmatprep.mubr.bf16.mxu0 %v9288
    %9426 = vmatmul.mubr.bf16.gmra.mrb[0].mxu0 %v8998
    %v9427 = vpop.f32.mrb[0].mxu0
    %v9428 = vadd.f32 0.0, %v9427
    %v9429 = vpop.f32.mrb[0].mxu0
    %v9430 = vpop.f32.mrb[0].mxu0
    %v9431 = vadd.f32 0.0, %v9430
    %v9432 = vpop.f32.mrb[0].mxu0
    %9433 = vmatprep.mubr.bf16.mxu0 %v9291
    %9434 = vmatmul.mubr.bf16.gmra.mrb[0].mxu0 %v9004
    %v9435 = vpop.f32.mrb[0].mxu0
    %v9436 = vadd.f32 0.0, %v9435
    %v9437 = vpop.f32.mrb[0].mxu0
    %v9438 = vpop.f32.mrb[0].mxu0
    %v9439 = vadd.f32 0.0, %v9438
    %v9440 = vpop.f32.mrb[0].mxu0
    %9441 = vmatprep.mubr.bf16.mxu0 %v9294
    %9442 = vmatmul.mubr.bf16.gmra.mrb[0].mxu0 %v9010
    %v9443 = vpop.f32.mrb[0].mxu0
    %v9444 = vadd.f32 0.0, %v9443
    %v9445 = vpop.f32.mrb[0].mxu0
    %v9446 = vpop.f32.mrb[0].mxu0
    %v9447 = vadd.f32 0.0, %v9446
    %v9448 = vpop.f32.mrb[0].mxu0
    %9449 = vmatprep.mubr.bf16.mxu0 %v9297
    %9450 = vmatmul.mubr.bf16.gmra.mrb[0].mxu0 %v9016
    %v9451 = vpop.f32.mrb[0].mxu0
    %v9452 = vadd.f32 0.0, %v9451
    %v9453 = vpop.f32.mrb[0].mxu0
    %v9454 = vpop.f32.mrb[0].mxu0
    %v9455 = vadd.f32 0.0, %v9454
    %v9456 = vpop.f32.mrb[0].mxu0
    %9457 = vmatprep.mubr.bf16.mxu0 %v9300
    %9458 = vmatmul.mubr.bf16.gmra.mrb[0].mxu0 %v9022
    %v9459 = vpop.f32.mrb[0].mxu0
    %v9460 = vadd.f32 0.0, %v9459
    %v9461 = vpop.f32.mrb[0].mxu0
    %v9462 = vpop.f32.mrb[0].mxu0
    %v9463 = vadd.f32 0.0, %v9462
    %v9464 = vpop.f32.mrb[0].mxu0
    %9465 = vmatprep.mubr.bf16.mxu0 %v9303
    %9466 = vmatmul.mubr.bf16.gmra.mrb[0].mxu0 %v9028
    %v9467 = vpop.f32.mrb[0].mxu0
    %v9468 = vadd.f32 0.0, %v9467
    %v9469 = vpop.f32.mrb[0].mxu0
    %v9470 = vpop.f32.mrb[0].mxu0
    %v9471 = vadd.f32 0.0, %v9470
    %v9472 = vpop.f32.mrb[0].mxu0
    %9473 = vmatprep.mubr.bf16.mxu0 %v9306
    %9474 = vmatmul.mubr.bf16.gmra.mrb[0].mxu0 %v9034
    %v9475 = vpop.f32.mrb[0].mxu0
    %v9476 = vadd.f32 0.0, %v9475
    %v9477 = vpop.f32.mrb[0].mxu0
    %v9478 = vpop.f32.mrb[0].mxu0
    %v9479 = vadd.f32 0.0, %v9478
    %v9480 = vpop.f32.mrb[0].mxu0
    %9481 = vmatprep.mubr.bf16.mxu0 %v9309
    %9482 = vmatmul.mubr.bf16.gmra.mrb[0].mxu0 %v9040
    %v9483 = vpop.f32.mrb[0].mxu0
    %v9484 = vadd.f32 0.0, %v9483
    %v9485 = vpop.f32.mrb[0].mxu0
    %v9486 = vpop.f32.mrb[0].mxu0
    %v9487 = vadd.f32 0.0, %v9486
    %v9488 = vpop.f32.mrb[0].mxu0
    %9489 = vmatprep.mubr.bf16.mxu0 %v9312
    %9490 = vmatmul.mubr.bf16.gmra.mrb[0].mxu0 %v9046
    %v9491 = vpop.f32.mrb[0].mxu0
    %v9492 = vadd.f32 0.0, %v9491
    %v9493 = vpop.f32.mrb[0].mxu0
    %v9494 = vpop.f32.mrb[0].mxu0
    %v9495 = vadd.f32 0.0, %v9494
    %v9496 = vpop.f32.mrb[0].mxu0
    %9497 = vmatprep.mubr.bf16.mxu0 %v9315
    %9498 = vmatmul.mubr.bf16.gmra.mrb[0].mxu0 %v9052
    %v9499 = vpop.f32.mrb[0].mxu0
    %v9500 = vadd.f32 0.0, %v9499
    %v9501 = vpop.f32.mrb[0].mxu0
    %v9502 = vpop.f32.mrb[0].mxu0
    %v9503 = vadd.f32 0.0, %v9502
    %v9504 = vpop.f32.mrb[0].mxu0
    %9505 = vmatprep.mubr.bf16.mxu0 %v9318
    %9506 = vmatmul.mubr.bf16.gmra.mrb[0].mxu0 %v9058
    %v9507 = vpop.f32.mrb[0].mxu0
    %v9508 = vadd.f32 0.0, %v9507
    %v9509 = vpop.f32.mrb[0].mxu0
    %v9510 = vpop.f32.mrb[0].mxu0
    %v9511 = vadd.f32 0.0, %v9510
    %v9512 = vpop.f32.mrb[0].mxu0
    %9513 = vmatprep.mubr.bf16.mxu0 %v9321
    %9514 = vmatmul.mubr.bf16.gmra.mrb[0].mxu0 %v9064
    %v9515 = vpop.f32.mrb[0].mxu0
    %v9516 = vadd.f32 0.0, %v9515
    %v9517 = vpop.f32.mrb[0].mxu0
    %v9518 = vpop.f32.mrb[0].mxu0
    %v9519 = vadd.f32 0.0, %v9518
    %v9520 = vpop.f32.mrb[0].mxu0
    %9521 = vmatprep.mubr.bf16.mxu0 %v9324
    %9522 = vmatmul.mubr.bf16.gmra.mrb[0].mxu0 %v9070
    %v9523 = vpop.f32.mrb[0].mxu0
    %v9524 = vadd.f32 0.0, %v9523
    %v9525 = vpop.f32.mrb[0].mxu0
    %v9526 = vpop.f32.mrb[0].mxu0
    %v9527 = vadd.f32 0.0, %v9526
    %v9528 = vpop.f32.mrb[0].mxu0
    %9529 = vmatprep.mubr.bf16.mxu0 %v9327
    %9530 = vmatmul.mubr.bf16.gmra.mrb[0].mxu0 %v9076
    %v9531 = vpop.f32.mrb[0].mxu0
    %v9532 = vpop.f32.mrb[0].mxu0
    %v9533 = vpop.f32.mrb[0].mxu0
    %v9534 = vpop.f32.mrb[0].mxu0
    %9535 = vmatprep.mubr.bf16.mxu0 %v9330
    %9536 = vmatmul.mubr.bf16.gmra.mrb[0].mxu0 %v9082
    %v9537 = vpop.f32.mrb[0].mxu0
    %v9538 = vadd.f32 0.0, %v9537
    %v9539 = vpop.f32.mrb[0].mxu0
    %v9540 = vpop.f32.mrb[0].mxu0
    %v9541 = vadd.f32 0.0, %v9540
    %v9542 = vpop.f32.mrb[0].mxu0
    %9543 = vmatprep.mubr.bf16.mxu0 %v9333
    %9544 = vmatmul.mubr.bf16.gmra.mrb[0].mxu0 %v9088
    %v9545 = vpop.f32.mrb[0].mxu0
    %v9546 = vadd.f32 0.0, %v9545
    %v9547 = vpop.f32.mrb[0].mxu0
    %v9548 = vpop.f32.mrb[0].mxu0
    %v9549 = vadd.f32 0.0, %v9548
    %v9550 = vpop.f32.mrb[0].mxu0
    %9551 = vmatprep.mubr.bf16.mxu0 %v9336
    %9552 = vmatmul.mubr.bf16.gmra.mrb[0].mxu0 %v9094
    %v9553 = vpop.f32.mrb[0].mxu0
    %v9554 = vadd.f32 0.0, %v9553
    %v9555 = vpop.f32.mrb[0].mxu0
    %v9556 = vpop.f32.mrb[0].mxu0
    %v9557 = vadd.f32 0.0, %v9556
    %v9558 = vpop.f32.mrb[0].mxu0
    %9559 = vmatprep.mubr.bf16.mxu0 %v9339
    %9560 = vmatmul.mubr.bf16.gmra.mrb[0].mxu0 %v9100
    %v9561 = vpop.f32.mrb[0].mxu0
    %v9562 = vadd.f32 0.0, %v9561
    %v9563 = vpop.f32.mrb[0].mxu0
    %v9564 = vpop.f32.mrb[0].mxu0
    %v9565 = vadd.f32 0.0, %v9564
    %v9566 = vpop.f32.mrb[0].mxu0
    %9567 = vmatprep.mubr.bf16.mxu0 %v9342
    %9568 = vmatmul.mubr.bf16.gmra.mrb[0].mxu0 %v9106
    %v9569 = vpop.f32.mrb[0].mxu0
    %v9570 = vadd.f32 0.0, %v9569
    %v9571 = vpop.f32.mrb[0].mxu0
    %v9572 = vpop.f32.mrb[0].mxu0
    %v9573 = vadd.f32 0.0, %v9572
    %v9574 = vpop.f32.mrb[0].mxu0
    %9575 = vmatprep.mubr.bf16.mxu0 %v9345
    %9576 = vmatmul.mubr.bf16.gmra.mrb[0].mxu0 %v9112
    %v9577 = vpop.f32.mrb[0].mxu0
    %v9578 = vadd.f32 0.0, %v9577
    %v9579 = vpop.f32.mrb[0].mxu0
    %v9580 = vpop.f32.mrb[0].mxu0
    %v9581 = vadd.f32 0.0, %v9580
    %v9582 = vpop.f32.mrb[0].mxu0
    %9583 = vmatprep.mubr.bf16.mxu0 %v9348
    %9584 = vmatmul.mubr.bf16.gmra.mrb[0].mxu0 %v9118
    %v9585 = vpop.f32.mrb[0].mxu0
    %v9586 = vadd.f32 0.0, %v9585
    %v9587 = vpop.f32.mrb[0].mxu0
    %v9588 = vpop.f32.mrb[0].mxu0
    %v9589 = vadd.f32 0.0, %v9588
    %v9590 = vpop.f32.mrb[0].mxu0
    %9591 = vmatprep.mubr.bf16.mxu0 %v9351
    %9592 = vmatmul.mubr.bf16.gmra.mrb[0].mxu0 %v9124
    %v9593 = vpop.f32.mrb[0].mxu0
    %v9594 = vadd.f32 0.0, %v9593
    %v9595 = vpop.f32.mrb[0].mxu0
    %v9596 = vpop.f32.mrb[0].mxu0
    %v9597 = vadd.f32 0.0, %v9596
    %v9598 = vpop.f32.mrb[0].mxu0
    %9599 = vmatprep.mubr.bf16.mxu0 %v9354
    %9600 = vmatmul.mubr.bf16.gmra.mrb[0].mxu0 %v9130
    %v9601 = vpop.f32.mrb[0].mxu0
    %v9602 = vadd.f32 0.0, %v9601
    %v9603 = vpop.f32.mrb[0].mxu0
    %v9604 = vpop.f32.mrb[0].mxu0
    %v9605 = vadd.f32 0.0, %v9604
    %v9606 = vpop.f32.mrb[0].mxu0
    %9607 = vmatprep.mubr.bf16.mxu0 %v9357
    %9608 = vmatmul.mubr.bf16.gmra.mrb[0].mxu0 %v9136
    %v9609 = vpop.f32.mrb[0].mxu0
    %v9610 = vadd.f32 0.0, %v9609
    %v9611 = vpop.f32.mrb[0].mxu0
    %v9612 = vpop.f32.mrb[0].mxu0
    %v9613 = vadd.f32 0.0, %v9612
    %v9614 = vpop.f32.mrb[0].mxu0
    %9615 = vmatprep.mubr.bf16.mxu0 %v9360
    %9616 = vmatmul.mubr.bf16.gmra.mrb[0].mxu0 %v9142
    %v9617 = vpop.f32.mrb[0].mxu0
    %v9618 = vadd.f32 0.0, %v9617
    %v9619 = vpop.f32.mrb[0].mxu0
    %v9620 = vpop.f32.mrb[0].mxu0
    %v9621 = vadd.f32 0.0, %v9620
    %v9622 = vpop.f32.mrb[0].mxu0
    %9623 = vmatprep.mubr.bf16.mxu0 %v9363
    %9624 = vmatmul.mubr.bf16.gmra.mrb[0].mxu0 %v9148
    %v9625 = vpop.f32.mrb[0].mxu0
    %v9626 = vadd.f32 0.0, %v9625
    %v9627 = vpop.f32.mrb[0].mxu0
    %v9628 = vpop.f32.mrb[0].mxu0
    %v9629 = vadd.f32 0.0, %v9628
    %v9630 = vpop.f32.mrb[0].mxu0
    %9631 = vmatprep.mubr.bf16.mxu0 %v9366
    %9632 = vmatmul.mubr.bf16.gmra.mrb[0].mxu0 %v9154
    %v9633 = vpop.f32.mrb[0].mxu0
    %v9634 = vadd.f32 0.0, %v9633
    %v9635 = vpop.f32.mrb[0].mxu0
    %v9636 = vpop.f32.mrb[0].mxu0
    %v9637 = vadd.f32 0.0, %v9636
    %v9638 = vpop.f32.mrb[0].mxu0
    %9639 = vmatprep.mubr.bf16.mxu0 %v9369
    %9640 = vmatmul.mubr.bf16.gmra.mrb[0].mxu0 %v9160
    %v9641 = vpop.f32.mrb[0].mxu0
    %v9642 = vadd.f32 0.0, %v9641
    %v9643 = vpop.f32.mrb[0].mxu0
    %v9644 = vpop.f32.mrb[0].mxu0
    %v9645 = vadd.f32 0.0, %v9644
    %v9646 = vpop.f32.mrb[0].mxu0
    %9647 = vmatprep.mubr.bf16.mxu0 %v9372
    %9648 = vmatmul.mubr.bf16.gmra.mrb[0].mxu0 %v9166
    %v9649 = vpop.f32.mrb[0].mxu0
    %v9650 = vadd.f32 0.0, %v9649
    %v9651 = vpop.f32.mrb[0].mxu0
    %v9652 = vpop.f32.mrb[0].mxu0
    %v9653 = vadd.f32 0.0, %v9652
    %v9654 = vpop.f32.mrb[0].mxu0
    %9655 = vmatprep.mubr.bf16.mxu0 %v9375
    %9656 = vmatmul.mubr.bf16.gmra.mrb[0].mxu0 %v9172
    %v9657 = vpop.f32.mrb[0].mxu0
    %v9658 = vpop.f32.mrb[0].mxu0
    %v9659 = vpop.f32.mrb[0].mxu0
    %v9660 = vpop.f32.mrb[0].mxu0
    %9661 = vdwg.mxu0
    %v9662 = vadd.f32 %v8670, %v9412
    %v9663 = vadd.f32 %v8673, %v9415
    %v9664 = vadd.f32 %v8678, %v9420
    %v9665 = vadd.f32 %v8681, %v9423
    %v9666 = vadd.f32 %v8686, %v9428
    %v9667 = vadd.f32 %v8689, %v9431
    %v9668 = vadd.f32 %v8694, %v9436
    %v9669 = vadd.f32 %v8697, %v9439
    %v9670 = vadd.f32 %v8702, %v9444
    %v9671 = vadd.f32 %v8705, %v9447
    %v9672 = vadd.f32 %v8710, %v9452
    %v9673 = vadd.f32 %v8713, %v9455
    %v9674 = vadd.f32 %v8718, %v9460
    %v9675 = vadd.f32 %v8721, %v9463
    %v9676 = vadd.f32 %v8726, %v9468
    %v9677 = vadd.f32 %v8729, %v9471
    %v9678 = vadd.f32 %v8734, %v9476
    %v9679 = vadd.f32 %v8737, %v9479
    %v9680 = vadd.f32 %v8742, %v9484
    %v9681 = vadd.f32 %v8745, %v9487
    %v9682 = vadd.f32 %v8750, %v9492
    %v9683 = vadd.f32 %v8753, %v9495
    %v9684 = vadd.f32 %v8758, %v9500
    %v9685 = vadd.f32 %v8761, %v9503
    %v9686 = vadd.f32 %v8766, %v9508
    %v9687 = vadd.f32 %v8769, %v9511
    %v9688 = vadd.f32 %v8774, %v9516
    %v9689 = vadd.f32 %v8777, %v9519
    %v9690 = vadd.f32 %v8782, %v9524
    %v9691 = vadd.f32 %v8785, %v9527
    %v9692 = vadd.f32 %v8796, %v9538
    %v9693 = vadd.f32 %v8799, %v9541
    %v9694 = vadd.f32 %v8804, %v9546
    %v9695 = vadd.f32 %v8807, %v9549
    %v9696 = vadd.f32 %v8812, %v9554
    %v9697 = vadd.f32 %v8815, %v9557
    %v9698 = vadd.f32 %v8820, %v9562
    %v9699 = vadd.f32 %v8823, %v9565
    %v9700 = vadd.f32 %v8828, %v9570
    %v9701 = vadd.f32 %v8831, %v9573
    %v9702 = vadd.f32 %v8836, %v9578
    %v9703 = vadd.f32 %v8839, %v9581
    %v9704 = vadd.f32 %v8844, %v9586
    %v9705 = vadd.f32 %v8847, %v9589
    %v9706 = vadd.f32 %v8852, %v9594
    %v9707 = vadd.f32 %v8855, %v9597
    %v9708 = vadd.f32 %v8860, %v9602
    %v9709 = vadd.f32 %v8863, %v9605
    %v9710 = vadd.f32 %v8868, %v9610
    %v9711 = vadd.f32 %v8871, %v9613
    %v9712 = vadd.f32 %v8876, %v9618
    %v9713 = vadd.f32 %v8879, %v9621
    %v9714 = vadd.f32 %v8884, %v9626
    %v9715 = vadd.f32 %v8887, %v9629
    %v9716 = vadd.f32 %v8892, %v9634
    %v9717 = vadd.f32 %v8895, %v9637
    %v9718 = vadd.f32 %v8900, %v9642
    %v9719 = vadd.f32 %v8903, %v9645
    %v9720 = vadd.f32 %v8908, %v9650
    %v9721 = vadd.f32 %v8911, %v9653
    %vm9722 = vcmp.ge.f32.partialorder %v9662, 0.0
    %vm9723 = vcmp.ge.f32.partialorder %v9663, 0.0
    %vm9724 = vcmp.ge.f32.partialorder %v9664, 0.0
    %vm9725 = vcmp.ge.f32.partialorder %v9665, 0.0
    %vm9726 = vcmp.ge.f32.partialorder %v9666, 0.0
    %vm9727 = vcmp.ge.f32.partialorder %v9667, 0.0
    %vm9728 = vcmp.ge.f32.partialorder %v9668, 0.0
    %vm9729 = vcmp.ge.f32.partialorder %v9669, 0.0
    %vm9730 = vcmp.ge.f32.partialorder %v9670, 0.0
    %vm9731 = vcmp.ge.f32.partialorder %v9671, 0.0
    %vm9732 = vcmp.ge.f32.partialorder %v9672, 0.0
    %vm9733 = vcmp.ge.f32.partialorder %v9673, 0.0
    %vm9734 = vcmp.ge.f32.partialorder %v9674, 0.0
    %vm9735 = vcmp.ge.f32.partialorder %v9675, 0.0
    %vm9736 = vcmp.ge.f32.partialorder %v9676, 0.0
    %vm9737 = vcmp.ge.f32.partialorder %v9677, 0.0
    %vm9738 = vcmp.ge.f32.partialorder %v9678, 0.0
    %vm9739 = vcmp.ge.f32.partialorder %v9679, 0.0
    %vm9740 = vcmp.ge.f32.partialorder %v9680, 0.0
    %vm9741 = vcmp.ge.f32.partialorder %v9681, 0.0
    %vm9742 = vcmp.ge.f32.partialorder %v9682, 0.0
    %vm9743 = vcmp.ge.f32.partialorder %v9683, 0.0
    %vm9744 = vcmp.ge.f32.partialorder %v9684, 0.0
    %vm9745 = vcmp.ge.f32.partialorder %v9685, 0.0
    %vm9746 = vcmp.ge.f32.partialorder %v9686, 0.0
    %vm9747 = vcmp.ge.f32.partialorder %v9687, 0.0
    %vm9748 = vcmp.ge.f32.partialorder %v9688, 0.0
    %vm9749 = vcmp.ge.f32.partialorder %v9689, 0.0
    %vm9750 = vcmp.ge.f32.partialorder %v9690, 0.0
    %vm9751 = vcmp.ge.f32.partialorder %v9691, 0.0
    %vm9752 = vcmp.ge.f32.partialorder %v9692, 0.0
    %vm9753 = vcmp.ge.f32.partialorder %v9693, 0.0
    %vm9754 = vcmp.ge.f32.partialorder %v9694, 0.0
    %vm9755 = vcmp.ge.f32.partialorder %v9695, 0.0
    %vm9756 = vcmp.ge.f32.partialorder %v9696, 0.0
    %vm9757 = vcmp.ge.f32.partialorder %v9697, 0.0
    %vm9758 = vcmp.ge.f32.partialorder %v9698, 0.0
    %vm9759 = vcmp.ge.f32.partialorder %v9699, 0.0
    %vm9760 = vcmp.ge.f32.partialorder %v9700, 0.0
    %vm9761 = vcmp.ge.f32.partialorder %v9701, 0.0
    %vm9762 = vcmp.ge.f32.partialorder %v9702, 0.0
    %vm9763 = vcmp.ge.f32.partialorder %v9703, 0.0
    %vm9764 = vcmp.ge.f32.partialorder %v9704, 0.0
    %vm9765 = vcmp.ge.f32.partialorder %v9705, 0.0
    %vm9766 = vcmp.ge.f32.partialorder %v9706, 0.0
    %vm9767 = vcmp.ge.f32.partialorder %v9707, 0.0
    %vm9768 = vcmp.ge.f32.partialorder %v9708, 0.0
    %vm9769 = vcmp.ge.f32.partialorder %v9709, 0.0
    %vm9770 = vcmp.ge.f32.partialorder %v9710, 0.0
    %vm9771 = vcmp.ge.f32.partialorder %v9711, 0.0
    %vm9772 = vcmp.ge.f32.partialorder %v9712, 0.0
    %vm9773 = vcmp.ge.f32.partialorder %v9713, 0.0
    %vm9774 = vcmp.ge.f32.partialorder %v9714, 0.0
    %vm9775 = vcmp.ge.f32.partialorder %v9715, 0.0
    %vm9776 = vcmp.ge.f32.partialorder %v9716, 0.0
    %vm9777 = vcmp.ge.f32.partialorder %v9717, 0.0
    %vm9778 = vcmp.ge.f32.partialorder %v9718, 0.0
    %vm9779 = vcmp.ge.f32.partialorder %v9719, 0.0
    %vm9780 = vcmp.ge.f32.partialorder %v9720, 0.0
    %vm9781 = vcmp.ge.f32.partialorder %v9721, 0.0
    %v9782 = vmul.f32 %v9662, 0.1
    %v9783 = vmul.f32 %v9663, 0.1
    %v9784 = vmul.f32 %v9664, 0.1
    %v9785 = vmul.f32 %v9665, 0.1
    %v9786 = vmul.f32 %v9666, 0.1
    %v9787 = vmul.f32 %v9667, 0.1
    %v9788 = vmul.f32 %v9668, 0.1
    %v9789 = vmul.f32 %v9669, 0.1
    %v9790 = vmul.f32 %v9670, 0.1
    %v9791 = vmul.f32 %v9671, 0.1
    %v9792 = vmul.f32 %v9672, 0.1
    %v9793 = vmul.f32 %v9673, 0.1
    %v9794 = vmul.f32 %v9674, 0.1
    %v9795 = vmul.f32 %v9675, 0.1
    %v9796 = vmul.f32 %v9676, 0.1
    %v9797 = vmul.f32 %v9677, 0.1
    %v9798 = vmul.f32 %v9678, 0.1
    %v9799 = vmul.f32 %v9679, 0.1
    %v9800 = vmul.f32 %v9680, 0.1
    %v9801 = vmul.f32 %v9681, 0.1
    %v9802 = vmul.f32 %v9682, 0.1
    %v9803 = vmul.f32 %v9683, 0.1
    %v9804 = vmul.f32 %v9684, 0.1
    %v9805 = vmul.f32 %v9685, 0.1
    %v9806 = vmul.f32 %v9686, 0.1
    %v9807 = vmul.f32 %v9687, 0.1
    %v9808 = vmul.f32 %v9688, 0.1
    %v9809 = vmul.f32 %v9689, 0.1
    %v9810 = vmul.f32 %v9690, 0.1
    %v9811 = vmul.f32 %v9691, 0.1
    %v9812 = vmul.f32 %v9692, 0.1
    %v9813 = vmul.f32 %v9693, 0.1
    %v9814 = vmul.f32 %v9694, 0.1
    %v9815 = vmul.f32 %v9695, 0.1
    %v9816 = vmul.f32 %v9696, 0.1
    %v9817 = vmul.f32 %v9697, 0.1
    %v9818 = vmul.f32 %v9698, 0.1
    %v9819 = vmul.f32 %v9699, 0.1
    %v9820 = vmul.f32 %v9700, 0.1
    %v9821 = vmul.f32 %v9701, 0.1
    %v9822 = vmul.f32 %v9702, 0.1
    %v9823 = vmul.f32 %v9703, 0.1
    %v9824 = vmul.f32 %v9704, 0.1
    %v9825 = vmul.f32 %v9705, 0.1
    %v9826 = vmul.f32 %v9706, 0.1
    %v9827 = vmul.f32 %v9707, 0.1
    %v9828 = vmul.f32 %v9708, 0.1
    %v9829 = vmul.f32 %v9709, 0.1
    %v9830 = vmul.f32 %v9710, 0.1
    %v9831 = vmul.f32 %v9711, 0.1
    %v9832 = vmul.f32 %v9712, 0.1
    %v9833 = vmul.f32 %v9713, 0.1
    %v9834 = vmul.f32 %v9714, 0.1
    %v9835 = vmul.f32 %v9715, 0.1
    %v9836 = vmul.f32 %v9716, 0.1
    %v9837 = vmul.f32 %v9717, 0.1
    %v9838 = vmul.f32 %v9718, 0.1
    %v9839 = vmul.f32 %v9719, 0.1
    %v9840 = vmul.f32 %v9720, 0.1
    %v9841 = vmul.f32 %v9721, 0.1
    %v9842 = vsel %vm9722, %v9662, %v9782
    %v9843 = vsel %vm9723, %v9663, %v9783
    %v9844 = vsel %vm9724, %v9664, %v9784
    %v9845 = vsel %vm9725, %v9665, %v9785
    %v9846 = vsel %vm9726, %v9666, %v9786
    %v9847 = vsel %vm9727, %v9667, %v9787
    %v9848 = vsel %vm9728, %v9668, %v9788
    %v9849 = vsel %vm9729, %v9669, %v9789
    %v9850 = vsel %vm9730, %v9670, %v9790
    %v9851 = vsel %vm9731, %v9671, %v9791
    %v9852 = vsel %vm9732, %v9672, %v9792
    %v9853 = vsel %vm9733, %v9673, %v9793
    %v9854 = vsel %vm9734, %v9674, %v9794
    %v9855 = vsel %vm9735, %v9675, %v9795
    %v9856 = vsel %vm9736, %v9676, %v9796
    %v9857 = vsel %vm9737, %v9677, %v9797
    %v9858 = vsel %vm9738, %v9678, %v9798
    %v9859 = vsel %vm9739, %v9679, %v9799
    %v9860 = vsel %vm9740, %v9680, %v9800
    %v9861 = vsel %vm9741, %v9681, %v9801
    %v9862 = vsel %vm9742, %v9682, %v9802
    %v9863 = vsel %vm9743, %v9683, %v9803
    %v9864 = vsel %vm9744, %v9684, %v9804
    %v9865 = vsel %vm9745, %v9685, %v9805
    %v9866 = vsel %vm9746, %v9686, %v9806
    %v9867 = vsel %vm9747, %v9687, %v9807
    %v9868 = vsel %vm9748, %v9688, %v9808
    %v9869 = vsel %vm9749, %v9689, %v9809
    %v9870 = vsel %vm9750, %v9690, %v9810
    %v9871 = vsel %vm9751, %v9691, %v9811
    %v9872 = vsel %vm9752, %v9692, %v9812
    %v9873 = vsel %vm9753, %v9693, %v9813
    %v9874 = vsel %vm9754, %v9694, %v9814
    %v9875 = vsel %vm9755, %v9695, %v9815
    %v9876 = vsel %vm9756, %v9696, %v9816
    %v9877 = vsel %vm9757, %v9697, %v9817
    %v9878 = vsel %vm9758, %v9698, %v9818
    %v9879 = vsel %vm9759, %v9699, %v9819
    %v9880 = vsel %vm9760, %v9700, %v9820
    %v9881 = vsel %vm9761, %v9701, %v9821
    %v9882 = vsel %vm9762, %v9702, %v9822
    %v9883 = vsel %vm9763, %v9703, %v9823
    %v9884 = vsel %vm9764, %v9704, %v9824
    %v9885 = vsel %vm9765, %v9705, %v9825
    %v9886 = vsel %vm9766, %v9706, %v9826
    %v9887 = vsel %vm9767, %v9707, %v9827
    %v9888 = vsel %vm9768, %v9708, %v9828
    %v9889 = vsel %vm9769, %v9709, %v9829
    %v9890 = vsel %vm9770, %v9710, %v9830
    %v9891 = vsel %vm9771, %v9711, %v9831
    %v9892 = vsel %vm9772, %v9712, %v9832
    %v9893 = vsel %vm9773, %v9713, %v9833
    %v9894 = vsel %vm9774, %v9714, %v9834
    %v9895 = vsel %vm9775, %v9715, %v9835
    %v9896 = vsel %vm9776, %v9716, %v9836
    %v9897 = vsel %vm9777, %v9717, %v9837
    %v9898 = vsel %vm9778, %v9718, %v9838
    %v9899 = vsel %vm9779, %v9719, %v9839
    %v9900 = vsel %vm9780, %v9720, %v9840
    %v9901 = vsel %vm9781, %v9721, %v9841
    %v9902 = vsel %vm3347, 0.0, -inf
    %v9903 = vsel %vm3347, %v9842, -inf
    %v9904 = vmax.f32 %v9902, %v9903
    %v9905 = vsel %vm3347, %v9843, -inf
    %v9906 = vmax.f32 %v9902, %v9905
    %v9907 = vsel %vm3347, %v9844, -inf
    %v9908 = vsel %vm3347, %v9846, -inf
    %v9909 = vmax.f32 %v9907, %v9908
    %v9910 = vsel %vm3347, %v9845, -inf
    %v9911 = vsel %vm3347, %v9847, -inf
    %v9912 = vmax.f32 %v9910, %v9911
    %v9913 = vsel %vm3347, %v9848, -inf
    %v9914 = vsel %vm3347, %v9850, -inf
    %v9915 = vmax.f32 %v9913, %v9914
    %v9916 = vsel %vm3347, %v9849, -inf
    %v9917 = vsel %vm3347, %v9851, -inf
    %v9918 = vmax.f32 %v9916, %v9917
    %v9919 = vsel %vm3347, %v9852, -inf
    %v9920 = vsel %vm3347, %v9854, -inf
    %v9921 = vmax.f32 %v9919, %v9920
    %v9922 = vsel %vm3347, %v9853, -inf
    %v9923 = vsel %vm3347, %v9855, -inf
    %v9924 = vmax.f32 %v9922, %v9923
    %v9925 = vsel %vm3347, %v9856, -inf
    %v9926 = vsel %vm3347, %v9858, -inf
    %v9927 = vmax.f32 %v9925, %v9926
    %v9928 = vsel %vm3347, %v9857, -inf
    %v9929 = vsel %vm3347, %v9859, -inf
    %v9930 = vmax.f32 %v9928, %v9929
    %v9931 = vsel %vm3347, %v9860, -inf
    %v9932 = vsel %vm3347, %v9862, -inf
    %v9933 = vmax.f32 %v9931, %v9932
    %v9934 = vsel %vm3347, %v9861, -inf
    %v9935 = vsel %vm3347, %v9863, -inf
    %v9936 = vmax.f32 %v9934, %v9935
    %v9937 = vsel %vm3347, %v9864, -inf
    %v9938 = vsel %vm3347, %v9866, -inf
    %v9939 = vmax.f32 %v9937, %v9938
    %v9940 = vsel %vm3347, %v9865, -inf
    %v9941 = vsel %vm3347, %v9867, -inf
    %v9942 = vmax.f32 %v9940, %v9941
    %v9943 = vsel %vm3347, %v9868, -inf
    %v9944 = vsel %vm3347, %v9870, -inf
    %v9945 = vmax.f32 %v9943, %v9944
    %v9946 = vsel %vm3347, %v9869, -inf
    %v9947 = vsel %vm3347, %v9871, -inf
    %v9948 = vmax.f32 %v9946, %v9947
    %v9949 = vsel %vm3347, %v9872, -inf
    %v9950 = vmax.f32 %v9902, %v9949
    %v9951 = vsel %vm3347, %v9873, -inf
    %v9952 = vmax.f32 %v9902, %v9951
    %v9953 = vsel %vm3347, %v9874, -inf
    %v9954 = vsel %vm3347, %v9876, -inf
    %v9955 = vmax.f32 %v9953, %v9954
    %v9956 = vsel %vm3347, %v9875, -inf
    %v9957 = vsel %vm3347, %v9877, -inf
    %v9958 = vmax.f32 %v9956, %v9957
    %v9959 = vsel %vm3347, %v9878, -inf
    %v9960 = vsel %vm3347, %v9880, -inf
    %v9961 = vmax.f32 %v9959, %v9960
    %v9962 = vsel %vm3347, %v9879, -inf
    %v9963 = vsel %vm3347, %v9881, -inf
    %v9964 = vmax.f32 %v9962, %v9963
    %v9965 = vsel %vm3347, %v9882, -inf
    %v9966 = vsel %vm3347, %v9884, -inf
    %v9967 = vmax.f32 %v9965, %v9966
    %v9968 = vsel %vm3347, %v9883, -inf
    %v9969 = vsel %vm3347, %v9885, -inf
    %v9970 = vmax.f32 %v9968, %v9969
    %v9971 = vsel %vm3347, %v9886, -inf
    %v9972 = vsel %vm3347, %v9888, -inf
    %v9973 = vmax.f32 %v9971, %v9972
    %v9974 = vsel %vm3347, %v9887, -inf
    %v9975 = vsel %vm3347, %v9889, -inf
    %v9976 = vmax.f32 %v9974, %v9975
    %v9977 = vsel %vm3347, %v9890, -inf
    %v9978 = vsel %vm3347, %v9892, -inf
    %v9979 = vmax.f32 %v9977, %v9978
    %v9980 = vsel %vm3347, %v9891, -inf
    %v9981 = vsel %vm3347, %v9893, -inf
    %v9982 = vmax.f32 %v9980, %v9981
    %v9983 = vsel %vm3347, %v9894, -inf
    %v9984 = vsel %vm3347, %v9896, -inf
    %v9985 = vmax.f32 %v9983, %v9984
    %v9986 = vsel %vm3347, %v9895, -inf
    %v9987 = vsel %vm3347, %v9897, -inf
    %v9988 = vmax.f32 %v9986, %v9987
    %v9989 = vsel %vm3347, %v9898, -inf
    %v9990 = vsel %vm3347, %v9900, -inf
    %v9991 = vmax.f32 %v9989, %v9990
    %v9992 = vsel %vm3347, %v9899, -inf
    %v9993 = vsel %vm3347, %v9901, -inf
    %v9994 = vmax.f32 %v9992, %v9993
    %v10027 = vcombine.high %v9904, %v9904
    %v10029 = vunpack.c.l.s4 1983009808
    %v10030 = vunpack.c.0.s8 %v10029
    %v10031 = vlaneseq
    %v10032 = vshrl.u32 %v10031, 7
    %v10033 = vsub.s32 %v10030, %v10032
    %v10034 = vrot.slane %v9904, %v10033
    %v10036 = vunpack.c.l.s4 1983009808
    %v10037 = vunpack.c.0.s8 %v10036
    %v10038 = vlaneseq
    %v10039 = vshrl.u32 %v10038, 7
    %v10040 = vsub.s32 %v10037, %v10039
    %v10041 = vrot.slane %v10027, %v10040
    %v10042 = vcombine.high %v10034, %v10034
    %v10043 = vcombine.high %v10041, %v10041
    %v10044 = vcombine.high %v9906, %v9906
    %v10046 = vunpack.c.l.s4 1983009808
    %v10047 = vunpack.c.0.s8 %v10046
    %v10048 = vlaneseq
    %v10049 = vshrl.u32 %v10048, 7
    %v10050 = vsub.s32 %v10047, %v10049
    %v10051 = vrot.slane %v9906, %v10050
    %v10053 = vunpack.c.l.s4 1983009808
    %v10054 = vunpack.c.0.s8 %v10053
    %v10055 = vlaneseq
    %v10056 = vshrl.u32 %v10055, 7
    %v10057 = vsub.s32 %v10054, %v10056
    %v10058 = vrot.slane %v10044, %v10057
    %v10059 = vcombine.high %v10051, %v10051
    %v10060 = vcombine.high %v10058, %v10058
    %v10061 = vcombine.high %v9909, %v9909
    %v10063 = vunpack.c.l.s4 1983009808
    %v10064 = vunpack.c.0.s8 %v10063
    %v10065 = vlaneseq
    %v10066 = vshrl.u32 %v10065, 7
    %v10067 = vsub.s32 %v10064, %v10066
    %v10068 = vrot.slane %v9909, %v10067
    %v10070 = vunpack.c.l.s4 1983009808
    %v10071 = vunpack.c.0.s8 %v10070
    %v10072 = vlaneseq
    %v10073 = vshrl.u32 %v10072, 7
    %v10074 = vsub.s32 %v10071, %v10073
    %v10075 = vrot.slane %v10061, %v10074
    %v10076 = vcombine.high %v10068, %v10068
    %v10077 = vcombine.high %v10075, %v10075
    %v10078 = vcombine.high %v9912, %v9912
    %v10080 = vunpack.c.l.s4 1983009808
    %v10081 = vunpack.c.0.s8 %v10080
    %v10082 = vlaneseq
    %v10083 = vshrl.u32 %v10082, 7
    %v10084 = vsub.s32 %v10081, %v10083
    %v10085 = vrot.slane %v9912, %v10084
    %v10087 = vunpack.c.l.s4 1983009808
    %v10088 = vunpack.c.0.s8 %v10087
    %v10089 = vlaneseq
    %v10090 = vshrl.u32 %v10089, 7
    %v10091 = vsub.s32 %v10088, %v10090
    %v10092 = vrot.slane %v10078, %v10091
    %v10093 = vcombine.high %v10085, %v10085
    %v10094 = vcombine.high %v10092, %v10092
    %v10095 = vcombine.high %v9915, %v9915
    %v10097 = vunpack.c.l.s4 1983009808
    %v10098 = vunpack.c.0.s8 %v10097
    %v10099 = vlaneseq
    %v10100 = vshrl.u32 %v10099, 7
    %v10101 = vsub.s32 %v10098, %v10100
    %v10102 = vrot.slane %v9915, %v10101
    %v10104 = vunpack.c.l.s4 1983009808
    %v10105 = vunpack.c.0.s8 %v10104
    %v10106 = vlaneseq
    %v10107 = vshrl.u32 %v10106, 7
    %v10108 = vsub.s32 %v10105, %v10107
    %v10109 = vrot.slane %v10095, %v10108
    %v10110 = vcombine.high %v10102, %v10102
    %v10111 = vcombine.high %v10109, %v10109
    %v10112 = vcombine.high %v9918, %v9918
    %v10114 = vunpack.c.l.s4 1983009808
    %v10115 = vunpack.c.0.s8 %v10114
    %v10116 = vlaneseq
    %v10117 = vshrl.u32 %v10116, 7
    %v10118 = vsub.s32 %v10115, %v10117
    %v10119 = vrot.slane %v9918, %v10118
    %v10121 = vunpack.c.l.s4 1983009808
    %v10122 = vunpack.c.0.s8 %v10121
    %v10123 = vlaneseq
    %v10124 = vshrl.u32 %v10123, 7
    %v10125 = vsub.s32 %v10122, %v10124
    %v10126 = vrot.slane %v10112, %v10125
    %v10127 = vcombine.high %v10119, %v10119
    %v10128 = vcombine.high %v10126, %v10126
    %v10129 = vcombine.high %v9921, %v9921
    %v10131 = vunpack.c.l.s4 1983009808
    %v10132 = vunpack.c.0.s8 %v10131
    %v10133 = vlaneseq
    %v10134 = vshrl.u32 %v10133, 7
    %v10135 = vsub.s32 %v10132, %v10134
    %v10136 = vrot.slane %v9921, %v10135
    %v10138 = vunpack.c.l.s4 1983009808
    %v10139 = vunpack.c.0.s8 %v10138
    %v10140 = vlaneseq
    %v10141 = vshrl.u32 %v10140, 7
    %v10142 = vsub.s32 %v10139, %v10141
    %v10143 = vrot.slane %v10129, %v10142
    %v10144 = vcombine.high %v10136, %v10136
    %v10145 = vcombine.high %v10143, %v10143
    %v10146 = vcombine.high %v9924, %v9924
    %v10148 = vunpack.c.l.s4 1983009808
    %v10149 = vunpack.c.0.s8 %v10148
    %v10150 = vlaneseq
    %v10151 = vshrl.u32 %v10150, 7
    %v10152 = vsub.s32 %v10149, %v10151
    %v10153 = vrot.slane %v9924, %v10152
    %v10155 = vunpack.c.l.s4 1983009808
    %v10156 = vunpack.c.0.s8 %v10155
    %v10157 = vlaneseq
    %v10158 = vshrl.u32 %v10157, 7
    %v10159 = vsub.s32 %v10156, %v10158
    %v10160 = vrot.slane %v10146, %v10159
    %v10161 = vcombine.high %v10153, %v10153
    %v10162 = vcombine.high %v10160, %v10160
    %v10163 = vcombine.high %v9927, %v9927
    %v10165 = vunpack.c.l.s4 1983009808
    %v10166 = vunpack.c.0.s8 %v10165
    %v10167 = vlaneseq
    %v10168 = vshrl.u32 %v10167, 7
    %v10169 = vsub.s32 %v10166, %v10168
    %v10170 = vrot.slane %v9927, %v10169
    %v10172 = vunpack.c.l.s4 1983009808
    %v10173 = vunpack.c.0.s8 %v10172
    %v10174 = vlaneseq
    %v10175 = vshrl.u32 %v10174, 7
    %v10176 = vsub.s32 %v10173, %v10175
    %v10177 = vrot.slane %v10163, %v10176
    %v10178 = vcombine.high %v10170, %v10170
    %v10179 = vcombine.high %v10177, %v10177
    %v10180 = vcombine.high %v9930, %v9930
    %v10182 = vunpack.c.l.s4 1983009808
    %v10183 = vunpack.c.0.s8 %v10182
    %v10184 = vlaneseq
    %v10185 = vshrl.u32 %v10184, 7
    %v10186 = vsub.s32 %v10183, %v10185
    %v10187 = vrot.slane %v9930, %v10186
    %v10189 = vunpack.c.l.s4 1983009808
    %v10190 = vunpack.c.0.s8 %v10189
    %v10191 = vlaneseq
    %v10192 = vshrl.u32 %v10191, 7
    %v10193 = vsub.s32 %v10190, %v10192
    %v10194 = vrot.slane %v10180, %v10193
    %v10195 = vcombine.high %v10187, %v10187
    %v10196 = vcombine.high %v10194, %v10194
    %v10197 = vcombine.high %v9933, %v9933
    %v10199 = vunpack.c.l.s4 1983009808
    %v10200 = vunpack.c.0.s8 %v10199
    %v10201 = vlaneseq
    %v10202 = vshrl.u32 %v10201, 7
    %v10203 = vsub.s32 %v10200, %v10202
    %v10204 = vrot.slane %v9933, %v10203
    %v10206 = vunpack.c.l.s4 1983009808
    %v10207 = vunpack.c.0.s8 %v10206
    %v10208 = vlaneseq
    %v10209 = vshrl.u32 %v10208, 7
    %v10210 = vsub.s32 %v10207, %v10209
    %v10211 = vrot.slane %v10197, %v10210
    %v10212 = vcombine.high %v10204, %v10204
    %v10213 = vcombine.high %v10211, %v10211
    %v10214 = vcombine.high %v9936, %v9936
    %v10216 = vunpack.c.l.s4 1983009808
    %v10217 = vunpack.c.0.s8 %v10216
    %v10218 = vlaneseq
    %v10219 = vshrl.u32 %v10218, 7
    %v10220 = vsub.s32 %v10217, %v10219
    %v10221 = vrot.slane %v9936, %v10220
    %v10223 = vunpack.c.l.s4 1983009808
    %v10224 = vunpack.c.0.s8 %v10223
    %v10225 = vlaneseq
    %v10226 = vshrl.u32 %v10225, 7
    %v10227 = vsub.s32 %v10224, %v10226
    %v10228 = vrot.slane %v10214, %v10227
    %v10229 = vcombine.high %v10221, %v10221
    %v10230 = vcombine.high %v10228, %v10228
    %v10231 = vcombine.high %v9939, %v9939
    %v10233 = vunpack.c.l.s4 1983009808
    %v10234 = vunpack.c.0.s8 %v10233
    %v10235 = vlaneseq
    %v10236 = vshrl.u32 %v10235, 7
    %v10237 = vsub.s32 %v10234, %v10236
    %v10238 = vrot.slane %v9939, %v10237
    %v10240 = vunpack.c.l.s4 1983009808
    %v10241 = vunpack.c.0.s8 %v10240
    %v10242 = vlaneseq
    %v10243 = vshrl.u32 %v10242, 7
    %v10244 = vsub.s32 %v10241, %v10243
    %v10245 = vrot.slane %v10231, %v10244
    %v10246 = vcombine.high %v10238, %v10238
    %v10247 = vcombine.high %v10245, %v10245
    %v10248 = vcombine.high %v9942, %v9942
    %v10250 = vunpack.c.l.s4 1983009808
    %v10251 = vunpack.c.0.s8 %v10250
    %v10252 = vlaneseq
    %v10253 = vshrl.u32 %v10252, 7
    %v10254 = vsub.s32 %v10251, %v10253
    %v10255 = vrot.slane %v9942, %v10254
    %v10257 = vunpack.c.l.s4 1983009808
    %v10258 = vunpack.c.0.s8 %v10257
    %v10259 = vlaneseq
    %v10260 = vshrl.u32 %v10259, 7
    %v10261 = vsub.s32 %v10258, %v10260
    %v10262 = vrot.slane %v10248, %v10261
    %v10263 = vcombine.high %v10255, %v10255
    %v10264 = vcombine.high %v10262, %v10262
    %v10265 = vcombine.high %v9945, %v9945
    %v10267 = vunpack.c.l.s4 1983009808
    %v10268 = vunpack.c.0.s8 %v10267
    %v10269 = vlaneseq
    %v10270 = vshrl.u32 %v10269, 7
    %v10271 = vsub.s32 %v10268, %v10270
    %v10272 = vrot.slane %v9945, %v10271
    %v10274 = vunpack.c.l.s4 1983009808
    %v10275 = vunpack.c.0.s8 %v10274
    %v10276 = vlaneseq
    %v10277 = vshrl.u32 %v10276, 7
    %v10278 = vsub.s32 %v10275, %v10277
    %v10279 = vrot.slane %v10265, %v10278
    %v10280 = vcombine.high %v10272, %v10272
    %v10281 = vcombine.high %v10279, %v10279
    %v10282 = vcombine.high %v9948, %v9948
    %v10284 = vunpack.c.l.s4 1983009808
    %v10285 = vunpack.c.0.s8 %v10284
    %v10286 = vlaneseq
    %v10287 = vshrl.u32 %v10286, 7
    %v10288 = vsub.s32 %v10285, %v10287
    %v10289 = vrot.slane %v9948, %v10288
    %v10291 = vunpack.c.l.s4 1983009808
    %v10292 = vunpack.c.0.s8 %v10291
    %v10293 = vlaneseq
    %v10294 = vshrl.u32 %v10293, 7
    %v10295 = vsub.s32 %v10292, %v10294
    %v10296 = vrot.slane %v10282, %v10295
    %v10297 = vcombine.high %v10289, %v10289
    %v10298 = vcombine.high %v10296, %v10296
    %v10299 = vcombine.high %v9950, %v9950
    %v10301 = vunpack.c.l.s4 1983009808
    %v10302 = vunpack.c.0.s8 %v10301
    %v10303 = vlaneseq
    %v10304 = vshrl.u32 %v10303, 7
    %v10305 = vsub.s32 %v10302, %v10304
    %v10306 = vrot.slane %v9950, %v10305
    %v10308 = vunpack.c.l.s4 1983009808
    %v10309 = vunpack.c.0.s8 %v10308
    %v10310 = vlaneseq
    %v10311 = vshrl.u32 %v10310, 7
    %v10312 = vsub.s32 %v10309, %v10311
    %v10313 = vrot.slane %v10299, %v10312
    %v10314 = vcombine.high %v10306, %v10306
    %v10315 = vcombine.high %v10313, %v10313
    %v10316 = vcombine.high %v9952, %v9952
    %v10318 = vunpack.c.l.s4 1983009808
    %v10319 = vunpack.c.0.s8 %v10318
    %v10320 = vlaneseq
    %v10321 = vshrl.u32 %v10320, 7
    %v10322 = vsub.s32 %v10319, %v10321
    %v10323 = vrot.slane %v9952, %v10322
    %v10325 = vunpack.c.l.s4 1983009808
    %v10326 = vunpack.c.0.s8 %v10325
    %v10327 = vlaneseq
    %v10328 = vshrl.u32 %v10327, 7
    %v10329 = vsub.s32 %v10326, %v10328
    %v10330 = vrot.slane %v10316, %v10329
    %v10331 = vcombine.high %v10323, %v10323
    %v10332 = vcombine.high %v10330, %v10330
    %v10333 = vcombine.high %v9955, %v9955
    %v10335 = vunpack.c.l.s4 1983009808
    %v10336 = vunpack.c.0.s8 %v10335
    %v10337 = vlaneseq
    %v10338 = vshrl.u32 %v10337, 7
    %v10339 = vsub.s32 %v10336, %v10338
    %v10340 = vrot.slane %v9955, %v10339
    %v10342 = vunpack.c.l.s4 1983009808
    %v10343 = vunpack.c.0.s8 %v10342
    %v10344 = vlaneseq
    %v10345 = vshrl.u32 %v10344, 7
    %v10346 = vsub.s32 %v10343, %v10345
    %v10347 = vrot.slane %v10333, %v10346
    %v10348 = vcombine.high %v10340, %v10340
    %v10349 = vcombine.high %v10347, %v10347
    %v10350 = vcombine.high %v9958, %v9958
    %v10352 = vunpack.c.l.s4 1983009808
    %v10353 = vunpack.c.0.s8 %v10352
    %v10354 = vlaneseq
    %v10355 = vshrl.u32 %v10354, 7
    %v10356 = vsub.s32 %v10353, %v10355
    %v10357 = vrot.slane %v9958, %v10356
    %v10359 = vunpack.c.l.s4 1983009808
    %v10360 = vunpack.c.0.s8 %v10359
    %v10361 = vlaneseq
    %v10362 = vshrl.u32 %v10361, 7
    %v10363 = vsub.s32 %v10360, %v10362
    %v10364 = vrot.slane %v10350, %v10363
    %v10365 = vcombine.high %v10357, %v10357
    %v10366 = vcombine.high %v10364, %v10364
    %v10367 = vcombine.high %v9961, %v9961
    %v10369 = vunpack.c.l.s4 1983009808
    %v10370 = vunpack.c.0.s8 %v10369
    %v10371 = vlaneseq
    %v10372 = vshrl.u32 %v10371, 7
    %v10373 = vsub.s32 %v10370, %v10372
    %v10374 = vrot.slane %v9961, %v10373
    %v10376 = vunpack.c.l.s4 1983009808
    %v10377 = vunpack.c.0.s8 %v10376
    %v10378 = vlaneseq
    %v10379 = vshrl.u32 %v10378, 7
    %v10380 = vsub.s32 %v10377, %v10379
    %v10381 = vrot.slane %v10367, %v10380
    %v10382 = vcombine.high %v10374, %v10374
    %v10383 = vcombine.high %v10381, %v10381
    %v10384 = vcombine.high %v9964, %v9964
    %v10386 = vunpack.c.l.s4 1983009808
    %v10387 = vunpack.c.0.s8 %v10386
    %v10388 = vlaneseq
    %v10389 = vshrl.u32 %v10388, 7
    %v10390 = vsub.s32 %v10387, %v10389
    %v10391 = vrot.slane %v9964, %v10390
    %v10393 = vunpack.c.l.s4 1983009808
    %v10394 = vunpack.c.0.s8 %v10393
    %v10395 = vlaneseq
    %v10396 = vshrl.u32 %v10395, 7
    %v10397 = vsub.s32 %v10394, %v10396
    %v10398 = vrot.slane %v10384, %v10397
    %v10399 = vcombine.high %v10391, %v10391
    %v10400 = vcombine.high %v10398, %v10398
    %v10401 = vcombine.high %v9967, %v9967
    %v10403 = vunpack.c.l.s4 1983009808
    %v10404 = vunpack.c.0.s8 %v10403
    %v10405 = vlaneseq
    %v10406 = vshrl.u32 %v10405, 7
    %v10407 = vsub.s32 %v10404, %v10406
    %v10408 = vrot.slane %v9967, %v10407
    %v10410 = vunpack.c.l.s4 1983009808
    %v10411 = vunpack.c.0.s8 %v10410
    %v10412 = vlaneseq
    %v10413 = vshrl.u32 %v10412, 7
    %v10414 = vsub.s32 %v10411, %v10413
    %v10415 = vrot.slane %v10401, %v10414
    %v10416 = vcombine.high %v10408, %v10408
    %v10417 = vcombine.high %v10415, %v10415
    %v10418 = vcombine.high %v9970, %v9970
    %v10420 = vunpack.c.l.s4 1983009808
    %v10421 = vunpack.c.0.s8 %v10420
    %v10422 = vlaneseq
    %v10423 = vshrl.u32 %v10422, 7
    %v10424 = vsub.s32 %v10421, %v10423
    %v10425 = vrot.slane %v9970, %v10424
    %v10427 = vunpack.c.l.s4 1983009808
    %v10428 = vunpack.c.0.s8 %v10427
    %v10429 = vlaneseq
    %v10430 = vshrl.u32 %v10429, 7
    %v10431 = vsub.s32 %v10428, %v10430
    %v10432 = vrot.slane %v10418, %v10431
    %v10433 = vcombine.high %v10425, %v10425
    %v10434 = vcombine.high %v10432, %v10432
    %v10435 = vcombine.high %v9973, %v9973
    %v10437 = vunpack.c.l.s4 1983009808
    %v10438 = vunpack.c.0.s8 %v10437
    %v10439 = vlaneseq
    %v10440 = vshrl.u32 %v10439, 7
    %v10441 = vsub.s32 %v10438, %v10440
    %v10442 = vrot.slane %v9973, %v10441
    %v10444 = vunpack.c.l.s4 1983009808
    %v10445 = vunpack.c.0.s8 %v10444
    %v10446 = vlaneseq
    %v10447 = vshrl.u32 %v10446, 7
    %v10448 = vsub.s32 %v10445, %v10447
    %v10449 = vrot.slane %v10435, %v10448
    %v10450 = vcombine.high %v10442, %v10442
    %v10451 = vcombine.high %v10449, %v10449
    %v10452 = vcombine.high %v9976, %v9976
    %v10454 = vunpack.c.l.s4 1983009808
    %v10455 = vunpack.c.0.s8 %v10454
    %v10456 = vlaneseq
    %v10457 = vshrl.u32 %v10456, 7
    %v10458 = vsub.s32 %v10455, %v10457
    %v10459 = vrot.slane %v9976, %v10458
    %v10461 = vunpack.c.l.s4 1983009808
    %v10462 = vunpack.c.0.s8 %v10461
    %v10463 = vlaneseq
    %v10464 = vshrl.u32 %v10463, 7
    %v10465 = vsub.s32 %v10462, %v10464
    %v10466 = vrot.slane %v10452, %v10465
    %v10467 = vcombine.high %v10459, %v10459
    %v10468 = vcombine.high %v10466, %v10466
    %v10469 = vcombine.high %v9979, %v9979
    %v10471 = vunpack.c.l.s4 1983009808
    %v10472 = vunpack.c.0.s8 %v10471
    %v10473 = vlaneseq
    %v10474 = vshrl.u32 %v10473, 7
    %v10475 = vsub.s32 %v10472, %v10474
    %v10476 = vrot.slane %v9979, %v10475
    %v10478 = vunpack.c.l.s4 1983009808
    %v10479 = vunpack.c.0.s8 %v10478
    %v10480 = vlaneseq
    %v10481 = vshrl.u32 %v10480, 7
    %v10482 = vsub.s32 %v10479, %v10481
    %v10483 = vrot.slane %v10469, %v10482
    %v10484 = vcombine.high %v10476, %v10476
    %v10485 = vcombine.high %v10483, %v10483
    %v10486 = vcombine.high %v9982, %v9982
    %v10488 = vunpack.c.l.s4 1983009808
    %v10489 = vunpack.c.0.s8 %v10488
    %v10490 = vlaneseq
    %v10491 = vshrl.u32 %v10490, 7
    %v10492 = vsub.s32 %v10489, %v10491
    %v10493 = vrot.slane %v9982, %v10492
    %v10495 = vunpack.c.l.s4 1983009808
    %v10496 = vunpack.c.0.s8 %v10495
    %v10497 = vlaneseq
    %v10498 = vshrl.u32 %v10497, 7
    %v10499 = vsub.s32 %v10496, %v10498
    %v10500 = vrot.slane %v10486, %v10499
    %v10501 = vcombine.high %v10493, %v10493
    %v10502 = vcombine.high %v10500, %v10500
    %v10503 = vcombine.high %v9985, %v9985
    %v10505 = vunpack.c.l.s4 1983009808
    %v10506 = vunpack.c.0.s8 %v10505
    %v10507 = vlaneseq
    %v10508 = vshrl.u32 %v10507, 7
    %v10509 = vsub.s32 %v10506, %v10508
    %v10510 = vrot.slane %v9985, %v10509
    %v10512 = vunpack.c.l.s4 1983009808
    %v10513 = vunpack.c.0.s8 %v10512
    %v10514 = vlaneseq
    %v10515 = vshrl.u32 %v10514, 7
    %v10516 = vsub.s32 %v10513, %v10515
    %v10517 = vrot.slane %v10503, %v10516
    %v10518 = vcombine.high %v10510, %v10510
    %v10519 = vcombine.high %v10517, %v10517
    %v10520 = vcombine.high %v9988, %v9988
    %v10522 = vunpack.c.l.s4 1983009808
    %v10523 = vunpack.c.0.s8 %v10522
    %v10524 = vlaneseq
    %v10525 = vshrl.u32 %v10524, 7
    %v10526 = vsub.s32 %v10523, %v10525
    %v10527 = vrot.slane %v9988, %v10526
    %v10529 = vunpack.c.l.s4 1983009808
    %v10530 = vunpack.c.0.s8 %v10529
    %v10531 = vlaneseq
    %v10532 = vshrl.u32 %v10531, 7
    %v10533 = vsub.s32 %v10530, %v10532
    %v10534 = vrot.slane %v10520, %v10533
    %v10535 = vcombine.high %v10527, %v10527
    %v10536 = vcombine.high %v10534, %v10534
    %v10537 = vcombine.high %v9991, %v9991
    %v10539 = vunpack.c.l.s4 1983009808
    %v10540 = vunpack.c.0.s8 %v10539
    %v10541 = vlaneseq
    %v10542 = vshrl.u32 %v10541, 7
    %v10543 = vsub.s32 %v10540, %v10542
    %v10544 = vrot.slane %v9991, %v10543
    %v10546 = vunpack.c.l.s4 1983009808
    %v10547 = vunpack.c.0.s8 %v10546
    %v10548 = vlaneseq
    %v10549 = vshrl.u32 %v10548, 7
    %v10550 = vsub.s32 %v10547, %v10549
    %v10551 = vrot.slane %v10537, %v10550
    %v10552 = vcombine.high %v10544, %v10544
    %v10553 = vcombine.high %v10551, %v10551
    %v10554 = vcombine.high %v9994, %v9994
    %v10556 = vunpack.c.l.s4 1983009808
    %v10557 = vunpack.c.0.s8 %v10556
    %v10558 = vlaneseq
    %v10559 = vshrl.u32 %v10558, 7
    %v10560 = vsub.s32 %v10557, %v10559
    %v10561 = vrot.slane %v9994, %v10560
    %v10563 = vunpack.c.l.s4 1983009808
    %v10564 = vunpack.c.0.s8 %v10563
    %v10565 = vlaneseq
    %v10566 = vshrl.u32 %v10565, 7
    %v10567 = vsub.s32 %v10564, %v10566
    %v10568 = vrot.slane %v10554, %v10567
    %v10569 = vcombine.high %v10561, %v10561
    %v10570 = vcombine.high %v10568, %v10568
    %vm10699 = vcmask 386048
    %v10700 = vsel %vm10699, %v10034, -inf
    %v10701 = vrot.slane %v10700, 4
    %v10702 = vmax.f32 %v10700, %v10701
    %v10703 = vrot.slane %v10702, 2
    %v10704 = vmax.f32 %v10702, %v10703
    %v10705 = vrot.slane %v10704, 1
    %v10706 = vmax.f32 %v10704, %v10705
    %v10707 = vsel %vm10699, %v10042, -inf
    %v10708 = vrot.slane %v10707, 4
    %v10709 = vmax.f32 %v10707, %v10708
    %v10710 = vrot.slane %v10709, 2
    %v10711 = vmax.f32 %v10709, %v10710
    %v10712 = vrot.slane %v10711, 1
    %v10713 = vmax.f32 %v10711, %v10712
    %v10714 = vsel %vm10699, %v10041, -inf
    %v10715 = vrot.slane %v10714, 4
    %v10716 = vmax.f32 %v10714, %v10715
    %v10717 = vrot.slane %v10716, 2
    %v10718 = vmax.f32 %v10716, %v10717
    %v10719 = vrot.slane %v10718, 1
    %v10720 = vmax.f32 %v10718, %v10719
    %v10721 = vsel %vm10699, %v10043, -inf
    %v10722 = vrot.slane %v10721, 4
    %v10723 = vmax.f32 %v10721, %v10722
    %v10724 = vrot.slane %v10723, 2
    %v10725 = vmax.f32 %v10723, %v10724
    %v10726 = vrot.slane %v10725, 1
    %v10727 = vmax.f32 %v10725, %v10726
    %v10728 = vsel %vm10699, %v10051, -inf
    %v10729 = vrot.slane %v10728, 4
    %v10730 = vmax.f32 %v10728, %v10729
    %v10731 = vrot.slane %v10730, 2
    %v10732 = vmax.f32 %v10730, %v10731
    %v10733 = vrot.slane %v10732, 1
    %v10734 = vmax.f32 %v10732, %v10733
    %v10735 = vsel %vm10699, %v10059, -inf
    %v10736 = vrot.slane %v10735, 4
    %v10737 = vmax.f32 %v10735, %v10736
    %v10738 = vrot.slane %v10737, 2
    %v10739 = vmax.f32 %v10737, %v10738
    %v10740 = vrot.slane %v10739, 1
    %v10741 = vmax.f32 %v10739, %v10740
    %v10742 = vsel %vm10699, %v10058, -inf
    %v10743 = vrot.slane %v10742, 4
    %v10744 = vmax.f32 %v10742, %v10743
    %v10745 = vrot.slane %v10744, 2
    %v10746 = vmax.f32 %v10744, %v10745
    %v10747 = vrot.slane %v10746, 1
    %v10748 = vmax.f32 %v10746, %v10747
    %v10749 = vsel %vm10699, %v10060, -inf
    %v10750 = vrot.slane %v10749, 4
    %v10751 = vmax.f32 %v10749, %v10750
    %v10752 = vrot.slane %v10751, 2
    %v10753 = vmax.f32 %v10751, %v10752
    %v10754 = vrot.slane %v10753, 1
    %v10755 = vmax.f32 %v10753, %v10754
    %v10756 = vsel %vm10699, %v10068, -inf
    %v10757 = vrot.slane %v10756, 4
    %v10758 = vmax.f32 %v10756, %v10757
    %v10759 = vrot.slane %v10758, 2
    %v10760 = vmax.f32 %v10758, %v10759
    %v10761 = vrot.slane %v10760, 1
    %v10762 = vmax.f32 %v10760, %v10761
    %v10763 = vsel %vm10699, %v10076, -inf
    %v10764 = vrot.slane %v10763, 4
    %v10765 = vmax.f32 %v10763, %v10764
    %v10766 = vrot.slane %v10765, 2
    %v10767 = vmax.f32 %v10765, %v10766
    %v10768 = vrot.slane %v10767, 1
    %v10769 = vmax.f32 %v10767, %v10768
    %v10770 = vsel %vm10699, %v10075, -inf
    %v10771 = vrot.slane %v10770, 4
    %v10772 = vmax.f32 %v10770, %v10771
    %v10773 = vrot.slane %v10772, 2
    %v10774 = vmax.f32 %v10772, %v10773
    %v10775 = vrot.slane %v10774, 1
    %v10776 = vmax.f32 %v10774, %v10775
    %v10777 = vsel %vm10699, %v10077, -inf
    %v10778 = vrot.slane %v10777, 4
    %v10779 = vmax.f32 %v10777, %v10778
    %v10780 = vrot.slane %v10779, 2
    %v10781 = vmax.f32 %v10779, %v10780
    %v10782 = vrot.slane %v10781, 1
    %v10783 = vmax.f32 %v10781, %v10782
    %v10784 = vsel %vm10699, %v10085, -inf
    %v10785 = vrot.slane %v10784, 4
    %v10786 = vmax.f32 %v10784, %v10785
    %v10787 = vrot.slane %v10786, 2
    %v10788 = vmax.f32 %v10786, %v10787
    %v10789 = vrot.slane %v10788, 1
    %v10790 = vmax.f32 %v10788, %v10789
    %v10791 = vsel %vm10699, %v10093, -inf
    %v10792 = vrot.slane %v10791, 4
    %v10793 = vmax.f32 %v10791, %v10792
    %v10794 = vrot.slane %v10793, 2
    %v10795 = vmax.f32 %v10793, %v10794
    %v10796 = vrot.slane %v10795, 1
    %v10797 = vmax.f32 %v10795, %v10796
    %v10798 = vsel %vm10699, %v10092, -inf
    %v10799 = vrot.slane %v10798, 4
    %v10800 = vmax.f32 %v10798, %v10799
    %v10801 = vrot.slane %v10800, 2
    %v10802 = vmax.f32 %v10800, %v10801
    %v10803 = vrot.slane %v10802, 1
    %v10804 = vmax.f32 %v10802, %v10803
    %v10805 = vsel %vm10699, %v10094, -inf
    %v10806 = vrot.slane %v10805, 4
    %v10807 = vmax.f32 %v10805, %v10806
    %v10808 = vrot.slane %v10807, 2
    %v10809 = vmax.f32 %v10807, %v10808
    %v10810 = vrot.slane %v10809, 1
    %v10811 = vmax.f32 %v10809, %v10810
    %v10812 = vsel %vm10699, %v10102, -inf
    %v10813 = vrot.slane %v10812, 4
    %v10814 = vmax.f32 %v10812, %v10813
    %v10815 = vrot.slane %v10814, 2
    %v10816 = vmax.f32 %v10814, %v10815
    %v10817 = vrot.slane %v10816, 1
    %v10818 = vmax.f32 %v10816, %v10817
    %v10819 = vsel %vm10699, %v10110, -inf
    %v10820 = vrot.slane %v10819, 4
    %v10821 = vmax.f32 %v10819, %v10820
    %v10822 = vrot.slane %v10821, 2
    %v10823 = vmax.f32 %v10821, %v10822
    %v10824 = vrot.slane %v10823, 1
    %v10825 = vmax.f32 %v10823, %v10824
    %v10826 = vsel %vm10699, %v10109, -inf
    %v10827 = vrot.slane %v10826, 4
    %v10828 = vmax.f32 %v10826, %v10827
    %v10829 = vrot.slane %v10828, 2
    %v10830 = vmax.f32 %v10828, %v10829
    %v10831 = vrot.slane %v10830, 1
    %v10832 = vmax.f32 %v10830, %v10831
    %v10833 = vsel %vm10699, %v10111, -inf
    %v10834 = vrot.slane %v10833, 4
    %v10835 = vmax.f32 %v10833, %v10834
    %v10836 = vrot.slane %v10835, 2
    %v10837 = vmax.f32 %v10835, %v10836
    %v10838 = vrot.slane %v10837, 1
    %v10839 = vmax.f32 %v10837, %v10838
    %v10840 = vsel %vm10699, %v10119, -inf
    %v10841 = vrot.slane %v10840, 4
    %v10842 = vmax.f32 %v10840, %v10841
    %v10843 = vrot.slane %v10842, 2
    %v10844 = vmax.f32 %v10842, %v10843
    %v10845 = vrot.slane %v10844, 1
    %v10846 = vmax.f32 %v10844, %v10845
    %v10847 = vsel %vm10699, %v10127, -inf
    %v10848 = vrot.slane %v10847, 4
    %v10849 = vmax.f32 %v10847, %v10848
    %v10850 = vrot.slane %v10849, 2
    %v10851 = vmax.f32 %v10849, %v10850
    %v10852 = vrot.slane %v10851, 1
    %v10853 = vmax.f32 %v10851, %v10852
    %v10854 = vsel %vm10699, %v10126, -inf
    %v10855 = vrot.slane %v10854, 4
    %v10856 = vmax.f32 %v10854, %v10855
    %v10857 = vrot.slane %v10856, 2
    %v10858 = vmax.f32 %v10856, %v10857
    %v10859 = vrot.slane %v10858, 1
    %v10860 = vmax.f32 %v10858, %v10859
    %v10861 = vsel %vm10699, %v10128, -inf
    %v10862 = vrot.slane %v10861, 4
    %v10863 = vmax.f32 %v10861, %v10862
    %v10864 = vrot.slane %v10863, 2
    %v10865 = vmax.f32 %v10863, %v10864
    %v10866 = vrot.slane %v10865, 1
    %v10867 = vmax.f32 %v10865, %v10866
    %v10868 = vsel %vm10699, %v10136, -inf
    %v10869 = vrot.slane %v10868, 4
    %v10870 = vmax.f32 %v10868, %v10869
    %v10871 = vrot.slane %v10870, 2
    %v10872 = vmax.f32 %v10870, %v10871
    %v10873 = vrot.slane %v10872, 1
    %v10874 = vmax.f32 %v10872, %v10873
    %v10875 = vsel %vm10699, %v10144, -inf
    %v10876 = vrot.slane %v10875, 4
    %v10877 = vmax.f32 %v10875, %v10876
    %v10878 = vrot.slane %v10877, 2
    %v10879 = vmax.f32 %v10877, %v10878
    %v10880 = vrot.slane %v10879, 1
    %v10881 = vmax.f32 %v10879, %v10880
    %v10882 = vsel %vm10699, %v10143, -inf
    %v10883 = vrot.slane %v10882, 4
    %v10884 = vmax.f32 %v10882, %v10883
    %v10885 = vrot.slane %v10884, 2
    %v10886 = vmax.f32 %v10884, %v10885
    %v10887 = vrot.slane %v10886, 1
    %v10888 = vmax.f32 %v10886, %v10887
    %v10889 = vsel %vm10699, %v10145, -inf
    %v10890 = vrot.slane %v10889, 4
    %v10891 = vmax.f32 %v10889, %v10890
    %v10892 = vrot.slane %v10891, 2
    %v10893 = vmax.f32 %v10891, %v10892
    %v10894 = vrot.slane %v10893, 1
    %v10895 = vmax.f32 %v10893, %v10894
    %v10896 = vsel %vm10699, %v10153, -inf
    %v10897 = vrot.slane %v10896, 4
    %v10898 = vmax.f32 %v10896, %v10897
    %v10899 = vrot.slane %v10898, 2
    %v10900 = vmax.f32 %v10898, %v10899
    %v10901 = vrot.slane %v10900, 1
    %v10902 = vmax.f32 %v10900, %v10901
    %v10903 = vsel %vm10699, %v10161, -inf
    %v10904 = vrot.slane %v10903, 4
    %v10905 = vmax.f32 %v10903, %v10904
    %v10906 = vrot.slane %v10905, 2
    %v10907 = vmax.f32 %v10905, %v10906
    %v10908 = vrot.slane %v10907, 1
    %v10909 = vmax.f32 %v10907, %v10908
    %v10910 = vsel %vm10699, %v10160, -inf
    %v10911 = vrot.slane %v10910, 4
    %v10912 = vmax.f32 %v10910, %v10911
    %v10913 = vrot.slane %v10912, 2
    %v10914 = vmax.f32 %v10912, %v10913
    %v10915 = vrot.slane %v10914, 1
    %v10916 = vmax.f32 %v10914, %v10915
    %v10917 = vsel %vm10699, %v10162, -inf
    %v10918 = vrot.slane %v10917, 4
    %v10919 = vmax.f32 %v10917, %v10918
    %v10920 = vrot.slane %v10919, 2
    %v10921 = vmax.f32 %v10919, %v10920
    %v10922 = vrot.slane %v10921, 1
    %v10923 = vmax.f32 %v10921, %v10922
    %v10924 = vsel %vm10699, %v10170, -inf
    %v10925 = vrot.slane %v10924, 4
    %v10926 = vmax.f32 %v10924, %v10925
    %v10927 = vrot.slane %v10926, 2
    %v10928 = vmax.f32 %v10926, %v10927
    %v10929 = vrot.slane %v10928, 1
    %v10930 = vmax.f32 %v10928, %v10929
    %v10931 = vsel %vm10699, %v10178, -inf
    %v10932 = vrot.slane %v10931, 4
    %v10933 = vmax.f32 %v10931, %v10932
    %v10934 = vrot.slane %v10933, 2
    %v10935 = vmax.f32 %v10933, %v10934
    %v10936 = vrot.slane %v10935, 1
    %v10937 = vmax.f32 %v10935, %v10936
    %v10938 = vsel %vm10699, %v10177, -inf
    %v10939 = vrot.slane %v10938, 4
    %v10940 = vmax.f32 %v10938, %v10939
    %v10941 = vrot.slane %v10940, 2
    %v10942 = vmax.f32 %v10940, %v10941
    %v10943 = vrot.slane %v10942, 1
    %v10944 = vmax.f32 %v10942, %v10943
    %v10945 = vsel %vm10699, %v10179, -inf
    %v10946 = vrot.slane %v10945, 4
    %v10947 = vmax.f32 %v10945, %v10946
    %v10948 = vrot.slane %v10947, 2
    %v10949 = vmax.f32 %v10947, %v10948
    %v10950 = vrot.slane %v10949, 1
    %v10951 = vmax.f32 %v10949, %v10950
    %v10952 = vsel %vm10699, %v10187, -inf
    %v10953 = vrot.slane %v10952, 4
    %v10954 = vmax.f32 %v10952, %v10953
    %v10955 = vrot.slane %v10954, 2
    %v10956 = vmax.f32 %v10954, %v10955
    %v10957 = vrot.slane %v10956, 1
    %v10958 = vmax.f32 %v10956, %v10957
    %v10959 = vsel %vm10699, %v10195, -inf
    %v10960 = vrot.slane %v10959, 4
    %v10961 = vmax.f32 %v10959, %v10960
    %v10962 = vrot.slane %v10961, 2
    %v10963 = vmax.f32 %v10961, %v10962
    %v10964 = vrot.slane %v10963, 1
    %v10965 = vmax.f32 %v10963, %v10964
    %v10966 = vsel %vm10699, %v10194, -inf
    %v10967 = vrot.slane %v10966, 4
    %v10968 = vmax.f32 %v10966, %v10967
    %v10969 = vrot.slane %v10968, 2
    %v10970 = vmax.f32 %v10968, %v10969
    %v10971 = vrot.slane %v10970, 1
    %v10972 = vmax.f32 %v10970, %v10971
    %v10973 = vsel %vm10699, %v10196, -inf
    %v10974 = vrot.slane %v10973, 4
    %v10975 = vmax.f32 %v10973, %v10974
    %v10976 = vrot.slane %v10975, 2
    %v10977 = vmax.f32 %v10975, %v10976
    %v10978 = vrot.slane %v10977, 1
    %v10979 = vmax.f32 %v10977, %v10978
    %v10980 = vsel %vm10699, %v10204, -inf
    %v10981 = vrot.slane %v10980, 4
    %v10982 = vmax.f32 %v10980, %v10981
    %v10983 = vrot.slane %v10982, 2
    %v10984 = vmax.f32 %v10982, %v10983
    %v10985 = vrot.slane %v10984, 1
    %v10986 = vmax.f32 %v10984, %v10985
    %v10987 = vsel %vm10699, %v10212, -inf
    %v10988 = vrot.slane %v10987, 4
    %v10989 = vmax.f32 %v10987, %v10988
    %v10990 = vrot.slane %v10989, 2
    %v10991 = vmax.f32 %v10989, %v10990
    %v10992 = vrot.slane %v10991, 1
    %v10993 = vmax.f32 %v10991, %v10992
    %v10994 = vsel %vm10699, %v10211, -inf
    %v10995 = vrot.slane %v10994, 4
    %v10996 = vmax.f32 %v10994, %v10995
    %v10997 = vrot.slane %v10996, 2
    %v10998 = vmax.f32 %v10996, %v10997
    %v10999 = vrot.slane %v10998, 1
    %v11000 = vmax.f32 %v10998, %v10999
    %v11001 = vsel %vm10699, %v10213, -inf
    %v11002 = vrot.slane %v11001, 4
    %v11003 = vmax.f32 %v11001, %v11002
    %v11004 = vrot.slane %v11003, 2
    %v11005 = vmax.f32 %v11003, %v11004
    %v11006 = vrot.slane %v11005, 1
    %v11007 = vmax.f32 %v11005, %v11006
    %v11008 = vsel %vm10699, %v10221, -inf
    %v11009 = vrot.slane %v11008, 4
    %v11010 = vmax.f32 %v11008, %v11009
    %v11011 = vrot.slane %v11010, 2
    %v11012 = vmax.f32 %v11010, %v11011
    %v11013 = vrot.slane %v11012, 1
    %v11014 = vmax.f32 %v11012, %v11013
    %v11015 = vsel %vm10699, %v10229, -inf
    %v11016 = vrot.slane %v11015, 4
    %v11017 = vmax.f32 %v11015, %v11016
    %v11018 = vrot.slane %v11017, 2
    %v11019 = vmax.f32 %v11017, %v11018
    %v11020 = vrot.slane %v11019, 1
    %v11021 = vmax.f32 %v11019, %v11020
    %v11022 = vsel %vm10699, %v10228, -inf
    %v11023 = vrot.slane %v11022, 4
    %v11024 = vmax.f32 %v11022, %v11023
    %v11025 = vrot.slane %v11024, 2
    %v11026 = vmax.f32 %v11024, %v11025
    %v11027 = vrot.slane %v11026, 1
    %v11028 = vmax.f32 %v11026, %v11027
    %v11029 = vsel %vm10699, %v10230, -inf
    %v11030 = vrot.slane %v11029, 4
    %v11031 = vmax.f32 %v11029, %v11030
    %v11032 = vrot.slane %v11031, 2
    %v11033 = vmax.f32 %v11031, %v11032
    %v11034 = vrot.slane %v11033, 1
    %v11035 = vmax.f32 %v11033, %v11034
    %v11036 = vsel %vm10699, %v10238, -inf
    %v11037 = vrot.slane %v11036, 4
    %v11038 = vmax.f32 %v11036, %v11037
    %v11039 = vrot.slane %v11038, 2
    %v11040 = vmax.f32 %v11038, %v11039
    %v11041 = vrot.slane %v11040, 1
    %v11042 = vmax.f32 %v11040, %v11041
    %v11043 = vsel %vm10699, %v10246, -inf
    %v11044 = vrot.slane %v11043, 4
    %v11045 = vmax.f32 %v11043, %v11044
    %v11046 = vrot.slane %v11045, 2
    %v11047 = vmax.f32 %v11045, %v11046
    %v11048 = vrot.slane %v11047, 1
    %v11049 = vmax.f32 %v11047, %v11048
    %v11050 = vsel %vm10699, %v10245, -inf
    %v11051 = vrot.slane %v11050, 4
    %v11052 = vmax.f32 %v11050, %v11051
    %v11053 = vrot.slane %v11052, 2
    %v11054 = vmax.f32 %v11052, %v11053
    %v11055 = vrot.slane %v11054, 1
    %v11056 = vmax.f32 %v11054, %v11055
    %v11057 = vsel %vm10699, %v10247, -inf
    %v11058 = vrot.slane %v11057, 4
    %v11059 = vmax.f32 %v11057, %v11058
    %v11060 = vrot.slane %v11059, 2
    %v11061 = vmax.f32 %v11059, %v11060
    %v11062 = vrot.slane %v11061, 1
    %v11063 = vmax.f32 %v11061, %v11062
    %v11064 = vsel %vm10699, %v10255, -inf
    %v11065 = vrot.slane %v11064, 4
    %v11066 = vmax.f32 %v11064, %v11065
    %v11067 = vrot.slane %v11066, 2
    %v11068 = vmax.f32 %v11066, %v11067
    %v11069 = vrot.slane %v11068, 1
    %v11070 = vmax.f32 %v11068, %v11069
    %v11071 = vsel %vm10699, %v10263, -inf
    %v11072 = vrot.slane %v11071, 4
    %v11073 = vmax.f32 %v11071, %v11072
    %v11074 = vrot.slane %v11073, 2
    %v11075 = vmax.f32 %v11073, %v11074
    %v11076 = vrot.slane %v11075, 1
    %v11077 = vmax.f32 %v11075, %v11076
    %v11078 = vsel %vm10699, %v10262, -inf
    %v11079 = vrot.slane %v11078, 4
    %v11080 = vmax.f32 %v11078, %v11079
    %v11081 = vrot.slane %v11080, 2
    %v11082 = vmax.f32 %v11080, %v11081
    %v11083 = vrot.slane %v11082, 1
    %v11084 = vmax.f32 %v11082, %v11083
    %v11085 = vsel %vm10699, %v10264, -inf
    %v11086 = vrot.slane %v11085, 4
    %v11087 = vmax.f32 %v11085, %v11086
    %v11088 = vrot.slane %v11087, 2
    %v11089 = vmax.f32 %v11087, %v11088
    %v11090 = vrot.slane %v11089, 1
    %v11091 = vmax.f32 %v11089, %v11090
    %v11092 = vsel %vm10699, %v10272, -inf
    %v11093 = vrot.slane %v11092, 4
    %v11094 = vmax.f32 %v11092, %v11093
    %v11095 = vrot.slane %v11094, 2
    %v11096 = vmax.f32 %v11094, %v11095
    %v11097 = vrot.slane %v11096, 1
    %v11098 = vmax.f32 %v11096, %v11097
    %v11099 = vsel %vm10699, %v10280, -inf
    %v11100 = vrot.slane %v11099, 4
    %v11101 = vmax.f32 %v11099, %v11100
    %v11102 = vrot.slane %v11101, 2
    %v11103 = vmax.f32 %v11101, %v11102
    %v11104 = vrot.slane %v11103, 1
    %v11105 = vmax.f32 %v11103, %v11104
    %v11106 = vsel %vm10699, %v10279, -inf
    %v11107 = vrot.slane %v11106, 4
    %v11108 = vmax.f32 %v11106, %v11107
    %v11109 = vrot.slane %v11108, 2
    %v11110 = vmax.f32 %v11108, %v11109
    %v11111 = vrot.slane %v11110, 1
    %v11112 = vmax.f32 %v11110, %v11111
    %v11113 = vsel %vm10699, %v10281, -inf
    %v11114 = vrot.slane %v11113, 4
    %v11115 = vmax.f32 %v11113, %v11114
    %v11116 = vrot.slane %v11115, 2
    %v11117 = vmax.f32 %v11115, %v11116
    %v11118 = vrot.slane %v11117, 1
    %v11119 = vmax.f32 %v11117, %v11118
    %v11120 = vsel %vm10699, %v10289, -inf
    %v11121 = vrot.slane %v11120, 4
    %v11122 = vmax.f32 %v11120, %v11121
    %v11123 = vrot.slane %v11122, 2
    %v11124 = vmax.f32 %v11122, %v11123
    %v11125 = vrot.slane %v11124, 1
    %v11126 = vmax.f32 %v11124, %v11125
    %v11127 = vsel %vm10699, %v10297, -inf
    %v11128 = vrot.slane %v11127, 4
    %v11129 = vmax.f32 %v11127, %v11128
    %v11130 = vrot.slane %v11129, 2
    %v11131 = vmax.f32 %v11129, %v11130
    %v11132 = vrot.slane %v11131, 1
    %v11133 = vmax.f32 %v11131, %v11132
    %v11134 = vsel %vm10699, %v10296, -inf
    %v11135 = vrot.slane %v11134, 4
    %v11136 = vmax.f32 %v11134, %v11135
    %v11137 = vrot.slane %v11136, 2
    %v11138 = vmax.f32 %v11136, %v11137
    %v11139 = vrot.slane %v11138, 1
    %v11140 = vmax.f32 %v11138, %v11139
    %v11141 = vsel %vm10699, %v10298, -inf
    %v11142 = vrot.slane %v11141, 4
    %v11143 = vmax.f32 %v11141, %v11142
    %v11144 = vrot.slane %v11143, 2
    %v11145 = vmax.f32 %v11143, %v11144
    %v11146 = vrot.slane %v11145, 1
    %v11147 = vmax.f32 %v11145, %v11146
    %v11148 = vsel %vm10699, %v10306, -inf
    %v11149 = vrot.slane %v11148, 4
    %v11150 = vmax.f32 %v11148, %v11149
    %v11151 = vrot.slane %v11150, 2
    %v11152 = vmax.f32 %v11150, %v11151
    %v11153 = vrot.slane %v11152, 1
    %v11154 = vmax.f32 %v11152, %v11153
    %v11155 = vsel %vm10699, %v10314, -inf
    %v11156 = vrot.slane %v11155, 4
    %v11157 = vmax.f32 %v11155, %v11156
    %v11158 = vrot.slane %v11157, 2
    %v11159 = vmax.f32 %v11157, %v11158
    %v11160 = vrot.slane %v11159, 1
    %v11161 = vmax.f32 %v11159, %v11160
    %v11162 = vsel %vm10699, %v10313, -inf
    %v11163 = vrot.slane %v11162, 4
    %v11164 = vmax.f32 %v11162, %v11163
    %v11165 = vrot.slane %v11164, 2
    %v11166 = vmax.f32 %v11164, %v11165
    %v11167 = vrot.slane %v11166, 1
    %v11168 = vmax.f32 %v11166, %v11167
    %v11169 = vsel %vm10699, %v10315, -inf
    %v11170 = vrot.slane %v11169, 4
    %v11171 = vmax.f32 %v11169, %v11170
    %v11172 = vrot.slane %v11171, 2
    %v11173 = vmax.f32 %v11171, %v11172
    %v11174 = vrot.slane %v11173, 1
    %v11175 = vmax.f32 %v11173, %v11174
    %v11176 = vsel %vm10699, %v10323, -inf
    %v11177 = vrot.slane %v11176, 4
    %v11178 = vmax.f32 %v11176, %v11177
    %v11179 = vrot.slane %v11178, 2
    %v11180 = vmax.f32 %v11178, %v11179
    %v11181 = vrot.slane %v11180, 1
    %v11182 = vmax.f32 %v11180, %v11181
    %v11183 = vsel %vm10699, %v10331, -inf
    %v11184 = vrot.slane %v11183, 4
    %v11185 = vmax.f32 %v11183, %v11184
    %v11186 = vrot.slane %v11185, 2
    %v11187 = vmax.f32 %v11185, %v11186
    %v11188 = vrot.slane %v11187, 1
    %v11189 = vmax.f32 %v11187, %v11188
    %v11190 = vsel %vm10699, %v10330, -inf
    %v11191 = vrot.slane %v11190, 4
    %v11192 = vmax.f32 %v11190, %v11191
    %v11193 = vrot.slane %v11192, 2
    %v11194 = vmax.f32 %v11192, %v11193
    %v11195 = vrot.slane %v11194, 1
    %v11196 = vmax.f32 %v11194, %v11195
    %v11197 = vsel %vm10699, %v10332, -inf
    %v11198 = vrot.slane %v11197, 4
    %v11199 = vmax.f32 %v11197, %v11198
    %v11200 = vrot.slane %v11199, 2
    %v11201 = vmax.f32 %v11199, %v11200
    %v11202 = vrot.slane %v11201, 1
    %v11203 = vmax.f32 %v11201, %v11202
    %v11204 = vsel %vm10699, %v10340, -inf
    %v11205 = vrot.slane %v11204, 4
    %v11206 = vmax.f32 %v11204, %v11205
    %v11207 = vrot.slane %v11206, 2
    %v11208 = vmax.f32 %v11206, %v11207
    %v11209 = vrot.slane %v11208, 1
    %v11210 = vmax.f32 %v11208, %v11209
    %v11211 = vsel %vm10699, %v10348, -inf
    %v11212 = vrot.slane %v11211, 4
    %v11213 = vmax.f32 %v11211, %v11212
    %v11214 = vrot.slane %v11213, 2
    %v11215 = vmax.f32 %v11213, %v11214
    %v11216 = vrot.slane %v11215, 1
    %v11217 = vmax.f32 %v11215, %v11216
    %v11218 = vsel %vm10699, %v10347, -inf
    %v11219 = vrot.slane %v11218, 4
    %v11220 = vmax.f32 %v11218, %v11219
    %v11221 = vrot.slane %v11220, 2
    %v11222 = vmax.f32 %v11220, %v11221
    %v11223 = vrot.slane %v11222, 1
    %v11224 = vmax.f32 %v11222, %v11223
    %v11225 = vsel %vm10699, %v10349, -inf
    %v11226 = vrot.slane %v11225, 4
    %v11227 = vmax.f32 %v11225, %v11226
    %v11228 = vrot.slane %v11227, 2
    %v11229 = vmax.f32 %v11227, %v11228
    %v11230 = vrot.slane %v11229, 1
    %v11231 = vmax.f32 %v11229, %v11230
    %v11232 = vsel %vm10699, %v10357, -inf
    %v11233 = vrot.slane %v11232, 4
    %v11234 = vmax.f32 %v11232, %v11233
    %v11235 = vrot.slane %v11234, 2
    %v11236 = vmax.f32 %v11234, %v11235
    %v11237 = vrot.slane %v11236, 1
    %v11238 = vmax.f32 %v11236, %v11237
    %v11239 = vsel %vm10699, %v10365, -inf
    %v11240 = vrot.slane %v11239, 4
    %v11241 = vmax.f32 %v11239, %v11240
    %v11242 = vrot.slane %v11241, 2
    %v11243 = vmax.f32 %v11241, %v11242
    %v11244 = vrot.slane %v11243, 1
    %v11245 = vmax.f32 %v11243, %v11244
    %v11246 = vsel %vm10699, %v10364, -inf
    %v11247 = vrot.slane %v11246, 4
    %v11248 = vmax.f32 %v11246, %v11247
    %v11249 = vrot.slane %v11248, 2
    %v11250 = vmax.f32 %v11248, %v11249
    %v11251 = vrot.slane %v11250, 1
    %v11252 = vmax.f32 %v11250, %v11251
    %v11253 = vsel %vm10699, %v10366, -inf
    %v11254 = vrot.slane %v11253, 4
    %v11255 = vmax.f32 %v11253, %v11254
    %v11256 = vrot.slane %v11255, 2
    %v11257 = vmax.f32 %v11255, %v11256
    %v11258 = vrot.slane %v11257, 1
    %v11259 = vmax.f32 %v11257, %v11258
    %v11260 = vsel %vm10699, %v10374, -inf
    %v11261 = vrot.slane %v11260, 4
    %v11262 = vmax.f32 %v11260, %v11261
    %v11263 = vrot.slane %v11262, 2
    %v11264 = vmax.f32 %v11262, %v11263
    %v11265 = vrot.slane %v11264, 1
    %v11266 = vmax.f32 %v11264, %v11265
    %v11267 = vsel %vm10699, %v10382, -inf
    %v11268 = vrot.slane %v11267, 4
    %v11269 = vmax.f32 %v11267, %v11268
    %v11270 = vrot.slane %v11269, 2
    %v11271 = vmax.f32 %v11269, %v11270
    %v11272 = vrot.slane %v11271, 1
    %v11273 = vmax.f32 %v11271, %v11272
    %v11274 = vsel %vm10699, %v10381, -inf
    %v11275 = vrot.slane %v11274, 4
    %v11276 = vmax.f32 %v11274, %v11275
    %v11277 = vrot.slane %v11276, 2
    %v11278 = vmax.f32 %v11276, %v11277
    %v11279 = vrot.slane %v11278, 1
    %v11280 = vmax.f32 %v11278, %v11279
    %v11281 = vsel %vm10699, %v10383, -inf
    %v11282 = vrot.slane %v11281, 4
    %v11283 = vmax.f32 %v11281, %v11282
    %v11284 = vrot.slane %v11283, 2
    %v11285 = vmax.f32 %v11283, %v11284
    %v11286 = vrot.slane %v11285, 1
    %v11287 = vmax.f32 %v11285, %v11286
    %v11288 = vsel %vm10699, %v10391, -inf
    %v11289 = vrot.slane %v11288, 4
    %v11290 = vmax.f32 %v11288, %v11289
    %v11291 = vrot.slane %v11290, 2
    %v11292 = vmax.f32 %v11290, %v11291
    %v11293 = vrot.slane %v11292, 1
    %v11294 = vmax.f32 %v11292, %v11293
    %v11295 = vsel %vm10699, %v10399, -inf
    %v11296 = vrot.slane %v11295, 4
    %v11297 = vmax.f32 %v11295, %v11296
    %v11298 = vrot.slane %v11297, 2
    %v11299 = vmax.f32 %v11297, %v11298
    %v11300 = vrot.slane %v11299, 1
    %v11301 = vmax.f32 %v11299, %v11300
    %v11302 = vsel %vm10699, %v10398, -inf
    %v11303 = vrot.slane %v11302, 4
    %v11304 = vmax.f32 %v11302, %v11303
    %v11305 = vrot.slane %v11304, 2
    %v11306 = vmax.f32 %v11304, %v11305
    %v11307 = vrot.slane %v11306, 1
    %v11308 = vmax.f32 %v11306, %v11307
    %v11309 = vsel %vm10699, %v10400, -inf
    %v11310 = vrot.slane %v11309, 4
    %v11311 = vmax.f32 %v11309, %v11310
    %v11312 = vrot.slane %v11311, 2
    %v11313 = vmax.f32 %v11311, %v11312
    %v11314 = vrot.slane %v11313, 1
    %v11315 = vmax.f32 %v11313, %v11314
    %v11316 = vsel %vm10699, %v10408, -inf
    %v11317 = vrot.slane %v11316, 4
    %v11318 = vmax.f32 %v11316, %v11317
    %v11319 = vrot.slane %v11318, 2
    %v11320 = vmax.f32 %v11318, %v11319
    %v11321 = vrot.slane %v11320, 1
    %v11322 = vmax.f32 %v11320, %v11321
    %v11323 = vsel %vm10699, %v10416, -inf
    %v11324 = vrot.slane %v11323, 4
    %v11325 = vmax.f32 %v11323, %v11324
    %v11326 = vrot.slane %v11325, 2
    %v11327 = vmax.f32 %v11325, %v11326
    %v11328 = vrot.slane %v11327, 1
    %v11329 = vmax.f32 %v11327, %v11328
    %v11330 = vsel %vm10699, %v10415, -inf
    %v11331 = vrot.slane %v11330, 4
    %v11332 = vmax.f32 %v11330, %v11331
    %v11333 = vrot.slane %v11332, 2
    %v11334 = vmax.f32 %v11332, %v11333
    %v11335 = vrot.slane %v11334, 1
    %v11336 = vmax.f32 %v11334, %v11335
    %v11337 = vsel %vm10699, %v10417, -inf
    %v11338 = vrot.slane %v11337, 4
    %v11339 = vmax.f32 %v11337, %v11338
    %v11340 = vrot.slane %v11339, 2
    %v11341 = vmax.f32 %v11339, %v11340
    %v11342 = vrot.slane %v11341, 1
    %v11343 = vmax.f32 %v11341, %v11342
    %v11344 = vsel %vm10699, %v10425, -inf
    %v11345 = vrot.slane %v11344, 4
    %v11346 = vmax.f32 %v11344, %v11345
    %v11347 = vrot.slane %v11346, 2
    %v11348 = vmax.f32 %v11346, %v11347
    %v11349 = vrot.slane %v11348, 1
    %v11350 = vmax.f32 %v11348, %v11349
    %v11351 = vsel %vm10699, %v10433, -inf
    %v11352 = vrot.slane %v11351, 4
    %v11353 = vmax.f32 %v11351, %v11352
    %v11354 = vrot.slane %v11353, 2
    %v11355 = vmax.f32 %v11353, %v11354
    %v11356 = vrot.slane %v11355, 1
    %v11357 = vmax.f32 %v11355, %v11356
    %v11358 = vsel %vm10699, %v10432, -inf
    %v11359 = vrot.slane %v11358, 4
    %v11360 = vmax.f32 %v11358, %v11359
    %v11361 = vrot.slane %v11360, 2
    %v11362 = vmax.f32 %v11360, %v11361
    %v11363 = vrot.slane %v11362, 1
    %v11364 = vmax.f32 %v11362, %v11363
    %v11365 = vsel %vm10699, %v10434, -inf
    %v11366 = vrot.slane %v11365, 4
    %v11367 = vmax.f32 %v11365, %v11366
    %v11368 = vrot.slane %v11367, 2
    %v11369 = vmax.f32 %v11367, %v11368
    %v11370 = vrot.slane %v11369, 1
    %v11371 = vmax.f32 %v11369, %v11370
    %v11372 = vsel %vm10699, %v10442, -inf
    %v11373 = vrot.slane %v11372, 4
    %v11374 = vmax.f32 %v11372, %v11373
    %v11375 = vrot.slane %v11374, 2
    %v11376 = vmax.f32 %v11374, %v11375
    %v11377 = vrot.slane %v11376, 1
    %v11378 = vmax.f32 %v11376, %v11377
    %v11379 = vsel %vm10699, %v10450, -inf
    %v11380 = vrot.slane %v11379, 4
    %v11381 = vmax.f32 %v11379, %v11380
    %v11382 = vrot.slane %v11381, 2
    %v11383 = vmax.f32 %v11381, %v11382
    %v11384 = vrot.slane %v11383, 1
    %v11385 = vmax.f32 %v11383, %v11384
    %v11386 = vsel %vm10699, %v10449, -inf
    %v11387 = vrot.slane %v11386, 4
    %v11388 = vmax.f32 %v11386, %v11387
    %v11389 = vrot.slane %v11388, 2
    %v11390 = vmax.f32 %v11388, %v11389
    %v11391 = vrot.slane %v11390, 1
    %v11392 = vmax.f32 %v11390, %v11391
    %v11393 = vsel %vm10699, %v10451, -inf
    %v11394 = vrot.slane %v11393, 4
    %v11395 = vmax.f32 %v11393, %v11394
    %v11396 = vrot.slane %v11395, 2
    %v11397 = vmax.f32 %v11395, %v11396
    %v11398 = vrot.slane %v11397, 1
    %v11399 = vmax.f32 %v11397, %v11398
    %v11400 = vsel %vm10699, %v10459, -inf
    %v11401 = vrot.slane %v11400, 4
    %v11402 = vmax.f32 %v11400, %v11401
    %v11403 = vrot.slane %v11402, 2
    %v11404 = vmax.f32 %v11402, %v11403
    %v11405 = vrot.slane %v11404, 1
    %v11406 = vmax.f32 %v11404, %v11405
    %v11407 = vsel %vm10699, %v10467, -inf
    %v11408 = vrot.slane %v11407, 4
    %v11409 = vmax.f32 %v11407, %v11408
    %v11410 = vrot.slane %v11409, 2
    %v11411 = vmax.f32 %v11409, %v11410
    %v11412 = vrot.slane %v11411, 1
    %v11413 = vmax.f32 %v11411, %v11412
    %v11414 = vsel %vm10699, %v10466, -inf
    %v11415 = vrot.slane %v11414, 4
    %v11416 = vmax.f32 %v11414, %v11415
    %v11417 = vrot.slane %v11416, 2
    %v11418 = vmax.f32 %v11416, %v11417
    %v11419 = vrot.slane %v11418, 1
    %v11420 = vmax.f32 %v11418, %v11419
    %v11421 = vsel %vm10699, %v10468, -inf
    %v11422 = vrot.slane %v11421, 4
    %v11423 = vmax.f32 %v11421, %v11422
    %v11424 = vrot.slane %v11423, 2
    %v11425 = vmax.f32 %v11423, %v11424
    %v11426 = vrot.slane %v11425, 1
    %v11427 = vmax.f32 %v11425, %v11426
    %v11428 = vsel %vm10699, %v10476, -inf
    %v11429 = vrot.slane %v11428, 4
    %v11430 = vmax.f32 %v11428, %v11429
    %v11431 = vrot.slane %v11430, 2
    %v11432 = vmax.f32 %v11430, %v11431
    %v11433 = vrot.slane %v11432, 1
    %v11434 = vmax.f32 %v11432, %v11433
    %v11435 = vsel %vm10699, %v10484, -inf
    %v11436 = vrot.slane %v11435, 4
    %v11437 = vmax.f32 %v11435, %v11436
    %v11438 = vrot.slane %v11437, 2
    %v11439 = vmax.f32 %v11437, %v11438
    %v11440 = vrot.slane %v11439, 1
    %v11441 = vmax.f32 %v11439, %v11440
    %v11442 = vsel %vm10699, %v10483, -inf
    %v11443 = vrot.slane %v11442, 4
    %v11444 = vmax.f32 %v11442, %v11443
    %v11445 = vrot.slane %v11444, 2
    %v11446 = vmax.f32 %v11444, %v11445
    %v11447 = vrot.slane %v11446, 1
    %v11448 = vmax.f32 %v11446, %v11447
    %v11449 = vsel %vm10699, %v10485, -inf
    %v11450 = vrot.slane %v11449, 4
    %v11451 = vmax.f32 %v11449, %v11450
    %v11452 = vrot.slane %v11451, 2
    %v11453 = vmax.f32 %v11451, %v11452
    %v11454 = vrot.slane %v11453, 1
    %v11455 = vmax.f32 %v11453, %v11454
    %v11456 = vsel %vm10699, %v10493, -inf
    %v11457 = vrot.slane %v11456, 4
    %v11458 = vmax.f32 %v11456, %v11457
    %v11459 = vrot.slane %v11458, 2
    %v11460 = vmax.f32 %v11458, %v11459
    %v11461 = vrot.slane %v11460, 1
    %v11462 = vmax.f32 %v11460, %v11461
    %v11463 = vsel %vm10699, %v10501, -inf
    %v11464 = vrot.slane %v11463, 4
    %v11465 = vmax.f32 %v11463, %v11464
    %v11466 = vrot.slane %v11465, 2
    %v11467 = vmax.f32 %v11465, %v11466
    %v11468 = vrot.slane %v11467, 1
    %v11469 = vmax.f32 %v11467, %v11468
    %v11470 = vsel %vm10699, %v10500, -inf
    %v11471 = vrot.slane %v11470, 4
    %v11472 = vmax.f32 %v11470, %v11471
    %v11473 = vrot.slane %v11472, 2
    %v11474 = vmax.f32 %v11472, %v11473
    %v11475 = vrot.slane %v11474, 1
    %v11476 = vmax.f32 %v11474, %v11475
    %v11477 = vsel %vm10699, %v10502, -inf
    %v11478 = vrot.slane %v11477, 4
    %v11479 = vmax.f32 %v11477, %v11478
    %v11480 = vrot.slane %v11479, 2
    %v11481 = vmax.f32 %v11479, %v11480
    %v11482 = vrot.slane %v11481, 1
    %v11483 = vmax.f32 %v11481, %v11482
    %v11484 = vsel %vm10699, %v10510, -inf
    %v11485 = vrot.slane %v11484, 4
    %v11486 = vmax.f32 %v11484, %v11485
    %v11487 = vrot.slane %v11486, 2
    %v11488 = vmax.f32 %v11486, %v11487
    %v11489 = vrot.slane %v11488, 1
    %v11490 = vmax.f32 %v11488, %v11489
    %v11491 = vsel %vm10699, %v10518, -inf
    %v11492 = vrot.slane %v11491, 4
    %v11493 = vmax.f32 %v11491, %v11492
    %v11494 = vrot.slane %v11493, 2
    %v11495 = vmax.f32 %v11493, %v11494
    %v11496 = vrot.slane %v11495, 1
    %v11497 = vmax.f32 %v11495, %v11496
    %v11498 = vsel %vm10699, %v10517, -inf
    %v11499 = vrot.slane %v11498, 4
    %v11500 = vmax.f32 %v11498, %v11499
    %v11501 = vrot.slane %v11500, 2
    %v11502 = vmax.f32 %v11500, %v11501
    %v11503 = vrot.slane %v11502, 1
    %v11504 = vmax.f32 %v11502, %v11503
    %v11505 = vsel %vm10699, %v10519, -inf
    %v11506 = vrot.slane %v11505, 4
    %v11507 = vmax.f32 %v11505, %v11506
    %v11508 = vrot.slane %v11507, 2
    %v11509 = vmax.f32 %v11507, %v11508
    %v11510 = vrot.slane %v11509, 1
    %v11511 = vmax.f32 %v11509, %v11510
    %v11512 = vsel %vm10699, %v10527, -inf
    %v11513 = vrot.slane %v11512, 4
    %v11514 = vmax.f32 %v11512, %v11513
    %v11515 = vrot.slane %v11514, 2
    %v11516 = vmax.f32 %v11514, %v11515
    %v11517 = vrot.slane %v11516, 1
    %v11518 = vmax.f32 %v11516, %v11517
    %v11519 = vsel %vm10699, %v10535, -inf
    %v11520 = vrot.slane %v11519, 4
    %v11521 = vmax.f32 %v11519, %v11520
    %v11522 = vrot.slane %v11521, 2
    %v11523 = vmax.f32 %v11521, %v11522
    %v11524 = vrot.slane %v11523, 1
    %v11525 = vmax.f32 %v11523, %v11524
    %v11526 = vsel %vm10699, %v10534, -inf
    %v11527 = vrot.slane %v11526, 4
    %v11528 = vmax.f32 %v11526, %v11527
    %v11529 = vrot.slane %v11528, 2
    %v11530 = vmax.f32 %v11528, %v11529
    %v11531 = vrot.slane %v11530, 1
    %v11532 = vmax.f32 %v11530, %v11531
    %v11533 = vsel %vm10699, %v10536, -inf
    %v11534 = vrot.slane %v11533, 4
    %v11535 = vmax.f32 %v11533, %v11534
    %v11536 = vrot.slane %v11535, 2
    %v11537 = vmax.f32 %v11535, %v11536
    %v11538 = vrot.slane %v11537, 1
    %v11539 = vmax.f32 %v11537, %v11538
    %v11540 = vsel %vm10699, %v10544, -inf
    %v11541 = vrot.slane %v11540, 4
    %v11542 = vmax.f32 %v11540, %v11541
    %v11543 = vrot.slane %v11542, 2
    %v11544 = vmax.f32 %v11542, %v11543
    %v11545 = vrot.slane %v11544, 1
    %v11546 = vmax.f32 %v11544, %v11545
    %v11547 = vsel %vm10699, %v10552, -inf
    %v11548 = vrot.slane %v11547, 4
    %v11549 = vmax.f32 %v11547, %v11548
    %v11550 = vrot.slane %v11549, 2
    %v11551 = vmax.f32 %v11549, %v11550
    %v11552 = vrot.slane %v11551, 1
    %v11553 = vmax.f32 %v11551, %v11552
    %v11554 = vsel %vm10699, %v10551, -inf
    %v11555 = vrot.slane %v11554, 4
    %v11556 = vmax.f32 %v11554, %v11555
    %v11557 = vrot.slane %v11556, 2
    %v11558 = vmax.f32 %v11556, %v11557
    %v11559 = vrot.slane %v11558, 1
    %v11560 = vmax.f32 %v11558, %v11559
    %v11561 = vsel %vm10699, %v10553, -inf
    %v11562 = vrot.slane %v11561, 4
    %v11563 = vmax.f32 %v11561, %v11562
    %v11564 = vrot.slane %v11563, 2
    %v11565 = vmax.f32 %v11563, %v11564
    %v11566 = vrot.slane %v11565, 1
    %v11567 = vmax.f32 %v11565, %v11566
    %v11568 = vsel %vm10699, %v10561, -inf
    %v11569 = vrot.slane %v11568, 4
    %v11570 = vmax.f32 %v11568, %v11569
    %v11571 = vrot.slane %v11570, 2
    %v11572 = vmax.f32 %v11570, %v11571
    %v11573 = vrot.slane %v11572, 1
    %v11574 = vmax.f32 %v11572, %v11573
    %v11575 = vsel %vm10699, %v10569, -inf
    %v11576 = vrot.slane %v11575, 4
    %v11577 = vmax.f32 %v11575, %v11576
    %v11578 = vrot.slane %v11577, 2
    %v11579 = vmax.f32 %v11577, %v11578
    %v11580 = vrot.slane %v11579, 1
    %v11581 = vmax.f32 %v11579, %v11580
    %v11582 = vsel %vm10699, %v10568, -inf
    %v11583 = vrot.slane %v11582, 4
    %v11584 = vmax.f32 %v11582, %v11583
    %v11585 = vrot.slane %v11584, 2
    %v11586 = vmax.f32 %v11584, %v11585
    %v11587 = vrot.slane %v11586, 1
    %v11588 = vmax.f32 %v11586, %v11587
    %v11589 = vsel %vm10699, %v10570, -inf
    %v11590 = vrot.slane %v11589, 4
    %v11591 = vmax.f32 %v11589, %v11590
    %v11592 = vrot.slane %v11591, 2
    %v11593 = vmax.f32 %v11591, %v11592
    %v11594 = vrot.slane %v11593, 1
    %v11595 = vmax.f32 %v11593, %v11594
    %vm11724 = vcmask 1041409
    %v11725 = vsel %vm11724, %v10713, %v10706
    %vm11726 = vcmask 1042434
    %v11727 = vsel %vm11726, %v10720, %v11725
    %vm11728 = vcmask 1043459
    %v11729 = vsel %vm11728, %v10727, %v11727
    %vm11730 = vcmask 1044484
    %v11731 = vsel %vm11730, %v10734, %v11729
    %vm11732 = vcmask 1045509
    %v11733 = vsel %vm11732, %v10741, %v11731
    %vm11734 = vcmask 1046534
    %v11735 = vsel %vm11734, %v10748, %v11733
    %vm11736 = vcmask 1047559
    %v11737 = vsel %vm11736, %v10755, %v11735
    %v11738 = vsel %vm11724, %v10769, %v10762
    %v11739 = vsel %vm11726, %v10776, %v11738
    %v11740 = vsel %vm11728, %v10783, %v11739
    %v11741 = vsel %vm11730, %v10790, %v11740
    %v11742 = vsel %vm11732, %v10797, %v11741
    %v11743 = vsel %vm11734, %v10804, %v11742
    %v11744 = vsel %vm11736, %v10811, %v11743
    %v11745 = vsel %vm11724, %v10825, %v10818
    %v11746 = vsel %vm11726, %v10832, %v11745
    %v11747 = vsel %vm11728, %v10839, %v11746
    %v11748 = vsel %vm11730, %v10846, %v11747
    %v11749 = vsel %vm11732, %v10853, %v11748
    %v11750 = vsel %vm11734, %v10860, %v11749
    %v11751 = vsel %vm11736, %v10867, %v11750
    %v11752 = vsel %vm11724, %v10881, %v10874
    %v11753 = vsel %vm11726, %v10888, %v11752
    %v11754 = vsel %vm11728, %v10895, %v11753
    %v11755 = vsel %vm11730, %v10902, %v11754
    %v11756 = vsel %vm11732, %v10909, %v11755
    %v11757 = vsel %vm11734, %v10916, %v11756
    %v11758 = vsel %vm11736, %v10923, %v11757
    %v11759 = vsel %vm11724, %v10937, %v10930
    %v11760 = vsel %vm11726, %v10944, %v11759
    %v11761 = vsel %vm11728, %v10951, %v11760
    %v11762 = vsel %vm11730, %v10958, %v11761
    %v11763 = vsel %vm11732, %v10965, %v11762
    %v11764 = vsel %vm11734, %v10972, %v11763
    %v11765 = vsel %vm11736, %v10979, %v11764
    %v11766 = vsel %vm11724, %v10993, %v10986
    %v11767 = vsel %vm11726, %v11000, %v11766
    %v11768 = vsel %vm11728, %v11007, %v11767
    %v11769 = vsel %vm11730, %v11014, %v11768
    %v11770 = vsel %vm11732, %v11021, %v11769
    %v11771 = vsel %vm11734, %v11028, %v11770
    %v11772 = vsel %vm11736, %v11035, %v11771
    %v11773 = vsel %vm11724, %v11049, %v11042
    %v11774 = vsel %vm11726, %v11056, %v11773
    %v11775 = vsel %vm11728, %v11063, %v11774
    %v11776 = vsel %vm11730, %v11070, %v11775
    %v11777 = vsel %vm11732, %v11077, %v11776
    %v11778 = vsel %vm11734, %v11084, %v11777
    %v11779 = vsel %vm11736, %v11091, %v11778
    %v11780 = vsel %vm11724, %v11105, %v11098
    %v11781 = vsel %vm11726, %v11112, %v11780
    %v11782 = vsel %vm11728, %v11119, %v11781
    %v11783 = vsel %vm11730, %v11126, %v11782
    %v11784 = vsel %vm11732, %v11133, %v11783
    %v11785 = vsel %vm11734, %v11140, %v11784
    %v11786 = vsel %vm11736, %v11147, %v11785
    %v11787 = vsel %vm11724, %v11161, %v11154
    %v11788 = vsel %vm11726, %v11168, %v11787
    %v11789 = vsel %vm11728, %v11175, %v11788
    %v11790 = vsel %vm11730, %v11182, %v11789
    %v11791 = vsel %vm11732, %v11189, %v11790
    %v11792 = vsel %vm11734, %v11196, %v11791
    %v11793 = vsel %vm11736, %v11203, %v11792
    %v11794 = vsel %vm11724, %v11217, %v11210
    %v11795 = vsel %vm11726, %v11224, %v11794
    %v11796 = vsel %vm11728, %v11231, %v11795
    %v11797 = vsel %vm11730, %v11238, %v11796
    %v11798 = vsel %vm11732, %v11245, %v11797
    %v11799 = vsel %vm11734, %v11252, %v11798
    %v11800 = vsel %vm11736, %v11259, %v11799
    %v11801 = vsel %vm11724, %v11273, %v11266
    %v11802 = vsel %vm11726, %v11280, %v11801
    %v11803 = vsel %vm11728, %v11287, %v11802
    %v11804 = vsel %vm11730, %v11294, %v11803
    %v11805 = vsel %vm11732, %v11301, %v11804
    %v11806 = vsel %vm11734, %v11308, %v11805
    %v11807 = vsel %vm11736, %v11315, %v11806
    %v11808 = vsel %vm11724, %v11329, %v11322
    %v11809 = vsel %vm11726, %v11336, %v11808
    %v11810 = vsel %vm11728, %v11343, %v11809
    %v11811 = vsel %vm11730, %v11350, %v11810
    %v11812 = vsel %vm11732, %v11357, %v11811
    %v11813 = vsel %vm11734, %v11364, %v11812
    %v11814 = vsel %vm11736, %v11371, %v11813
    %v11815 = vsel %vm11724, %v11385, %v11378
    %v11816 = vsel %vm11726, %v11392, %v11815
    %v11817 = vsel %vm11728, %v11399, %v11816
    %v11818 = vsel %vm11730, %v11406, %v11817
    %v11819 = vsel %vm11732, %v11413, %v11818
    %v11820 = vsel %vm11734, %v11420, %v11819
    %v11821 = vsel %vm11736, %v11427, %v11820
    %v11822 = vsel %vm11724, %v11441, %v11434
    %v11823 = vsel %vm11726, %v11448, %v11822
    %v11824 = vsel %vm11728, %v11455, %v11823
    %v11825 = vsel %vm11730, %v11462, %v11824
    %v11826 = vsel %vm11732, %v11469, %v11825
    %v11827 = vsel %vm11734, %v11476, %v11826
    %v11828 = vsel %vm11736, %v11483, %v11827
    %v11829 = vsel %vm11724, %v11497, %v11490
    %v11830 = vsel %vm11726, %v11504, %v11829
    %v11831 = vsel %vm11728, %v11511, %v11830
    %v11832 = vsel %vm11730, %v11518, %v11831
    %v11833 = vsel %vm11732, %v11525, %v11832
    %v11834 = vsel %vm11734, %v11532, %v11833
    %v11835 = vsel %vm11736, %v11539, %v11834
    %v11836 = vsel %vm11724, %v11553, %v11546
    %v11837 = vsel %vm11726, %v11560, %v11836
    %v11838 = vsel %vm11728, %v11567, %v11837
    %v11839 = vsel %vm11730, %v11574, %v11838
    %v11840 = vsel %vm11732, %v11581, %v11839
    %v11841 = vsel %vm11734, %v11588, %v11840
    %v11842 = vsel %vm11736, %v11595, %v11841
    %11859 = vst.msk [vmem:[#allocation10] sm:$0xff] %vm3347, %v11737
    %11860 = vst.msk [vmem:[#allocation10 + $0x8] sm:$0xff] %vm3347, %v11744
    %11861 = vst.msk [vmem:[#allocation10 + $0x10] sm:$0xff] %vm3347, %v11751
    %11862 = vst.msk [vmem:[#allocation10 + $0x18] sm:$0xff] %vm3347, %v11758
    %11863 = vst.msk [vmem:[#allocation10 + $0x20] sm:$0xff] %vm3347, %v11765
    %11864 = vst.msk [vmem:[#allocation10 + $0x28] sm:$0xff] %vm3347, %v11772
    %11865 = vst.msk [vmem:[#allocation10 + $0x30] sm:$0xff] %vm3347, %v11779
    %11866 = vst.msk [vmem:[#allocation10 + $0x38] sm:$0xff] %vm3347, %v11786
    %11867 = vst.msk [vmem:[#allocation10 + $0x40] sm:$0xff] %vm3347, %v11793
    %11868 = vst.msk [vmem:[#allocation10 + $0x48] sm:$0xff] %vm3347, %v11800
    %11869 = vst.msk [vmem:[#allocation10 + $0x50] sm:$0xff] %vm3347, %v11807
    %11870 = vst.msk [vmem:[#allocation10 + $0x58] sm:$0xff] %vm3347, %v11814
    %11871 = vst.msk [vmem:[#allocation10 + $0x60] sm:$0xff] %vm3347, %v11821
    %11872 = vst.msk [vmem:[#allocation10 + $0x68] sm:$0xff] %vm3347, %v11828
    %11873 = vst.msk [vmem:[#allocation10 + $0x70] sm:$0xff] %vm3347, %v11835
    %11874 = vst.msk [vmem:[#allocation10 + $0x78] sm:$0xff] %vm3347, %v11842
    // Predicated region
    $region34: #{enc_conv_forward.1} parent=1 // pred_check
      _
    $region35: #{enc_conv_forward.1} parent=1 // pred_check_branch
      %11876 = sbr.rel (0) target = $region37
    $region36: #{enc_conv_forward.1} parent=1 // pred_region
      %s11878 = ssub.s32 2048, 2048
      %11879 = vsyncadd [#allocation4], %s11878
      %s11880 = sshll.u32 [#allocation10], 4
      %s11881 = int_to_ptr.vmem [resolvable:$true] %s11880
      %11886 = dma.vmem_to_hbm [thread:$0]  %s11881, 2048, %s4, [#allocation4], 128, 128, 8
    $region37: #{enc_conv_forward.1} parent=1 // pred_fallthru
      _
    // Predicated region
    $region38: #{enc_conv_forward.1} parent=1 // pred_check
      _
    $region39: #{enc_conv_forward.1} parent=1 // pred_check_branch
      %11888 = sbr.rel (0) target = $region41
    $region40: #{enc_conv_forward.1} parent=1 // pred_region
      %11889 = dma.done [#allocation4], 2048
    $region41: #{enc_conv_forward.1} parent=1 // pred_fallthru
      _
    %11890 = vsyncpa [#allocation3], 1
    %11891 = vsyncpa [#allocation6], 1
    %11892 = vsyncpa [#allocation9], 1
    %11893 = vsyncpa [#allocation4], 1

</llo_original>
